<compile_context>
chip_gen: v7x
topology: tpu7x:2x2x1
jax: 0.10.0
libtpu: 0.0.40
codegen_flags: <defaults>
</compile_context>

<pallas_src>
import jax
import jax.numpy as jnp
from jax.experimental import pallas as pl
from jax.experimental.pallas import tpu as pltpu


# ------------------------------ kernel bodies ------------------------------ #

def _upsample_conv_kernel(xm_ref, xt_ref, w_ref, b_ref, o_ref):
    """Fused nearest-2x upsample + 3x3 conv for one (batch, row-tile) block.

    xm_ref: (1, TH, W+2, Cin)  bf16  -- main rows of the 1-padded input tile
    xt_ref: (1, 2,  W+2, Cin)  bf16  -- 2-row halo (the next two padded rows)
    w_ref : (2, 2, 4*Cin, O)   bf16  -- phase-collapsed weights (a, b, 4C, O)
    b_ref : (1, O)             f32
    o_ref : (1, 2*TH, 2*W, O)  input dtype
    """
    th = xm_ref.shape[1]
    wp = xm_ref.shape[2]            # W + 2
    c = xm_ref.shape[3]
    w = wp - 2
    o = w_ref.shape[-1]

    # Local padded slab (TH+2, W+2, C): main rows + 2-row halo.
    x = jnp.concatenate([xm_ref[0], xt_ref[0]], axis=0)

    # Three column-shifted views shared by all four phases.
    cols = [x[:, v:v + w, :] for v in range(3)]        # each (TH+2, W, C)

    bias = b_ref[...]                                  # (1, O) f32

    row_phases = []
    for a in (0, 1):
        col_phases = []
        for b in (0, 1):
            # im2col of the 2x2 effective stencil -> one K=4C MXU contraction.
            taps = []
            for u in (0, 1):
                for v in (0, 1):
                    taps.append(cols[b + v][a + u:a + u + th].reshape(th * w, c))
            lhs = jnp.concatenate(taps, axis=-1)                         # (TH*W, 4C) bf16
            acc = jnp.dot(lhs, w_ref[a, b],
                          preferred_element_type=jnp.float32)           # (TH*W, O) f32
            col_phases.append((acc + bias).reshape(th, w, o))
        # interleave column phases: out[., 2j+b, .] = col_phases[b][., j, .]
        row_phases.append(jnp.stack(col_phases, axis=2).reshape(th, 2 * w, o))
    # interleave row phases: out[2i+a, ., .] = row_phases[a][i, ., .]
    y = jnp.stack(row_phases, axis=1).reshape(2 * th, 2 * w, o)
    o_ref[0] = y.astype(o_ref.dtype)


def _upsample2x_kernel(x_ref, o_ref):
    """use_conv=False path: plain nearest-neighbour 2x upsample of one tile."""
    x = x_ref[0]                                       # (TH, W, C)
    th, w, c = x.shape
    r = jnp.stack([x, x], axis=2).reshape(th, 2 * w, c)        # repeat columns
    o_ref[0] = jnp.stack([r, r], axis=1).reshape(2 * th, 2 * w, c)  # repeat rows


# ------------------------------ wrapper glue ------------------------------- #

def _row_tile(h, need_even=True):
    for t in (8, 4, 2):
        if h % t == 0:
            return t
    if not need_even:
        return 1
    raise ValueError("H must be even for the fused upsample+conv kernel")


def _phase_weights(w):
    """Collapse a (3,3,Cin,O) HWIO kernel into (2,2,4*Cin,O) phase weights.

    Phase (a,b) taps input offsets (u,v) in {0,1}^2 of the 1-padded input; taps
    of the original 3x3 kernel that hit the same input pixel are summed.
    Tap order along the 4*Cin axis is (u,v) = (0,0),(0,1),(1,0),(1,1), matching
    the im2col concatenation order in the kernel.
    """
    rows = {0: [w[0], w[1] + w[2]],          # a = 0: offsets {i, i+1} of padded X
            1: [w[0] + w[1], w[2]]}          # a = 1: offsets {i+1, i+2}
    phases_a = []
    for a in (0, 1):
        phases_b = []
        for b in (0, 1):
            taps = []
            for u in (0, 1):
                r = rows[a][u]               # (3, Cin, O) over kx
                if b == 0:
                    c_taps = [r[0], r[1] + r[2]]
                else:
                    c_taps = [r[0] + r[1], r[2]]
                for v in (0, 1):
                    taps.append(c_taps[v])                       # (Cin, O)
            phases_b.append(jnp.concatenate(taps, axis=0))       # (4*Cin, O)
        phases_a.append(jnp.stack(phases_b, axis=0))             # (2, 4*Cin, O)
    return jnp.stack(phases_a, axis=0)                           # (2, 2, 4*Cin, O)


def _upsample_conv_call(xp, wp, bias, out_dtype, h, w, th):
    n, c = xp.shape[0], xp.shape[-1]
    o = wp.shape[-1]
    nt = h // th
    flops = 2 * n * h * w * (16 * c) * o
    bytes_accessed = (xp.size * xp.dtype.itemsize
                      + wp.size * wp.dtype.itemsize
                      + n * 4 * h * w * o * jnp.dtype(out_dtype).itemsize)
    return pl.pallas_call(
        _upsample_conv_kernel,
        grid=(n, nt),
        in_specs=[
            # main TH rows of the padded input tile
            pl.BlockSpec((1, th, w + 2, c), lambda ni, ti: (ni, ti, 0, 0)),
            # 2-row halo: next two padded rows (same array, 2-row blocks)
            pl.BlockSpec((1, 2, w + 2, c),
                         lambda ni, ti: (ni, ti * (th // 2) + th // 2, 0, 0)),
            # phase-collapsed weights + bias, resident across the grid
            pl.BlockSpec((2, 2, 4 * c, o), lambda ni, ti: (0, 0, 0, 0)),
            pl.BlockSpec((1, o), lambda ni, ti: (0, 0)),
        ],
        out_specs=pl.BlockSpec((1, 2 * th, 2 * w, o), lambda ni, ti: (ni, ti, 0, 0)),
        out_shape=jax.ShapeDtypeStruct((n, 2 * h, 2 * w, o), out_dtype),
        compiler_params=pltpu.CompilerParams(
            dimension_semantics=("parallel", "parallel"),
            vmem_limit_bytes=32 * 1024 * 1024),
        cost_estimate=pl.CostEstimate(flops=flops, transcendentals=0,
                                      bytes_accessed=bytes_accessed),
    )(xp, xp, wp, bias)


def _upsample2x_call(x, th):
    n, h, w, c = x.shape
    nt = h // th
    return pl.pallas_call(
        _upsample2x_kernel,
        grid=(n, nt),
        in_specs=[pl.BlockSpec((1, th, w, c), lambda ni, ti: (ni, ti, 0, 0))],
        out_specs=pl.BlockSpec((1, 2 * th, 2 * w, c), lambda ni, ti: (ni, ti, 0, 0)),
        out_shape=jax.ShapeDtypeStruct((n, 2 * h, 2 * w, c), x.dtype),
        compiler_params=pltpu.CompilerParams(
            dimension_semantics=("parallel", "parallel")),
    )(x)


def upsample_forward_nhwc(params, x, *, use_conv=True,
                          conv_operand_dtype=jnp.bfloat16):
    """Upsample.forward in NHWC (the fast path: no layout transposes)."""
    n, h, w, c = x.shape
    if not use_conv:
        return _upsample2x_call(x, _row_tile(h, need_even=False))

    cw = params["conv_w"]                              # (3, 3, Cin, O) HWIO
    assert cw.shape[:3] == (3, 3, c)
    th = _row_tile(h, need_even=True)
    # Collapse to phase weights in f32, then cast MXU operands to bf16.
    wp = _phase_weights(cw.astype(jnp.float32)).astype(conv_operand_dtype)
    bias = params["conv_b"].astype(jnp.float32).reshape(1, -1)
    # Single 1-pixel pad of the (small, pre-upsample) input; XLA fuses the
    # bf16 cast and pad into one pass.
    xp = jnp.pad(x.astype(conv_operand_dtype),
                 ((0, 0), (1, 1), (1, 1), (0, 0)))
    return _upsample_conv_call(xp, wp, bias, x.dtype, h, w, th)


def upsample_forward(params, x_nchw, *, use_conv=True):
    """PyTorch-layout adapter (NCHW in / NCHW out).

    Prefer `upsample_forward_nhwc` end-to-end in a real model: the two
    transposes here are full-tensor HBM passes done by XLA.
    """
    x = jnp.transpose(x_nchw, (0, 2, 3, 1))
    y = upsample_forward_nhwc(params, x, use_conv=use_conv)
    return jnp.transpose(y, (0, 3, 1, 2))


# ----------------------------------- demo ---------------------------------- #

if __name__ == "__main__":
    # channels=128 keeps the output channel (lane) axis dense; real UNet widths
    # are 320/640/1280.
    N, C, H, W = 2, 128, 16, 16
    key = jax.random.PRNGKey(0)
    kx, kw, kb = jax.random.split(key, 3)
    x_nchw = jax.random.normal(kx, (N, C, H, W), jnp.float32)
    params = {
        "conv_w": 0.1 * jax.random.normal(kw, (3, 3, C, C), jnp.float32),  # HWIO
        "conv_b": 0.05 * jax.random.normal(kb, (C,), jnp.float32),
    }

    # use_conv=True path (the SD-UNet configuration)
    y = jax.jit(upsample_forward)(params, x_nchw)
    jax.block_until_ready(y)
    assert y.shape == (N, C, 2 * H, 2 * W) and y.dtype == x_nchw.dtype

    # Reference: nearest-2x upsample then 3x3 conv (pure XLA, f32).
    x_nhwc = jnp.transpose(x_nchw, (0, 2, 3, 1))
    xu = jnp.repeat(jnp.repeat(x_nhwc, 2, axis=1), 2, axis=2)
    ref = jax.lax.conv_general_dilated(
        xu, params["conv_w"], (1, 1), ((1, 1), (1, 1)),
        dimension_numbers=("NHWC", "HWIO", "NHWC")) + params["conv_b"]
    ref = jnp.transpose(ref, (0, 3, 1, 2))
    err = jnp.max(jnp.abs(y - ref))
    scale = jnp.max(jnp.abs(ref))
    assert err <= 0.05 * scale + 1e-3, (float(err), float(scale))

    # use_conv=False path (exact nearest-neighbour repeat)
    y2 = jax.jit(lambda p, a: upsample_forward(p, a, use_conv=False))(params, x_nchw)
    jax.block_until_ready(y2)
    ref2 = jnp.repeat(jnp.repeat(x_nchw, 2, axis=2), 2, axis=3)
    assert bool(jnp.array_equal(y2, ref2))

    print("KERNEL_OK")
</pallas_src>

<mosaic_0001>
module attributes {stable_mosaic.version = 11 : i64} {
  func.func @_upsample_conv_kernel(%arg0: i32, %arg1: i32, %arg2: memref<1x8x18x128xbf16, #tpu.memory_space<vmem>>, %arg3: memref<1x2x18x128xbf16, #tpu.memory_space<vmem>>, %arg4: memref<2x2x512x128xbf16, #tpu.memory_space<vmem>>, %arg5: memref<1x128xf32, #tpu.memory_space<vmem>>, %arg6: memref<1x16x32x128xf32, #tpu.memory_space<vmem>>) attributes {dimension_semantics = [#tpu.dimension_semantics<parallel>, #tpu.dimension_semantics<parallel>], iteration_bounds = array<i64: 2, 2>, scalar_prefetch = 0 : i64, scratch_operands = 0 : i64, tpu.core_type = #tpu.core_type<tc>, window_params = [{transform_indices = @transform_0, window_bounds = array<i64: 1, 8, 18, 128>}, {transform_indices = @transform_1, window_bounds = array<i64: 1, 2, 18, 128>}, {pipeline_mode = #tpu.pipeline_mode<synchronous>, transform_indices = @transform_2, window_bounds = array<i64: 2, 2, 512, 128>}, {pipeline_mode = #tpu.pipeline_mode<synchronous>, transform_indices = @transform_3, window_bounds = array<i64: 1, 128>}, {transform_indices = @transform_4, window_bounds = array<i64: 1, 16, 32, 128>}]} {
    %c0 = arith.constant 0 : index
    %c0_0 = arith.constant 0 : index
    %c0_1 = arith.constant 0 : index
    %c0_2 = arith.constant 0 : index
    %0 = vector.load %arg2[%c0, %c0_0, %c0_1, %c0_2] : memref<1x8x18x128xbf16, #tpu.memory_space<vmem>>, vector<1x8x18x128xbf16>
    %1 = vector.shape_cast %0 : vector<1x8x18x128xbf16> to vector<8x18x128xbf16>
    %c0_3 = arith.constant 0 : index
    %c0_4 = arith.constant 0 : index
    %c0_5 = arith.constant 0 : index
    %c0_6 = arith.constant 0 : index
    %2 = vector.load %arg3[%c0_3, %c0_4, %c0_5, %c0_6] : memref<1x2x18x128xbf16, #tpu.memory_space<vmem>>, vector<1x2x18x128xbf16>
    %3 = vector.shape_cast %2 : vector<1x2x18x128xbf16> to vector<2x18x128xbf16>
    %4 = tpu.concatenate %1, %3 in 0 : vector<8x18x128xbf16>, vector<2x18x128xbf16> -> vector<10x18x128xbf16>
    %5 = vector.extract_strided_slice %4 {offsets = [0, 0, 0], sizes = [10, 16, 128], strides = [1, 1, 1]} : vector<10x18x128xbf16> to vector<10x16x128xbf16>
    %6 = vector.extract_strided_slice %4 {offsets = [0, 1, 0], sizes = [10, 16, 128], strides = [1, 1, 1]} : vector<10x18x128xbf16> to vector<10x16x128xbf16>
    %7 = vector.extract_strided_slice %4 {offsets = [0, 2, 0], sizes = [10, 16, 128], strides = [1, 1, 1]} : vector<10x18x128xbf16> to vector<10x16x128xbf16>
    %c0_7 = arith.constant 0 : index
    %c0_8 = arith.constant 0 : index
    %8 = vector.load %arg5[%c0_7, %c0_8] : memref<1x128xf32, #tpu.memory_space<vmem>>, vector<1x128xf32>
    %9 = vector.extract_strided_slice %5 {offsets = [0, 0, 0], sizes = [8, 16, 128], strides = [1, 1, 1]} : vector<10x16x128xbf16> to vector<8x16x128xbf16>
    %10 = vector.shape_cast %9 : vector<8x16x128xbf16> to vector<128x128xbf16>
    %11 = vector.extract_strided_slice %6 {offsets = [0, 0, 0], sizes = [8, 16, 128], strides = [1, 1, 1]} : vector<10x16x128xbf16> to vector<8x16x128xbf16>
    %12 = vector.shape_cast %11 : vector<8x16x128xbf16> to vector<128x128xbf16>
    %13 = vector.extract_strided_slice %5 {offsets = [1, 0, 0], sizes = [8, 16, 128], strides = [1, 1, 1]} : vector<10x16x128xbf16> to vector<8x16x128xbf16>
    %14 = vector.shape_cast %13 : vector<8x16x128xbf16> to vector<128x128xbf16>
    %15 = vector.extract_strided_slice %6 {offsets = [1, 0, 0], sizes = [8, 16, 128], strides = [1, 1, 1]} : vector<10x16x128xbf16> to vector<8x16x128xbf16>
    %16 = vector.shape_cast %15 : vector<8x16x128xbf16> to vector<128x128xbf16>
    %17 = tpu.concatenate %10, %12, %14, %16 in 1 : vector<128x128xbf16>, vector<128x128xbf16>, vector<128x128xbf16>, vector<128x128xbf16> -> vector<128x512xbf16>
    %c0_9 = arith.constant 0 : index
    %c0_10 = arith.constant 0 : index
    %c0_11 = arith.constant 0 : index
    %c0_12 = arith.constant 0 : index
    %18 = vector.load %arg4[%c0_9, %c0_10, %c0_11, %c0_12] : memref<2x2x512x128xbf16, #tpu.memory_space<vmem>>, vector<1x1x512x128xbf16>
    %19 = vector.shape_cast %18 : vector<1x1x512x128xbf16> to vector<512x128xbf16>
    %cst = arith.constant dense<0.000000e+00> : vector<128x128xf32>
    %20 = tpu.matmul %17, %19, %cst {dimension_numbers = #tpu.dot_dimension_numbers<[1], [0], [0], [1], [0, 0, 1, 1], [], []>} : vector<128x512xbf16>, vector<512x128xbf16>, vector<128x128xf32> -> vector<128x128xf32>
    %21 = vector.broadcast %8 : vector<1x128xf32> to vector<128x128xf32>
    %22 = arith.addf %20, %21 : vector<128x128xf32>
    %23 = vector.shape_cast %22 : vector<128x128xf32> to vector<8x16x128xf32>
    %24 = vector.extract_strided_slice %6 {offsets = [0, 0, 0], sizes = [8, 16, 128], strides = [1, 1, 1]} : vector<10x16x128xbf16> to vector<8x16x128xbf16>
    %25 = vector.shape_cast %24 : vector<8x16x128xbf16> to vector<128x128xbf16>
    %26 = vector.extract_strided_slice %7 {offsets = [0, 0, 0], sizes = [8, 16, 128], strides = [1, 1, 1]} : vector<10x16x128xbf16> to vector<8x16x128xbf16>
    %27 = vector.shape_cast %26 : vector<8x16x128xbf16> to vector<128x128xbf16>
    %28 = vector.extract_strided_slice %6 {offsets = [1, 0, 0], sizes = [8, 16, 128], strides = [1, 1, 1]} : vector<10x16x128xbf16> to vector<8x16x128xbf16>
    %29 = vector.shape_cast %28 : vector<8x16x128xbf16> to vector<128x128xbf16>
    %30 = vector.extract_strided_slice %7 {offsets = [1, 0, 0], sizes = [8, 16, 128], strides = [1, 1, 1]} : vector<10x16x128xbf16> to vector<8x16x128xbf16>
    %31 = vector.shape_cast %30 : vector<8x16x128xbf16> to vector<128x128xbf16>
    %32 = tpu.concatenate %25, %27, %29, %31 in 1 : vector<128x128xbf16>, vector<128x128xbf16>, vector<128x128xbf16>, vector<128x128xbf16> -> vector<128x512xbf16>
    %c0_13 = arith.constant 0 : index
    %c1 = arith.constant 1 : index
    %c0_14 = arith.constant 0 : index
    %c0_15 = arith.constant 0 : index
    %33 = vector.load %arg4[%c0_13, %c1, %c0_14, %c0_15] : memref<2x2x512x128xbf16, #tpu.memory_space<vmem>>, vector<1x1x512x128xbf16>
    %34 = vector.shape_cast %33 : vector<1x1x512x128xbf16> to vector<512x128xbf16>
    %cst_16 = arith.constant dense<0.000000e+00> : vector<128x128xf32>
    %35 = tpu.matmul %32, %34, %cst_16 {dimension_numbers = #tpu.dot_dimension_numbers<[1], [0], [0], [1], [0, 0, 1, 1], [], []>} : vector<128x512xbf16>, vector<512x128xbf16>, vector<128x128xf32> -> vector<128x128xf32>
    %36 = vector.broadcast %8 : vector<1x128xf32> to vector<128x128xf32>
    %37 = arith.addf %35, %36 : vector<128x128xf32>
    %38 = vector.shape_cast %37 : vector<128x128xf32> to vector<8x16x128xf32>
    %39 = vector.shape_cast %23 : vector<8x16x128xf32> to vector<8x16x1x128xf32>
    %40 = vector.shape_cast %38 : vector<8x16x128xf32> to vector<8x16x1x128xf32>
    %41 = tpu.concatenate %39, %40 in 2 : vector<8x16x1x128xf32>, vector<8x16x1x128xf32> -> vector<8x16x2x128xf32>
    %42 = vector.shape_cast %41 : vector<8x16x2x128xf32> to vector<8x32x128xf32>
    %43 = vector.extract_strided_slice %5 {offsets = [1, 0, 0], sizes = [8, 16, 128], strides = [1, 1, 1]} : vector<10x16x128xbf16> to vector<8x16x128xbf16>
    %44 = vector.shape_cast %43 : vector<8x16x128xbf16> to vector<128x128xbf16>
    %45 = vector.extract_strided_slice %6 {offsets = [1, 0, 0], sizes = [8, 16, 128], strides = [1, 1, 1]} : vector<10x16x128xbf16> to vector<8x16x128xbf16>
    %46 = vector.shape_cast %45 : vector<8x16x128xbf16> to vector<128x128xbf16>
    %47 = vector.extract_strided_slice %5 {offsets = [2, 0, 0], sizes = [8, 16, 128], strides = [1, 1, 1]} : vector<10x16x128xbf16> to vector<8x16x128xbf16>
    %48 = vector.shape_cast %47 : vector<8x16x128xbf16> to vector<128x128xbf16>
    %49 = vector.extract_strided_slice %6 {offsets = [2, 0, 0], sizes = [8, 16, 128], strides = [1, 1, 1]} : vector<10x16x128xbf16> to vector<8x16x128xbf16>
    %50 = vector.shape_cast %49 : vector<8x16x128xbf16> to vector<128x128xbf16>
    %51 = tpu.concatenate %44, %46, %48, %50 in 1 : vector<128x128xbf16>, vector<128x128xbf16>, vector<128x128xbf16>, vector<128x128xbf16> -> vector<128x512xbf16>
    %c1_17 = arith.constant 1 : index
    %c0_18 = arith.constant 0 : index
    %c0_19 = arith.constant 0 : index
    %c0_20 = arith.constant 0 : index
    %52 = vector.load %arg4[%c1_17, %c0_18, %c0_19, %c0_20] : memref<2x2x512x128xbf16, #tpu.memory_space<vmem>>, vector<1x1x512x128xbf16>
    %53 = vector.shape_cast %52 : vector<1x1x512x128xbf16> to vector<512x128xbf16>
    %cst_21 = arith.constant dense<0.000000e+00> : vector<128x128xf32>
    %54 = tpu.matmul %51, %53, %cst_21 {dimension_numbers = #tpu.dot_dimension_numbers<[1], [0], [0], [1], [0, 0, 1, 1], [], []>} : vector<128x512xbf16>, vector<512x128xbf16>, vector<128x128xf32> -> vector<128x128xf32>
    %55 = vector.broadcast %8 : vector<1x128xf32> to vector<128x128xf32>
    %56 = arith.addf %54, %55 : vector<128x128xf32>
    %57 = vector.shape_cast %56 : vector<128x128xf32> to vector<8x16x128xf32>
    %58 = vector.extract_strided_slice %6 {offsets = [1, 0, 0], sizes = [8, 16, 128], strides = [1, 1, 1]} : vector<10x16x128xbf16> to vector<8x16x128xbf16>
    %59 = vector.shape_cast %58 : vector<8x16x128xbf16> to vector<128x128xbf16>
    %60 = vector.extract_strided_slice %7 {offsets = [1, 0, 0], sizes = [8, 16, 128], strides = [1, 1, 1]} : vector<10x16x128xbf16> to vector<8x16x128xbf16>
    %61 = vector.shape_cast %60 : vector<8x16x128xbf16> to vector<128x128xbf16>
    %62 = vector.extract_strided_slice %6 {offsets = [2, 0, 0], sizes = [8, 16, 128], strides = [1, 1, 1]} : vector<10x16x128xbf16> to vector<8x16x128xbf16>
    %63 = vector.shape_cast %62 : vector<8x16x128xbf16> to vector<128x128xbf16>
    %64 = vector.extract_strided_slice %7 {offsets = [2, 0, 0], sizes = [8, 16, 128], strides = [1, 1, 1]} : vector<10x16x128xbf16> to vector<8x16x128xbf16>
    %65 = vector.shape_cast %64 : vector<8x16x128xbf16> to vector<128x128xbf16>
    %66 = tpu.concatenate %59, %61, %63, %65 in 1 : vector<128x128xbf16>, vector<128x128xbf16>, vector<128x128xbf16>, vector<128x128xbf16> -> vector<128x512xbf16>
    %c1_22 = arith.constant 1 : index
    %c1_23 = arith.constant 1 : index
    %c0_24 = arith.constant 0 : index
    %c0_25 = arith.constant 0 : index
    %67 = vector.load %arg4[%c1_22, %c1_23, %c0_24, %c0_25] : memref<2x2x512x128xbf16, #tpu.memory_space<vmem>>, vector<1x1x512x128xbf16>
    %68 = vector.shape_cast %67 : vector<1x1x512x128xbf16> to vector<512x128xbf16>
    %cst_26 = arith.constant dense<0.000000e+00> : vector<128x128xf32>
    %69 = tpu.matmul %66, %68, %cst_26 {dimension_numbers = #tpu.dot_dimension_numbers<[1], [0], [0], [1], [0, 0, 1, 1], [], []>} : vector<128x512xbf16>, vector<512x128xbf16>, vector<128x128xf32> -> vector<128x128xf32>
    %70 = vector.broadcast %8 : vector<1x128xf32> to vector<128x128xf32>
    %71 = arith.addf %69, %70 : vector<128x128xf32>
    %72 = vector.shape_cast %71 : vector<128x128xf32> to vector<8x16x128xf32>
    %73 = vector.shape_cast %57 : vector<8x16x128xf32> to vector<8x16x1x128xf32>
    %74 = vector.shape_cast %72 : vector<8x16x128xf32> to vector<8x16x1x128xf32>
    %75 = tpu.concatenate %73, %74 in 2 : vector<8x16x1x128xf32>, vector<8x16x1x128xf32> -> vector<8x16x2x128xf32>
    %76 = vector.shape_cast %75 : vector<8x16x2x128xf32> to vector<8x32x128xf32>
    %77 = vector.shape_cast %42 : vector<8x32x128xf32> to vector<8x1x32x128xf32>
    %78 = vector.shape_cast %76 : vector<8x32x128xf32> to vector<8x1x32x128xf32>
    %79 = tpu.concatenate %77, %78 in 1 : vector<8x1x32x128xf32>, vector<8x1x32x128xf32> -> vector<8x2x32x128xf32>
    %80 = vector.shape_cast %79 : vector<8x2x32x128xf32> to vector<16x32x128xf32>
    %c0_27 = arith.constant 0 : index
    %c0_28 = arith.constant 0 : index
    %c0_29 = arith.constant 0 : index
    %c0_30 = arith.constant 0 : index
    %81 = vector.load %arg6[%c0_27, %c0_28, %c0_29, %c0_30] : memref<1x16x32x128xf32, #tpu.memory_space<vmem>>, vector<1x16x32x128xf32>
    %82 = vector.shape_cast %81 : vector<1x16x32x128xf32> to vector<16x32x128xf32>
    %83 = vector.shape_cast %80 : vector<16x32x128xf32> to vector<1x16x32x128xf32>
    tpu.vector_store %arg6[%c0_27, %c0_28, %c0_29, %c0_30], %83 {strides = array<i32>} : memref<1x16x32x128xf32, #tpu.memory_space<vmem>>, vector<1x16x32x128xf32>,
    return
  }
  func.func @transform_0(%arg0: i32, %arg1: i32) -> (i32, i32, i32, i32) {
    %c0_i32 = arith.constant 0 : i32
    %c0_i32_0 = arith.constant 0 : i32
    %c0_i32_1 = arith.constant 0 : i32
    return %arg0, %arg1, %c0_i32, %c0_i32_0 : i32, i32, i32, i32
  }
  func.func @transform_1(%arg0: i32, %arg1: i32) -> (i32, i32, i32, i32) {
    %c4_i32 = arith.constant 4 : i32
    %0 = arith.muli %arg1, %c4_i32 : i32
    %c4_i32_0 = arith.constant 4 : i32
    %1 = arith.addi %0, %c4_i32_0 : i32
    %c0_i32 = arith.constant 0 : i32
    %c0_i32_1 = arith.constant 0 : i32
    %c0_i32_2 = arith.constant 0 : i32
    return %arg0, %1, %c0_i32, %c0_i32_1 : i32, i32, i32, i32
  }
  func.func @transform_2(%arg0: i32, %arg1: i32) -> (i32, i32, i32, i32) {
    %c0_i32 = arith.constant 0 : i32
    %c0_i32_0 = arith.constant 0 : i32
    %c0_i32_1 = arith.constant 0 : i32
    %c0_i32_2 = arith.constant 0 : i32
    %c0_i32_3 = arith.constant 0 : i32
    return %c0_i32, %c0_i32_0, %c0_i32_1, %c0_i32_2 : i32, i32, i32, i32
  }
  func.func @transform_3(%arg0: i32, %arg1: i32) -> (i32, i32) {
    %c0_i32 = arith.constant 0 : i32
    %c0_i32_0 = arith.constant 0 : i32
    %c0_i32_1 = arith.constant 0 : i32
    return %c0_i32, %c0_i32_0 : i32, i32
  }
  func.func @transform_4(%arg0: i32, %arg1: i32) -> (i32, i32, i32, i32) {
    %c0_i32 = arith.constant 0 : i32
    %c0_i32_0 = arith.constant 0 : i32
    %c0_i32_1 = arith.constant 0 : i32
    return %arg0, %arg1, %c0_i32, %c0_i32_0 : i32, i32, i32, i32
  }
}

</mosaic_0001>

<llo_original>
// kernel: upsample_forward.1
$region0: #{upsample_forward.1}
  #allocation0 [shape = 'u32[]', space=smem, size = 0x4, offset = 0x4, fixed_abs, tag = 'smem constant byte address 0x4 - core index']
  #allocation1 [shape = 'u32[144,128]{1,0:T(1,128)}', space=vmem, size = 0x12000, scoped, tag = 'internal scratch']
  %s0 = inlined_call_operand.vmem [shape: bf16[2,18,18,128], index: 0, kind: input, shape index: {}, may-alias: {0,1}]
  %s1 = inlined_call_operand.vmem [shape: bf16[2,18,18,128], index: 1, kind: input, shape index: {}, may-alias: {0,1}]
  %s2 = inlined_call_operand.vmem [shape: bf16[2,2,512,128], index: 2, kind: input, shape index: {}]
  %s3 = inlined_call_operand.vmem [shape: f32[1,128], index: 3, kind: input, shape index: {}]
  %s4 = inlined_call_operand.hbm [shape: f32[2,32,32,128], index: 4, kind: output, shape index: {}]
  %s5 = sld [smem:[#allocation0]]
  $region49: #{upsample_forward.1} parent=0
    _
  %s7 = ssub.s32 1, %s5
  %s8 = scalar_select 0, %s7, %s5
  $region1: #{upsample_forward.1} parent=0
    #allocation2 [shape = 'u8[524288]{0}', space=vmem, size = 0x80000, scoped, tag = 'output window, operand 0']
    #allocation3 [shape = 's32[2]{0}', space=sflag, size = 0x8, scoped, tag = 'scoped memory for upsample_forward.1']
    %9 = vsyncpa [#allocation3], 0
    %s10 = scalar_lea.sflag [#allocation3], 1
    %11 = vsyncpa %s10, 0
    loop: start=0, step=1, limit=6
    $region2: #{upsample_forward.1} parent=1 // loop_pre_header
      _
    $region3: #{upsample_forward.1} parent=1 // loop_header
      %s13 = sphi 0, %s17
      %p14 = scmp.ge.s32.totalorder %s13, 6
      %s20 = sphi 0, %s32
      %s21 = sphi 0, %s28
      %s22 = sphi 0, %s20
      %s23 = sphi 0, %s21
      %s24 = sphi 0, %s22
      %s25 = sphi 0, %s23
      %s37 = sphi 0, %s39
      %s40 = sphi 0, %s37
      %s41 = sphi 0, %s40
      %s57 = sphi 0, %s41
      %s69 = sphi 0, %s71
      %s72 = sphi 0, %s69
      %s73 = sphi 0, %s72
      %s89 = sphi 0, %s73
      %s93 = sphi 0, %s93
      %s95 = sphi 0, %s93
      %s96 = sphi 0, %s95
      %s110 = sphi 0, %s96
      %s114 = sphi 0, %s114
      %s116 = sphi 0, %s114
      %s117 = sphi 0, %s116
      %s131 = sphi 0, %s117
      %s139 = sphi 0, %s141
      %s142 = sphi 0, %s139
      %s143 = sphi 0, %s142
      %s159 = sphi 0, %s143
    $region4: #{upsample_forward.1} parent=1 // loop_header_branch
      %16 = sbr.rel (%p14) target = $region8
    $region5: #{upsample_forward.1} parent=1 // loop_body
      %s18 = ssub.s32 %s13, 1
      %s19 = ssub.s32 %s13, 2
      %s26 = sadd.s32 1, %s21
      %p27 = scmp.ge.s32.totalorder %s26, 2
      %s28 = scalar_select %p27, 0, %s26
      %s29 = sadd.s32 1, %s20
      %s30 = scalar_select %p27, %s29, %s20
      %p31 = scmp.ge.s32.totalorder %s30, 2
      %s32 = scalar_select %p31, 0, %s30
      %s33 = ssub.s32 %s20, %s32
      %s34 = ssub.s32 %s21, %s28
      %s35 = sor.u32 %s33, %s34
      %p36 = scmp.eq.s32.totalorder %s35, 0
      %s38 = sadd.s32 %s37, 1
      %s39 = scalar_select %p36, %s37, %s38
      %p42 = pneg %p36
      %p43 = scmp.eq.s32.totalorder %s13, 3
      %p44 = por %p42, %p43
      %p45 = scmp.ne.s32.totalorder %s37, %s40
      %p46 = scmp.eq.s32.totalorder %s13, 0
      %p47 = por %p45, %p46
      %p48 = scmp.ne.s32.totalorder %s37, %s40
      %p49 = scmp.eq.s32.totalorder %s18, 3
      %p50 = por %p48, %p49
      %p51 = scmp.ne.s32.totalorder %s40, %s41
      %p52 = scmp.eq.s32.totalorder %s18, 0
      %p53 = por %p51, %p52
      %p54 = scmp.ne.s32.totalorder %s40, %s41
      %p55 = scmp.eq.s32.totalorder %s19, 3
      %p56 = por %p54, %p55
      %p58 = scmp.ne.s32.totalorder %s41, %s57
      %p59 = scmp.eq.s32.totalorder %s19, 0
      %p60 = por %p58, %p59
      %s61 = smul.u32 %s21, 4
      %s62 = sadd.s32 %s61, 4
      %s63 = smul.u32 %s28, 4
      %s64 = sadd.s32 %s63, 4
      %s65 = ssub.s32 %s20, %s32
      %s66 = ssub.s32 %s62, %s64
      %s67 = sor.u32 %s65, %s66
      %p68 = scmp.eq.s32.totalorder %s67, 0
      %s70 = sadd.s32 %s69, 1
      %s71 = scalar_select %p68, %s69, %s70
      %p74 = pneg %p68
      %p75 = scmp.eq.s32.totalorder %s13, 3
      %p76 = por %p74, %p75
      %p77 = scmp.ne.s32.totalorder %s69, %s72
      %p78 = scmp.eq.s32.totalorder %s13, 0
      %p79 = por %p77, %p78
      %p80 = scmp.ne.s32.totalorder %s69, %s72
      %p81 = scmp.eq.s32.totalorder %s18, 3
      %p82 = por %p80, %p81
      %p83 = scmp.ne.s32.totalorder %s72, %s73
      %p84 = scmp.eq.s32.totalorder %s18, 0
      %p85 = por %p83, %p84
      %p86 = scmp.ne.s32.totalorder %s72, %s73
      %p87 = scmp.eq.s32.totalorder %s19, 3
      %p88 = por %p86, %p87
      %p90 = scmp.ne.s32.totalorder %s73, %s89
      %p91 = scmp.eq.s32.totalorder %s19, 0
      %p92 = por %p90, %p91
      %s94 = sadd.s32 %s93, 1
      %p97 = scmp.eq.s32.totalorder %s13, 3
      %p98 = scmp.ne.s32.totalorder %s93, %s95
      %p99 = scmp.eq.s32.totalorder %s13, 0
      %p100 = por %p98, %p99
      %p101 = scmp.ne.s32.totalorder %s93, %s95
      %p102 = scmp.eq.s32.totalorder %s18, 3
      %p103 = por %p101, %p102
      %p104 = scmp.ne.s32.totalorder %s95, %s96
      %p105 = scmp.eq.s32.totalorder %s18, 0
      %p106 = por %p104, %p105
      %p107 = scmp.ne.s32.totalorder %s95, %s96
      %p108 = scmp.eq.s32.totalorder %s19, 3
      %p109 = por %p107, %p108
      %p111 = scmp.ne.s32.totalorder %s96, %s110
      %p112 = scmp.eq.s32.totalorder %s19, 0
      %p113 = por %p111, %p112
      %s115 = sadd.s32 %s114, 1
      %p118 = scmp.eq.s32.totalorder %s13, 3
      %p119 = scmp.ne.s32.totalorder %s114, %s116
      %p120 = scmp.eq.s32.totalorder %s13, 0
      %p121 = por %p119, %p120
      %p122 = scmp.ne.s32.totalorder %s114, %s116
      %p123 = scmp.eq.s32.totalorder %s18, 3
      %p124 = por %p122, %p123
      %p125 = scmp.ne.s32.totalorder %s116, %s117
      %p126 = scmp.eq.s32.totalorder %s18, 0
      %p127 = por %p125, %p126
      %p128 = scmp.ne.s32.totalorder %s116, %s117
      %p129 = scmp.eq.s32.totalorder %s19, 3
      %p130 = por %p128, %p129
      %p132 = scmp.ne.s32.totalorder %s117, %s131
      %p133 = scmp.eq.s32.totalorder %s19, 0
      %p134 = por %p132, %p133
      %s135 = ssub.s32 %s20, %s32
      %s136 = ssub.s32 %s21, %s28
      %s137 = sor.u32 %s135, %s136
      %p138 = scmp.eq.s32.totalorder %s137, 0
      %s140 = sadd.s32 %s139, 1
      %s141 = scalar_select %p138, %s139, %s140
      %p144 = pneg %p138
      %p145 = scmp.eq.s32.totalorder %s13, 3
      %p146 = por %p144, %p145
      %p147 = scmp.ne.s32.totalorder %s139, %s142
      %p148 = scmp.eq.s32.totalorder %s13, 0
      %p149 = por %p147, %p148
      %p150 = scmp.ne.s32.totalorder %s139, %s142
      %p151 = scmp.eq.s32.totalorder %s18, 3
      %p152 = por %p150, %p151
      %p153 = scmp.ne.s32.totalorder %s142, %s143
      %p154 = scmp.eq.s32.totalorder %s18, 0
      %p155 = por %p153, %p154
      %p156 = scmp.ne.s32.totalorder %s142, %s143
      %p157 = scmp.eq.s32.totalorder %s19, 3
      %p158 = por %p156, %p157
      %p160 = scmp.ne.s32.totalorder %s143, %s159
      %p161 = scmp.eq.s32.totalorder %s19, 0
      %p162 = por %p160, %p161
      %p163 = scmp.le.s32.totalorder 1, %s13
      %p164 = scmp.lt.s32.totalorder %s13, 5
      %p165 = pnand %p163, %p164
      %p166 = pneg %p165
      // Predicated region
      $region9: #{upsample_forward.1} parent=5 // pred_check
        _
      $region10: #{upsample_forward.1} parent=5 // pred_check_branch
        %168 = sbr.rel (%p165) target = $region12
      $region11: #{upsample_forward.1} parent=5 // pred_region
        %s169 = ssub.s32 %s13, 1
        // Predicated region
        $region13: #{upsample_forward.1} parent=11 // pred_check
          %p170 = pneg %p106
        $region14: #{upsample_forward.1} parent=11 // pred_check_branch
          %172 = sbr.rel (%p170) target = $region16
        $region15: #{upsample_forward.1} parent=11 // pred_region
          _
        $region16: #{upsample_forward.1} parent=11 // pred_fallthru
          _
        // Predicated region
        $region17: #{upsample_forward.1} parent=11 // pred_check
          %p173 = pneg %p127
        $region18: #{upsample_forward.1} parent=11 // pred_check_branch
          %175 = sbr.rel (%p173) target = $region20
        $region19: #{upsample_forward.1} parent=11 // pred_region
          _
        $region20: #{upsample_forward.1} parent=11 // pred_fallthru
          _
      $region12: #{upsample_forward.1} parent=5 // pred_fallthru
        _
      %p176 = scmp.lt.s32.totalorder %s13, 4
      // Predicated region
      $region21: #{upsample_forward.1} parent=5 // pred_check
        %p177 = pneg %p176
      $region22: #{upsample_forward.1} parent=5 // pred_check_branch
        %179 = sbr.rel (%p177) target = $region24
      $region23: #{upsample_forward.1} parent=5 // pred_region
        // Predicated region
        $region25: #{upsample_forward.1} parent=23 // pred_check
          %p180 = pneg %p47
        $region26: #{upsample_forward.1} parent=23 // pred_check_branch
          %182 = sbr.rel (%p180) target = $region28
        $region27: #{upsample_forward.1} parent=23 // pred_region
          %s183 = smul.u32 8, %s21
          %s184 = ssub.s32 18, %s183
          %p185 = scmp.lt.s32.totalorder %s184, 8
          %s186 = scalar_select %p185, %s184, 8
          %s187 = smul.u32 64, %s186
          %s188 = smul.u32 %s187, 3
          %p189 = scmp.lt.s32.totalorder %s20, 1
          %s190 = scalar_select %p189, %s20, 1
          %p191 = scmp.lt.s32.totalorder %s183, 17
          %s192 = scalar_select %p191, %s183, 17
          %s193 = smul.addr %s192, 3
          %s194 = smul.addr %s190, 54
          %s195 = sadd.s32 %s193, %s194
          %s196 = smul.addr %s195, 4
          %s197 = scalar_lea.vmem %s0, %s196
          %s198 = smul.u32 8, %s21
          %s199 = ssub.s32 18, %s198
          %p200 = scmp.lt.s32.totalorder %s199, 8
          %s201 = scalar_select %p200, %s199, 8
          %s202 = smul.u32 64, %s201
          %s203 = smul.u32 %s202, 3
        $region28: #{upsample_forward.1} parent=23 // pred_fallthru
          _
        // Predicated region
        $region29: #{upsample_forward.1} parent=23 // pred_check
          %p204 = pneg %p79
        $region30: #{upsample_forward.1} parent=23 // pred_check_branch
          %206 = sbr.rel (%p204) target = $region32
        $region31: #{upsample_forward.1} parent=23 // pred_region
          %s207 = smul.u32 %s21, 4
          %s208 = sadd.s32 %s207, 4
          %s209 = smul.u32 2, %s208
          %p210 = scmp.lt.s32.totalorder %s20, 1
          %s211 = scalar_select %p210, %s20, 1
          %p212 = scmp.lt.s32.totalorder %s209, 17
          %s213 = scalar_select %p212, %s209, 17
          %s214 = smul.addr %s213, 3
          %s215 = smul.addr %s211, 54
          %s216 = sadd.s32 %s214, %s215
          %s217 = smul.addr %s216, 4
          %s218 = scalar_lea.vmem %s1, %s217
          %s219 = smul.u32 %s21, 4
          %s220 = sadd.s32 %s219, 4
          %s221 = smul.u32 2, %s220
        $region32: #{upsample_forward.1} parent=23 // pred_fallthru
          _
      $region24: #{upsample_forward.1} parent=5 // pred_fallthru
        _
      %p222 = scmp.le.s32.totalorder 1, %s13
      %p223 = scmp.lt.s32.totalorder %s13, 5
      %p224 = pnand %p222, %p223
      %p225 = pneg %p224
      // Predicated region
      $region33: #{upsample_forward.1} parent=5 // pred_check
        _
      $region34: #{upsample_forward.1} parent=5 // pred_check_branch
        %227 = sbr.rel (%p224) target = $region36
      $region35: #{upsample_forward.1} parent=5 // pred_region
        %s228 = ssub.s32 %s13, 1
        %s229 = smul.u32 8, %s23
        %s230 = ssub.s32 18, %s229
        %p231 = scmp.lt.s32.totalorder %s230, 8
        %s232 = scalar_select %p231, %s230, 8
        %s233 = smul.u32 64, %s232
        %s234 = smul.u32 %s233, 3
        %p235 = scmp.lt.s32.totalorder %s22, 1
        %s236 = scalar_select %p235, %s22, 1
        %p237 = scmp.lt.s32.totalorder %s229, 17
        %s238 = scalar_select %p237, %s229, 17
        %s239 = smul.addr %s238, 3
        %s240 = smul.addr %s236, 54
        %s241 = sadd.s32 %s239, %s240
        %s242 = smul.addr %s241, 4
        %s243 = scalar_lea.vmem %s0, %s242
        %p244 = pneg %p53
        %p245 = pneg %p50
        %s246 = smul.u32 %s23, 4
        %s247 = sadd.s32 %s246, 4
        %s248 = smul.u32 2, %s247
        %p249 = scmp.lt.s32.totalorder %s22, 1
        %s250 = scalar_select %p249, %s22, 1
        %p251 = scmp.lt.s32.totalorder %s248, 17
        %s252 = scalar_select %p251, %s248, 17
        %s253 = smul.addr %s252, 3
        %s254 = smul.addr %s250, 54
        %s255 = sadd.s32 %s253, %s254
        %s256 = smul.addr %s255, 4
        %s257 = scalar_lea.vmem %s1, %s256
        %p258 = pneg %p85
        %p259 = pneg %p82
        %p260 = pneg %p106
        %p261 = pneg %p103
        %p262 = pneg %p127
        %p263 = pneg %p124
        %p264 = pneg %p155
        %p265 = pneg %p152
        %s266 = sand.u32 %s142, 1
        %s267 = scalar_lea.sflag [#allocation3], %s266
        %s268 = sand.u32 %s142, 1
        %s269 = smul.addr %s268, 512
        %s270 = scalar_lea.vmem [#allocation2], %s269
        %s271 = smul.u32 8, %s23
        %s272 = ssub.s32 18, %s271
        %p273 = scmp.lt.s32.totalorder %s272, 8
        %s274 = scalar_select %p273, %s272, 8
        %s275 = smul.u32 64, %s274
        %s276 = smul.u32 %s275, 3
        %p277 = scmp.lt.s32.totalorder %s22, 1
        %s278 = scalar_select %p277, %s22, 1
        %p279 = scmp.lt.s32.totalorder %s271, 17
        %s280 = scalar_select %p279, %s271, 17
        %s281 = smul.addr %s280, 3
        %s282 = smul.addr %s278, 54
        %s283 = sadd.s32 %s281, %s282
        %s284 = smul.addr %s283, 4
        %s285 = scalar_lea.vmem %s0, %s284
        %s286 = smul.u32 8, %s23
        %s287 = ssub.s32 18, %s286
        %p288 = scmp.lt.s32.totalorder %s287, 8
        %s289 = scalar_select %p288, %s287, 8
        %s290 = smul.u32 64, %s289
        %s291 = smul.u32 %s290, 3
        %s292 = smul.u32 %s23, 4
        %s293 = sadd.s32 %s292, 4
        %s294 = smul.u32 2, %s293
        %p295 = scmp.lt.s32.totalorder %s22, 1
        %s296 = scalar_select %p295, %s22, 1
        %p297 = scmp.lt.s32.totalorder %s294, 17
        %s298 = scalar_select %p297, %s294, 17
        %s299 = smul.addr %s298, 3
        %s300 = smul.addr %s296, 54
        %s301 = sadd.s32 %s299, %s300
        %s302 = smul.addr %s301, 4
        %s303 = scalar_lea.vmem %s1, %s302
        %s304 = smul.u32 %s23, 4
        %s305 = sadd.s32 %s304, 4
        %s306 = smul.u32 2, %s305
        %s307 = smul.u32 16, %s23
        %v309 = vld [vmem:[%s285] sm:$0xf]
        %v310 = vld [vmem:[%s285 + $0x4] sm:$0xf]
        %v311 = vld [vmem:[%s285 + $0x8] sm:$0x1]
        %v312 = vld [vmem:[%s285 + $0xc] sm:$0xf]
        %v313 = vld [vmem:[%s285 + $0x10] sm:$0xf]
        %v314 = vld [vmem:[%s285 + $0x14] sm:$0x1]
        %v315 = vld [vmem:[%s285 + $0x18] sm:$0xf]
        %v316 = vld [vmem:[%s285 + $0x1c] sm:$0xf]
        %v317 = vld [vmem:[%s285 + $0x20] sm:$0x1]
        %v318 = vld [vmem:[%s285 + $0x24] sm:$0xf]
        %v319 = vld [vmem:[%s285 + $0x28] sm:$0xf]
        %v320 = vld [vmem:[%s285 + $0x2c] sm:$0x1]
        %v321 = vld [vmem:[%s285 + $0x30] sm:$0xf]
        %v322 = vld [vmem:[%s285 + $0x34] sm:$0xf]
        %v323 = vld [vmem:[%s285 + $0x38] sm:$0x1]
        %v324 = vld [vmem:[%s285 + $0x3c] sm:$0xf]
        %v325 = vld [vmem:[%s285 + $0x40] sm:$0xf]
        %v326 = vld [vmem:[%s285 + $0x44] sm:$0x1]
        %v327 = vld [vmem:[%s285 + $0x48] sm:$0xf]
        %v328 = vld [vmem:[%s285 + $0x4c] sm:$0xf]
        %v329 = vld [vmem:[%s285 + $0x50] sm:$0x1]
        %v330 = vld [vmem:[%s285 + $0x54] sm:$0xf]
        %v331 = vld [vmem:[%s285 + $0x58] sm:$0xf]
        %v332 = vld [vmem:[%s285 + $0x5c] sm:$0x1]
        %v333 = vld [vmem:[%s303] sm:$0xf]
        %v334 = vld [vmem:[%s303 + $0x4] sm:$0xf]
        %v335 = vld [vmem:[%s303 + $0x8] sm:$0x1]
        %v336 = vld [vmem:[%s303 + $0xc] sm:$0xf]
        %v337 = vld [vmem:[%s303 + $0x10] sm:$0xf]
        %v338 = vld [vmem:[%s303 + $0x14] sm:$0x1]
        %v339 = vld [vmem:[%s3] sm:$0x1]
        %vm340 = vsmask.f32 3328
        %vm341 = vsmask.f32 7440
        %vm342 = vmor %vm340, %vm341
        %v344 = vshrl.u32 %v309, 16
        %v346 = vrot.slane %v344, 4
        %v347 = vshll.u32 %v309, 16
        %v349 = vrot.slane %v347, 5
        %v350 = vor.u32 %v346, %v349
        %v351 = vrot.slane %v350, 4
        %v353 = vshll.u32 %v310, 16
        %v355 = vrot.slane %v353, 5
        %v356 = vsel %vm342, %v351, %v355
        %v357 = vshrl.u32 %v310, 16
        %v359 = vrot.slane %v357, 4
        %v360 = vor.u32 %v359, %v355
        %v361 = vrot.slane %v360, 4
        %v363 = vshll.u32 %v311, 16
        %v365 = vrot.slane %v363, 5
        %v366 = vsel %vm342, %v361, %v365
        %v368 = vshrl.u32 %v312, 16
        %v370 = vrot.slane %v368, 4
        %v371 = vshll.u32 %v312, 16
        %v373 = vrot.slane %v371, 5
        %v374 = vor.u32 %v370, %v373
        %v375 = vrot.slane %v374, 4
        %v377 = vshll.u32 %v313, 16
        %v379 = vrot.slane %v377, 5
        %v380 = vsel %vm342, %v375, %v379
        %v381 = vshrl.u32 %v313, 16
        %v383 = vrot.slane %v381, 4
        %v384 = vor.u32 %v383, %v379
        %v385 = vrot.slane %v384, 4
        %v387 = vshll.u32 %v314, 16
        %v389 = vrot.slane %v387, 5
        %v390 = vsel %vm342, %v385, %v389
        %v392 = vshrl.u32 %v315, 16
        %v394 = vrot.slane %v392, 4
        %v395 = vshll.u32 %v315, 16
        %v397 = vrot.slane %v395, 5
        %v398 = vor.u32 %v394, %v397
        %v399 = vrot.slane %v398, 4
        %v401 = vshll.u32 %v316, 16
        %v403 = vrot.slane %v401, 5
        %v404 = vsel %vm342, %v399, %v403
        %v405 = vshrl.u32 %v316, 16
        %v407 = vrot.slane %v405, 4
        %v408 = vor.u32 %v407, %v403
        %v409 = vrot.slane %v408, 4
        %v411 = vshll.u32 %v317, 16
        %v413 = vrot.slane %v411, 5
        %v414 = vsel %vm342, %v409, %v413
        %v416 = vshrl.u32 %v318, 16
        %v418 = vrot.slane %v416, 4
        %v419 = vshll.u32 %v318, 16
        %v421 = vrot.slane %v419, 5
        %v422 = vor.u32 %v418, %v421
        %v423 = vrot.slane %v422, 4
        %v425 = vshll.u32 %v319, 16
        %v427 = vrot.slane %v425, 5
        %v428 = vsel %vm342, %v423, %v427
        %v429 = vshrl.u32 %v319, 16
        %v431 = vrot.slane %v429, 4
        %v432 = vor.u32 %v431, %v427
        %v433 = vrot.slane %v432, 4
        %v435 = vshll.u32 %v320, 16
        %v437 = vrot.slane %v435, 5
        %v438 = vsel %vm342, %v433, %v437
        %v440 = vshrl.u32 %v321, 16
        %v442 = vrot.slane %v440, 4
        %v443 = vshll.u32 %v321, 16
        %v445 = vrot.slane %v443, 5
        %v446 = vor.u32 %v442, %v445
        %v447 = vrot.slane %v446, 4
        %v449 = vshll.u32 %v322, 16
        %v451 = vrot.slane %v449, 5
        %v452 = vsel %vm342, %v447, %v451
        %v453 = vshrl.u32 %v322, 16
        %v455 = vrot.slane %v453, 4
        %v456 = vor.u32 %v455, %v451
        %v457 = vrot.slane %v456, 4
        %v459 = vshll.u32 %v323, 16
        %v461 = vrot.slane %v459, 5
        %v462 = vsel %vm342, %v457, %v461
        %v464 = vshrl.u32 %v324, 16
        %v466 = vrot.slane %v464, 4
        %v467 = vshll.u32 %v324, 16
        %v469 = vrot.slane %v467, 5
        %v470 = vor.u32 %v466, %v469
        %v471 = vrot.slane %v470, 4
        %v473 = vshll.u32 %v325, 16
        %v475 = vrot.slane %v473, 5
        %v476 = vsel %vm342, %v471, %v475
        %v477 = vshrl.u32 %v325, 16
        %v479 = vrot.slane %v477, 4
        %v480 = vor.u32 %v479, %v475
        %v481 = vrot.slane %v480, 4
        %v483 = vshll.u32 %v326, 16
        %v485 = vrot.slane %v483, 5
        %v486 = vsel %vm342, %v481, %v485
        %v488 = vshrl.u32 %v327, 16
        %v490 = vrot.slane %v488, 4
        %v491 = vshll.u32 %v327, 16
        %v493 = vrot.slane %v491, 5
        %v494 = vor.u32 %v490, %v493
        %v495 = vrot.slane %v494, 4
        %v497 = vshll.u32 %v328, 16
        %v499 = vrot.slane %v497, 5
        %v500 = vsel %vm342, %v495, %v499
        %v501 = vshrl.u32 %v328, 16
        %v503 = vrot.slane %v501, 4
        %v504 = vor.u32 %v503, %v499
        %v505 = vrot.slane %v504, 4
        %v507 = vshll.u32 %v329, 16
        %v509 = vrot.slane %v507, 5
        %v510 = vsel %vm342, %v505, %v509
        %v512 = vshrl.u32 %v330, 16
        %v514 = vrot.slane %v512, 4
        %v515 = vshll.u32 %v330, 16
        %v517 = vrot.slane %v515, 5
        %v518 = vor.u32 %v514, %v517
        %v519 = vrot.slane %v518, 4
        %v521 = vshll.u32 %v331, 16
        %v523 = vrot.slane %v521, 5
        %v524 = vsel %vm342, %v519, %v523
        %v525 = vshrl.u32 %v331, 16
        %v527 = vrot.slane %v525, 4
        %v528 = vor.u32 %v527, %v523
        %v529 = vrot.slane %v528, 4
        %v531 = vshll.u32 %v332, 16
        %v533 = vrot.slane %v531, 5
        %v534 = vsel %vm342, %v529, %v533
        %v536 = vshrl.u32 %v333, 16
        %v538 = vrot.slane %v536, 4
        %v539 = vshll.u32 %v333, 16
        %v541 = vrot.slane %v539, 5
        %v542 = vor.u32 %v538, %v541
        %v543 = vrot.slane %v542, 4
        %v545 = vshll.u32 %v334, 16
        %v547 = vrot.slane %v545, 5
        %v548 = vsel %vm342, %v543, %v547
        %v549 = vshrl.u32 %v334, 16
        %v551 = vrot.slane %v549, 4
        %v552 = vor.u32 %v551, %v547
        %v553 = vrot.slane %v552, 4
        %v555 = vshll.u32 %v335, 16
        %v557 = vrot.slane %v555, 5
        %v558 = vsel %vm342, %v553, %v557
        %v575 = vunpack.c.l.b16 %v309
        %v576 = vunpack.c.l.b16 %v310
        %v577 = vunpack.c.l.b16 %v312
        %v578 = vunpack.c.l.b16 %v313
        %v579 = vunpack.c.l.b16 %v315
        %v580 = vunpack.c.l.b16 %v316
        %v581 = vunpack.c.l.b16 %v318
        %v582 = vunpack.c.l.b16 %v319
        %v583 = vunpack.c.l.b16 %v321
        %v584 = vunpack.c.l.b16 %v322
        %v585 = vunpack.c.l.b16 %v324
        %v586 = vunpack.c.l.b16 %v325
        %v587 = vunpack.c.l.b16 %v327
        %v588 = vunpack.c.l.b16 %v328
        %v589 = vunpack.c.l.b16 %v330
        %v590 = vunpack.c.l.b16 %v331
        %v591 = vpack.c.b16 %v576, %v575
        %v592 = vpack.c.b16 %v578, %v577
        %v593 = vpack.c.b16 %v580, %v579
        %v594 = vpack.c.b16 %v582, %v581
        %v595 = vpack.c.b16 %v584, %v583
        %v596 = vpack.c.b16 %v586, %v585
        %v597 = vpack.c.b16 %v588, %v587
        %v598 = vpack.c.b16 %v590, %v589
        %v607 = vunpack.c.l.b16 %v356
        %v608 = vunpack.c.l.b16 %v366
        %v609 = vunpack.c.l.b16 %v380
        %v610 = vunpack.c.l.b16 %v390
        %v611 = vunpack.c.l.b16 %v404
        %v612 = vunpack.c.l.b16 %v414
        %v613 = vunpack.c.l.b16 %v428
        %v614 = vunpack.c.l.b16 %v438
        %v615 = vunpack.c.l.b16 %v452
        %v616 = vunpack.c.l.b16 %v462
        %v617 = vunpack.c.l.b16 %v476
        %v618 = vunpack.c.l.b16 %v486
        %v619 = vunpack.c.l.b16 %v500
        %v620 = vunpack.c.l.b16 %v510
        %v621 = vunpack.c.l.b16 %v524
        %v622 = vunpack.c.l.b16 %v534
        %v623 = vpack.c.b16 %v608, %v607
        %v624 = vpack.c.b16 %v610, %v609
        %v625 = vpack.c.b16 %v612, %v611
        %v626 = vpack.c.b16 %v614, %v613
        %v627 = vpack.c.b16 %v616, %v615
        %v628 = vpack.c.b16 %v618, %v617
        %v629 = vpack.c.b16 %v620, %v619
        %v630 = vpack.c.b16 %v622, %v621
        %v641 = vunpack.c.l.b16 %v333
        %v642 = vunpack.c.l.b16 %v334
        %v643 = vpack.c.b16 %v642, %v641
        %v645 = vunpack.c.l.b16 %v548
        %v646 = vunpack.c.l.b16 %v558
        %v647 = vpack.c.b16 %v646, %v645
        %v649 = vld [vmem:[%s2] sm:$0xf]
        %v650 = vld [vmem:[%s2 + $0x4] sm:$0xf]
        %v651 = vld [vmem:[%s2 + $0x8] sm:$0xf]
        %v652 = vld [vmem:[%s2 + $0xc] sm:$0xf]
        %v653 = vld [vmem:[%s2 + $0x10] sm:$0xf]
        %v654 = vld [vmem:[%s2 + $0x14] sm:$0xf]
        %v655 = vld [vmem:[%s2 + $0x18] sm:$0xf]
        %v656 = vld [vmem:[%s2 + $0x1c] sm:$0xf]
        %v657 = vld [vmem:[%s2 + $0x20] sm:$0xf]
        %v658 = vld [vmem:[%s2 + $0x24] sm:$0xf]
        %v659 = vld [vmem:[%s2 + $0x28] sm:$0xf]
        %v660 = vld [vmem:[%s2 + $0x2c] sm:$0xf]
        %v661 = vld [vmem:[%s2 + $0x30] sm:$0xf]
        %v662 = vld [vmem:[%s2 + $0x34] sm:$0xf]
        %v663 = vld [vmem:[%s2 + $0x38] sm:$0xf]
        %v664 = vld [vmem:[%s2 + $0x3c] sm:$0xf]
        %v665 = vld [vmem:[%s2 + $0x40] sm:$0xf]
        %v666 = vld [vmem:[%s2 + $0x44] sm:$0xf]
        %v667 = vld [vmem:[%s2 + $0x48] sm:$0xf]
        %v668 = vld [vmem:[%s2 + $0x4c] sm:$0xf]
        %v669 = vld [vmem:[%s2 + $0x50] sm:$0xf]
        %v670 = vld [vmem:[%s2 + $0x54] sm:$0xf]
        %v671 = vld [vmem:[%s2 + $0x58] sm:$0xf]
        %v672 = vld [vmem:[%s2 + $0x5c] sm:$0xf]
        %v673 = vld [vmem:[%s2 + $0x60] sm:$0xf]
        %v674 = vld [vmem:[%s2 + $0x64] sm:$0xf]
        %v675 = vld [vmem:[%s2 + $0x68] sm:$0xf]
        %v676 = vld [vmem:[%s2 + $0x6c] sm:$0xf]
        %v677 = vld [vmem:[%s2 + $0x70] sm:$0xf]
        %v678 = vld [vmem:[%s2 + $0x74] sm:$0xf]
        %v679 = vld [vmem:[%s2 + $0x78] sm:$0xf]
        %v680 = vld [vmem:[%s2 + $0x7c] sm:$0xf]
        %v681 = vld [vmem:[%s2 + $0x80] sm:$0xf]
        %v682 = vld [vmem:[%s2 + $0x84] sm:$0xf]
        %v683 = vld [vmem:[%s2 + $0x88] sm:$0xf]
        %v684 = vld [vmem:[%s2 + $0x8c] sm:$0xf]
        %v685 = vld [vmem:[%s2 + $0x90] sm:$0xf]
        %v686 = vld [vmem:[%s2 + $0x94] sm:$0xf]
        %v687 = vld [vmem:[%s2 + $0x98] sm:$0xf]
        %v688 = vld [vmem:[%s2 + $0x9c] sm:$0xf]
        %v689 = vld [vmem:[%s2 + $0xa0] sm:$0xf]
        %v690 = vld [vmem:[%s2 + $0xa4] sm:$0xf]
        %v691 = vld [vmem:[%s2 + $0xa8] sm:$0xf]
        %v692 = vld [vmem:[%s2 + $0xac] sm:$0xf]
        %v693 = vld [vmem:[%s2 + $0xb0] sm:$0xf]
        %v694 = vld [vmem:[%s2 + $0xb4] sm:$0xf]
        %v695 = vld [vmem:[%s2 + $0xb8] sm:$0xf]
        %v696 = vld [vmem:[%s2 + $0xbc] sm:$0xf]
        %v697 = vld [vmem:[%s2 + $0xc0] sm:$0xf]
        %v698 = vld [vmem:[%s2 + $0xc4] sm:$0xf]
        %v699 = vld [vmem:[%s2 + $0xc8] sm:$0xf]
        %v700 = vld [vmem:[%s2 + $0xcc] sm:$0xf]
        %v701 = vld [vmem:[%s2 + $0xd0] sm:$0xf]
        %v702 = vld [vmem:[%s2 + $0xd4] sm:$0xf]
        %v703 = vld [vmem:[%s2 + $0xd8] sm:$0xf]
        %v704 = vld [vmem:[%s2 + $0xdc] sm:$0xf]
        %v705 = vld [vmem:[%s2 + $0xe0] sm:$0xf]
        %v706 = vld [vmem:[%s2 + $0xe4] sm:$0xf]
        %v707 = vld [vmem:[%s2 + $0xe8] sm:$0xf]
        %v708 = vld [vmem:[%s2 + $0xec] sm:$0xf]
        %v709 = vld [vmem:[%s2 + $0xf0] sm:$0xf]
        %v710 = vld [vmem:[%s2 + $0xf4] sm:$0xf]
        %v711 = vld [vmem:[%s2 + $0xf8] sm:$0xf]
        %v712 = vld [vmem:[%s2 + $0xfc] sm:$0xf]
        %v714 = vlaneseq
        %v715 = vshrl.u32 %v714, 7
        %v716 = vsub.s32 0, %v715
        %v717 = vrot.slane %v339, %v716
        %v783 = vunpack.c.l.b16 %v649
        %v784 = vunpack.c.l.b16 %v650
        %v785 = vunpack.c.l.b16 %v651
        %v786 = vunpack.c.l.b16 %v652
        %v787 = vunpack.c.l.b16 %v653
        %v788 = vunpack.c.l.b16 %v654
        %v789 = vunpack.c.l.b16 %v655
        %v790 = vunpack.c.l.b16 %v656
        %v791 = vunpack.c.l.b16 %v657
        %v792 = vunpack.c.l.b16 %v658
        %v793 = vunpack.c.l.b16 %v659
        %v794 = vunpack.c.l.b16 %v660
        %v795 = vunpack.c.l.b16 %v661
        %v796 = vunpack.c.l.b16 %v662
        %v797 = vunpack.c.l.b16 %v663
        %v798 = vunpack.c.l.b16 %v664
        %v799 = vunpack.c.l.b16 %v665
        %v800 = vunpack.c.l.b16 %v666
        %v801 = vunpack.c.l.b16 %v667
        %v802 = vunpack.c.l.b16 %v668
        %v803 = vunpack.c.l.b16 %v669
        %v804 = vunpack.c.l.b16 %v670
        %v805 = vunpack.c.l.b16 %v671
        %v806 = vunpack.c.l.b16 %v672
        %v807 = vunpack.c.l.b16 %v673
        %v808 = vunpack.c.l.b16 %v674
        %v809 = vunpack.c.l.b16 %v675
        %v810 = vunpack.c.l.b16 %v676
        %v811 = vunpack.c.l.b16 %v677
        %v812 = vunpack.c.l.b16 %v678
        %v813 = vunpack.c.l.b16 %v679
        %v814 = vunpack.c.l.b16 %v680
        %v815 = vunpack.c.l.b16 %v681
        %v816 = vunpack.c.l.b16 %v682
        %v817 = vunpack.c.l.b16 %v683
        %v818 = vunpack.c.l.b16 %v684
        %v819 = vunpack.c.l.b16 %v685
        %v820 = vunpack.c.l.b16 %v686
        %v821 = vunpack.c.l.b16 %v687
        %v822 = vunpack.c.l.b16 %v688
        %v823 = vunpack.c.l.b16 %v689
        %v824 = vunpack.c.l.b16 %v690
        %v825 = vunpack.c.l.b16 %v691
        %v826 = vunpack.c.l.b16 %v692
        %v827 = vunpack.c.l.b16 %v693
        %v828 = vunpack.c.l.b16 %v694
        %v829 = vunpack.c.l.b16 %v695
        %v830 = vunpack.c.l.b16 %v696
        %v831 = vunpack.c.l.b16 %v697
        %v832 = vunpack.c.l.b16 %v698
        %v833 = vunpack.c.l.b16 %v699
        %v834 = vunpack.c.l.b16 %v700
        %v835 = vunpack.c.l.b16 %v701
        %v836 = vunpack.c.l.b16 %v702
        %v837 = vunpack.c.l.b16 %v703
        %v838 = vunpack.c.l.b16 %v704
        %v839 = vunpack.c.l.b16 %v705
        %v840 = vunpack.c.l.b16 %v706
        %v841 = vunpack.c.l.b16 %v707
        %v842 = vunpack.c.l.b16 %v708
        %v843 = vunpack.c.l.b16 %v709
        %v844 = vunpack.c.l.b16 %v710
        %v845 = vunpack.c.l.b16 %v711
        %v846 = vunpack.c.l.b16 %v712
        %v847 = vpack.c.b16 %v784, %v783
        %v848 = vpack.c.b16 %v786, %v785
        %v849 = vpack.c.b16 %v788, %v787
        %v850 = vpack.c.b16 %v790, %v789
        %v851 = vpack.c.b16 %v792, %v791
        %v852 = vpack.c.b16 %v794, %v793
        %v853 = vpack.c.b16 %v796, %v795
        %v854 = vpack.c.b16 %v798, %v797
        %v855 = vpack.c.b16 %v800, %v799
        %v856 = vpack.c.b16 %v802, %v801
        %v857 = vpack.c.b16 %v804, %v803
        %v858 = vpack.c.b16 %v806, %v805
        %v859 = vpack.c.b16 %v808, %v807
        %v860 = vpack.c.b16 %v810, %v809
        %v861 = vpack.c.b16 %v812, %v811
        %v862 = vpack.c.b16 %v814, %v813
        %v863 = vpack.c.b16 %v816, %v815
        %v864 = vpack.c.b16 %v818, %v817
        %v865 = vpack.c.b16 %v820, %v819
        %v866 = vpack.c.b16 %v822, %v821
        %v867 = vpack.c.b16 %v824, %v823
        %v868 = vpack.c.b16 %v826, %v825
        %v869 = vpack.c.b16 %v828, %v827
        %v870 = vpack.c.b16 %v830, %v829
        %v871 = vpack.c.b16 %v832, %v831
        %v872 = vpack.c.b16 %v834, %v833
        %v873 = vpack.c.b16 %v836, %v835
        %v874 = vpack.c.b16 %v838, %v837
        %v875 = vpack.c.b16 %v840, %v839
        %v876 = vpack.c.b16 %v842, %v841
        %v877 = vpack.c.b16 %v844, %v843
        %v878 = vpack.c.b16 %v846, %v845
        %911 = vmatprep.subr.bf16.mxu0 0
        %912 = vmatpush1.bf16.msra.mxu0 %v847
        %913 = vmatprep.subr.bf16.mxu0 0
        %914 = vmatpush1.bf16.msra.mxu0 %v848
        %915 = vmatprep.subr.bf16.mxu0 0
        %916 = vmatpush1.bf16.msra.mxu0 %v849
        %917 = vmatprep.subr.bf16.mxu0 0
        %918 = vmatpush1.bf16.msra.mxu0 %v850
        %919 = vmatprep.subr.bf16.mxu0 0
        %920 = vmatpush1.bf16.msra.mxu0 %v851
        %921 = vmatprep.subr.bf16.mxu0 0
        %922 = vmatpush1.bf16.msra.mxu0 %v852
        %923 = vmatprep.subr.bf16.mxu0 0
        %924 = vmatpush1.bf16.msra.mxu0 %v853
        %925 = vmatprep.subr.bf16.mxu0 0
        %926 = vmatpush1.bf16.msra.mxu0 %v854
        %927 = vmatprep.subr.bf16.mxu0 0
        %928 = vmatpush1.bf16.msra.mxu0 %v855
        %929 = vmatprep.subr.bf16.mxu0 0
        %930 = vmatpush1.bf16.msra.mxu0 %v856
        %931 = vmatprep.subr.bf16.mxu0 0
        %932 = vmatpush1.bf16.msra.mxu0 %v857
        %933 = vmatprep.subr.bf16.mxu0 0
        %934 = vmatpush1.bf16.msra.mxu0 %v858
        %935 = vmatprep.subr.bf16.mxu0 0
        %936 = vmatpush1.bf16.msra.mxu0 %v859
        %937 = vmatprep.subr.bf16.mxu0 0
        %938 = vmatpush1.bf16.msra.mxu0 %v860
        %939 = vmatprep.subr.bf16.mxu0 0
        %940 = vmatpush1.bf16.msra.mxu0 %v861
        %941 = vmatprep.subr.bf16.mxu0 0
        %942 = vmatpush1.bf16.msra.mxu0 %v862
        %943 = vmatprep.mubr.bf16.mxu0 %v623
        %944 = vmatmul.mubr.bf16.gmra.mrb[0].mxu0 %v591
        %v945 = vpop.f32.mrb[0].mxu0
        %v946 = vadd.f32 %v717, %v945
        %v947 = vpop.f32.mrb[0].mxu0
        %v948 = vpop.f32.mrb[0].mxu0
        %v949 = vadd.f32 %v717, %v948
        %v950 = vpop.f32.mrb[0].mxu0
        %951 = vmatprep.mubr.bf16.mxu0 %v624
        %952 = vmatmul.mubr.bf16.gmra.mrb[0].mxu0 %v592
        %v953 = vpop.f32.mrb[0].mxu0
        %v954 = vadd.f32 %v717, %v953
        %v955 = vpop.f32.mrb[0].mxu0
        %v956 = vpop.f32.mrb[0].mxu0
        %v957 = vadd.f32 %v717, %v956
        %v958 = vpop.f32.mrb[0].mxu0
        %959 = vmatprep.mubr.bf16.mxu0 %v625
        %960 = vmatmul.mubr.bf16.gmra.mrb[0].mxu0 %v593
        %v961 = vpop.f32.mrb[0].mxu0
        %v962 = vadd.f32 %v717, %v961
        %v963 = vpop.f32.mrb[0].mxu0
        %v964 = vpop.f32.mrb[0].mxu0
        %v965 = vadd.f32 %v717, %v964
        %v966 = vpop.f32.mrb[0].mxu0
        %967 = vmatprep.mubr.bf16.mxu0 %v626
        %968 = vmatmul.mubr.bf16.gmra.mrb[0].mxu0 %v594
        %v969 = vpop.f32.mrb[0].mxu0
        %v970 = vadd.f32 %v717, %v969
        %v971 = vpop.f32.mrb[0].mxu0
        %v972 = vpop.f32.mrb[0].mxu0
        %v973 = vadd.f32 %v717, %v972
        %v974 = vpop.f32.mrb[0].mxu0
        %975 = vmatprep.mubr.bf16.mxu0 %v627
        %976 = vmatmul.mubr.bf16.gmra.mrb[0].mxu0 %v595
        %v977 = vpop.f32.mrb[0].mxu0
        %v978 = vadd.f32 %v717, %v977
        %v979 = vpop.f32.mrb[0].mxu0
        %v980 = vpop.f32.mrb[0].mxu0
        %v981 = vadd.f32 %v717, %v980
        %v982 = vpop.f32.mrb[0].mxu0
        %983 = vmatprep.mubr.bf16.mxu0 %v628
        %984 = vmatmul.mubr.bf16.gmra.mrb[0].mxu0 %v596
        %v985 = vpop.f32.mrb[0].mxu0
        %v986 = vadd.f32 %v717, %v985
        %v987 = vpop.f32.mrb[0].mxu0
        %v988 = vpop.f32.mrb[0].mxu0
        %v989 = vadd.f32 %v717, %v988
        %v990 = vpop.f32.mrb[0].mxu0
        %991 = vmatprep.mubr.bf16.mxu0 %v629
        %992 = vmatmul.mubr.bf16.gmra.mrb[0].mxu0 %v597
        %v993 = vpop.f32.mrb[0].mxu0
        %v994 = vadd.f32 %v717, %v993
        %v995 = vpop.f32.mrb[0].mxu0
        %v996 = vpop.f32.mrb[0].mxu0
        %v997 = vadd.f32 %v717, %v996
        %v998 = vpop.f32.mrb[0].mxu0
        %999 = vmatprep.mubr.bf16.mxu0 %v630
        %1000 = vmatmul.mubr.bf16.gmra.mrb[0].mxu0 %v598
        %v1001 = vpop.f32.mrb[0].mxu0
        %v1002 = vadd.f32 %v717, %v1001
        %v1003 = vpop.f32.mrb[0].mxu0
        %v1004 = vpop.f32.mrb[0].mxu0
        %v1005 = vadd.f32 %v717, %v1004
        %v1006 = vpop.f32.mrb[0].mxu0
        %1007 = vdwg.mxu0
        %1008 = vmatprep.subr.bf16.mxu0 0
        %1009 = vmatpush1.bf16.msra.mxu0 %v863
        %1010 = vmatprep.subr.bf16.mxu0 0
        %1011 = vmatpush1.bf16.msra.mxu0 %v864
        %1012 = vmatprep.subr.bf16.mxu0 0
        %1013 = vmatpush1.bf16.msra.mxu0 %v865
        %1014 = vmatprep.subr.bf16.mxu0 0
        %1015 = vmatpush1.bf16.msra.mxu0 %v866
        %1016 = vmatprep.subr.bf16.mxu0 0
        %1017 = vmatpush1.bf16.msra.mxu0 %v867
        %1018 = vmatprep.subr.bf16.mxu0 0
        %1019 = vmatpush1.bf16.msra.mxu0 %v868
        %1020 = vmatprep.subr.bf16.mxu0 0
        %1021 = vmatpush1.bf16.msra.mxu0 %v869
        %1022 = vmatprep.subr.bf16.mxu0 0
        %1023 = vmatpush1.bf16.msra.mxu0 %v870
        %1024 = vmatprep.subr.bf16.mxu0 0
        %1025 = vmatpush1.bf16.msra.mxu0 %v871
        %1026 = vmatprep.subr.bf16.mxu0 0
        %1027 = vmatpush1.bf16.msra.mxu0 %v872
        %1028 = vmatprep.subr.bf16.mxu0 0
        %1029 = vmatpush1.bf16.msra.mxu0 %v873
        %1030 = vmatprep.subr.bf16.mxu0 0
        %1031 = vmatpush1.bf16.msra.mxu0 %v874
        %1032 = vmatprep.subr.bf16.mxu0 0
        %1033 = vmatpush1.bf16.msra.mxu0 %v875
        %1034 = vmatprep.subr.bf16.mxu0 0
        %1035 = vmatpush1.bf16.msra.mxu0 %v876
        %1036 = vmatprep.subr.bf16.mxu0 0
        %1037 = vmatpush1.bf16.msra.mxu0 %v877
        %1038 = vmatprep.subr.bf16.mxu0 0
        %1039 = vmatpush1.bf16.msra.mxu0 %v878
        %1040 = vmatprep.mubr.bf16.mxu0 %v624
        %1041 = vmatmul.mubr.bf16.gmra.mrb[0].mxu0 %v592
        %v1042 = vpop.f32.mrb[0].mxu0
        %v1043 = vadd.f32 %v946, %v1042
        %v1044 = vpop.f32.mrb[0].mxu0
        %v1045 = vpop.f32.mrb[0].mxu0
        %v1046 = vadd.f32 %v949, %v1045
        %v1047 = vpop.f32.mrb[0].mxu0
        %1048 = vmatprep.mubr.bf16.mxu0 %v625
        %1049 = vmatmul.mubr.bf16.gmra.mrb[0].mxu0 %v593
        %v1050 = vpop.f32.mrb[0].mxu0
        %v1051 = vadd.f32 %v954, %v1050
        %v1052 = vpop.f32.mrb[0].mxu0
        %v1053 = vpop.f32.mrb[0].mxu0
        %v1054 = vadd.f32 %v957, %v1053
        %v1055 = vpop.f32.mrb[0].mxu0
        %1056 = vmatprep.mubr.bf16.mxu0 %v626
        %1057 = vmatmul.mubr.bf16.gmra.mrb[0].mxu0 %v594
        %v1058 = vpop.f32.mrb[0].mxu0
        %v1059 = vadd.f32 %v962, %v1058
        %v1060 = vpop.f32.mrb[0].mxu0
        %v1061 = vpop.f32.mrb[0].mxu0
        %v1062 = vadd.f32 %v965, %v1061
        %v1063 = vpop.f32.mrb[0].mxu0
        %1064 = vmatprep.mubr.bf16.mxu0 %v627
        %1065 = vmatmul.mubr.bf16.gmra.mrb[0].mxu0 %v595
        %v1066 = vpop.f32.mrb[0].mxu0
        %v1067 = vadd.f32 %v970, %v1066
        %v1068 = vpop.f32.mrb[0].mxu0
        %v1069 = vpop.f32.mrb[0].mxu0
        %v1070 = vadd.f32 %v973, %v1069
        %v1071 = vpop.f32.mrb[0].mxu0
        %1072 = vmatprep.mubr.bf16.mxu0 %v628
        %1073 = vmatmul.mubr.bf16.gmra.mrb[0].mxu0 %v596
        %v1074 = vpop.f32.mrb[0].mxu0
        %v1075 = vadd.f32 %v978, %v1074
        %v1076 = vpop.f32.mrb[0].mxu0
        %v1077 = vpop.f32.mrb[0].mxu0
        %v1078 = vadd.f32 %v981, %v1077
        %v1079 = vpop.f32.mrb[0].mxu0
        %1080 = vmatprep.mubr.bf16.mxu0 %v629
        %1081 = vmatmul.mubr.bf16.gmra.mrb[0].mxu0 %v597
        %v1082 = vpop.f32.mrb[0].mxu0
        %v1083 = vadd.f32 %v986, %v1082
        %v1084 = vpop.f32.mrb[0].mxu0
        %v1085 = vpop.f32.mrb[0].mxu0
        %v1086 = vadd.f32 %v989, %v1085
        %v1087 = vpop.f32.mrb[0].mxu0
        %1088 = vmatprep.mubr.bf16.mxu0 %v630
        %1089 = vmatmul.mubr.bf16.gmra.mrb[0].mxu0 %v598
        %v1090 = vpop.f32.mrb[0].mxu0
        %v1091 = vadd.f32 %v994, %v1090
        %v1092 = vpop.f32.mrb[0].mxu0
        %v1093 = vpop.f32.mrb[0].mxu0
        %v1094 = vadd.f32 %v997, %v1093
        %v1095 = vpop.f32.mrb[0].mxu0
        %1096 = vmatprep.mubr.bf16.mxu0 %v647
        %1097 = vmatmul.mubr.bf16.gmra.mrb[0].mxu0 %v643
        %v1098 = vpop.f32.mrb[0].mxu0
        %v1099 = vadd.f32 %v1002, %v1098
        %v1100 = vpop.f32.mrb[0].mxu0
        %v1101 = vpop.f32.mrb[0].mxu0
        %v1102 = vadd.f32 %v1005, %v1101
        %v1103 = vpop.f32.mrb[0].mxu0
        %1104 = vdwg.mxu0
        %vm1113 = vcmask 1042432
        %vm1114 = vcmask 1046532
        %vm1115 = vmor %vm1113, %vm1114
        %v1116 = vrot.slane %v309, 5
        %v1117 = vrot.slane %v1116, 4
        %v1118 = vrot.slane %v310, 5
        %v1119 = vsel %vm1115, %v1117, %v1118
        %v1120 = vrot.slane %v1118, 4
        %v1121 = vrot.slane %v311, 5
        %v1122 = vsel %vm1115, %v1120, %v1121
        %v1123 = vrot.slane %v312, 5
        %v1124 = vrot.slane %v1123, 4
        %v1125 = vrot.slane %v313, 5
        %v1126 = vsel %vm1115, %v1124, %v1125
        %v1127 = vrot.slane %v1125, 4
        %v1128 = vrot.slane %v314, 5
        %v1129 = vsel %vm1115, %v1127, %v1128
        %v1130 = vrot.slane %v315, 5
        %v1131 = vrot.slane %v1130, 4
        %v1132 = vrot.slane %v316, 5
        %v1133 = vsel %vm1115, %v1131, %v1132
        %v1134 = vrot.slane %v1132, 4
        %v1135 = vrot.slane %v317, 5
        %v1136 = vsel %vm1115, %v1134, %v1135
        %v1137 = vrot.slane %v318, 5
        %v1138 = vrot.slane %v1137, 4
        %v1139 = vrot.slane %v319, 5
        %v1140 = vsel %vm1115, %v1138, %v1139
        %v1141 = vrot.slane %v1139, 4
        %v1142 = vrot.slane %v320, 5
        %v1143 = vsel %vm1115, %v1141, %v1142
        %v1144 = vrot.slane %v321, 5
        %v1145 = vrot.slane %v1144, 4
        %v1146 = vrot.slane %v322, 5
        %v1147 = vsel %vm1115, %v1145, %v1146
        %v1148 = vrot.slane %v1146, 4
        %v1149 = vrot.slane %v323, 5
        %v1150 = vsel %vm1115, %v1148, %v1149
        %v1151 = vrot.slane %v324, 5
        %v1152 = vrot.slane %v1151, 4
        %v1153 = vrot.slane %v325, 5
        %v1154 = vsel %vm1115, %v1152, %v1153
        %v1155 = vrot.slane %v1153, 4
        %v1156 = vrot.slane %v326, 5
        %v1157 = vsel %vm1115, %v1155, %v1156
        %v1158 = vrot.slane %v327, 5
        %v1159 = vrot.slane %v1158, 4
        %v1160 = vrot.slane %v328, 5
        %v1161 = vsel %vm1115, %v1159, %v1160
        %v1162 = vrot.slane %v1160, 4
        %v1163 = vrot.slane %v329, 5
        %v1164 = vsel %vm1115, %v1162, %v1163
        %v1165 = vrot.slane %v330, 5
        %v1166 = vrot.slane %v1165, 4
        %v1167 = vrot.slane %v331, 5
        %v1168 = vsel %vm1115, %v1166, %v1167
        %v1169 = vrot.slane %v1167, 4
        %v1170 = vrot.slane %v332, 5
        %v1171 = vsel %vm1115, %v1169, %v1170
        %v1173 = vrot.slane %v333, 5
        %v1174 = vrot.slane %v1173, 4
        %v1175 = vrot.slane %v334, 5
        %v1176 = vsel %vm1115, %v1174, %v1175
        %v1177 = vrot.slane %v1175, 4
        %v1178 = vrot.slane %v335, 5
        %v1179 = vsel %vm1115, %v1177, %v1178
        %v1180 = vunpack.c.l.b16 %v1119
        %v1181 = vunpack.c.l.b16 %v1122
        %v1182 = vunpack.c.l.b16 %v1126
        %v1183 = vunpack.c.l.b16 %v1129
        %v1184 = vunpack.c.l.b16 %v1133
        %v1185 = vunpack.c.l.b16 %v1136
        %v1186 = vunpack.c.l.b16 %v1140
        %v1187 = vunpack.c.l.b16 %v1143
        %v1188 = vunpack.c.l.b16 %v1147
        %v1189 = vunpack.c.l.b16 %v1150
        %v1190 = vunpack.c.l.b16 %v1154
        %v1191 = vunpack.c.l.b16 %v1157
        %v1192 = vunpack.c.l.b16 %v1161
        %v1193 = vunpack.c.l.b16 %v1164
        %v1194 = vunpack.c.l.b16 %v1168
        %v1195 = vunpack.c.l.b16 %v1171
        %v1196 = vpack.c.b16 %v1181, %v1180
        %v1197 = vpack.c.b16 %v1183, %v1182
        %v1198 = vpack.c.b16 %v1185, %v1184
        %v1199 = vpack.c.b16 %v1187, %v1186
        %v1200 = vpack.c.b16 %v1189, %v1188
        %v1201 = vpack.c.b16 %v1191, %v1190
        %v1202 = vpack.c.b16 %v1193, %v1192
        %v1203 = vpack.c.b16 %v1195, %v1194
        %v1212 = vunpack.c.l.b16 %v1176
        %v1213 = vunpack.c.l.b16 %v1179
        %v1214 = vpack.c.b16 %v1213, %v1212
        %s1216 = scalar_lea.vmem %s2, 256
        %v1217 = vld [vmem:[%s1216] sm:$0xf]
        %v1218 = vld [vmem:[%s1216 + $0x4] sm:$0xf]
        %v1219 = vld [vmem:[%s1216 + $0x8] sm:$0xf]
        %v1220 = vld [vmem:[%s1216 + $0xc] sm:$0xf]
        %v1221 = vld [vmem:[%s1216 + $0x10] sm:$0xf]
        %v1222 = vld [vmem:[%s1216 + $0x14] sm:$0xf]
        %v1223 = vld [vmem:[%s1216 + $0x18] sm:$0xf]
        %v1224 = vld [vmem:[%s1216 + $0x1c] sm:$0xf]
        %v1225 = vld [vmem:[%s1216 + $0x20] sm:$0xf]
        %v1226 = vld [vmem:[%s1216 + $0x24] sm:$0xf]
        %v1227 = vld [vmem:[%s1216 + $0x28] sm:$0xf]
        %v1228 = vld [vmem:[%s1216 + $0x2c] sm:$0xf]
        %v1229 = vld [vmem:[%s1216 + $0x30] sm:$0xf]
        %v1230 = vld [vmem:[%s1216 + $0x34] sm:$0xf]
        %v1231 = vld [vmem:[%s1216 + $0x38] sm:$0xf]
        %v1232 = vld [vmem:[%s1216 + $0x3c] sm:$0xf]
        %v1233 = vld [vmem:[%s1216 + $0x40] sm:$0xf]
        %v1234 = vld [vmem:[%s1216 + $0x44] sm:$0xf]
        %v1235 = vld [vmem:[%s1216 + $0x48] sm:$0xf]
        %v1236 = vld [vmem:[%s1216 + $0x4c] sm:$0xf]
        %v1237 = vld [vmem:[%s1216 + $0x50] sm:$0xf]
        %v1238 = vld [vmem:[%s1216 + $0x54] sm:$0xf]
        %v1239 = vld [vmem:[%s1216 + $0x58] sm:$0xf]
        %v1240 = vld [vmem:[%s1216 + $0x5c] sm:$0xf]
        %v1241 = vld [vmem:[%s1216 + $0x60] sm:$0xf]
        %v1242 = vld [vmem:[%s1216 + $0x64] sm:$0xf]
        %v1243 = vld [vmem:[%s1216 + $0x68] sm:$0xf]
        %v1244 = vld [vmem:[%s1216 + $0x6c] sm:$0xf]
        %v1245 = vld [vmem:[%s1216 + $0x70] sm:$0xf]
        %v1246 = vld [vmem:[%s1216 + $0x74] sm:$0xf]
        %v1247 = vld [vmem:[%s1216 + $0x78] sm:$0xf]
        %v1248 = vld [vmem:[%s1216 + $0x7c] sm:$0xf]
        %v1249 = vld [vmem:[%s1216 + $0x80] sm:$0xf]
        %v1250 = vld [vmem:[%s1216 + $0x84] sm:$0xf]
        %v1251 = vld [vmem:[%s1216 + $0x88] sm:$0xf]
        %v1252 = vld [vmem:[%s1216 + $0x8c] sm:$0xf]
        %v1253 = vld [vmem:[%s1216 + $0x90] sm:$0xf]
        %v1254 = vld [vmem:[%s1216 + $0x94] sm:$0xf]
        %v1255 = vld [vmem:[%s1216 + $0x98] sm:$0xf]
        %v1256 = vld [vmem:[%s1216 + $0x9c] sm:$0xf]
        %v1257 = vld [vmem:[%s1216 + $0xa0] sm:$0xf]
        %v1258 = vld [vmem:[%s1216 + $0xa4] sm:$0xf]
        %v1259 = vld [vmem:[%s1216 + $0xa8] sm:$0xf]
        %v1260 = vld [vmem:[%s1216 + $0xac] sm:$0xf]
        %v1261 = vld [vmem:[%s1216 + $0xb0] sm:$0xf]
        %v1262 = vld [vmem:[%s1216 + $0xb4] sm:$0xf]
        %v1263 = vld [vmem:[%s1216 + $0xb8] sm:$0xf]
        %v1264 = vld [vmem:[%s1216 + $0xbc] sm:$0xf]
        %v1265 = vld [vmem:[%s1216 + $0xc0] sm:$0xf]
        %v1266 = vld [vmem:[%s1216 + $0xc4] sm:$0xf]
        %v1267 = vld [vmem:[%s1216 + $0xc8] sm:$0xf]
        %v1268 = vld [vmem:[%s1216 + $0xcc] sm:$0xf]
        %v1269 = vld [vmem:[%s1216 + $0xd0] sm:$0xf]
        %v1270 = vld [vmem:[%s1216 + $0xd4] sm:$0xf]
        %v1271 = vld [vmem:[%s1216 + $0xd8] sm:$0xf]
        %v1272 = vld [vmem:[%s1216 + $0xdc] sm:$0xf]
        %v1273 = vld [vmem:[%s1216 + $0xe0] sm:$0xf]
        %v1274 = vld [vmem:[%s1216 + $0xe4] sm:$0xf]
        %v1275 = vld [vmem:[%s1216 + $0xe8] sm:$0xf]
        %v1276 = vld [vmem:[%s1216 + $0xec] sm:$0xf]
        %v1277 = vld [vmem:[%s1216 + $0xf0] sm:$0xf]
        %v1278 = vld [vmem:[%s1216 + $0xf4] sm:$0xf]
        %v1279 = vld [vmem:[%s1216 + $0xf8] sm:$0xf]
        %v1280 = vld [vmem:[%s1216 + $0xfc] sm:$0xf]
        %v1345 = vunpack.c.l.b16 %v1217
        %v1346 = vunpack.c.l.b16 %v1218
        %v1347 = vunpack.c.l.b16 %v1219
        %v1348 = vunpack.c.l.b16 %v1220
        %v1349 = vunpack.c.l.b16 %v1221
        %v1350 = vunpack.c.l.b16 %v1222
        %v1351 = vunpack.c.l.b16 %v1223
        %v1352 = vunpack.c.l.b16 %v1224
        %v1353 = vunpack.c.l.b16 %v1225
        %v1354 = vunpack.c.l.b16 %v1226
        %v1355 = vunpack.c.l.b16 %v1227
        %v1356 = vunpack.c.l.b16 %v1228
        %v1357 = vunpack.c.l.b16 %v1229
        %v1358 = vunpack.c.l.b16 %v1230
        %v1359 = vunpack.c.l.b16 %v1231
        %v1360 = vunpack.c.l.b16 %v1232
        %v1361 = vunpack.c.l.b16 %v1233
        %v1362 = vunpack.c.l.b16 %v1234
        %v1363 = vunpack.c.l.b16 %v1235
        %v1364 = vunpack.c.l.b16 %v1236
        %v1365 = vunpack.c.l.b16 %v1237
        %v1366 = vunpack.c.l.b16 %v1238
        %v1367 = vunpack.c.l.b16 %v1239
        %v1368 = vunpack.c.l.b16 %v1240
        %v1369 = vunpack.c.l.b16 %v1241
        %v1370 = vunpack.c.l.b16 %v1242
        %v1371 = vunpack.c.l.b16 %v1243
        %v1372 = vunpack.c.l.b16 %v1244
        %v1373 = vunpack.c.l.b16 %v1245
        %v1374 = vunpack.c.l.b16 %v1246
        %v1375 = vunpack.c.l.b16 %v1247
        %v1376 = vunpack.c.l.b16 %v1248
        %v1377 = vunpack.c.l.b16 %v1249
        %v1378 = vunpack.c.l.b16 %v1250
        %v1379 = vunpack.c.l.b16 %v1251
        %v1380 = vunpack.c.l.b16 %v1252
        %v1381 = vunpack.c.l.b16 %v1253
        %v1382 = vunpack.c.l.b16 %v1254
        %v1383 = vunpack.c.l.b16 %v1255
        %v1384 = vunpack.c.l.b16 %v1256
        %v1385 = vunpack.c.l.b16 %v1257
        %v1386 = vunpack.c.l.b16 %v1258
        %v1387 = vunpack.c.l.b16 %v1259
        %v1388 = vunpack.c.l.b16 %v1260
        %v1389 = vunpack.c.l.b16 %v1261
        %v1390 = vunpack.c.l.b16 %v1262
        %v1391 = vunpack.c.l.b16 %v1263
        %v1392 = vunpack.c.l.b16 %v1264
        %v1393 = vunpack.c.l.b16 %v1265
        %v1394 = vunpack.c.l.b16 %v1266
        %v1395 = vunpack.c.l.b16 %v1267
        %v1396 = vunpack.c.l.b16 %v1268
        %v1397 = vunpack.c.l.b16 %v1269
        %v1398 = vunpack.c.l.b16 %v1270
        %v1399 = vunpack.c.l.b16 %v1271
        %v1400 = vunpack.c.l.b16 %v1272
        %v1401 = vunpack.c.l.b16 %v1273
        %v1402 = vunpack.c.l.b16 %v1274
        %v1403 = vunpack.c.l.b16 %v1275
        %v1404 = vunpack.c.l.b16 %v1276
        %v1405 = vunpack.c.l.b16 %v1277
        %v1406 = vunpack.c.l.b16 %v1278
        %v1407 = vunpack.c.l.b16 %v1279
        %v1408 = vunpack.c.l.b16 %v1280
        %v1409 = vpack.c.b16 %v1346, %v1345
        %v1410 = vpack.c.b16 %v1348, %v1347
        %v1411 = vpack.c.b16 %v1350, %v1349
        %v1412 = vpack.c.b16 %v1352, %v1351
        %v1413 = vpack.c.b16 %v1354, %v1353
        %v1414 = vpack.c.b16 %v1356, %v1355
        %v1415 = vpack.c.b16 %v1358, %v1357
        %v1416 = vpack.c.b16 %v1360, %v1359
        %v1417 = vpack.c.b16 %v1362, %v1361
        %v1418 = vpack.c.b16 %v1364, %v1363
        %v1419 = vpack.c.b16 %v1366, %v1365
        %v1420 = vpack.c.b16 %v1368, %v1367
        %v1421 = vpack.c.b16 %v1370, %v1369
        %v1422 = vpack.c.b16 %v1372, %v1371
        %v1423 = vpack.c.b16 %v1374, %v1373
        %v1424 = vpack.c.b16 %v1376, %v1375
        %v1425 = vpack.c.b16 %v1378, %v1377
        %v1426 = vpack.c.b16 %v1380, %v1379
        %v1427 = vpack.c.b16 %v1382, %v1381
        %v1428 = vpack.c.b16 %v1384, %v1383
        %v1429 = vpack.c.b16 %v1386, %v1385
        %v1430 = vpack.c.b16 %v1388, %v1387
        %v1431 = vpack.c.b16 %v1390, %v1389
        %v1432 = vpack.c.b16 %v1392, %v1391
        %v1433 = vpack.c.b16 %v1394, %v1393
        %v1434 = vpack.c.b16 %v1396, %v1395
        %v1435 = vpack.c.b16 %v1398, %v1397
        %v1436 = vpack.c.b16 %v1400, %v1399
        %v1437 = vpack.c.b16 %v1402, %v1401
        %v1438 = vpack.c.b16 %v1404, %v1403
        %v1439 = vpack.c.b16 %v1406, %v1405
        %v1440 = vpack.c.b16 %v1408, %v1407
        %1473 = vmatprep.subr.bf16.mxu0 0
        %1474 = vmatpush1.bf16.msra.mxu0 %v1409
        %1475 = vmatprep.subr.bf16.mxu0 0
        %1476 = vmatpush1.bf16.msra.mxu0 %v1410
        %1477 = vmatprep.subr.bf16.mxu0 0
        %1478 = vmatpush1.bf16.msra.mxu0 %v1411
        %1479 = vmatprep.subr.bf16.mxu0 0
        %1480 = vmatpush1.bf16.msra.mxu0 %v1412
        %1481 = vmatprep.subr.bf16.mxu0 0
        %1482 = vmatpush1.bf16.msra.mxu0 %v1413
        %1483 = vmatprep.subr.bf16.mxu0 0
        %1484 = vmatpush1.bf16.msra.mxu0 %v1414
        %1485 = vmatprep.subr.bf16.mxu0 0
        %1486 = vmatpush1.bf16.msra.mxu0 %v1415
        %1487 = vmatprep.subr.bf16.mxu0 0
        %1488 = vmatpush1.bf16.msra.mxu0 %v1416
        %1489 = vmatprep.subr.bf16.mxu0 0
        %1490 = vmatpush1.bf16.msra.mxu0 %v1417
        %1491 = vmatprep.subr.bf16.mxu0 0
        %1492 = vmatpush1.bf16.msra.mxu0 %v1418
        %1493 = vmatprep.subr.bf16.mxu0 0
        %1494 = vmatpush1.bf16.msra.mxu0 %v1419
        %1495 = vmatprep.subr.bf16.mxu0 0
        %1496 = vmatpush1.bf16.msra.mxu0 %v1420
        %1497 = vmatprep.subr.bf16.mxu0 0
        %1498 = vmatpush1.bf16.msra.mxu0 %v1421
        %1499 = vmatprep.subr.bf16.mxu0 0
        %1500 = vmatpush1.bf16.msra.mxu0 %v1422
        %1501 = vmatprep.subr.bf16.mxu0 0
        %1502 = vmatpush1.bf16.msra.mxu0 %v1423
        %1503 = vmatprep.subr.bf16.mxu0 0
        %1504 = vmatpush1.bf16.msra.mxu0 %v1424
        %1505 = vmatprep.mubr.bf16.mxu0 %v1196
        %1506 = vmatmul.mubr.bf16.gmra.mrb[0].mxu0 %v623
        %v1507 = vpop.f32.mrb[0].mxu0
        %v1508 = vadd.f32 %v717, %v1507
        %v1509 = vpop.f32.mrb[0].mxu0
        %v1510 = vpop.f32.mrb[0].mxu0
        %v1511 = vadd.f32 %v717, %v1510
        %v1512 = vpop.f32.mrb[0].mxu0
        %1513 = vmatprep.mubr.bf16.mxu0 %v1197
        %1514 = vmatmul.mubr.bf16.gmra.mrb[0].mxu0 %v624
        %v1515 = vpop.f32.mrb[0].mxu0
        %v1516 = vadd.f32 %v717, %v1515
        %v1517 = vpop.f32.mrb[0].mxu0
        %v1518 = vpop.f32.mrb[0].mxu0
        %v1519 = vadd.f32 %v717, %v1518
        %v1520 = vpop.f32.mrb[0].mxu0
        %1521 = vmatprep.mubr.bf16.mxu0 %v1198
        %1522 = vmatmul.mubr.bf16.gmra.mrb[0].mxu0 %v625
        %v1523 = vpop.f32.mrb[0].mxu0
        %v1524 = vadd.f32 %v717, %v1523
        %v1525 = vpop.f32.mrb[0].mxu0
        %v1526 = vpop.f32.mrb[0].mxu0
        %v1527 = vadd.f32 %v717, %v1526
        %v1528 = vpop.f32.mrb[0].mxu0
        %1529 = vmatprep.mubr.bf16.mxu0 %v1199
        %1530 = vmatmul.mubr.bf16.gmra.mrb[0].mxu0 %v626
        %v1531 = vpop.f32.mrb[0].mxu0
        %v1532 = vadd.f32 %v717, %v1531
        %v1533 = vpop.f32.mrb[0].mxu0
        %v1534 = vpop.f32.mrb[0].mxu0
        %v1535 = vadd.f32 %v717, %v1534
        %v1536 = vpop.f32.mrb[0].mxu0
        %1537 = vmatprep.mubr.bf16.mxu0 %v1200
        %1538 = vmatmul.mubr.bf16.gmra.mrb[0].mxu0 %v627
        %v1539 = vpop.f32.mrb[0].mxu0
        %v1540 = vadd.f32 %v717, %v1539
        %v1541 = vpop.f32.mrb[0].mxu0
        %v1542 = vpop.f32.mrb[0].mxu0
        %v1543 = vadd.f32 %v717, %v1542
        %v1544 = vpop.f32.mrb[0].mxu0
        %1545 = vmatprep.mubr.bf16.mxu0 %v1201
        %1546 = vmatmul.mubr.bf16.gmra.mrb[0].mxu0 %v628
        %v1547 = vpop.f32.mrb[0].mxu0
        %v1548 = vadd.f32 %v717, %v1547
        %v1549 = vpop.f32.mrb[0].mxu0
        %v1550 = vpop.f32.mrb[0].mxu0
        %v1551 = vadd.f32 %v717, %v1550
        %v1552 = vpop.f32.mrb[0].mxu0
        %1553 = vmatprep.mubr.bf16.mxu0 %v1202
        %1554 = vmatmul.mubr.bf16.gmra.mrb[0].mxu0 %v629
        %v1555 = vpop.f32.mrb[0].mxu0
        %v1556 = vadd.f32 %v717, %v1555
        %v1557 = vpop.f32.mrb[0].mxu0
        %v1558 = vpop.f32.mrb[0].mxu0
        %v1559 = vadd.f32 %v717, %v1558
        %v1560 = vpop.f32.mrb[0].mxu0
        %1561 = vmatprep.mubr.bf16.mxu0 %v1203
        %1562 = vmatmul.mubr.bf16.gmra.mrb[0].mxu0 %v630
        %v1563 = vpop.f32.mrb[0].mxu0
        %v1564 = vadd.f32 %v717, %v1563
        %v1565 = vpop.f32.mrb[0].mxu0
        %v1566 = vpop.f32.mrb[0].mxu0
        %v1567 = vadd.f32 %v717, %v1566
        %v1568 = vpop.f32.mrb[0].mxu0
        %1569 = vdwg.mxu0
        %1570 = vmatprep.subr.bf16.mxu0 0
        %1571 = vmatpush1.bf16.msra.mxu0 %v1425
        %1572 = vmatprep.subr.bf16.mxu0 0
        %1573 = vmatpush1.bf16.msra.mxu0 %v1426
        %1574 = vmatprep.subr.bf16.mxu0 0
        %1575 = vmatpush1.bf16.msra.mxu0 %v1427
        %1576 = vmatprep.subr.bf16.mxu0 0
        %1577 = vmatpush1.bf16.msra.mxu0 %v1428
        %1578 = vmatprep.subr.bf16.mxu0 0
        %1579 = vmatpush1.bf16.msra.mxu0 %v1429
        %1580 = vmatprep.subr.bf16.mxu0 0
        %1581 = vmatpush1.bf16.msra.mxu0 %v1430
        %1582 = vmatprep.subr.bf16.mxu0 0
        %1583 = vmatpush1.bf16.msra.mxu0 %v1431
        %1584 = vmatprep.subr.bf16.mxu0 0
        %1585 = vmatpush1.bf16.msra.mxu0 %v1432
        %1586 = vmatprep.subr.bf16.mxu0 0
        %1587 = vmatpush1.bf16.msra.mxu0 %v1433
        %1588 = vmatprep.subr.bf16.mxu0 0
        %1589 = vmatpush1.bf16.msra.mxu0 %v1434
        %1590 = vmatprep.subr.bf16.mxu0 0
        %1591 = vmatpush1.bf16.msra.mxu0 %v1435
        %1592 = vmatprep.subr.bf16.mxu0 0
        %1593 = vmatpush1.bf16.msra.mxu0 %v1436
        %1594 = vmatprep.subr.bf16.mxu0 0
        %1595 = vmatpush1.bf16.msra.mxu0 %v1437
        %1596 = vmatprep.subr.bf16.mxu0 0
        %1597 = vmatpush1.bf16.msra.mxu0 %v1438
        %1598 = vmatprep.subr.bf16.mxu0 0
        %1599 = vmatpush1.bf16.msra.mxu0 %v1439
        %1600 = vmatprep.subr.bf16.mxu0 0
        %1601 = vmatpush1.bf16.msra.mxu0 %v1440
        %1602 = vmatprep.mubr.bf16.mxu0 %v1197
        %1603 = vmatmul.mubr.bf16.gmra.mrb[0].mxu0 %v624
        %v1604 = vpop.f32.mrb[0].mxu0
        %v1605 = vadd.f32 %v1508, %v1604
        %v1606 = vpop.f32.mrb[0].mxu0
        %v1607 = vpop.f32.mrb[0].mxu0
        %v1608 = vadd.f32 %v1511, %v1607
        %v1609 = vpop.f32.mrb[0].mxu0
        %1610 = vmatprep.mubr.bf16.mxu0 %v1198
        %1611 = vmatmul.mubr.bf16.gmra.mrb[0].mxu0 %v625
        %v1612 = vpop.f32.mrb[0].mxu0
        %v1613 = vadd.f32 %v1516, %v1612
        %v1614 = vpop.f32.mrb[0].mxu0
        %v1615 = vpop.f32.mrb[0].mxu0
        %v1616 = vadd.f32 %v1519, %v1615
        %v1617 = vpop.f32.mrb[0].mxu0
        %1618 = vmatprep.mubr.bf16.mxu0 %v1199
        %1619 = vmatmul.mubr.bf16.gmra.mrb[0].mxu0 %v626
        %v1620 = vpop.f32.mrb[0].mxu0
        %v1621 = vadd.f32 %v1524, %v1620
        %v1622 = vpop.f32.mrb[0].mxu0
        %v1623 = vpop.f32.mrb[0].mxu0
        %v1624 = vadd.f32 %v1527, %v1623
        %v1625 = vpop.f32.mrb[0].mxu0
        %1626 = vmatprep.mubr.bf16.mxu0 %v1200
        %1627 = vmatmul.mubr.bf16.gmra.mrb[0].mxu0 %v627
        %v1628 = vpop.f32.mrb[0].mxu0
        %v1629 = vadd.f32 %v1532, %v1628
        %v1630 = vpop.f32.mrb[0].mxu0
        %v1631 = vpop.f32.mrb[0].mxu0
        %v1632 = vadd.f32 %v1535, %v1631
        %v1633 = vpop.f32.mrb[0].mxu0
        %1634 = vmatprep.mubr.bf16.mxu0 %v1201
        %1635 = vmatmul.mubr.bf16.gmra.mrb[0].mxu0 %v628
        %v1636 = vpop.f32.mrb[0].mxu0
        %v1637 = vadd.f32 %v1540, %v1636
        %v1638 = vpop.f32.mrb[0].mxu0
        %v1639 = vpop.f32.mrb[0].mxu0
        %v1640 = vadd.f32 %v1543, %v1639
        %v1641 = vpop.f32.mrb[0].mxu0
        %1642 = vmatprep.mubr.bf16.mxu0 %v1202
        %1643 = vmatmul.mubr.bf16.gmra.mrb[0].mxu0 %v629
        %v1644 = vpop.f32.mrb[0].mxu0
        %v1645 = vadd.f32 %v1548, %v1644
        %v1646 = vpop.f32.mrb[0].mxu0
        %v1647 = vpop.f32.mrb[0].mxu0
        %v1648 = vadd.f32 %v1551, %v1647
        %v1649 = vpop.f32.mrb[0].mxu0
        %1650 = vmatprep.mubr.bf16.mxu0 %v1203
        %1651 = vmatmul.mubr.bf16.gmra.mrb[0].mxu0 %v630
        %v1652 = vpop.f32.mrb[0].mxu0
        %v1653 = vadd.f32 %v1556, %v1652
        %v1654 = vpop.f32.mrb[0].mxu0
        %v1655 = vpop.f32.mrb[0].mxu0
        %v1656 = vadd.f32 %v1559, %v1655
        %v1657 = vpop.f32.mrb[0].mxu0
        %1658 = vmatprep.mubr.bf16.mxu0 %v1214
        %1659 = vmatmul.mubr.bf16.gmra.mrb[0].mxu0 %v647
        %v1660 = vpop.f32.mrb[0].mxu0
        %v1661 = vadd.f32 %v1564, %v1660
        %v1662 = vpop.f32.mrb[0].mxu0
        %v1663 = vpop.f32.mrb[0].mxu0
        %v1664 = vadd.f32 %v1567, %v1663
        %v1665 = vpop.f32.mrb[0].mxu0
        %1666 = vdwg.mxu0
        %v1683 = vcombine.high %v1043, %v1043
        %v1685 = vunpack.c.l.s4 1966171168
        %v1686 = vunpack.c.0.s8 %v1685
        %v1687 = vlaneseq
        %v1688 = vshrl.u32 %v1687, 7
        %v1689 = vsub.s32 %v1686, %v1688
        %v1690 = vrot.slane %v1043, %v1689
        %v1692 = vunpack.c.l.s4 1966171168
        %v1693 = vunpack.c.0.s8 %v1692
        %v1694 = vlaneseq
        %v1695 = vshrl.u32 %v1694, 7
        %v1696 = vsub.s32 %v1693, %v1695
        %v1697 = vrot.slane %v1683, %v1696
        %v1698 = vcombine.high %v1690, %v1690
        %v1699 = vcombine.high %v1697, %v1697
        %v1701 = vunpack.c.l.s4 1966171168
        %v1702 = vunpack.c.0.s8 %v1701
        %v1703 = vlaneseq
        %v1704 = vshrl.u32 %v1703, 7
        %v1705 = vsub.s32 %v1702, %v1704
        %v1706 = vrot.slane %v1690, %v1705
        %v1708 = vunpack.c.l.s4 1966171168
        %v1709 = vunpack.c.0.s8 %v1708
        %v1710 = vlaneseq
        %v1711 = vshrl.u32 %v1710, 7
        %v1712 = vsub.s32 %v1709, %v1711
        %v1713 = vrot.slane %v1697, %v1712
        %v1715 = vunpack.c.l.s4 1966171168
        %v1716 = vunpack.c.0.s8 %v1715
        %v1717 = vlaneseq
        %v1718 = vshrl.u32 %v1717, 7
        %v1719 = vsub.s32 %v1716, %v1718
        %v1720 = vrot.slane %v1698, %v1719
        %v1722 = vunpack.c.l.s4 1966171168
        %v1723 = vunpack.c.0.s8 %v1722
        %v1724 = vlaneseq
        %v1725 = vshrl.u32 %v1724, 7
        %v1726 = vsub.s32 %v1723, %v1725
        %v1727 = vrot.slane %v1699, %v1726
        %v1728 = vcombine.high %v1706, %v1706
        %v1729 = vcombine.high %v1713, %v1713
        %v1730 = vcombine.high %v1720, %v1720
        %v1731 = vcombine.high %v1727, %v1727
        %v1732 = vcombine.high %v1046, %v1046
        %v1734 = vunpack.c.l.s4 1966171168
        %v1735 = vunpack.c.0.s8 %v1734
        %v1736 = vlaneseq
        %v1737 = vshrl.u32 %v1736, 7
        %v1738 = vsub.s32 %v1735, %v1737
        %v1739 = vrot.slane %v1046, %v1738
        %v1741 = vunpack.c.l.s4 1966171168
        %v1742 = vunpack.c.0.s8 %v1741
        %v1743 = vlaneseq
        %v1744 = vshrl.u32 %v1743, 7
        %v1745 = vsub.s32 %v1742, %v1744
        %v1746 = vrot.slane %v1732, %v1745
        %v1747 = vcombine.high %v1739, %v1739
        %v1748 = vcombine.high %v1746, %v1746
        %v1750 = vunpack.c.l.s4 1966171168
        %v1751 = vunpack.c.0.s8 %v1750
        %v1752 = vlaneseq
        %v1753 = vshrl.u32 %v1752, 7
        %v1754 = vsub.s32 %v1751, %v1753
        %v1755 = vrot.slane %v1739, %v1754
        %v1757 = vunpack.c.l.s4 1966171168
        %v1758 = vunpack.c.0.s8 %v1757
        %v1759 = vlaneseq
        %v1760 = vshrl.u32 %v1759, 7
        %v1761 = vsub.s32 %v1758, %v1760
        %v1762 = vrot.slane %v1746, %v1761
        %v1764 = vunpack.c.l.s4 1966171168
        %v1765 = vunpack.c.0.s8 %v1764
        %v1766 = vlaneseq
        %v1767 = vshrl.u32 %v1766, 7
        %v1768 = vsub.s32 %v1765, %v1767
        %v1769 = vrot.slane %v1747, %v1768
        %v1771 = vunpack.c.l.s4 1966171168
        %v1772 = vunpack.c.0.s8 %v1771
        %v1773 = vlaneseq
        %v1774 = vshrl.u32 %v1773, 7
        %v1775 = vsub.s32 %v1772, %v1774
        %v1776 = vrot.slane %v1748, %v1775
        %v1777 = vcombine.high %v1755, %v1755
        %v1778 = vcombine.high %v1762, %v1762
        %v1779 = vcombine.high %v1769, %v1769
        %v1780 = vcombine.high %v1776, %v1776
        %v1781 = vcombine.high %v1051, %v1051
        %v1783 = vunpack.c.l.s4 1966171168
        %v1784 = vunpack.c.0.s8 %v1783
        %v1785 = vlaneseq
        %v1786 = vshrl.u32 %v1785, 7
        %v1787 = vsub.s32 %v1784, %v1786
        %v1788 = vrot.slane %v1051, %v1787
        %v1790 = vunpack.c.l.s4 1966171168
        %v1791 = vunpack.c.0.s8 %v1790
        %v1792 = vlaneseq
        %v1793 = vshrl.u32 %v1792, 7
        %v1794 = vsub.s32 %v1791, %v1793
        %v1795 = vrot.slane %v1781, %v1794
        %v1796 = vcombine.high %v1788, %v1788
        %v1797 = vcombine.high %v1795, %v1795
        %v1799 = vunpack.c.l.s4 1966171168
        %v1800 = vunpack.c.0.s8 %v1799
        %v1801 = vlaneseq
        %v1802 = vshrl.u32 %v1801, 7
        %v1803 = vsub.s32 %v1800, %v1802
        %v1804 = vrot.slane %v1788, %v1803
        %v1806 = vunpack.c.l.s4 1966171168
        %v1807 = vunpack.c.0.s8 %v1806
        %v1808 = vlaneseq
        %v1809 = vshrl.u32 %v1808, 7
        %v1810 = vsub.s32 %v1807, %v1809
        %v1811 = vrot.slane %v1795, %v1810
        %v1813 = vunpack.c.l.s4 1966171168
        %v1814 = vunpack.c.0.s8 %v1813
        %v1815 = vlaneseq
        %v1816 = vshrl.u32 %v1815, 7
        %v1817 = vsub.s32 %v1814, %v1816
        %v1818 = vrot.slane %v1796, %v1817
        %v1820 = vunpack.c.l.s4 1966171168
        %v1821 = vunpack.c.0.s8 %v1820
        %v1822 = vlaneseq
        %v1823 = vshrl.u32 %v1822, 7
        %v1824 = vsub.s32 %v1821, %v1823
        %v1825 = vrot.slane %v1797, %v1824
        %v1826 = vcombine.high %v1804, %v1804
        %v1827 = vcombine.high %v1811, %v1811
        %v1828 = vcombine.high %v1818, %v1818
        %v1829 = vcombine.high %v1825, %v1825
        %v1830 = vcombine.high %v1054, %v1054
        %v1832 = vunpack.c.l.s4 1966171168
        %v1833 = vunpack.c.0.s8 %v1832
        %v1834 = vlaneseq
        %v1835 = vshrl.u32 %v1834, 7
        %v1836 = vsub.s32 %v1833, %v1835
        %v1837 = vrot.slane %v1054, %v1836
        %v1839 = vunpack.c.l.s4 1966171168
        %v1840 = vunpack.c.0.s8 %v1839
        %v1841 = vlaneseq
        %v1842 = vshrl.u32 %v1841, 7
        %v1843 = vsub.s32 %v1840, %v1842
        %v1844 = vrot.slane %v1830, %v1843
        %v1845 = vcombine.high %v1837, %v1837
        %v1846 = vcombine.high %v1844, %v1844
        %v1848 = vunpack.c.l.s4 1966171168
        %v1849 = vunpack.c.0.s8 %v1848
        %v1850 = vlaneseq
        %v1851 = vshrl.u32 %v1850, 7
        %v1852 = vsub.s32 %v1849, %v1851
        %v1853 = vrot.slane %v1837, %v1852
        %v1855 = vunpack.c.l.s4 1966171168
        %v1856 = vunpack.c.0.s8 %v1855
        %v1857 = vlaneseq
        %v1858 = vshrl.u32 %v1857, 7
        %v1859 = vsub.s32 %v1856, %v1858
        %v1860 = vrot.slane %v1844, %v1859
        %v1862 = vunpack.c.l.s4 1966171168
        %v1863 = vunpack.c.0.s8 %v1862
        %v1864 = vlaneseq
        %v1865 = vshrl.u32 %v1864, 7
        %v1866 = vsub.s32 %v1863, %v1865
        %v1867 = vrot.slane %v1845, %v1866
        %v1869 = vunpack.c.l.s4 1966171168
        %v1870 = vunpack.c.0.s8 %v1869
        %v1871 = vlaneseq
        %v1872 = vshrl.u32 %v1871, 7
        %v1873 = vsub.s32 %v1870, %v1872
        %v1874 = vrot.slane %v1846, %v1873
        %v1875 = vcombine.high %v1853, %v1853
        %v1876 = vcombine.high %v1860, %v1860
        %v1877 = vcombine.high %v1867, %v1867
        %v1878 = vcombine.high %v1874, %v1874
        %v1879 = vcombine.high %v1059, %v1059
        %v1881 = vunpack.c.l.s4 1966171168
        %v1882 = vunpack.c.0.s8 %v1881
        %v1883 = vlaneseq
        %v1884 = vshrl.u32 %v1883, 7
        %v1885 = vsub.s32 %v1882, %v1884
        %v1886 = vrot.slane %v1059, %v1885
        %v1888 = vunpack.c.l.s4 1966171168
        %v1889 = vunpack.c.0.s8 %v1888
        %v1890 = vlaneseq
        %v1891 = vshrl.u32 %v1890, 7
        %v1892 = vsub.s32 %v1889, %v1891
        %v1893 = vrot.slane %v1879, %v1892
        %v1894 = vcombine.high %v1886, %v1886
        %v1895 = vcombine.high %v1893, %v1893
        %v1897 = vunpack.c.l.s4 1966171168
        %v1898 = vunpack.c.0.s8 %v1897
        %v1899 = vlaneseq
        %v1900 = vshrl.u32 %v1899, 7
        %v1901 = vsub.s32 %v1898, %v1900
        %v1902 = vrot.slane %v1886, %v1901
        %v1904 = vunpack.c.l.s4 1966171168
        %v1905 = vunpack.c.0.s8 %v1904
        %v1906 = vlaneseq
        %v1907 = vshrl.u32 %v1906, 7
        %v1908 = vsub.s32 %v1905, %v1907
        %v1909 = vrot.slane %v1893, %v1908
        %v1911 = vunpack.c.l.s4 1966171168
        %v1912 = vunpack.c.0.s8 %v1911
        %v1913 = vlaneseq
        %v1914 = vshrl.u32 %v1913, 7
        %v1915 = vsub.s32 %v1912, %v1914
        %v1916 = vrot.slane %v1894, %v1915
        %v1918 = vunpack.c.l.s4 1966171168
        %v1919 = vunpack.c.0.s8 %v1918
        %v1920 = vlaneseq
        %v1921 = vshrl.u32 %v1920, 7
        %v1922 = vsub.s32 %v1919, %v1921
        %v1923 = vrot.slane %v1895, %v1922
        %v1924 = vcombine.high %v1902, %v1902
        %v1925 = vcombine.high %v1909, %v1909
        %v1926 = vcombine.high %v1916, %v1916
        %v1927 = vcombine.high %v1923, %v1923
        %v1928 = vcombine.high %v1062, %v1062
        %v1930 = vunpack.c.l.s4 1966171168
        %v1931 = vunpack.c.0.s8 %v1930
        %v1932 = vlaneseq
        %v1933 = vshrl.u32 %v1932, 7
        %v1934 = vsub.s32 %v1931, %v1933
        %v1935 = vrot.slane %v1062, %v1934
        %v1937 = vunpack.c.l.s4 1966171168
        %v1938 = vunpack.c.0.s8 %v1937
        %v1939 = vlaneseq
        %v1940 = vshrl.u32 %v1939, 7
        %v1941 = vsub.s32 %v1938, %v1940
        %v1942 = vrot.slane %v1928, %v1941
        %v1943 = vcombine.high %v1935, %v1935
        %v1944 = vcombine.high %v1942, %v1942
        %v1946 = vunpack.c.l.s4 1966171168
        %v1947 = vunpack.c.0.s8 %v1946
        %v1948 = vlaneseq
        %v1949 = vshrl.u32 %v1948, 7
        %v1950 = vsub.s32 %v1947, %v1949
        %v1951 = vrot.slane %v1935, %v1950
        %v1953 = vunpack.c.l.s4 1966171168
        %v1954 = vunpack.c.0.s8 %v1953
        %v1955 = vlaneseq
        %v1956 = vshrl.u32 %v1955, 7
        %v1957 = vsub.s32 %v1954, %v1956
        %v1958 = vrot.slane %v1942, %v1957
        %v1960 = vunpack.c.l.s4 1966171168
        %v1961 = vunpack.c.0.s8 %v1960
        %v1962 = vlaneseq
        %v1963 = vshrl.u32 %v1962, 7
        %v1964 = vsub.s32 %v1961, %v1963
        %v1965 = vrot.slane %v1943, %v1964
        %v1967 = vunpack.c.l.s4 1966171168
        %v1968 = vunpack.c.0.s8 %v1967
        %v1969 = vlaneseq
        %v1970 = vshrl.u32 %v1969, 7
        %v1971 = vsub.s32 %v1968, %v1970
        %v1972 = vrot.slane %v1944, %v1971
        %v1973 = vcombine.high %v1951, %v1951
        %v1974 = vcombine.high %v1958, %v1958
        %v1975 = vcombine.high %v1965, %v1965
        %v1976 = vcombine.high %v1972, %v1972
        %v1977 = vcombine.high %v1067, %v1067
        %v1979 = vunpack.c.l.s4 1966171168
        %v1980 = vunpack.c.0.s8 %v1979
        %v1981 = vlaneseq
        %v1982 = vshrl.u32 %v1981, 7
        %v1983 = vsub.s32 %v1980, %v1982
        %v1984 = vrot.slane %v1067, %v1983
        %v1986 = vunpack.c.l.s4 1966171168
        %v1987 = vunpack.c.0.s8 %v1986
        %v1988 = vlaneseq
        %v1989 = vshrl.u32 %v1988, 7
        %v1990 = vsub.s32 %v1987, %v1989
        %v1991 = vrot.slane %v1977, %v1990
        %v1992 = vcombine.high %v1984, %v1984
        %v1993 = vcombine.high %v1991, %v1991
        %v1995 = vunpack.c.l.s4 1966171168
        %v1996 = vunpack.c.0.s8 %v1995
        %v1997 = vlaneseq
        %v1998 = vshrl.u32 %v1997, 7
        %v1999 = vsub.s32 %v1996, %v1998
        %v2000 = vrot.slane %v1984, %v1999
        %v2002 = vunpack.c.l.s4 1966171168
        %v2003 = vunpack.c.0.s8 %v2002
        %v2004 = vlaneseq
        %v2005 = vshrl.u32 %v2004, 7
        %v2006 = vsub.s32 %v2003, %v2005
        %v2007 = vrot.slane %v1991, %v2006
        %v2009 = vunpack.c.l.s4 1966171168
        %v2010 = vunpack.c.0.s8 %v2009
        %v2011 = vlaneseq
        %v2012 = vshrl.u32 %v2011, 7
        %v2013 = vsub.s32 %v2010, %v2012
        %v2014 = vrot.slane %v1992, %v2013
        %v2016 = vunpack.c.l.s4 1966171168
        %v2017 = vunpack.c.0.s8 %v2016
        %v2018 = vlaneseq
        %v2019 = vshrl.u32 %v2018, 7
        %v2020 = vsub.s32 %v2017, %v2019
        %v2021 = vrot.slane %v1993, %v2020
        %v2022 = vcombine.high %v2000, %v2000
        %v2023 = vcombine.high %v2007, %v2007
        %v2024 = vcombine.high %v2014, %v2014
        %v2025 = vcombine.high %v2021, %v2021
        %v2026 = vcombine.high %v1070, %v1070
        %v2028 = vunpack.c.l.s4 1966171168
        %v2029 = vunpack.c.0.s8 %v2028
        %v2030 = vlaneseq
        %v2031 = vshrl.u32 %v2030, 7
        %v2032 = vsub.s32 %v2029, %v2031
        %v2033 = vrot.slane %v1070, %v2032
        %v2035 = vunpack.c.l.s4 1966171168
        %v2036 = vunpack.c.0.s8 %v2035
        %v2037 = vlaneseq
        %v2038 = vshrl.u32 %v2037, 7
        %v2039 = vsub.s32 %v2036, %v2038
        %v2040 = vrot.slane %v2026, %v2039
        %v2041 = vcombine.high %v2033, %v2033
        %v2042 = vcombine.high %v2040, %v2040
        %v2044 = vunpack.c.l.s4 1966171168
        %v2045 = vunpack.c.0.s8 %v2044
        %v2046 = vlaneseq
        %v2047 = vshrl.u32 %v2046, 7
        %v2048 = vsub.s32 %v2045, %v2047
        %v2049 = vrot.slane %v2033, %v2048
        %v2051 = vunpack.c.l.s4 1966171168
        %v2052 = vunpack.c.0.s8 %v2051
        %v2053 = vlaneseq
        %v2054 = vshrl.u32 %v2053, 7
        %v2055 = vsub.s32 %v2052, %v2054
        %v2056 = vrot.slane %v2040, %v2055
        %v2058 = vunpack.c.l.s4 1966171168
        %v2059 = vunpack.c.0.s8 %v2058
        %v2060 = vlaneseq
        %v2061 = vshrl.u32 %v2060, 7
        %v2062 = vsub.s32 %v2059, %v2061
        %v2063 = vrot.slane %v2041, %v2062
        %v2065 = vunpack.c.l.s4 1966171168
        %v2066 = vunpack.c.0.s8 %v2065
        %v2067 = vlaneseq
        %v2068 = vshrl.u32 %v2067, 7
        %v2069 = vsub.s32 %v2066, %v2068
        %v2070 = vrot.slane %v2042, %v2069
        %v2071 = vcombine.high %v2049, %v2049
        %v2072 = vcombine.high %v2056, %v2056
        %v2073 = vcombine.high %v2063, %v2063
        %v2074 = vcombine.high %v2070, %v2070
        %v2075 = vcombine.high %v1075, %v1075
        %v2077 = vunpack.c.l.s4 1966171168
        %v2078 = vunpack.c.0.s8 %v2077
        %v2079 = vlaneseq
        %v2080 = vshrl.u32 %v2079, 7
        %v2081 = vsub.s32 %v2078, %v2080
        %v2082 = vrot.slane %v1075, %v2081
        %v2084 = vunpack.c.l.s4 1966171168
        %v2085 = vunpack.c.0.s8 %v2084
        %v2086 = vlaneseq
        %v2087 = vshrl.u32 %v2086, 7
        %v2088 = vsub.s32 %v2085, %v2087
        %v2089 = vrot.slane %v2075, %v2088
        %v2090 = vcombine.high %v2082, %v2082
        %v2091 = vcombine.high %v2089, %v2089
        %v2093 = vunpack.c.l.s4 1966171168
        %v2094 = vunpack.c.0.s8 %v2093
        %v2095 = vlaneseq
        %v2096 = vshrl.u32 %v2095, 7
        %v2097 = vsub.s32 %v2094, %v2096
        %v2098 = vrot.slane %v2082, %v2097
        %v2100 = vunpack.c.l.s4 1966171168
        %v2101 = vunpack.c.0.s8 %v2100
        %v2102 = vlaneseq
        %v2103 = vshrl.u32 %v2102, 7
        %v2104 = vsub.s32 %v2101, %v2103
        %v2105 = vrot.slane %v2089, %v2104
        %v2107 = vunpack.c.l.s4 1966171168
        %v2108 = vunpack.c.0.s8 %v2107
        %v2109 = vlaneseq
        %v2110 = vshrl.u32 %v2109, 7
        %v2111 = vsub.s32 %v2108, %v2110
        %v2112 = vrot.slane %v2090, %v2111
        %v2114 = vunpack.c.l.s4 1966171168
        %v2115 = vunpack.c.0.s8 %v2114
        %v2116 = vlaneseq
        %v2117 = vshrl.u32 %v2116, 7
        %v2118 = vsub.s32 %v2115, %v2117
        %v2119 = vrot.slane %v2091, %v2118
        %v2120 = vcombine.high %v2098, %v2098
        %v2121 = vcombine.high %v2105, %v2105
        %v2122 = vcombine.high %v2112, %v2112
        %v2123 = vcombine.high %v2119, %v2119
        %v2124 = vcombine.high %v1078, %v1078
        %v2126 = vunpack.c.l.s4 1966171168
        %v2127 = vunpack.c.0.s8 %v2126
        %v2128 = vlaneseq
        %v2129 = vshrl.u32 %v2128, 7
        %v2130 = vsub.s32 %v2127, %v2129
        %v2131 = vrot.slane %v1078, %v2130
        %v2133 = vunpack.c.l.s4 1966171168
        %v2134 = vunpack.c.0.s8 %v2133
        %v2135 = vlaneseq
        %v2136 = vshrl.u32 %v2135, 7
        %v2137 = vsub.s32 %v2134, %v2136
        %v2138 = vrot.slane %v2124, %v2137
        %v2139 = vcombine.high %v2131, %v2131
        %v2140 = vcombine.high %v2138, %v2138
        %v2142 = vunpack.c.l.s4 1966171168
        %v2143 = vunpack.c.0.s8 %v2142
        %v2144 = vlaneseq
        %v2145 = vshrl.u32 %v2144, 7
        %v2146 = vsub.s32 %v2143, %v2145
        %v2147 = vrot.slane %v2131, %v2146
        %v2149 = vunpack.c.l.s4 1966171168
        %v2150 = vunpack.c.0.s8 %v2149
        %v2151 = vlaneseq
        %v2152 = vshrl.u32 %v2151, 7
        %v2153 = vsub.s32 %v2150, %v2152
        %v2154 = vrot.slane %v2138, %v2153
        %v2156 = vunpack.c.l.s4 1966171168
        %v2157 = vunpack.c.0.s8 %v2156
        %v2158 = vlaneseq
        %v2159 = vshrl.u32 %v2158, 7
        %v2160 = vsub.s32 %v2157, %v2159
        %v2161 = vrot.slane %v2139, %v2160
        %v2163 = vunpack.c.l.s4 1966171168
        %v2164 = vunpack.c.0.s8 %v2163
        %v2165 = vlaneseq
        %v2166 = vshrl.u32 %v2165, 7
        %v2167 = vsub.s32 %v2164, %v2166
        %v2168 = vrot.slane %v2140, %v2167
        %v2169 = vcombine.high %v2147, %v2147
        %v2170 = vcombine.high %v2154, %v2154
        %v2171 = vcombine.high %v2161, %v2161
        %v2172 = vcombine.high %v2168, %v2168
        %v2173 = vcombine.high %v1083, %v1083
        %v2175 = vunpack.c.l.s4 1966171168
        %v2176 = vunpack.c.0.s8 %v2175
        %v2177 = vlaneseq
        %v2178 = vshrl.u32 %v2177, 7
        %v2179 = vsub.s32 %v2176, %v2178
        %v2180 = vrot.slane %v1083, %v2179
        %v2182 = vunpack.c.l.s4 1966171168
        %v2183 = vunpack.c.0.s8 %v2182
        %v2184 = vlaneseq
        %v2185 = vshrl.u32 %v2184, 7
        %v2186 = vsub.s32 %v2183, %v2185
        %v2187 = vrot.slane %v2173, %v2186
        %v2188 = vcombine.high %v2180, %v2180
        %v2189 = vcombine.high %v2187, %v2187
        %v2191 = vunpack.c.l.s4 1966171168
        %v2192 = vunpack.c.0.s8 %v2191
        %v2193 = vlaneseq
        %v2194 = vshrl.u32 %v2193, 7
        %v2195 = vsub.s32 %v2192, %v2194
        %v2196 = vrot.slane %v2180, %v2195
        %v2198 = vunpack.c.l.s4 1966171168
        %v2199 = vunpack.c.0.s8 %v2198
        %v2200 = vlaneseq
        %v2201 = vshrl.u32 %v2200, 7
        %v2202 = vsub.s32 %v2199, %v2201
        %v2203 = vrot.slane %v2187, %v2202
        %v2205 = vunpack.c.l.s4 1966171168
        %v2206 = vunpack.c.0.s8 %v2205
        %v2207 = vlaneseq
        %v2208 = vshrl.u32 %v2207, 7
        %v2209 = vsub.s32 %v2206, %v2208
        %v2210 = vrot.slane %v2188, %v2209
        %v2212 = vunpack.c.l.s4 1966171168
        %v2213 = vunpack.c.0.s8 %v2212
        %v2214 = vlaneseq
        %v2215 = vshrl.u32 %v2214, 7
        %v2216 = vsub.s32 %v2213, %v2215
        %v2217 = vrot.slane %v2189, %v2216
        %v2218 = vcombine.high %v2196, %v2196
        %v2219 = vcombine.high %v2203, %v2203
        %v2220 = vcombine.high %v2210, %v2210
        %v2221 = vcombine.high %v2217, %v2217
        %v2222 = vcombine.high %v1086, %v1086
        %v2224 = vunpack.c.l.s4 1966171168
        %v2225 = vunpack.c.0.s8 %v2224
        %v2226 = vlaneseq
        %v2227 = vshrl.u32 %v2226, 7
        %v2228 = vsub.s32 %v2225, %v2227
        %v2229 = vrot.slane %v1086, %v2228
        %v2231 = vunpack.c.l.s4 1966171168
        %v2232 = vunpack.c.0.s8 %v2231
        %v2233 = vlaneseq
        %v2234 = vshrl.u32 %v2233, 7
        %v2235 = vsub.s32 %v2232, %v2234
        %v2236 = vrot.slane %v2222, %v2235
        %v2237 = vcombine.high %v2229, %v2229
        %v2238 = vcombine.high %v2236, %v2236
        %v2240 = vunpack.c.l.s4 1966171168
        %v2241 = vunpack.c.0.s8 %v2240
        %v2242 = vlaneseq
        %v2243 = vshrl.u32 %v2242, 7
        %v2244 = vsub.s32 %v2241, %v2243
        %v2245 = vrot.slane %v2229, %v2244
        %v2247 = vunpack.c.l.s4 1966171168
        %v2248 = vunpack.c.0.s8 %v2247
        %v2249 = vlaneseq
        %v2250 = vshrl.u32 %v2249, 7
        %v2251 = vsub.s32 %v2248, %v2250
        %v2252 = vrot.slane %v2236, %v2251
        %v2254 = vunpack.c.l.s4 1966171168
        %v2255 = vunpack.c.0.s8 %v2254
        %v2256 = vlaneseq
        %v2257 = vshrl.u32 %v2256, 7
        %v2258 = vsub.s32 %v2255, %v2257
        %v2259 = vrot.slane %v2237, %v2258
        %v2261 = vunpack.c.l.s4 1966171168
        %v2262 = vunpack.c.0.s8 %v2261
        %v2263 = vlaneseq
        %v2264 = vshrl.u32 %v2263, 7
        %v2265 = vsub.s32 %v2262, %v2264
        %v2266 = vrot.slane %v2238, %v2265
        %v2267 = vcombine.high %v2245, %v2245
        %v2268 = vcombine.high %v2252, %v2252
        %v2269 = vcombine.high %v2259, %v2259
        %v2270 = vcombine.high %v2266, %v2266
        %v2271 = vcombine.high %v1091, %v1091
        %v2273 = vunpack.c.l.s4 1966171168
        %v2274 = vunpack.c.0.s8 %v2273
        %v2275 = vlaneseq
        %v2276 = vshrl.u32 %v2275, 7
        %v2277 = vsub.s32 %v2274, %v2276
        %v2278 = vrot.slane %v1091, %v2277
        %v2280 = vunpack.c.l.s4 1966171168
        %v2281 = vunpack.c.0.s8 %v2280
        %v2282 = vlaneseq
        %v2283 = vshrl.u32 %v2282, 7
        %v2284 = vsub.s32 %v2281, %v2283
        %v2285 = vrot.slane %v2271, %v2284
        %v2286 = vcombine.high %v2278, %v2278
        %v2287 = vcombine.high %v2285, %v2285
        %v2289 = vunpack.c.l.s4 1966171168
        %v2290 = vunpack.c.0.s8 %v2289
        %v2291 = vlaneseq
        %v2292 = vshrl.u32 %v2291, 7
        %v2293 = vsub.s32 %v2290, %v2292
        %v2294 = vrot.slane %v2278, %v2293
        %v2296 = vunpack.c.l.s4 1966171168
        %v2297 = vunpack.c.0.s8 %v2296
        %v2298 = vlaneseq
        %v2299 = vshrl.u32 %v2298, 7
        %v2300 = vsub.s32 %v2297, %v2299
        %v2301 = vrot.slane %v2285, %v2300
        %v2303 = vunpack.c.l.s4 1966171168
        %v2304 = vunpack.c.0.s8 %v2303
        %v2305 = vlaneseq
        %v2306 = vshrl.u32 %v2305, 7
        %v2307 = vsub.s32 %v2304, %v2306
        %v2308 = vrot.slane %v2286, %v2307
        %v2310 = vunpack.c.l.s4 1966171168
        %v2311 = vunpack.c.0.s8 %v2310
        %v2312 = vlaneseq
        %v2313 = vshrl.u32 %v2312, 7
        %v2314 = vsub.s32 %v2311, %v2313
        %v2315 = vrot.slane %v2287, %v2314
        %v2316 = vcombine.high %v2294, %v2294
        %v2317 = vcombine.high %v2301, %v2301
        %v2318 = vcombine.high %v2308, %v2308
        %v2319 = vcombine.high %v2315, %v2315
        %v2320 = vcombine.high %v1094, %v1094
        %v2322 = vunpack.c.l.s4 1966171168
        %v2323 = vunpack.c.0.s8 %v2322
        %v2324 = vlaneseq
        %v2325 = vshrl.u32 %v2324, 7
        %v2326 = vsub.s32 %v2323, %v2325
        %v2327 = vrot.slane %v1094, %v2326
        %v2329 = vunpack.c.l.s4 1966171168
        %v2330 = vunpack.c.0.s8 %v2329
        %v2331 = vlaneseq
        %v2332 = vshrl.u32 %v2331, 7
        %v2333 = vsub.s32 %v2330, %v2332
        %v2334 = vrot.slane %v2320, %v2333
        %v2335 = vcombine.high %v2327, %v2327
        %v2336 = vcombine.high %v2334, %v2334
        %v2338 = vunpack.c.l.s4 1966171168
        %v2339 = vunpack.c.0.s8 %v2338
        %v2340 = vlaneseq
        %v2341 = vshrl.u32 %v2340, 7
        %v2342 = vsub.s32 %v2339, %v2341
        %v2343 = vrot.slane %v2327, %v2342
        %v2345 = vunpack.c.l.s4 1966171168
        %v2346 = vunpack.c.0.s8 %v2345
        %v2347 = vlaneseq
        %v2348 = vshrl.u32 %v2347, 7
        %v2349 = vsub.s32 %v2346, %v2348
        %v2350 = vrot.slane %v2334, %v2349
        %v2352 = vunpack.c.l.s4 1966171168
        %v2353 = vunpack.c.0.s8 %v2352
        %v2354 = vlaneseq
        %v2355 = vshrl.u32 %v2354, 7
        %v2356 = vsub.s32 %v2353, %v2355
        %v2357 = vrot.slane %v2335, %v2356
        %v2359 = vunpack.c.l.s4 1966171168
        %v2360 = vunpack.c.0.s8 %v2359
        %v2361 = vlaneseq
        %v2362 = vshrl.u32 %v2361, 7
        %v2363 = vsub.s32 %v2360, %v2362
        %v2364 = vrot.slane %v2336, %v2363
        %v2365 = vcombine.high %v2343, %v2343
        %v2366 = vcombine.high %v2350, %v2350
        %v2367 = vcombine.high %v2357, %v2357
        %v2368 = vcombine.high %v2364, %v2364
        %v2369 = vcombine.high %v1099, %v1099
        %v2371 = vunpack.c.l.s4 1966171168
        %v2372 = vunpack.c.0.s8 %v2371
        %v2373 = vlaneseq
        %v2374 = vshrl.u32 %v2373, 7
        %v2375 = vsub.s32 %v2372, %v2374
        %v2376 = vrot.slane %v1099, %v2375
        %v2378 = vunpack.c.l.s4 1966171168
        %v2379 = vunpack.c.0.s8 %v2378
        %v2380 = vlaneseq
        %v2381 = vshrl.u32 %v2380, 7
        %v2382 = vsub.s32 %v2379, %v2381
        %v2383 = vrot.slane %v2369, %v2382
        %v2384 = vcombine.high %v2376, %v2376
        %v2385 = vcombine.high %v2383, %v2383
        %v2387 = vunpack.c.l.s4 1966171168
        %v2388 = vunpack.c.0.s8 %v2387
        %v2389 = vlaneseq
        %v2390 = vshrl.u32 %v2389, 7
        %v2391 = vsub.s32 %v2388, %v2390
        %v2392 = vrot.slane %v2376, %v2391
        %v2394 = vunpack.c.l.s4 1966171168
        %v2395 = vunpack.c.0.s8 %v2394
        %v2396 = vlaneseq
        %v2397 = vshrl.u32 %v2396, 7
        %v2398 = vsub.s32 %v2395, %v2397
        %v2399 = vrot.slane %v2383, %v2398
        %v2401 = vunpack.c.l.s4 1966171168
        %v2402 = vunpack.c.0.s8 %v2401
        %v2403 = vlaneseq
        %v2404 = vshrl.u32 %v2403, 7
        %v2405 = vsub.s32 %v2402, %v2404
        %v2406 = vrot.slane %v2384, %v2405
        %v2408 = vunpack.c.l.s4 1966171168
        %v2409 = vunpack.c.0.s8 %v2408
        %v2410 = vlaneseq
        %v2411 = vshrl.u32 %v2410, 7
        %v2412 = vsub.s32 %v2409, %v2411
        %v2413 = vrot.slane %v2385, %v2412
        %v2414 = vcombine.high %v2392, %v2392
        %v2415 = vcombine.high %v2399, %v2399
        %v2416 = vcombine.high %v2406, %v2406
        %v2417 = vcombine.high %v2413, %v2413
        %v2418 = vcombine.high %v1102, %v1102
        %v2420 = vunpack.c.l.s4 1966171168
        %v2421 = vunpack.c.0.s8 %v2420
        %v2422 = vlaneseq
        %v2423 = vshrl.u32 %v2422, 7
        %v2424 = vsub.s32 %v2421, %v2423
        %v2425 = vrot.slane %v1102, %v2424
        %v2427 = vunpack.c.l.s4 1966171168
        %v2428 = vunpack.c.0.s8 %v2427
        %v2429 = vlaneseq
        %v2430 = vshrl.u32 %v2429, 7
        %v2431 = vsub.s32 %v2428, %v2430
        %v2432 = vrot.slane %v2418, %v2431
        %v2433 = vcombine.high %v2425, %v2425
        %v2434 = vcombine.high %v2432, %v2432
        %v2436 = vunpack.c.l.s4 1966171168
        %v2437 = vunpack.c.0.s8 %v2436
        %v2438 = vlaneseq
        %v2439 = vshrl.u32 %v2438, 7
        %v2440 = vsub.s32 %v2437, %v2439
        %v2441 = vrot.slane %v2425, %v2440
        %v2443 = vunpack.c.l.s4 1966171168
        %v2444 = vunpack.c.0.s8 %v2443
        %v2445 = vlaneseq
        %v2446 = vshrl.u32 %v2445, 7
        %v2447 = vsub.s32 %v2444, %v2446
        %v2448 = vrot.slane %v2432, %v2447
        %v2450 = vunpack.c.l.s4 1966171168
        %v2451 = vunpack.c.0.s8 %v2450
        %v2452 = vlaneseq
        %v2453 = vshrl.u32 %v2452, 7
        %v2454 = vsub.s32 %v2451, %v2453
        %v2455 = vrot.slane %v2433, %v2454
        %v2457 = vunpack.c.l.s4 1966171168
        %v2458 = vunpack.c.0.s8 %v2457
        %v2459 = vlaneseq
        %v2460 = vshrl.u32 %v2459, 7
        %v2461 = vsub.s32 %v2458, %v2460
        %v2462 = vrot.slane %v2434, %v2461
        %v2463 = vcombine.high %v2441, %v2441
        %v2464 = vcombine.high %v2448, %v2448
        %v2465 = vcombine.high %v2455, %v2455
        %v2466 = vcombine.high %v2462, %v2462
        %v2611 = vcombine.high %v1605, %v1605
        %v2613 = vunpack.c.l.s4 1966171168
        %v2614 = vunpack.c.0.s8 %v2613
        %v2615 = vlaneseq
        %v2616 = vshrl.u32 %v2615, 7
        %v2617 = vsub.s32 %v2614, %v2616
        %v2618 = vrot.slane %v1605, %v2617
        %v2620 = vunpack.c.l.s4 1966171168
        %v2621 = vunpack.c.0.s8 %v2620
        %v2622 = vlaneseq
        %v2623 = vshrl.u32 %v2622, 7
        %v2624 = vsub.s32 %v2621, %v2623
        %v2625 = vrot.slane %v2611, %v2624
        %v2626 = vcombine.high %v2618, %v2618
        %v2627 = vcombine.high %v2625, %v2625
        %v2629 = vunpack.c.l.s4 1966171168
        %v2630 = vunpack.c.0.s8 %v2629
        %v2631 = vlaneseq
        %v2632 = vshrl.u32 %v2631, 7
        %v2633 = vsub.s32 %v2630, %v2632
        %v2634 = vrot.slane %v2618, %v2633
        %v2636 = vunpack.c.l.s4 1966171168
        %v2637 = vunpack.c.0.s8 %v2636
        %v2638 = vlaneseq
        %v2639 = vshrl.u32 %v2638, 7
        %v2640 = vsub.s32 %v2637, %v2639
        %v2641 = vrot.slane %v2625, %v2640
        %v2643 = vunpack.c.l.s4 1966171168
        %v2644 = vunpack.c.0.s8 %v2643
        %v2645 = vlaneseq
        %v2646 = vshrl.u32 %v2645, 7
        %v2647 = vsub.s32 %v2644, %v2646
        %v2648 = vrot.slane %v2626, %v2647
        %v2650 = vunpack.c.l.s4 1966171168
        %v2651 = vunpack.c.0.s8 %v2650
        %v2652 = vlaneseq
        %v2653 = vshrl.u32 %v2652, 7
        %v2654 = vsub.s32 %v2651, %v2653
        %v2655 = vrot.slane %v2627, %v2654
        %v2656 = vcombine.high %v2634, %v2634
        %v2657 = vcombine.high %v2641, %v2641
        %v2658 = vcombine.high %v2648, %v2648
        %v2659 = vcombine.high %v2655, %v2655
        %v2660 = vcombine.high %v1608, %v1608
        %v2662 = vunpack.c.l.s4 1966171168
        %v2663 = vunpack.c.0.s8 %v2662
        %v2664 = vlaneseq
        %v2665 = vshrl.u32 %v2664, 7
        %v2666 = vsub.s32 %v2663, %v2665
        %v2667 = vrot.slane %v1608, %v2666
        %v2669 = vunpack.c.l.s4 1966171168
        %v2670 = vunpack.c.0.s8 %v2669
        %v2671 = vlaneseq
        %v2672 = vshrl.u32 %v2671, 7
        %v2673 = vsub.s32 %v2670, %v2672
        %v2674 = vrot.slane %v2660, %v2673
        %v2675 = vcombine.high %v2667, %v2667
        %v2676 = vcombine.high %v2674, %v2674
        %v2678 = vunpack.c.l.s4 1966171168
        %v2679 = vunpack.c.0.s8 %v2678
        %v2680 = vlaneseq
        %v2681 = vshrl.u32 %v2680, 7
        %v2682 = vsub.s32 %v2679, %v2681
        %v2683 = vrot.slane %v2667, %v2682
        %v2685 = vunpack.c.l.s4 1966171168
        %v2686 = vunpack.c.0.s8 %v2685
        %v2687 = vlaneseq
        %v2688 = vshrl.u32 %v2687, 7
        %v2689 = vsub.s32 %v2686, %v2688
        %v2690 = vrot.slane %v2674, %v2689
        %v2692 = vunpack.c.l.s4 1966171168
        %v2693 = vunpack.c.0.s8 %v2692
        %v2694 = vlaneseq
        %v2695 = vshrl.u32 %v2694, 7
        %v2696 = vsub.s32 %v2693, %v2695
        %v2697 = vrot.slane %v2675, %v2696
        %v2699 = vunpack.c.l.s4 1966171168
        %v2700 = vunpack.c.0.s8 %v2699
        %v2701 = vlaneseq
        %v2702 = vshrl.u32 %v2701, 7
        %v2703 = vsub.s32 %v2700, %v2702
        %v2704 = vrot.slane %v2676, %v2703
        %v2705 = vcombine.high %v2683, %v2683
        %v2706 = vcombine.high %v2690, %v2690
        %v2707 = vcombine.high %v2697, %v2697
        %v2708 = vcombine.high %v2704, %v2704
        %v2709 = vcombine.high %v1613, %v1613
        %v2711 = vunpack.c.l.s4 1966171168
        %v2712 = vunpack.c.0.s8 %v2711
        %v2713 = vlaneseq
        %v2714 = vshrl.u32 %v2713, 7
        %v2715 = vsub.s32 %v2712, %v2714
        %v2716 = vrot.slane %v1613, %v2715
        %v2718 = vunpack.c.l.s4 1966171168
        %v2719 = vunpack.c.0.s8 %v2718
        %v2720 = vlaneseq
        %v2721 = vshrl.u32 %v2720, 7
        %v2722 = vsub.s32 %v2719, %v2721
        %v2723 = vrot.slane %v2709, %v2722
        %v2724 = vcombine.high %v2716, %v2716
        %v2725 = vcombine.high %v2723, %v2723
        %v2727 = vunpack.c.l.s4 1966171168
        %v2728 = vunpack.c.0.s8 %v2727
        %v2729 = vlaneseq
        %v2730 = vshrl.u32 %v2729, 7
        %v2731 = vsub.s32 %v2728, %v2730
        %v2732 = vrot.slane %v2716, %v2731
        %v2734 = vunpack.c.l.s4 1966171168
        %v2735 = vunpack.c.0.s8 %v2734
        %v2736 = vlaneseq
        %v2737 = vshrl.u32 %v2736, 7
        %v2738 = vsub.s32 %v2735, %v2737
        %v2739 = vrot.slane %v2723, %v2738
        %v2741 = vunpack.c.l.s4 1966171168
        %v2742 = vunpack.c.0.s8 %v2741
        %v2743 = vlaneseq
        %v2744 = vshrl.u32 %v2743, 7
        %v2745 = vsub.s32 %v2742, %v2744
        %v2746 = vrot.slane %v2724, %v2745
        %v2748 = vunpack.c.l.s4 1966171168
        %v2749 = vunpack.c.0.s8 %v2748
        %v2750 = vlaneseq
        %v2751 = vshrl.u32 %v2750, 7
        %v2752 = vsub.s32 %v2749, %v2751
        %v2753 = vrot.slane %v2725, %v2752
        %v2754 = vcombine.high %v2732, %v2732
        %v2755 = vcombine.high %v2739, %v2739
        %v2756 = vcombine.high %v2746, %v2746
        %v2757 = vcombine.high %v2753, %v2753
        %v2758 = vcombine.high %v1616, %v1616
        %v2760 = vunpack.c.l.s4 1966171168
        %v2761 = vunpack.c.0.s8 %v2760
        %v2762 = vlaneseq
        %v2763 = vshrl.u32 %v2762, 7
        %v2764 = vsub.s32 %v2761, %v2763
        %v2765 = vrot.slane %v1616, %v2764
        %v2767 = vunpack.c.l.s4 1966171168
        %v2768 = vunpack.c.0.s8 %v2767
        %v2769 = vlaneseq
        %v2770 = vshrl.u32 %v2769, 7
        %v2771 = vsub.s32 %v2768, %v2770
        %v2772 = vrot.slane %v2758, %v2771
        %v2773 = vcombine.high %v2765, %v2765
        %v2774 = vcombine.high %v2772, %v2772
        %v2776 = vunpack.c.l.s4 1966171168
        %v2777 = vunpack.c.0.s8 %v2776
        %v2778 = vlaneseq
        %v2779 = vshrl.u32 %v2778, 7
        %v2780 = vsub.s32 %v2777, %v2779
        %v2781 = vrot.slane %v2765, %v2780
        %v2783 = vunpack.c.l.s4 1966171168
        %v2784 = vunpack.c.0.s8 %v2783
        %v2785 = vlaneseq
        %v2786 = vshrl.u32 %v2785, 7
        %v2787 = vsub.s32 %v2784, %v2786
        %v2788 = vrot.slane %v2772, %v2787
        %v2790 = vunpack.c.l.s4 1966171168
        %v2791 = vunpack.c.0.s8 %v2790
        %v2792 = vlaneseq
        %v2793 = vshrl.u32 %v2792, 7
        %v2794 = vsub.s32 %v2791, %v2793
        %v2795 = vrot.slane %v2773, %v2794
        %v2797 = vunpack.c.l.s4 1966171168
        %v2798 = vunpack.c.0.s8 %v2797
        %v2799 = vlaneseq
        %v2800 = vshrl.u32 %v2799, 7
        %v2801 = vsub.s32 %v2798, %v2800
        %v2802 = vrot.slane %v2774, %v2801
        %v2803 = vcombine.high %v2781, %v2781
        %v2804 = vcombine.high %v2788, %v2788
        %v2805 = vcombine.high %v2795, %v2795
        %v2806 = vcombine.high %v2802, %v2802
        %v2807 = vcombine.high %v1621, %v1621
        %v2809 = vunpack.c.l.s4 1966171168
        %v2810 = vunpack.c.0.s8 %v2809
        %v2811 = vlaneseq
        %v2812 = vshrl.u32 %v2811, 7
        %v2813 = vsub.s32 %v2810, %v2812
        %v2814 = vrot.slane %v1621, %v2813
        %v2816 = vunpack.c.l.s4 1966171168
        %v2817 = vunpack.c.0.s8 %v2816
        %v2818 = vlaneseq
        %v2819 = vshrl.u32 %v2818, 7
        %v2820 = vsub.s32 %v2817, %v2819
        %v2821 = vrot.slane %v2807, %v2820
        %v2822 = vcombine.high %v2814, %v2814
        %v2823 = vcombine.high %v2821, %v2821
        %v2825 = vunpack.c.l.s4 1966171168
        %v2826 = vunpack.c.0.s8 %v2825
        %v2827 = vlaneseq
        %v2828 = vshrl.u32 %v2827, 7
        %v2829 = vsub.s32 %v2826, %v2828
        %v2830 = vrot.slane %v2814, %v2829
        %v2832 = vunpack.c.l.s4 1966171168
        %v2833 = vunpack.c.0.s8 %v2832
        %v2834 = vlaneseq
        %v2835 = vshrl.u32 %v2834, 7
        %v2836 = vsub.s32 %v2833, %v2835
        %v2837 = vrot.slane %v2821, %v2836
        %v2839 = vunpack.c.l.s4 1966171168
        %v2840 = vunpack.c.0.s8 %v2839
        %v2841 = vlaneseq
        %v2842 = vshrl.u32 %v2841, 7
        %v2843 = vsub.s32 %v2840, %v2842
        %v2844 = vrot.slane %v2822, %v2843
        %v2846 = vunpack.c.l.s4 1966171168
        %v2847 = vunpack.c.0.s8 %v2846
        %v2848 = vlaneseq
        %v2849 = vshrl.u32 %v2848, 7
        %v2850 = vsub.s32 %v2847, %v2849
        %v2851 = vrot.slane %v2823, %v2850
        %v2852 = vcombine.high %v2830, %v2830
        %v2853 = vcombine.high %v2837, %v2837
        %v2854 = vcombine.high %v2844, %v2844
        %v2855 = vcombine.high %v2851, %v2851
        %v2856 = vcombine.high %v1624, %v1624
        %v2858 = vunpack.c.l.s4 1966171168
        %v2859 = vunpack.c.0.s8 %v2858
        %v2860 = vlaneseq
        %v2861 = vshrl.u32 %v2860, 7
        %v2862 = vsub.s32 %v2859, %v2861
        %v2863 = vrot.slane %v1624, %v2862
        %v2865 = vunpack.c.l.s4 1966171168
        %v2866 = vunpack.c.0.s8 %v2865
        %v2867 = vlaneseq
        %v2868 = vshrl.u32 %v2867, 7
        %v2869 = vsub.s32 %v2866, %v2868
        %v2870 = vrot.slane %v2856, %v2869
        %v2871 = vcombine.high %v2863, %v2863
        %v2872 = vcombine.high %v2870, %v2870
        %v2874 = vunpack.c.l.s4 1966171168
        %v2875 = vunpack.c.0.s8 %v2874
        %v2876 = vlaneseq
        %v2877 = vshrl.u32 %v2876, 7
        %v2878 = vsub.s32 %v2875, %v2877
        %v2879 = vrot.slane %v2863, %v2878
        %v2881 = vunpack.c.l.s4 1966171168
        %v2882 = vunpack.c.0.s8 %v2881
        %v2883 = vlaneseq
        %v2884 = vshrl.u32 %v2883, 7
        %v2885 = vsub.s32 %v2882, %v2884
        %v2886 = vrot.slane %v2870, %v2885
        %v2888 = vunpack.c.l.s4 1966171168
        %v2889 = vunpack.c.0.s8 %v2888
        %v2890 = vlaneseq
        %v2891 = vshrl.u32 %v2890, 7
        %v2892 = vsub.s32 %v2889, %v2891
        %v2893 = vrot.slane %v2871, %v2892
        %v2895 = vunpack.c.l.s4 1966171168
        %v2896 = vunpack.c.0.s8 %v2895
        %v2897 = vlaneseq
        %v2898 = vshrl.u32 %v2897, 7
        %v2899 = vsub.s32 %v2896, %v2898
        %v2900 = vrot.slane %v2872, %v2899
        %v2901 = vcombine.high %v2879, %v2879
        %v2902 = vcombine.high %v2886, %v2886
        %v2903 = vcombine.high %v2893, %v2893
        %v2904 = vcombine.high %v2900, %v2900
        %v2905 = vcombine.high %v1629, %v1629
        %v2907 = vunpack.c.l.s4 1966171168
        %v2908 = vunpack.c.0.s8 %v2907
        %v2909 = vlaneseq
        %v2910 = vshrl.u32 %v2909, 7
        %v2911 = vsub.s32 %v2908, %v2910
        %v2912 = vrot.slane %v1629, %v2911
        %v2914 = vunpack.c.l.s4 1966171168
        %v2915 = vunpack.c.0.s8 %v2914
        %v2916 = vlaneseq
        %v2917 = vshrl.u32 %v2916, 7
        %v2918 = vsub.s32 %v2915, %v2917
        %v2919 = vrot.slane %v2905, %v2918
        %v2920 = vcombine.high %v2912, %v2912
        %v2921 = vcombine.high %v2919, %v2919
        %v2923 = vunpack.c.l.s4 1966171168
        %v2924 = vunpack.c.0.s8 %v2923
        %v2925 = vlaneseq
        %v2926 = vshrl.u32 %v2925, 7
        %v2927 = vsub.s32 %v2924, %v2926
        %v2928 = vrot.slane %v2912, %v2927
        %v2930 = vunpack.c.l.s4 1966171168
        %v2931 = vunpack.c.0.s8 %v2930
        %v2932 = vlaneseq
        %v2933 = vshrl.u32 %v2932, 7
        %v2934 = vsub.s32 %v2931, %v2933
        %v2935 = vrot.slane %v2919, %v2934
        %v2937 = vunpack.c.l.s4 1966171168
        %v2938 = vunpack.c.0.s8 %v2937
        %v2939 = vlaneseq
        %v2940 = vshrl.u32 %v2939, 7
        %v2941 = vsub.s32 %v2938, %v2940
        %v2942 = vrot.slane %v2920, %v2941
        %v2944 = vunpack.c.l.s4 1966171168
        %v2945 = vunpack.c.0.s8 %v2944
        %v2946 = vlaneseq
        %v2947 = vshrl.u32 %v2946, 7
        %v2948 = vsub.s32 %v2945, %v2947
        %v2949 = vrot.slane %v2921, %v2948
        %v2950 = vcombine.high %v2928, %v2928
        %v2951 = vcombine.high %v2935, %v2935
        %v2952 = vcombine.high %v2942, %v2942
        %v2953 = vcombine.high %v2949, %v2949
        %v2954 = vcombine.high %v1632, %v1632
        %v2956 = vunpack.c.l.s4 1966171168
        %v2957 = vunpack.c.0.s8 %v2956
        %v2958 = vlaneseq
        %v2959 = vshrl.u32 %v2958, 7
        %v2960 = vsub.s32 %v2957, %v2959
        %v2961 = vrot.slane %v1632, %v2960
        %v2963 = vunpack.c.l.s4 1966171168
        %v2964 = vunpack.c.0.s8 %v2963
        %v2965 = vlaneseq
        %v2966 = vshrl.u32 %v2965, 7
        %v2967 = vsub.s32 %v2964, %v2966
        %v2968 = vrot.slane %v2954, %v2967
        %v2969 = vcombine.high %v2961, %v2961
        %v2970 = vcombine.high %v2968, %v2968
        %v2972 = vunpack.c.l.s4 1966171168
        %v2973 = vunpack.c.0.s8 %v2972
        %v2974 = vlaneseq
        %v2975 = vshrl.u32 %v2974, 7
        %v2976 = vsub.s32 %v2973, %v2975
        %v2977 = vrot.slane %v2961, %v2976
        %v2979 = vunpack.c.l.s4 1966171168
        %v2980 = vunpack.c.0.s8 %v2979
        %v2981 = vlaneseq
        %v2982 = vshrl.u32 %v2981, 7
        %v2983 = vsub.s32 %v2980, %v2982
        %v2984 = vrot.slane %v2968, %v2983
        %v2986 = vunpack.c.l.s4 1966171168
        %v2987 = vunpack.c.0.s8 %v2986
        %v2988 = vlaneseq
        %v2989 = vshrl.u32 %v2988, 7
        %v2990 = vsub.s32 %v2987, %v2989
        %v2991 = vrot.slane %v2969, %v2990
        %v2993 = vunpack.c.l.s4 1966171168
        %v2994 = vunpack.c.0.s8 %v2993
        %v2995 = vlaneseq
        %v2996 = vshrl.u32 %v2995, 7
        %v2997 = vsub.s32 %v2994, %v2996
        %v2998 = vrot.slane %v2970, %v2997
        %v2999 = vcombine.high %v2977, %v2977
        %v3000 = vcombine.high %v2984, %v2984
        %v3001 = vcombine.high %v2991, %v2991
        %v3002 = vcombine.high %v2998, %v2998
        %v3003 = vcombine.high %v1637, %v1637
        %v3005 = vunpack.c.l.s4 1966171168
        %v3006 = vunpack.c.0.s8 %v3005
        %v3007 = vlaneseq
        %v3008 = vshrl.u32 %v3007, 7
        %v3009 = vsub.s32 %v3006, %v3008
        %v3010 = vrot.slane %v1637, %v3009
        %v3012 = vunpack.c.l.s4 1966171168
        %v3013 = vunpack.c.0.s8 %v3012
        %v3014 = vlaneseq
        %v3015 = vshrl.u32 %v3014, 7
        %v3016 = vsub.s32 %v3013, %v3015
        %v3017 = vrot.slane %v3003, %v3016
        %v3018 = vcombine.high %v3010, %v3010
        %v3019 = vcombine.high %v3017, %v3017
        %v3021 = vunpack.c.l.s4 1966171168
        %v3022 = vunpack.c.0.s8 %v3021
        %v3023 = vlaneseq
        %v3024 = vshrl.u32 %v3023, 7
        %v3025 = vsub.s32 %v3022, %v3024
        %v3026 = vrot.slane %v3010, %v3025
        %v3028 = vunpack.c.l.s4 1966171168
        %v3029 = vunpack.c.0.s8 %v3028
        %v3030 = vlaneseq
        %v3031 = vshrl.u32 %v3030, 7
        %v3032 = vsub.s32 %v3029, %v3031
        %v3033 = vrot.slane %v3017, %v3032
        %v3035 = vunpack.c.l.s4 1966171168
        %v3036 = vunpack.c.0.s8 %v3035
        %v3037 = vlaneseq
        %v3038 = vshrl.u32 %v3037, 7
        %v3039 = vsub.s32 %v3036, %v3038
        %v3040 = vrot.slane %v3018, %v3039
        %v3042 = vunpack.c.l.s4 1966171168
        %v3043 = vunpack.c.0.s8 %v3042
        %v3044 = vlaneseq
        %v3045 = vshrl.u32 %v3044, 7
        %v3046 = vsub.s32 %v3043, %v3045
        %v3047 = vrot.slane %v3019, %v3046
        %v3048 = vcombine.high %v3026, %v3026
        %v3049 = vcombine.high %v3033, %v3033
        %v3050 = vcombine.high %v3040, %v3040
        %v3051 = vcombine.high %v3047, %v3047
        %v3052 = vcombine.high %v1640, %v1640
        %v3054 = vunpack.c.l.s4 1966171168
        %v3055 = vunpack.c.0.s8 %v3054
        %v3056 = vlaneseq
        %v3057 = vshrl.u32 %v3056, 7
        %v3058 = vsub.s32 %v3055, %v3057
        %v3059 = vrot.slane %v1640, %v3058
        %v3061 = vunpack.c.l.s4 1966171168
        %v3062 = vunpack.c.0.s8 %v3061
        %v3063 = vlaneseq
        %v3064 = vshrl.u32 %v3063, 7
        %v3065 = vsub.s32 %v3062, %v3064
        %v3066 = vrot.slane %v3052, %v3065
        %v3067 = vcombine.high %v3059, %v3059
        %v3068 = vcombine.high %v3066, %v3066
        %v3070 = vunpack.c.l.s4 1966171168
        %v3071 = vunpack.c.0.s8 %v3070
        %v3072 = vlaneseq
        %v3073 = vshrl.u32 %v3072, 7
        %v3074 = vsub.s32 %v3071, %v3073
        %v3075 = vrot.slane %v3059, %v3074
        %v3077 = vunpack.c.l.s4 1966171168
        %v3078 = vunpack.c.0.s8 %v3077
        %v3079 = vlaneseq
        %v3080 = vshrl.u32 %v3079, 7
        %v3081 = vsub.s32 %v3078, %v3080
        %v3082 = vrot.slane %v3066, %v3081
        %v3084 = vunpack.c.l.s4 1966171168
        %v3085 = vunpack.c.0.s8 %v3084
        %v3086 = vlaneseq
        %v3087 = vshrl.u32 %v3086, 7
        %v3088 = vsub.s32 %v3085, %v3087
        %v3089 = vrot.slane %v3067, %v3088
        %v3091 = vunpack.c.l.s4 1966171168
        %v3092 = vunpack.c.0.s8 %v3091
        %v3093 = vlaneseq
        %v3094 = vshrl.u32 %v3093, 7
        %v3095 = vsub.s32 %v3092, %v3094
        %v3096 = vrot.slane %v3068, %v3095
        %v3097 = vcombine.high %v3075, %v3075
        %v3098 = vcombine.high %v3082, %v3082
        %v3099 = vcombine.high %v3089, %v3089
        %v3100 = vcombine.high %v3096, %v3096
        %v3101 = vcombine.high %v1645, %v1645
        %v3103 = vunpack.c.l.s4 1966171168
        %v3104 = vunpack.c.0.s8 %v3103
        %v3105 = vlaneseq
        %v3106 = vshrl.u32 %v3105, 7
        %v3107 = vsub.s32 %v3104, %v3106
        %v3108 = vrot.slane %v1645, %v3107
        %v3110 = vunpack.c.l.s4 1966171168
        %v3111 = vunpack.c.0.s8 %v3110
        %v3112 = vlaneseq
        %v3113 = vshrl.u32 %v3112, 7
        %v3114 = vsub.s32 %v3111, %v3113
        %v3115 = vrot.slane %v3101, %v3114
        %v3116 = vcombine.high %v3108, %v3108
        %v3117 = vcombine.high %v3115, %v3115
        %v3119 = vunpack.c.l.s4 1966171168
        %v3120 = vunpack.c.0.s8 %v3119
        %v3121 = vlaneseq
        %v3122 = vshrl.u32 %v3121, 7
        %v3123 = vsub.s32 %v3120, %v3122
        %v3124 = vrot.slane %v3108, %v3123
        %v3126 = vunpack.c.l.s4 1966171168
        %v3127 = vunpack.c.0.s8 %v3126
        %v3128 = vlaneseq
        %v3129 = vshrl.u32 %v3128, 7
        %v3130 = vsub.s32 %v3127, %v3129
        %v3131 = vrot.slane %v3115, %v3130
        %v3133 = vunpack.c.l.s4 1966171168
        %v3134 = vunpack.c.0.s8 %v3133
        %v3135 = vlaneseq
        %v3136 = vshrl.u32 %v3135, 7
        %v3137 = vsub.s32 %v3134, %v3136
        %v3138 = vrot.slane %v3116, %v3137
        %v3140 = vunpack.c.l.s4 1966171168
        %v3141 = vunpack.c.0.s8 %v3140
        %v3142 = vlaneseq
        %v3143 = vshrl.u32 %v3142, 7
        %v3144 = vsub.s32 %v3141, %v3143
        %v3145 = vrot.slane %v3117, %v3144
        %v3146 = vcombine.high %v3124, %v3124
        %v3147 = vcombine.high %v3131, %v3131
        %v3148 = vcombine.high %v3138, %v3138
        %v3149 = vcombine.high %v3145, %v3145
        %v3150 = vcombine.high %v1648, %v1648
        %v3152 = vunpack.c.l.s4 1966171168
        %v3153 = vunpack.c.0.s8 %v3152
        %v3154 = vlaneseq
        %v3155 = vshrl.u32 %v3154, 7
        %v3156 = vsub.s32 %v3153, %v3155
        %v3157 = vrot.slane %v1648, %v3156
        %v3159 = vunpack.c.l.s4 1966171168
        %v3160 = vunpack.c.0.s8 %v3159
        %v3161 = vlaneseq
        %v3162 = vshrl.u32 %v3161, 7
        %v3163 = vsub.s32 %v3160, %v3162
        %v3164 = vrot.slane %v3150, %v3163
        %v3165 = vcombine.high %v3157, %v3157
        %v3166 = vcombine.high %v3164, %v3164
        %v3168 = vunpack.c.l.s4 1966171168
        %v3169 = vunpack.c.0.s8 %v3168
        %v3170 = vlaneseq
        %v3171 = vshrl.u32 %v3170, 7
        %v3172 = vsub.s32 %v3169, %v3171
        %v3173 = vrot.slane %v3157, %v3172
        %v3175 = vunpack.c.l.s4 1966171168
        %v3176 = vunpack.c.0.s8 %v3175
        %v3177 = vlaneseq
        %v3178 = vshrl.u32 %v3177, 7
        %v3179 = vsub.s32 %v3176, %v3178
        %v3180 = vrot.slane %v3164, %v3179
        %v3182 = vunpack.c.l.s4 1966171168
        %v3183 = vunpack.c.0.s8 %v3182
        %v3184 = vlaneseq
        %v3185 = vshrl.u32 %v3184, 7
        %v3186 = vsub.s32 %v3183, %v3185
        %v3187 = vrot.slane %v3165, %v3186
        %v3189 = vunpack.c.l.s4 1966171168
        %v3190 = vunpack.c.0.s8 %v3189
        %v3191 = vlaneseq
        %v3192 = vshrl.u32 %v3191, 7
        %v3193 = vsub.s32 %v3190, %v3192
        %v3194 = vrot.slane %v3166, %v3193
        %v3195 = vcombine.high %v3173, %v3173
        %v3196 = vcombine.high %v3180, %v3180
        %v3197 = vcombine.high %v3187, %v3187
        %v3198 = vcombine.high %v3194, %v3194
        %v3199 = vcombine.high %v1653, %v1653
        %v3201 = vunpack.c.l.s4 1966171168
        %v3202 = vunpack.c.0.s8 %v3201
        %v3203 = vlaneseq
        %v3204 = vshrl.u32 %v3203, 7
        %v3205 = vsub.s32 %v3202, %v3204
        %v3206 = vrot.slane %v1653, %v3205
        %v3208 = vunpack.c.l.s4 1966171168
        %v3209 = vunpack.c.0.s8 %v3208
        %v3210 = vlaneseq
        %v3211 = vshrl.u32 %v3210, 7
        %v3212 = vsub.s32 %v3209, %v3211
        %v3213 = vrot.slane %v3199, %v3212
        %v3214 = vcombine.high %v3206, %v3206
        %v3215 = vcombine.high %v3213, %v3213
        %v3217 = vunpack.c.l.s4 1966171168
        %v3218 = vunpack.c.0.s8 %v3217
        %v3219 = vlaneseq
        %v3220 = vshrl.u32 %v3219, 7
        %v3221 = vsub.s32 %v3218, %v3220
        %v3222 = vrot.slane %v3206, %v3221
        %v3224 = vunpack.c.l.s4 1966171168
        %v3225 = vunpack.c.0.s8 %v3224
        %v3226 = vlaneseq
        %v3227 = vshrl.u32 %v3226, 7
        %v3228 = vsub.s32 %v3225, %v3227
        %v3229 = vrot.slane %v3213, %v3228
        %v3231 = vunpack.c.l.s4 1966171168
        %v3232 = vunpack.c.0.s8 %v3231
        %v3233 = vlaneseq
        %v3234 = vshrl.u32 %v3233, 7
        %v3235 = vsub.s32 %v3232, %v3234
        %v3236 = vrot.slane %v3214, %v3235
        %v3238 = vunpack.c.l.s4 1966171168
        %v3239 = vunpack.c.0.s8 %v3238
        %v3240 = vlaneseq
        %v3241 = vshrl.u32 %v3240, 7
        %v3242 = vsub.s32 %v3239, %v3241
        %v3243 = vrot.slane %v3215, %v3242
        %v3244 = vcombine.high %v3222, %v3222
        %v3245 = vcombine.high %v3229, %v3229
        %v3246 = vcombine.high %v3236, %v3236
        %v3247 = vcombine.high %v3243, %v3243
        %v3248 = vcombine.high %v1656, %v1656
        %v3250 = vunpack.c.l.s4 1966171168
        %v3251 = vunpack.c.0.s8 %v3250
        %v3252 = vlaneseq
        %v3253 = vshrl.u32 %v3252, 7
        %v3254 = vsub.s32 %v3251, %v3253
        %v3255 = vrot.slane %v1656, %v3254
        %v3257 = vunpack.c.l.s4 1966171168
        %v3258 = vunpack.c.0.s8 %v3257
        %v3259 = vlaneseq
        %v3260 = vshrl.u32 %v3259, 7
        %v3261 = vsub.s32 %v3258, %v3260
        %v3262 = vrot.slane %v3248, %v3261
        %v3263 = vcombine.high %v3255, %v3255
        %v3264 = vcombine.high %v3262, %v3262
        %v3266 = vunpack.c.l.s4 1966171168
        %v3267 = vunpack.c.0.s8 %v3266
        %v3268 = vlaneseq
        %v3269 = vshrl.u32 %v3268, 7
        %v3270 = vsub.s32 %v3267, %v3269
        %v3271 = vrot.slane %v3255, %v3270
        %v3273 = vunpack.c.l.s4 1966171168
        %v3274 = vunpack.c.0.s8 %v3273
        %v3275 = vlaneseq
        %v3276 = vshrl.u32 %v3275, 7
        %v3277 = vsub.s32 %v3274, %v3276
        %v3278 = vrot.slane %v3262, %v3277
        %v3280 = vunpack.c.l.s4 1966171168
        %v3281 = vunpack.c.0.s8 %v3280
        %v3282 = vlaneseq
        %v3283 = vshrl.u32 %v3282, 7
        %v3284 = vsub.s32 %v3281, %v3283
        %v3285 = vrot.slane %v3263, %v3284
        %v3287 = vunpack.c.l.s4 1966171168
        %v3288 = vunpack.c.0.s8 %v3287
        %v3289 = vlaneseq
        %v3290 = vshrl.u32 %v3289, 7
        %v3291 = vsub.s32 %v3288, %v3290
        %v3292 = vrot.slane %v3264, %v3291
        %v3293 = vcombine.high %v3271, %v3271
        %v3294 = vcombine.high %v3278, %v3278
        %v3295 = vcombine.high %v3285, %v3285
        %v3296 = vcombine.high %v3292, %v3292
        %v3297 = vcombine.high %v1661, %v1661
        %v3299 = vunpack.c.l.s4 1966171168
        %v3300 = vunpack.c.0.s8 %v3299
        %v3301 = vlaneseq
        %v3302 = vshrl.u32 %v3301, 7
        %v3303 = vsub.s32 %v3300, %v3302
        %v3304 = vrot.slane %v1661, %v3303
        %v3306 = vunpack.c.l.s4 1966171168
        %v3307 = vunpack.c.0.s8 %v3306
        %v3308 = vlaneseq
        %v3309 = vshrl.u32 %v3308, 7
        %v3310 = vsub.s32 %v3307, %v3309
        %v3311 = vrot.slane %v3297, %v3310
        %v3312 = vcombine.high %v3304, %v3304
        %v3313 = vcombine.high %v3311, %v3311
        %v3315 = vunpack.c.l.s4 1966171168
        %v3316 = vunpack.c.0.s8 %v3315
        %v3317 = vlaneseq
        %v3318 = vshrl.u32 %v3317, 7
        %v3319 = vsub.s32 %v3316, %v3318
        %v3320 = vrot.slane %v3304, %v3319
        %v3322 = vunpack.c.l.s4 1966171168
        %v3323 = vunpack.c.0.s8 %v3322
        %v3324 = vlaneseq
        %v3325 = vshrl.u32 %v3324, 7
        %v3326 = vsub.s32 %v3323, %v3325
        %v3327 = vrot.slane %v3311, %v3326
        %v3329 = vunpack.c.l.s4 1966171168
        %v3330 = vunpack.c.0.s8 %v3329
        %v3331 = vlaneseq
        %v3332 = vshrl.u32 %v3331, 7
        %v3333 = vsub.s32 %v3330, %v3332
        %v3334 = vrot.slane %v3312, %v3333
        %v3336 = vunpack.c.l.s4 1966171168
        %v3337 = vunpack.c.0.s8 %v3336
        %v3338 = vlaneseq
        %v3339 = vshrl.u32 %v3338, 7
        %v3340 = vsub.s32 %v3337, %v3339
        %v3341 = vrot.slane %v3313, %v3340
        %v3342 = vcombine.high %v3320, %v3320
        %v3343 = vcombine.high %v3327, %v3327
        %v3344 = vcombine.high %v3334, %v3334
        %v3345 = vcombine.high %v3341, %v3341
        %v3346 = vcombine.high %v1664, %v1664
        %v3348 = vunpack.c.l.s4 1966171168
        %v3349 = vunpack.c.0.s8 %v3348
        %v3350 = vlaneseq
        %v3351 = vshrl.u32 %v3350, 7
        %v3352 = vsub.s32 %v3349, %v3351
        %v3353 = vrot.slane %v1664, %v3352
        %v3355 = vunpack.c.l.s4 1966171168
        %v3356 = vunpack.c.0.s8 %v3355
        %v3357 = vlaneseq
        %v3358 = vshrl.u32 %v3357, 7
        %v3359 = vsub.s32 %v3356, %v3358
        %v3360 = vrot.slane %v3346, %v3359
        %v3361 = vcombine.high %v3353, %v3353
        %v3362 = vcombine.high %v3360, %v3360
        %v3364 = vunpack.c.l.s4 1966171168
        %v3365 = vunpack.c.0.s8 %v3364
        %v3366 = vlaneseq
        %v3367 = vshrl.u32 %v3366, 7
        %v3368 = vsub.s32 %v3365, %v3367
        %v3369 = vrot.slane %v3353, %v3368
        %v3371 = vunpack.c.l.s4 1966171168
        %v3372 = vunpack.c.0.s8 %v3371
        %v3373 = vlaneseq
        %v3374 = vshrl.u32 %v3373, 7
        %v3375 = vsub.s32 %v3372, %v3374
        %v3376 = vrot.slane %v3360, %v3375
        %v3378 = vunpack.c.l.s4 1966171168
        %v3379 = vunpack.c.0.s8 %v3378
        %v3380 = vlaneseq
        %v3381 = vshrl.u32 %v3380, 7
        %v3382 = vsub.s32 %v3379, %v3381
        %v3383 = vrot.slane %v3361, %v3382
        %v3385 = vunpack.c.l.s4 1966171168
        %v3386 = vunpack.c.0.s8 %v3385
        %v3387 = vlaneseq
        %v3388 = vshrl.u32 %v3387, 7
        %v3389 = vsub.s32 %v3386, %v3388
        %v3390 = vrot.slane %v3362, %v3389
        %v3391 = vcombine.high %v3369, %v3369
        %v3392 = vcombine.high %v3376, %v3376
        %v3393 = vcombine.high %v3383, %v3383
        %v3394 = vcombine.high %v3390, %v3390
        %v3395 = vlaneseq
        %v3396 = vshrl.u32 %v3395, 7
        %v3397 = vsub.s32 0, %v3396
        %v3398 = vrot.slane %v2634, %v3397
        %v3399 = vlaneseq
        %v3400 = vshrl.u32 %v3399, 7
        %v3401 = vsub.s32 0, %v3400
        %v3402 = vrot.slane %v2648, %v3401
        %v3403 = vlaneseq
        %v3404 = vshrl.u32 %v3403, 7
        %v3405 = vsub.s32 0, %v3404
        %v3406 = vrot.slane %v2656, %v3405
        %v3407 = vlaneseq
        %v3408 = vshrl.u32 %v3407, 7
        %v3409 = vsub.s32 0, %v3408
        %v3410 = vrot.slane %v2658, %v3409
        %v3411 = vlaneseq
        %v3412 = vshrl.u32 %v3411, 7
        %v3413 = vsub.s32 0, %v3412
        %v3414 = vrot.slane %v2641, %v3413
        %v3415 = vlaneseq
        %v3416 = vshrl.u32 %v3415, 7
        %v3417 = vsub.s32 0, %v3416
        %v3418 = vrot.slane %v2655, %v3417
        %v3419 = vlaneseq
        %v3420 = vshrl.u32 %v3419, 7
        %v3421 = vsub.s32 0, %v3420
        %v3422 = vrot.slane %v2657, %v3421
        %v3423 = vlaneseq
        %v3424 = vshrl.u32 %v3423, 7
        %v3425 = vsub.s32 0, %v3424
        %v3426 = vrot.slane %v2659, %v3425
        %v3427 = vlaneseq
        %v3428 = vshrl.u32 %v3427, 7
        %v3429 = vsub.s32 0, %v3428
        %v3430 = vrot.slane %v2683, %v3429
        %v3431 = vlaneseq
        %v3432 = vshrl.u32 %v3431, 7
        %v3433 = vsub.s32 0, %v3432
        %v3434 = vrot.slane %v2697, %v3433
        %v3435 = vlaneseq
        %v3436 = vshrl.u32 %v3435, 7
        %v3437 = vsub.s32 0, %v3436
        %v3438 = vrot.slane %v2705, %v3437
        %v3439 = vlaneseq
        %v3440 = vshrl.u32 %v3439, 7
        %v3441 = vsub.s32 0, %v3440
        %v3442 = vrot.slane %v2707, %v3441
        %v3443 = vlaneseq
        %v3444 = vshrl.u32 %v3443, 7
        %v3445 = vsub.s32 0, %v3444
        %v3446 = vrot.slane %v2690, %v3445
        %v3447 = vlaneseq
        %v3448 = vshrl.u32 %v3447, 7
        %v3449 = vsub.s32 0, %v3448
        %v3450 = vrot.slane %v2704, %v3449
        %v3451 = vlaneseq
        %v3452 = vshrl.u32 %v3451, 7
        %v3453 = vsub.s32 0, %v3452
        %v3454 = vrot.slane %v2706, %v3453
        %v3455 = vlaneseq
        %v3456 = vshrl.u32 %v3455, 7
        %v3457 = vsub.s32 0, %v3456
        %v3458 = vrot.slane %v2708, %v3457
        %v3459 = vlaneseq
        %v3460 = vshrl.u32 %v3459, 7
        %v3461 = vsub.s32 0, %v3460
        %v3462 = vrot.slane %v2732, %v3461
        %v3463 = vlaneseq
        %v3464 = vshrl.u32 %v3463, 7
        %v3465 = vsub.s32 0, %v3464
        %v3466 = vrot.slane %v2746, %v3465
        %v3467 = vlaneseq
        %v3468 = vshrl.u32 %v3467, 7
        %v3469 = vsub.s32 0, %v3468
        %v3470 = vrot.slane %v2754, %v3469
        %v3471 = vlaneseq
        %v3472 = vshrl.u32 %v3471, 7
        %v3473 = vsub.s32 0, %v3472
        %v3474 = vrot.slane %v2756, %v3473
        %v3475 = vlaneseq
        %v3476 = vshrl.u32 %v3475, 7
        %v3477 = vsub.s32 0, %v3476
        %v3478 = vrot.slane %v2739, %v3477
        %v3479 = vlaneseq
        %v3480 = vshrl.u32 %v3479, 7
        %v3481 = vsub.s32 0, %v3480
        %v3482 = vrot.slane %v2753, %v3481
        %v3483 = vlaneseq
        %v3484 = vshrl.u32 %v3483, 7
        %v3485 = vsub.s32 0, %v3484
        %v3486 = vrot.slane %v2755, %v3485
        %v3487 = vlaneseq
        %v3488 = vshrl.u32 %v3487, 7
        %v3489 = vsub.s32 0, %v3488
        %v3490 = vrot.slane %v2757, %v3489
        %v3491 = vlaneseq
        %v3492 = vshrl.u32 %v3491, 7
        %v3493 = vsub.s32 0, %v3492
        %v3494 = vrot.slane %v2781, %v3493
        %v3495 = vlaneseq
        %v3496 = vshrl.u32 %v3495, 7
        %v3497 = vsub.s32 0, %v3496
        %v3498 = vrot.slane %v2795, %v3497
        %v3499 = vlaneseq
        %v3500 = vshrl.u32 %v3499, 7
        %v3501 = vsub.s32 0, %v3500
        %v3502 = vrot.slane %v2803, %v3501
        %v3503 = vlaneseq
        %v3504 = vshrl.u32 %v3503, 7
        %v3505 = vsub.s32 0, %v3504
        %v3506 = vrot.slane %v2805, %v3505
        %v3507 = vlaneseq
        %v3508 = vshrl.u32 %v3507, 7
        %v3509 = vsub.s32 0, %v3508
        %v3510 = vrot.slane %v2788, %v3509
        %v3511 = vlaneseq
        %v3512 = vshrl.u32 %v3511, 7
        %v3513 = vsub.s32 0, %v3512
        %v3514 = vrot.slane %v2802, %v3513
        %v3515 = vlaneseq
        %v3516 = vshrl.u32 %v3515, 7
        %v3517 = vsub.s32 0, %v3516
        %v3518 = vrot.slane %v2804, %v3517
        %v3519 = vlaneseq
        %v3520 = vshrl.u32 %v3519, 7
        %v3521 = vsub.s32 0, %v3520
        %v3522 = vrot.slane %v2806, %v3521
        %v3523 = vlaneseq
        %v3524 = vshrl.u32 %v3523, 7
        %v3525 = vsub.s32 0, %v3524
        %v3526 = vrot.slane %v2830, %v3525
        %v3527 = vlaneseq
        %v3528 = vshrl.u32 %v3527, 7
        %v3529 = vsub.s32 0, %v3528
        %v3530 = vrot.slane %v2844, %v3529
        %v3531 = vlaneseq
        %v3532 = vshrl.u32 %v3531, 7
        %v3533 = vsub.s32 0, %v3532
        %v3534 = vrot.slane %v2852, %v3533
        %v3535 = vlaneseq
        %v3536 = vshrl.u32 %v3535, 7
        %v3537 = vsub.s32 0, %v3536
        %v3538 = vrot.slane %v2854, %v3537
        %v3539 = vlaneseq
        %v3540 = vshrl.u32 %v3539, 7
        %v3541 = vsub.s32 0, %v3540
        %v3542 = vrot.slane %v2837, %v3541
        %v3543 = vlaneseq
        %v3544 = vshrl.u32 %v3543, 7
        %v3545 = vsub.s32 0, %v3544
        %v3546 = vrot.slane %v2851, %v3545
        %v3547 = vlaneseq
        %v3548 = vshrl.u32 %v3547, 7
        %v3549 = vsub.s32 0, %v3548
        %v3550 = vrot.slane %v2853, %v3549
        %v3551 = vlaneseq
        %v3552 = vshrl.u32 %v3551, 7
        %v3553 = vsub.s32 0, %v3552
        %v3554 = vrot.slane %v2855, %v3553
        %v3555 = vlaneseq
        %v3556 = vshrl.u32 %v3555, 7
        %v3557 = vsub.s32 0, %v3556
        %v3558 = vrot.slane %v2879, %v3557
        %v3559 = vlaneseq
        %v3560 = vshrl.u32 %v3559, 7
        %v3561 = vsub.s32 0, %v3560
        %v3562 = vrot.slane %v2893, %v3561
        %v3563 = vlaneseq
        %v3564 = vshrl.u32 %v3563, 7
        %v3565 = vsub.s32 0, %v3564
        %v3566 = vrot.slane %v2901, %v3565
        %v3567 = vlaneseq
        %v3568 = vshrl.u32 %v3567, 7
        %v3569 = vsub.s32 0, %v3568
        %v3570 = vrot.slane %v2903, %v3569
        %v3571 = vlaneseq
        %v3572 = vshrl.u32 %v3571, 7
        %v3573 = vsub.s32 0, %v3572
        %v3574 = vrot.slane %v2886, %v3573
        %v3575 = vlaneseq
        %v3576 = vshrl.u32 %v3575, 7
        %v3577 = vsub.s32 0, %v3576
        %v3578 = vrot.slane %v2900, %v3577
        %v3579 = vlaneseq
        %v3580 = vshrl.u32 %v3579, 7
        %v3581 = vsub.s32 0, %v3580
        %v3582 = vrot.slane %v2902, %v3581
        %v3583 = vlaneseq
        %v3584 = vshrl.u32 %v3583, 7
        %v3585 = vsub.s32 0, %v3584
        %v3586 = vrot.slane %v2904, %v3585
        %v3587 = vlaneseq
        %v3588 = vshrl.u32 %v3587, 7
        %v3589 = vsub.s32 0, %v3588
        %v3590 = vrot.slane %v2928, %v3589
        %v3591 = vlaneseq
        %v3592 = vshrl.u32 %v3591, 7
        %v3593 = vsub.s32 0, %v3592
        %v3594 = vrot.slane %v2942, %v3593
        %v3595 = vlaneseq
        %v3596 = vshrl.u32 %v3595, 7
        %v3597 = vsub.s32 0, %v3596
        %v3598 = vrot.slane %v2950, %v3597
        %v3599 = vlaneseq
        %v3600 = vshrl.u32 %v3599, 7
        %v3601 = vsub.s32 0, %v3600
        %v3602 = vrot.slane %v2952, %v3601
        %v3603 = vlaneseq
        %v3604 = vshrl.u32 %v3603, 7
        %v3605 = vsub.s32 0, %v3604
        %v3606 = vrot.slane %v2935, %v3605
        %v3607 = vlaneseq
        %v3608 = vshrl.u32 %v3607, 7
        %v3609 = vsub.s32 0, %v3608
        %v3610 = vrot.slane %v2949, %v3609
        %v3611 = vlaneseq
        %v3612 = vshrl.u32 %v3611, 7
        %v3613 = vsub.s32 0, %v3612
        %v3614 = vrot.slane %v2951, %v3613
        %v3615 = vlaneseq
        %v3616 = vshrl.u32 %v3615, 7
        %v3617 = vsub.s32 0, %v3616
        %v3618 = vrot.slane %v2953, %v3617
        %v3619 = vlaneseq
        %v3620 = vshrl.u32 %v3619, 7
        %v3621 = vsub.s32 0, %v3620
        %v3622 = vrot.slane %v2977, %v3621
        %v3623 = vlaneseq
        %v3624 = vshrl.u32 %v3623, 7
        %v3625 = vsub.s32 0, %v3624
        %v3626 = vrot.slane %v2991, %v3625
        %v3627 = vlaneseq
        %v3628 = vshrl.u32 %v3627, 7
        %v3629 = vsub.s32 0, %v3628
        %v3630 = vrot.slane %v2999, %v3629
        %v3631 = vlaneseq
        %v3632 = vshrl.u32 %v3631, 7
        %v3633 = vsub.s32 0, %v3632
        %v3634 = vrot.slane %v3001, %v3633
        %v3635 = vlaneseq
        %v3636 = vshrl.u32 %v3635, 7
        %v3637 = vsub.s32 0, %v3636
        %v3638 = vrot.slane %v2984, %v3637
        %v3639 = vlaneseq
        %v3640 = vshrl.u32 %v3639, 7
        %v3641 = vsub.s32 0, %v3640
        %v3642 = vrot.slane %v2998, %v3641
        %v3643 = vlaneseq
        %v3644 = vshrl.u32 %v3643, 7
        %v3645 = vsub.s32 0, %v3644
        %v3646 = vrot.slane %v3000, %v3645
        %v3647 = vlaneseq
        %v3648 = vshrl.u32 %v3647, 7
        %v3649 = vsub.s32 0, %v3648
        %v3650 = vrot.slane %v3002, %v3649
        %v3651 = vlaneseq
        %v3652 = vshrl.u32 %v3651, 7
        %v3653 = vsub.s32 0, %v3652
        %v3654 = vrot.slane %v3026, %v3653
        %v3655 = vlaneseq
        %v3656 = vshrl.u32 %v3655, 7
        %v3657 = vsub.s32 0, %v3656
        %v3658 = vrot.slane %v3040, %v3657
        %v3659 = vlaneseq
        %v3660 = vshrl.u32 %v3659, 7
        %v3661 = vsub.s32 0, %v3660
        %v3662 = vrot.slane %v3048, %v3661
        %v3663 = vlaneseq
        %v3664 = vshrl.u32 %v3663, 7
        %v3665 = vsub.s32 0, %v3664
        %v3666 = vrot.slane %v3050, %v3665
        %v3667 = vlaneseq
        %v3668 = vshrl.u32 %v3667, 7
        %v3669 = vsub.s32 0, %v3668
        %v3670 = vrot.slane %v3033, %v3669
        %v3671 = vlaneseq
        %v3672 = vshrl.u32 %v3671, 7
        %v3673 = vsub.s32 0, %v3672
        %v3674 = vrot.slane %v3047, %v3673
        %v3675 = vlaneseq
        %v3676 = vshrl.u32 %v3675, 7
        %v3677 = vsub.s32 0, %v3676
        %v3678 = vrot.slane %v3049, %v3677
        %v3679 = vlaneseq
        %v3680 = vshrl.u32 %v3679, 7
        %v3681 = vsub.s32 0, %v3680
        %v3682 = vrot.slane %v3051, %v3681
        %v3683 = vlaneseq
        %v3684 = vshrl.u32 %v3683, 7
        %v3685 = vsub.s32 0, %v3684
        %v3686 = vrot.slane %v3075, %v3685
        %v3687 = vlaneseq
        %v3688 = vshrl.u32 %v3687, 7
        %v3689 = vsub.s32 0, %v3688
        %v3690 = vrot.slane %v3089, %v3689
        %v3691 = vlaneseq
        %v3692 = vshrl.u32 %v3691, 7
        %v3693 = vsub.s32 0, %v3692
        %v3694 = vrot.slane %v3097, %v3693
        %v3695 = vlaneseq
        %v3696 = vshrl.u32 %v3695, 7
        %v3697 = vsub.s32 0, %v3696
        %v3698 = vrot.slane %v3099, %v3697
        %v3699 = vlaneseq
        %v3700 = vshrl.u32 %v3699, 7
        %v3701 = vsub.s32 0, %v3700
        %v3702 = vrot.slane %v3082, %v3701
        %v3703 = vlaneseq
        %v3704 = vshrl.u32 %v3703, 7
        %v3705 = vsub.s32 0, %v3704
        %v3706 = vrot.slane %v3096, %v3705
        %v3707 = vlaneseq
        %v3708 = vshrl.u32 %v3707, 7
        %v3709 = vsub.s32 0, %v3708
        %v3710 = vrot.slane %v3098, %v3709
        %v3711 = vlaneseq
        %v3712 = vshrl.u32 %v3711, 7
        %v3713 = vsub.s32 0, %v3712
        %v3714 = vrot.slane %v3100, %v3713
        %v3715 = vlaneseq
        %v3716 = vshrl.u32 %v3715, 7
        %v3717 = vsub.s32 0, %v3716
        %v3718 = vrot.slane %v3124, %v3717
        %v3719 = vlaneseq
        %v3720 = vshrl.u32 %v3719, 7
        %v3721 = vsub.s32 0, %v3720
        %v3722 = vrot.slane %v3138, %v3721
        %v3723 = vlaneseq
        %v3724 = vshrl.u32 %v3723, 7
        %v3725 = vsub.s32 0, %v3724
        %v3726 = vrot.slane %v3146, %v3725
        %v3727 = vlaneseq
        %v3728 = vshrl.u32 %v3727, 7
        %v3729 = vsub.s32 0, %v3728
        %v3730 = vrot.slane %v3148, %v3729
        %v3731 = vlaneseq
        %v3732 = vshrl.u32 %v3731, 7
        %v3733 = vsub.s32 0, %v3732
        %v3734 = vrot.slane %v3131, %v3733
        %v3735 = vlaneseq
        %v3736 = vshrl.u32 %v3735, 7
        %v3737 = vsub.s32 0, %v3736
        %v3738 = vrot.slane %v3145, %v3737
        %v3739 = vlaneseq
        %v3740 = vshrl.u32 %v3739, 7
        %v3741 = vsub.s32 0, %v3740
        %v3742 = vrot.slane %v3147, %v3741
        %v3743 = vlaneseq
        %v3744 = vshrl.u32 %v3743, 7
        %v3745 = vsub.s32 0, %v3744
        %v3746 = vrot.slane %v3149, %v3745
        %v3747 = vlaneseq
        %v3748 = vshrl.u32 %v3747, 7
        %v3749 = vsub.s32 0, %v3748
        %v3750 = vrot.slane %v3173, %v3749
        %v3751 = vlaneseq
        %v3752 = vshrl.u32 %v3751, 7
        %v3753 = vsub.s32 0, %v3752
        %v3754 = vrot.slane %v3187, %v3753
        %v3755 = vlaneseq
        %v3756 = vshrl.u32 %v3755, 7
        %v3757 = vsub.s32 0, %v3756
        %v3758 = vrot.slane %v3195, %v3757
        %v3759 = vlaneseq
        %v3760 = vshrl.u32 %v3759, 7
        %v3761 = vsub.s32 0, %v3760
        %v3762 = vrot.slane %v3197, %v3761
        %v3763 = vlaneseq
        %v3764 = vshrl.u32 %v3763, 7
        %v3765 = vsub.s32 0, %v3764
        %v3766 = vrot.slane %v3180, %v3765
        %v3767 = vlaneseq
        %v3768 = vshrl.u32 %v3767, 7
        %v3769 = vsub.s32 0, %v3768
        %v3770 = vrot.slane %v3194, %v3769
        %v3771 = vlaneseq
        %v3772 = vshrl.u32 %v3771, 7
        %v3773 = vsub.s32 0, %v3772
        %v3774 = vrot.slane %v3196, %v3773
        %v3775 = vlaneseq
        %v3776 = vshrl.u32 %v3775, 7
        %v3777 = vsub.s32 0, %v3776
        %v3778 = vrot.slane %v3198, %v3777
        %v3779 = vlaneseq
        %v3780 = vshrl.u32 %v3779, 7
        %v3781 = vsub.s32 0, %v3780
        %v3782 = vrot.slane %v3222, %v3781
        %v3783 = vlaneseq
        %v3784 = vshrl.u32 %v3783, 7
        %v3785 = vsub.s32 0, %v3784
        %v3786 = vrot.slane %v3236, %v3785
        %v3787 = vlaneseq
        %v3788 = vshrl.u32 %v3787, 7
        %v3789 = vsub.s32 0, %v3788
        %v3790 = vrot.slane %v3244, %v3789
        %v3791 = vlaneseq
        %v3792 = vshrl.u32 %v3791, 7
        %v3793 = vsub.s32 0, %v3792
        %v3794 = vrot.slane %v3246, %v3793
        %v3795 = vlaneseq
        %v3796 = vshrl.u32 %v3795, 7
        %v3797 = vsub.s32 0, %v3796
        %v3798 = vrot.slane %v3229, %v3797
        %v3799 = vlaneseq
        %v3800 = vshrl.u32 %v3799, 7
        %v3801 = vsub.s32 0, %v3800
        %v3802 = vrot.slane %v3243, %v3801
        %v3803 = vlaneseq
        %v3804 = vshrl.u32 %v3803, 7
        %v3805 = vsub.s32 0, %v3804
        %v3806 = vrot.slane %v3245, %v3805
        %v3807 = vlaneseq
        %v3808 = vshrl.u32 %v3807, 7
        %v3809 = vsub.s32 0, %v3808
        %v3810 = vrot.slane %v3247, %v3809
        %v3811 = vlaneseq
        %v3812 = vshrl.u32 %v3811, 7
        %v3813 = vsub.s32 0, %v3812
        %v3814 = vrot.slane %v3271, %v3813
        %v3815 = vlaneseq
        %v3816 = vshrl.u32 %v3815, 7
        %v3817 = vsub.s32 0, %v3816
        %v3818 = vrot.slane %v3285, %v3817
        %v3819 = vlaneseq
        %v3820 = vshrl.u32 %v3819, 7
        %v3821 = vsub.s32 0, %v3820
        %v3822 = vrot.slane %v3293, %v3821
        %v3823 = vlaneseq
        %v3824 = vshrl.u32 %v3823, 7
        %v3825 = vsub.s32 0, %v3824
        %v3826 = vrot.slane %v3295, %v3825
        %v3827 = vlaneseq
        %v3828 = vshrl.u32 %v3827, 7
        %v3829 = vsub.s32 0, %v3828
        %v3830 = vrot.slane %v3278, %v3829
        %v3831 = vlaneseq
        %v3832 = vshrl.u32 %v3831, 7
        %v3833 = vsub.s32 0, %v3832
        %v3834 = vrot.slane %v3292, %v3833
        %v3835 = vlaneseq
        %v3836 = vshrl.u32 %v3835, 7
        %v3837 = vsub.s32 0, %v3836
        %v3838 = vrot.slane %v3294, %v3837
        %v3839 = vlaneseq
        %v3840 = vshrl.u32 %v3839, 7
        %v3841 = vsub.s32 0, %v3840
        %v3842 = vrot.slane %v3296, %v3841
        %v3843 = vlaneseq
        %v3844 = vshrl.u32 %v3843, 7
        %v3845 = vsub.s32 0, %v3844
        %v3846 = vrot.slane %v3320, %v3845
        %v3847 = vlaneseq
        %v3848 = vshrl.u32 %v3847, 7
        %v3849 = vsub.s32 0, %v3848
        %v3850 = vrot.slane %v3334, %v3849
        %v3851 = vlaneseq
        %v3852 = vshrl.u32 %v3851, 7
        %v3853 = vsub.s32 0, %v3852
        %v3854 = vrot.slane %v3342, %v3853
        %v3855 = vlaneseq
        %v3856 = vshrl.u32 %v3855, 7
        %v3857 = vsub.s32 0, %v3856
        %v3858 = vrot.slane %v3344, %v3857
        %v3859 = vlaneseq
        %v3860 = vshrl.u32 %v3859, 7
        %v3861 = vsub.s32 0, %v3860
        %v3862 = vrot.slane %v3327, %v3861
        %v3863 = vlaneseq
        %v3864 = vshrl.u32 %v3863, 7
        %v3865 = vsub.s32 0, %v3864
        %v3866 = vrot.slane %v3341, %v3865
        %v3867 = vlaneseq
        %v3868 = vshrl.u32 %v3867, 7
        %v3869 = vsub.s32 0, %v3868
        %v3870 = vrot.slane %v3343, %v3869
        %v3871 = vlaneseq
        %v3872 = vshrl.u32 %v3871, 7
        %v3873 = vsub.s32 0, %v3872
        %v3874 = vrot.slane %v3345, %v3873
        %v3875 = vlaneseq
        %v3876 = vshrl.u32 %v3875, 7
        %v3877 = vsub.s32 0, %v3876
        %v3878 = vrot.slane %v3369, %v3877
        %v3879 = vlaneseq
        %v3880 = vshrl.u32 %v3879, 7
        %v3881 = vsub.s32 0, %v3880
        %v3882 = vrot.slane %v3383, %v3881
        %v3883 = vlaneseq
        %v3884 = vshrl.u32 %v3883, 7
        %v3885 = vsub.s32 0, %v3884
        %v3886 = vrot.slane %v3391, %v3885
        %v3887 = vlaneseq
        %v3888 = vshrl.u32 %v3887, 7
        %v3889 = vsub.s32 0, %v3888
        %v3890 = vrot.slane %v3393, %v3889
        %v3891 = vlaneseq
        %v3892 = vshrl.u32 %v3891, 7
        %v3893 = vsub.s32 0, %v3892
        %v3894 = vrot.slane %v3376, %v3893
        %v3895 = vlaneseq
        %v3896 = vshrl.u32 %v3895, 7
        %v3897 = vsub.s32 0, %v3896
        %v3898 = vrot.slane %v3390, %v3897
        %v3899 = vlaneseq
        %v3900 = vshrl.u32 %v3899, 7
        %v3901 = vsub.s32 0, %v3900
        %v3902 = vrot.slane %v3392, %v3901
        %v3903 = vlaneseq
        %v3904 = vshrl.u32 %v3903, 7
        %v3905 = vsub.s32 0, %v3904
        %v3906 = vrot.slane %v3394, %v3905
        %vm4035 = vcmask 1040384
        %v4036 = vsel %vm4035, %v1706, %v3398
        %v4037 = vsel %vm4035, %v1720, %v3402
        %v4038 = vsel %vm4035, %v1728, %v3406
        %v4039 = vsel %vm4035, %v1730, %v3410
        %v4040 = vsel %vm4035, %v1713, %v3414
        %v4041 = vsel %vm4035, %v1727, %v3418
        %v4042 = vsel %vm4035, %v1729, %v3422
        %v4043 = vsel %vm4035, %v1731, %v3426
        %v4044 = vsel %vm4035, %v1755, %v3430
        %v4045 = vsel %vm4035, %v1769, %v3434
        %v4046 = vsel %vm4035, %v1777, %v3438
        %v4047 = vsel %vm4035, %v1779, %v3442
        %v4048 = vsel %vm4035, %v1762, %v3446
        %v4049 = vsel %vm4035, %v1776, %v3450
        %v4050 = vsel %vm4035, %v1778, %v3454
        %v4051 = vsel %vm4035, %v1780, %v3458
        %v4052 = vsel %vm4035, %v1804, %v3462
        %v4053 = vsel %vm4035, %v1818, %v3466
        %v4054 = vsel %vm4035, %v1826, %v3470
        %v4055 = vsel %vm4035, %v1828, %v3474
        %v4056 = vsel %vm4035, %v1811, %v3478
        %v4057 = vsel %vm4035, %v1825, %v3482
        %v4058 = vsel %vm4035, %v1827, %v3486
        %v4059 = vsel %vm4035, %v1829, %v3490
        %v4060 = vsel %vm4035, %v1853, %v3494
        %v4061 = vsel %vm4035, %v1867, %v3498
        %v4062 = vsel %vm4035, %v1875, %v3502
        %v4063 = vsel %vm4035, %v1877, %v3506
        %v4064 = vsel %vm4035, %v1860, %v3510
        %v4065 = vsel %vm4035, %v1874, %v3514
        %v4066 = vsel %vm4035, %v1876, %v3518
        %v4067 = vsel %vm4035, %v1878, %v3522
        %v4068 = vsel %vm4035, %v1902, %v3526
        %v4069 = vsel %vm4035, %v1916, %v3530
        %v4070 = vsel %vm4035, %v1924, %v3534
        %v4071 = vsel %vm4035, %v1926, %v3538
        %v4072 = vsel %vm4035, %v1909, %v3542
        %v4073 = vsel %vm4035, %v1923, %v3546
        %v4074 = vsel %vm4035, %v1925, %v3550
        %v4075 = vsel %vm4035, %v1927, %v3554
        %v4076 = vsel %vm4035, %v1951, %v3558
        %v4077 = vsel %vm4035, %v1965, %v3562
        %v4078 = vsel %vm4035, %v1973, %v3566
        %v4079 = vsel %vm4035, %v1975, %v3570
        %v4080 = vsel %vm4035, %v1958, %v3574
        %v4081 = vsel %vm4035, %v1972, %v3578
        %v4082 = vsel %vm4035, %v1974, %v3582
        %v4083 = vsel %vm4035, %v1976, %v3586
        %v4084 = vsel %vm4035, %v2000, %v3590
        %v4085 = vsel %vm4035, %v2014, %v3594
        %v4086 = vsel %vm4035, %v2022, %v3598
        %v4087 = vsel %vm4035, %v2024, %v3602
        %v4088 = vsel %vm4035, %v2007, %v3606
        %v4089 = vsel %vm4035, %v2021, %v3610
        %v4090 = vsel %vm4035, %v2023, %v3614
        %v4091 = vsel %vm4035, %v2025, %v3618
        %v4092 = vsel %vm4035, %v2049, %v3622
        %v4093 = vsel %vm4035, %v2063, %v3626
        %v4094 = vsel %vm4035, %v2071, %v3630
        %v4095 = vsel %vm4035, %v2073, %v3634
        %v4096 = vsel %vm4035, %v2056, %v3638
        %v4097 = vsel %vm4035, %v2070, %v3642
        %v4098 = vsel %vm4035, %v2072, %v3646
        %v4099 = vsel %vm4035, %v2074, %v3650
        %v4100 = vsel %vm4035, %v2098, %v3654
        %v4101 = vsel %vm4035, %v2112, %v3658
        %v4102 = vsel %vm4035, %v2120, %v3662
        %v4103 = vsel %vm4035, %v2122, %v3666
        %v4104 = vsel %vm4035, %v2105, %v3670
        %v4105 = vsel %vm4035, %v2119, %v3674
        %v4106 = vsel %vm4035, %v2121, %v3678
        %v4107 = vsel %vm4035, %v2123, %v3682
        %v4108 = vsel %vm4035, %v2147, %v3686
        %v4109 = vsel %vm4035, %v2161, %v3690
        %v4110 = vsel %vm4035, %v2169, %v3694
        %v4111 = vsel %vm4035, %v2171, %v3698
        %v4112 = vsel %vm4035, %v2154, %v3702
        %v4113 = vsel %vm4035, %v2168, %v3706
        %v4114 = vsel %vm4035, %v2170, %v3710
        %v4115 = vsel %vm4035, %v2172, %v3714
        %v4116 = vsel %vm4035, %v2196, %v3718
        %v4117 = vsel %vm4035, %v2210, %v3722
        %v4118 = vsel %vm4035, %v2218, %v3726
        %v4119 = vsel %vm4035, %v2220, %v3730
        %v4120 = vsel %vm4035, %v2203, %v3734
        %v4121 = vsel %vm4035, %v2217, %v3738
        %v4122 = vsel %vm4035, %v2219, %v3742
        %v4123 = vsel %vm4035, %v2221, %v3746
        %v4124 = vsel %vm4035, %v2245, %v3750
        %v4125 = vsel %vm4035, %v2259, %v3754
        %v4126 = vsel %vm4035, %v2267, %v3758
        %v4127 = vsel %vm4035, %v2269, %v3762
        %v4128 = vsel %vm4035, %v2252, %v3766
        %v4129 = vsel %vm4035, %v2266, %v3770
        %v4130 = vsel %vm4035, %v2268, %v3774
        %v4131 = vsel %vm4035, %v2270, %v3778
        %v4132 = vsel %vm4035, %v2294, %v3782
        %v4133 = vsel %vm4035, %v2308, %v3786
        %v4134 = vsel %vm4035, %v2316, %v3790
        %v4135 = vsel %vm4035, %v2318, %v3794
        %v4136 = vsel %vm4035, %v2301, %v3798
        %v4137 = vsel %vm4035, %v2315, %v3802
        %v4138 = vsel %vm4035, %v2317, %v3806
        %v4139 = vsel %vm4035, %v2319, %v3810
        %v4140 = vsel %vm4035, %v2343, %v3814
        %v4141 = vsel %vm4035, %v2357, %v3818
        %v4142 = vsel %vm4035, %v2365, %v3822
        %v4143 = vsel %vm4035, %v2367, %v3826
        %v4144 = vsel %vm4035, %v2350, %v3830
        %v4145 = vsel %vm4035, %v2364, %v3834
        %v4146 = vsel %vm4035, %v2366, %v3838
        %v4147 = vsel %vm4035, %v2368, %v3842
        %v4148 = vsel %vm4035, %v2392, %v3846
        %v4149 = vsel %vm4035, %v2406, %v3850
        %v4150 = vsel %vm4035, %v2414, %v3854
        %v4151 = vsel %vm4035, %v2416, %v3858
        %v4152 = vsel %vm4035, %v2399, %v3862
        %v4153 = vsel %vm4035, %v2413, %v3866
        %v4154 = vsel %vm4035, %v2415, %v3870
        %v4155 = vsel %vm4035, %v2417, %v3874
        %v4156 = vsel %vm4035, %v2441, %v3878
        %v4157 = vsel %vm4035, %v2455, %v3882
        %v4158 = vsel %vm4035, %v2463, %v3886
        %v4159 = vsel %vm4035, %v2465, %v3890
        %v4160 = vsel %vm4035, %v2448, %v3894
        %v4161 = vsel %vm4035, %v2462, %v3898
        %v4162 = vsel %vm4035, %v2464, %v3902
        %v4163 = vsel %vm4035, %v2466, %v3906
        %v4165 = vshrl.u32 %v336, 16
        %v4167 = vrot.slane %v4165, 4
        %v4168 = vshll.u32 %v336, 16
        %v4170 = vrot.slane %v4168, 5
        %v4171 = vor.u32 %v4167, %v4170
        %v4172 = vrot.slane %v4171, 4
        %v4174 = vshll.u32 %v337, 16
        %v4176 = vrot.slane %v4174, 5
        %v4177 = vsel %vm342, %v4172, %v4176
        %v4178 = vshrl.u32 %v337, 16
        %v4180 = vrot.slane %v4178, 4
        %v4181 = vor.u32 %v4180, %v4176
        %v4182 = vrot.slane %v4181, 4
        %v4184 = vshll.u32 %v338, 16
        %v4186 = vrot.slane %v4184, 5
        %v4187 = vsel %vm342, %v4182, %v4186
        %v4190 = vunpack.c.l.b16 %v336
        %v4191 = vunpack.c.l.b16 %v337
        %v4192 = vpack.c.b16 %v4191, %v4190
        %v4194 = vunpack.c.l.b16 %v4177
        %v4195 = vunpack.c.l.b16 %v4187
        %v4196 = vpack.c.b16 %v4195, %v4194
        %s4198 = scalar_lea.vmem %s2, 512
        %v4199 = vld [vmem:[%s4198] sm:$0xf]
        %v4200 = vld [vmem:[%s4198 + $0x4] sm:$0xf]
        %v4201 = vld [vmem:[%s4198 + $0x8] sm:$0xf]
        %v4202 = vld [vmem:[%s4198 + $0xc] sm:$0xf]
        %v4203 = vld [vmem:[%s4198 + $0x10] sm:$0xf]
        %v4204 = vld [vmem:[%s4198 + $0x14] sm:$0xf]
        %v4205 = vld [vmem:[%s4198 + $0x18] sm:$0xf]
        %v4206 = vld [vmem:[%s4198 + $0x1c] sm:$0xf]
        %v4207 = vld [vmem:[%s4198 + $0x20] sm:$0xf]
        %v4208 = vld [vmem:[%s4198 + $0x24] sm:$0xf]
        %v4209 = vld [vmem:[%s4198 + $0x28] sm:$0xf]
        %v4210 = vld [vmem:[%s4198 + $0x2c] sm:$0xf]
        %v4211 = vld [vmem:[%s4198 + $0x30] sm:$0xf]
        %v4212 = vld [vmem:[%s4198 + $0x34] sm:$0xf]
        %v4213 = vld [vmem:[%s4198 + $0x38] sm:$0xf]
        %v4214 = vld [vmem:[%s4198 + $0x3c] sm:$0xf]
        %v4215 = vld [vmem:[%s4198 + $0x40] sm:$0xf]
        %v4216 = vld [vmem:[%s4198 + $0x44] sm:$0xf]
        %v4217 = vld [vmem:[%s4198 + $0x48] sm:$0xf]
        %v4218 = vld [vmem:[%s4198 + $0x4c] sm:$0xf]
        %v4219 = vld [vmem:[%s4198 + $0x50] sm:$0xf]
        %v4220 = vld [vmem:[%s4198 + $0x54] sm:$0xf]
        %v4221 = vld [vmem:[%s4198 + $0x58] sm:$0xf]
        %v4222 = vld [vmem:[%s4198 + $0x5c] sm:$0xf]
        %v4223 = vld [vmem:[%s4198 + $0x60] sm:$0xf]
        %v4224 = vld [vmem:[%s4198 + $0x64] sm:$0xf]
        %v4225 = vld [vmem:[%s4198 + $0x68] sm:$0xf]
        %v4226 = vld [vmem:[%s4198 + $0x6c] sm:$0xf]
        %v4227 = vld [vmem:[%s4198 + $0x70] sm:$0xf]
        %v4228 = vld [vmem:[%s4198 + $0x74] sm:$0xf]
        %v4229 = vld [vmem:[%s4198 + $0x78] sm:$0xf]
        %v4230 = vld [vmem:[%s4198 + $0x7c] sm:$0xf]
        %v4231 = vld [vmem:[%s4198 + $0x80] sm:$0xf]
        %v4232 = vld [vmem:[%s4198 + $0x84] sm:$0xf]
        %v4233 = vld [vmem:[%s4198 + $0x88] sm:$0xf]
        %v4234 = vld [vmem:[%s4198 + $0x8c] sm:$0xf]
        %v4235 = vld [vmem:[%s4198 + $0x90] sm:$0xf]
        %v4236 = vld [vmem:[%s4198 + $0x94] sm:$0xf]
        %v4237 = vld [vmem:[%s4198 + $0x98] sm:$0xf]
        %v4238 = vld [vmem:[%s4198 + $0x9c] sm:$0xf]
        %v4239 = vld [vmem:[%s4198 + $0xa0] sm:$0xf]
        %v4240 = vld [vmem:[%s4198 + $0xa4] sm:$0xf]
        %v4241 = vld [vmem:[%s4198 + $0xa8] sm:$0xf]
        %v4242 = vld [vmem:[%s4198 + $0xac] sm:$0xf]
        %v4243 = vld [vmem:[%s4198 + $0xb0] sm:$0xf]
        %v4244 = vld [vmem:[%s4198 + $0xb4] sm:$0xf]
        %v4245 = vld [vmem:[%s4198 + $0xb8] sm:$0xf]
        %v4246 = vld [vmem:[%s4198 + $0xbc] sm:$0xf]
        %v4247 = vld [vmem:[%s4198 + $0xc0] sm:$0xf]
        %v4248 = vld [vmem:[%s4198 + $0xc4] sm:$0xf]
        %v4249 = vld [vmem:[%s4198 + $0xc8] sm:$0xf]
        %v4250 = vld [vmem:[%s4198 + $0xcc] sm:$0xf]
        %v4251 = vld [vmem:[%s4198 + $0xd0] sm:$0xf]
        %v4252 = vld [vmem:[%s4198 + $0xd4] sm:$0xf]
        %v4253 = vld [vmem:[%s4198 + $0xd8] sm:$0xf]
        %v4254 = vld [vmem:[%s4198 + $0xdc] sm:$0xf]
        %v4255 = vld [vmem:[%s4198 + $0xe0] sm:$0xf]
        %v4256 = vld [vmem:[%s4198 + $0xe4] sm:$0xf]
        %v4257 = vld [vmem:[%s4198 + $0xe8] sm:$0xf]
        %v4258 = vld [vmem:[%s4198 + $0xec] sm:$0xf]
        %v4259 = vld [vmem:[%s4198 + $0xf0] sm:$0xf]
        %v4260 = vld [vmem:[%s4198 + $0xf4] sm:$0xf]
        %v4261 = vld [vmem:[%s4198 + $0xf8] sm:$0xf]
        %v4262 = vld [vmem:[%s4198 + $0xfc] sm:$0xf]
        %v4327 = vunpack.c.l.b16 %v4199
        %v4328 = vunpack.c.l.b16 %v4200
        %v4329 = vunpack.c.l.b16 %v4201
        %v4330 = vunpack.c.l.b16 %v4202
        %v4331 = vunpack.c.l.b16 %v4203
        %v4332 = vunpack.c.l.b16 %v4204
        %v4333 = vunpack.c.l.b16 %v4205
        %v4334 = vunpack.c.l.b16 %v4206
        %v4335 = vunpack.c.l.b16 %v4207
        %v4336 = vunpack.c.l.b16 %v4208
        %v4337 = vunpack.c.l.b16 %v4209
        %v4338 = vunpack.c.l.b16 %v4210
        %v4339 = vunpack.c.l.b16 %v4211
        %v4340 = vunpack.c.l.b16 %v4212
        %v4341 = vunpack.c.l.b16 %v4213
        %v4342 = vunpack.c.l.b16 %v4214
        %v4343 = vunpack.c.l.b16 %v4215
        %v4344 = vunpack.c.l.b16 %v4216
        %v4345 = vunpack.c.l.b16 %v4217
        %v4346 = vunpack.c.l.b16 %v4218
        %v4347 = vunpack.c.l.b16 %v4219
        %v4348 = vunpack.c.l.b16 %v4220
        %v4349 = vunpack.c.l.b16 %v4221
        %v4350 = vunpack.c.l.b16 %v4222
        %v4351 = vunpack.c.l.b16 %v4223
        %v4352 = vunpack.c.l.b16 %v4224
        %v4353 = vunpack.c.l.b16 %v4225
        %v4354 = vunpack.c.l.b16 %v4226
        %v4355 = vunpack.c.l.b16 %v4227
        %v4356 = vunpack.c.l.b16 %v4228
        %v4357 = vunpack.c.l.b16 %v4229
        %v4358 = vunpack.c.l.b16 %v4230
        %v4359 = vunpack.c.l.b16 %v4231
        %v4360 = vunpack.c.l.b16 %v4232
        %v4361 = vunpack.c.l.b16 %v4233
        %v4362 = vunpack.c.l.b16 %v4234
        %v4363 = vunpack.c.l.b16 %v4235
        %v4364 = vunpack.c.l.b16 %v4236
        %v4365 = vunpack.c.l.b16 %v4237
        %v4366 = vunpack.c.l.b16 %v4238
        %v4367 = vunpack.c.l.b16 %v4239
        %v4368 = vunpack.c.l.b16 %v4240
        %v4369 = vunpack.c.l.b16 %v4241
        %v4370 = vunpack.c.l.b16 %v4242
        %v4371 = vunpack.c.l.b16 %v4243
        %v4372 = vunpack.c.l.b16 %v4244
        %v4373 = vunpack.c.l.b16 %v4245
        %v4374 = vunpack.c.l.b16 %v4246
        %v4375 = vunpack.c.l.b16 %v4247
        %v4376 = vunpack.c.l.b16 %v4248
        %v4377 = vunpack.c.l.b16 %v4249
        %v4378 = vunpack.c.l.b16 %v4250
        %v4379 = vunpack.c.l.b16 %v4251
        %v4380 = vunpack.c.l.b16 %v4252
        %v4381 = vunpack.c.l.b16 %v4253
        %v4382 = vunpack.c.l.b16 %v4254
        %v4383 = vunpack.c.l.b16 %v4255
        %v4384 = vunpack.c.l.b16 %v4256
        %v4385 = vunpack.c.l.b16 %v4257
        %v4386 = vunpack.c.l.b16 %v4258
        %v4387 = vunpack.c.l.b16 %v4259
        %v4388 = vunpack.c.l.b16 %v4260
        %v4389 = vunpack.c.l.b16 %v4261
        %v4390 = vunpack.c.l.b16 %v4262
        %v4391 = vpack.c.b16 %v4328, %v4327
        %v4392 = vpack.c.b16 %v4330, %v4329
        %v4393 = vpack.c.b16 %v4332, %v4331
        %v4394 = vpack.c.b16 %v4334, %v4333
        %v4395 = vpack.c.b16 %v4336, %v4335
        %v4396 = vpack.c.b16 %v4338, %v4337
        %v4397 = vpack.c.b16 %v4340, %v4339
        %v4398 = vpack.c.b16 %v4342, %v4341
        %v4399 = vpack.c.b16 %v4344, %v4343
        %v4400 = vpack.c.b16 %v4346, %v4345
        %v4401 = vpack.c.b16 %v4348, %v4347
        %v4402 = vpack.c.b16 %v4350, %v4349
        %v4403 = vpack.c.b16 %v4352, %v4351
        %v4404 = vpack.c.b16 %v4354, %v4353
        %v4405 = vpack.c.b16 %v4356, %v4355
        %v4406 = vpack.c.b16 %v4358, %v4357
        %v4407 = vpack.c.b16 %v4360, %v4359
        %v4408 = vpack.c.b16 %v4362, %v4361
        %v4409 = vpack.c.b16 %v4364, %v4363
        %v4410 = vpack.c.b16 %v4366, %v4365
        %v4411 = vpack.c.b16 %v4368, %v4367
        %v4412 = vpack.c.b16 %v4370, %v4369
        %v4413 = vpack.c.b16 %v4372, %v4371
        %v4414 = vpack.c.b16 %v4374, %v4373
        %v4415 = vpack.c.b16 %v4376, %v4375
        %v4416 = vpack.c.b16 %v4378, %v4377
        %v4417 = vpack.c.b16 %v4380, %v4379
        %v4418 = vpack.c.b16 %v4382, %v4381
        %v4419 = vpack.c.b16 %v4384, %v4383
        %v4420 = vpack.c.b16 %v4386, %v4385
        %v4421 = vpack.c.b16 %v4388, %v4387
        %v4422 = vpack.c.b16 %v4390, %v4389
        %4455 = vmatprep.subr.bf16.mxu0 0
        %4456 = vmatpush1.bf16.msra.mxu0 %v4391
        %4457 = vmatprep.subr.bf16.mxu0 0
        %4458 = vmatpush1.bf16.msra.mxu0 %v4392
        %4459 = vmatprep.subr.bf16.mxu0 0
        %4460 = vmatpush1.bf16.msra.mxu0 %v4393
        %4461 = vmatprep.subr.bf16.mxu0 0
        %4462 = vmatpush1.bf16.msra.mxu0 %v4394
        %4463 = vmatprep.subr.bf16.mxu0 0
        %4464 = vmatpush1.bf16.msra.mxu0 %v4395
        %4465 = vmatprep.subr.bf16.mxu0 0
        %4466 = vmatpush1.bf16.msra.mxu0 %v4396
        %4467 = vmatprep.subr.bf16.mxu0 0
        %4468 = vmatpush1.bf16.msra.mxu0 %v4397
        %4469 = vmatprep.subr.bf16.mxu0 0
        %4470 = vmatpush1.bf16.msra.mxu0 %v4398
        %4471 = vmatprep.subr.bf16.mxu0 0
        %4472 = vmatpush1.bf16.msra.mxu0 %v4399
        %4473 = vmatprep.subr.bf16.mxu0 0
        %4474 = vmatpush1.bf16.msra.mxu0 %v4400
        %4475 = vmatprep.subr.bf16.mxu0 0
        %4476 = vmatpush1.bf16.msra.mxu0 %v4401
        %4477 = vmatprep.subr.bf16.mxu0 0
        %4478 = vmatpush1.bf16.msra.mxu0 %v4402
        %4479 = vmatprep.subr.bf16.mxu0 0
        %4480 = vmatpush1.bf16.msra.mxu0 %v4403
        %4481 = vmatprep.subr.bf16.mxu0 0
        %4482 = vmatpush1.bf16.msra.mxu0 %v4404
        %4483 = vmatprep.subr.bf16.mxu0 0
        %4484 = vmatpush1.bf16.msra.mxu0 %v4405
        %4485 = vmatprep.subr.bf16.mxu0 0
        %4486 = vmatpush1.bf16.msra.mxu0 %v4406
        %4487 = vmatprep.mubr.bf16.mxu0 %v624
        %4488 = vmatmul.mubr.bf16.gmra.mrb[0].mxu0 %v592
        %v4489 = vpop.f32.mrb[0].mxu0
        %v4490 = vadd.f32 %v717, %v4489
        %v4491 = vpop.f32.mrb[0].mxu0
        %v4492 = vpop.f32.mrb[0].mxu0
        %v4493 = vadd.f32 %v717, %v4492
        %v4494 = vpop.f32.mrb[0].mxu0
        %4495 = vmatprep.mubr.bf16.mxu0 %v625
        %4496 = vmatmul.mubr.bf16.gmra.mrb[0].mxu0 %v593
        %v4497 = vpop.f32.mrb[0].mxu0
        %v4498 = vadd.f32 %v717, %v4497
        %v4499 = vpop.f32.mrb[0].mxu0
        %v4500 = vpop.f32.mrb[0].mxu0
        %v4501 = vadd.f32 %v717, %v4500
        %v4502 = vpop.f32.mrb[0].mxu0
        %4503 = vmatprep.mubr.bf16.mxu0 %v626
        %4504 = vmatmul.mubr.bf16.gmra.mrb[0].mxu0 %v594
        %v4505 = vpop.f32.mrb[0].mxu0
        %v4506 = vadd.f32 %v717, %v4505
        %v4507 = vpop.f32.mrb[0].mxu0
        %v4508 = vpop.f32.mrb[0].mxu0
        %v4509 = vadd.f32 %v717, %v4508
        %v4510 = vpop.f32.mrb[0].mxu0
        %4511 = vmatprep.mubr.bf16.mxu0 %v627
        %4512 = vmatmul.mubr.bf16.gmra.mrb[0].mxu0 %v595
        %v4513 = vpop.f32.mrb[0].mxu0
        %v4514 = vadd.f32 %v717, %v4513
        %v4515 = vpop.f32.mrb[0].mxu0
        %v4516 = vpop.f32.mrb[0].mxu0
        %v4517 = vadd.f32 %v717, %v4516
        %v4518 = vpop.f32.mrb[0].mxu0
        %4519 = vmatprep.mubr.bf16.mxu0 %v628
        %4520 = vmatmul.mubr.bf16.gmra.mrb[0].mxu0 %v596
        %v4521 = vpop.f32.mrb[0].mxu0
        %v4522 = vadd.f32 %v717, %v4521
        %v4523 = vpop.f32.mrb[0].mxu0
        %v4524 = vpop.f32.mrb[0].mxu0
        %v4525 = vadd.f32 %v717, %v4524
        %v4526 = vpop.f32.mrb[0].mxu0
        %4527 = vmatprep.mubr.bf16.mxu0 %v629
        %4528 = vmatmul.mubr.bf16.gmra.mrb[0].mxu0 %v597
        %v4529 = vpop.f32.mrb[0].mxu0
        %v4530 = vadd.f32 %v717, %v4529
        %v4531 = vpop.f32.mrb[0].mxu0
        %v4532 = vpop.f32.mrb[0].mxu0
        %v4533 = vadd.f32 %v717, %v4532
        %v4534 = vpop.f32.mrb[0].mxu0
        %4535 = vmatprep.mubr.bf16.mxu0 %v630
        %4536 = vmatmul.mubr.bf16.gmra.mrb[0].mxu0 %v598
        %v4537 = vpop.f32.mrb[0].mxu0
        %v4538 = vadd.f32 %v717, %v4537
        %v4539 = vpop.f32.mrb[0].mxu0
        %v4540 = vpop.f32.mrb[0].mxu0
        %v4541 = vadd.f32 %v717, %v4540
        %v4542 = vpop.f32.mrb[0].mxu0
        %4543 = vmatprep.mubr.bf16.mxu0 %v647
        %4544 = vmatmul.mubr.bf16.gmra.mrb[0].mxu0 %v643
        %v4545 = vpop.f32.mrb[0].mxu0
        %v4546 = vadd.f32 %v717, %v4545
        %v4547 = vpop.f32.mrb[0].mxu0
        %v4548 = vpop.f32.mrb[0].mxu0
        %v4549 = vadd.f32 %v717, %v4548
        %v4550 = vpop.f32.mrb[0].mxu0
        %4551 = vdwg.mxu0
        %4552 = vmatprep.subr.bf16.mxu0 0
        %4553 = vmatpush1.bf16.msra.mxu0 %v4407
        %4554 = vmatprep.subr.bf16.mxu0 0
        %4555 = vmatpush1.bf16.msra.mxu0 %v4408
        %4556 = vmatprep.subr.bf16.mxu0 0
        %4557 = vmatpush1.bf16.msra.mxu0 %v4409
        %4558 = vmatprep.subr.bf16.mxu0 0
        %4559 = vmatpush1.bf16.msra.mxu0 %v4410
        %4560 = vmatprep.subr.bf16.mxu0 0
        %4561 = vmatpush1.bf16.msra.mxu0 %v4411
        %4562 = vmatprep.subr.bf16.mxu0 0
        %4563 = vmatpush1.bf16.msra.mxu0 %v4412
        %4564 = vmatprep.subr.bf16.mxu0 0
        %4565 = vmatpush1.bf16.msra.mxu0 %v4413
        %4566 = vmatprep.subr.bf16.mxu0 0
        %4567 = vmatpush1.bf16.msra.mxu0 %v4414
        %4568 = vmatprep.subr.bf16.mxu0 0
        %4569 = vmatpush1.bf16.msra.mxu0 %v4415
        %4570 = vmatprep.subr.bf16.mxu0 0
        %4571 = vmatpush1.bf16.msra.mxu0 %v4416
        %4572 = vmatprep.subr.bf16.mxu0 0
        %4573 = vmatpush1.bf16.msra.mxu0 %v4417
        %4574 = vmatprep.subr.bf16.mxu0 0
        %4575 = vmatpush1.bf16.msra.mxu0 %v4418
        %4576 = vmatprep.subr.bf16.mxu0 0
        %4577 = vmatpush1.bf16.msra.mxu0 %v4419
        %4578 = vmatprep.subr.bf16.mxu0 0
        %4579 = vmatpush1.bf16.msra.mxu0 %v4420
        %4580 = vmatprep.subr.bf16.mxu0 0
        %4581 = vmatpush1.bf16.msra.mxu0 %v4421
        %4582 = vmatprep.subr.bf16.mxu0 0
        %4583 = vmatpush1.bf16.msra.mxu0 %v4422
        %4584 = vmatprep.mubr.bf16.mxu0 %v625
        %4585 = vmatmul.mubr.bf16.gmra.mrb[0].mxu0 %v593
        %v4586 = vpop.f32.mrb[0].mxu0
        %v4587 = vadd.f32 %v4490, %v4586
        %v4588 = vpop.f32.mrb[0].mxu0
        %v4589 = vpop.f32.mrb[0].mxu0
        %v4590 = vadd.f32 %v4493, %v4589
        %v4591 = vpop.f32.mrb[0].mxu0
        %4592 = vmatprep.mubr.bf16.mxu0 %v626
        %4593 = vmatmul.mubr.bf16.gmra.mrb[0].mxu0 %v594
        %v4594 = vpop.f32.mrb[0].mxu0
        %v4595 = vadd.f32 %v4498, %v4594
        %v4596 = vpop.f32.mrb[0].mxu0
        %v4597 = vpop.f32.mrb[0].mxu0
        %v4598 = vadd.f32 %v4501, %v4597
        %v4599 = vpop.f32.mrb[0].mxu0
        %4600 = vmatprep.mubr.bf16.mxu0 %v627
        %4601 = vmatmul.mubr.bf16.gmra.mrb[0].mxu0 %v595
        %v4602 = vpop.f32.mrb[0].mxu0
        %v4603 = vadd.f32 %v4506, %v4602
        %v4604 = vpop.f32.mrb[0].mxu0
        %v4605 = vpop.f32.mrb[0].mxu0
        %v4606 = vadd.f32 %v4509, %v4605
        %v4607 = vpop.f32.mrb[0].mxu0
        %4608 = vmatprep.mubr.bf16.mxu0 %v628
        %4609 = vmatmul.mubr.bf16.gmra.mrb[0].mxu0 %v596
        %v4610 = vpop.f32.mrb[0].mxu0
        %v4611 = vadd.f32 %v4514, %v4610
        %v4612 = vpop.f32.mrb[0].mxu0
        %v4613 = vpop.f32.mrb[0].mxu0
        %v4614 = vadd.f32 %v4517, %v4613
        %v4615 = vpop.f32.mrb[0].mxu0
        %4616 = vmatprep.mubr.bf16.mxu0 %v629
        %4617 = vmatmul.mubr.bf16.gmra.mrb[0].mxu0 %v597
        %v4618 = vpop.f32.mrb[0].mxu0
        %v4619 = vadd.f32 %v4522, %v4618
        %v4620 = vpop.f32.mrb[0].mxu0
        %v4621 = vpop.f32.mrb[0].mxu0
        %v4622 = vadd.f32 %v4525, %v4621
        %v4623 = vpop.f32.mrb[0].mxu0
        %4624 = vmatprep.mubr.bf16.mxu0 %v630
        %4625 = vmatmul.mubr.bf16.gmra.mrb[0].mxu0 %v598
        %v4626 = vpop.f32.mrb[0].mxu0
        %v4627 = vadd.f32 %v4530, %v4626
        %v4628 = vpop.f32.mrb[0].mxu0
        %v4629 = vpop.f32.mrb[0].mxu0
        %v4630 = vadd.f32 %v4533, %v4629
        %v4631 = vpop.f32.mrb[0].mxu0
        %4632 = vmatprep.mubr.bf16.mxu0 %v647
        %4633 = vmatmul.mubr.bf16.gmra.mrb[0].mxu0 %v643
        %v4634 = vpop.f32.mrb[0].mxu0
        %v4635 = vadd.f32 %v4538, %v4634
        %v4636 = vpop.f32.mrb[0].mxu0
        %v4637 = vpop.f32.mrb[0].mxu0
        %v4638 = vadd.f32 %v4541, %v4637
        %v4639 = vpop.f32.mrb[0].mxu0
        %4640 = vmatprep.mubr.bf16.mxu0 %v4196
        %4641 = vmatmul.mubr.bf16.gmra.mrb[0].mxu0 %v4192
        %v4642 = vpop.f32.mrb[0].mxu0
        %v4643 = vadd.f32 %v4546, %v4642
        %v4644 = vpop.f32.mrb[0].mxu0
        %v4645 = vpop.f32.mrb[0].mxu0
        %v4646 = vadd.f32 %v4549, %v4645
        %v4647 = vpop.f32.mrb[0].mxu0
        %4648 = vdwg.mxu0
        %v4650 = vrot.slane %v336, 5
        %v4651 = vrot.slane %v4650, 4
        %v4652 = vrot.slane %v337, 5
        %v4653 = vsel %vm1115, %v4651, %v4652
        %v4654 = vrot.slane %v4652, 4
        %v4655 = vrot.slane %v338, 5
        %v4656 = vsel %vm1115, %v4654, %v4655
        %v4657 = vunpack.c.l.b16 %v4653
        %v4658 = vunpack.c.l.b16 %v4656
        %v4659 = vpack.c.b16 %v4658, %v4657
        %s4661 = scalar_lea.vmem %s2, 768
        %v4662 = vld [vmem:[%s4661] sm:$0xf]
        %v4663 = vld [vmem:[%s4661 + $0x4] sm:$0xf]
        %v4664 = vld [vmem:[%s4661 + $0x8] sm:$0xf]
        %v4665 = vld [vmem:[%s4661 + $0xc] sm:$0xf]
        %v4666 = vld [vmem:[%s4661 + $0x10] sm:$0xf]
        %v4667 = vld [vmem:[%s4661 + $0x14] sm:$0xf]
        %v4668 = vld [vmem:[%s4661 + $0x18] sm:$0xf]
        %v4669 = vld [vmem:[%s4661 + $0x1c] sm:$0xf]
        %v4670 = vld [vmem:[%s4661 + $0x20] sm:$0xf]
        %v4671 = vld [vmem:[%s4661 + $0x24] sm:$0xf]
        %v4672 = vld [vmem:[%s4661 + $0x28] sm:$0xf]
        %v4673 = vld [vmem:[%s4661 + $0x2c] sm:$0xf]
        %v4674 = vld [vmem:[%s4661 + $0x30] sm:$0xf]
        %v4675 = vld [vmem:[%s4661 + $0x34] sm:$0xf]
        %v4676 = vld [vmem:[%s4661 + $0x38] sm:$0xf]
        %v4677 = vld [vmem:[%s4661 + $0x3c] sm:$0xf]
        %v4678 = vld [vmem:[%s4661 + $0x40] sm:$0xf]
        %v4679 = vld [vmem:[%s4661 + $0x44] sm:$0xf]
        %v4680 = vld [vmem:[%s4661 + $0x48] sm:$0xf]
        %v4681 = vld [vmem:[%s4661 + $0x4c] sm:$0xf]
        %v4682 = vld [vmem:[%s4661 + $0x50] sm:$0xf]
        %v4683 = vld [vmem:[%s4661 + $0x54] sm:$0xf]
        %v4684 = vld [vmem:[%s4661 + $0x58] sm:$0xf]
        %v4685 = vld [vmem:[%s4661 + $0x5c] sm:$0xf]
        %v4686 = vld [vmem:[%s4661 + $0x60] sm:$0xf]
        %v4687 = vld [vmem:[%s4661 + $0x64] sm:$0xf]
        %v4688 = vld [vmem:[%s4661 + $0x68] sm:$0xf]
        %v4689 = vld [vmem:[%s4661 + $0x6c] sm:$0xf]
        %v4690 = vld [vmem:[%s4661 + $0x70] sm:$0xf]
        %v4691 = vld [vmem:[%s4661 + $0x74] sm:$0xf]
        %v4692 = vld [vmem:[%s4661 + $0x78] sm:$0xf]
        %v4693 = vld [vmem:[%s4661 + $0x7c] sm:$0xf]
        %v4694 = vld [vmem:[%s4661 + $0x80] sm:$0xf]
        %v4695 = vld [vmem:[%s4661 + $0x84] sm:$0xf]
        %v4696 = vld [vmem:[%s4661 + $0x88] sm:$0xf]
        %v4697 = vld [vmem:[%s4661 + $0x8c] sm:$0xf]
        %v4698 = vld [vmem:[%s4661 + $0x90] sm:$0xf]
        %v4699 = vld [vmem:[%s4661 + $0x94] sm:$0xf]
        %v4700 = vld [vmem:[%s4661 + $0x98] sm:$0xf]
        %v4701 = vld [vmem:[%s4661 + $0x9c] sm:$0xf]
        %v4702 = vld [vmem:[%s4661 + $0xa0] sm:$0xf]
        %v4703 = vld [vmem:[%s4661 + $0xa4] sm:$0xf]
        %v4704 = vld [vmem:[%s4661 + $0xa8] sm:$0xf]
        %v4705 = vld [vmem:[%s4661 + $0xac] sm:$0xf]
        %v4706 = vld [vmem:[%s4661 + $0xb0] sm:$0xf]
        %v4707 = vld [vmem:[%s4661 + $0xb4] sm:$0xf]
        %v4708 = vld [vmem:[%s4661 + $0xb8] sm:$0xf]
        %v4709 = vld [vmem:[%s4661 + $0xbc] sm:$0xf]
        %v4710 = vld [vmem:[%s4661 + $0xc0] sm:$0xf]
        %v4711 = vld [vmem:[%s4661 + $0xc4] sm:$0xf]
        %v4712 = vld [vmem:[%s4661 + $0xc8] sm:$0xf]
        %v4713 = vld [vmem:[%s4661 + $0xcc] sm:$0xf]
        %v4714 = vld [vmem:[%s4661 + $0xd0] sm:$0xf]
        %v4715 = vld [vmem:[%s4661 + $0xd4] sm:$0xf]
        %v4716 = vld [vmem:[%s4661 + $0xd8] sm:$0xf]
        %v4717 = vld [vmem:[%s4661 + $0xdc] sm:$0xf]
        %v4718 = vld [vmem:[%s4661 + $0xe0] sm:$0xf]
        %v4719 = vld [vmem:[%s4661 + $0xe4] sm:$0xf]
        %v4720 = vld [vmem:[%s4661 + $0xe8] sm:$0xf]
        %v4721 = vld [vmem:[%s4661 + $0xec] sm:$0xf]
        %v4722 = vld [vmem:[%s4661 + $0xf0] sm:$0xf]
        %v4723 = vld [vmem:[%s4661 + $0xf4] sm:$0xf]
        %v4724 = vld [vmem:[%s4661 + $0xf8] sm:$0xf]
        %v4725 = vld [vmem:[%s4661 + $0xfc] sm:$0xf]
        %v4790 = vunpack.c.l.b16 %v4662
        %v4791 = vunpack.c.l.b16 %v4663
        %v4792 = vunpack.c.l.b16 %v4664
        %v4793 = vunpack.c.l.b16 %v4665
        %v4794 = vunpack.c.l.b16 %v4666
        %v4795 = vunpack.c.l.b16 %v4667
        %v4796 = vunpack.c.l.b16 %v4668
        %v4797 = vunpack.c.l.b16 %v4669
        %v4798 = vunpack.c.l.b16 %v4670
        %v4799 = vunpack.c.l.b16 %v4671
        %v4800 = vunpack.c.l.b16 %v4672
        %v4801 = vunpack.c.l.b16 %v4673
        %v4802 = vunpack.c.l.b16 %v4674
        %v4803 = vunpack.c.l.b16 %v4675
        %v4804 = vunpack.c.l.b16 %v4676
        %v4805 = vunpack.c.l.b16 %v4677
        %v4806 = vunpack.c.l.b16 %v4678
        %v4807 = vunpack.c.l.b16 %v4679
        %v4808 = vunpack.c.l.b16 %v4680
        %v4809 = vunpack.c.l.b16 %v4681
        %v4810 = vunpack.c.l.b16 %v4682
        %v4811 = vunpack.c.l.b16 %v4683
        %v4812 = vunpack.c.l.b16 %v4684
        %v4813 = vunpack.c.l.b16 %v4685
        %v4814 = vunpack.c.l.b16 %v4686
        %v4815 = vunpack.c.l.b16 %v4687
        %v4816 = vunpack.c.l.b16 %v4688
        %v4817 = vunpack.c.l.b16 %v4689
        %v4818 = vunpack.c.l.b16 %v4690
        %v4819 = vunpack.c.l.b16 %v4691
        %v4820 = vunpack.c.l.b16 %v4692
        %v4821 = vunpack.c.l.b16 %v4693
        %v4822 = vunpack.c.l.b16 %v4694
        %v4823 = vunpack.c.l.b16 %v4695
        %v4824 = vunpack.c.l.b16 %v4696
        %v4825 = vunpack.c.l.b16 %v4697
        %v4826 = vunpack.c.l.b16 %v4698
        %v4827 = vunpack.c.l.b16 %v4699
        %v4828 = vunpack.c.l.b16 %v4700
        %v4829 = vunpack.c.l.b16 %v4701
        %v4830 = vunpack.c.l.b16 %v4702
        %v4831 = vunpack.c.l.b16 %v4703
        %v4832 = vunpack.c.l.b16 %v4704
        %v4833 = vunpack.c.l.b16 %v4705
        %v4834 = vunpack.c.l.b16 %v4706
        %v4835 = vunpack.c.l.b16 %v4707
        %v4836 = vunpack.c.l.b16 %v4708
        %v4837 = vunpack.c.l.b16 %v4709
        %v4838 = vunpack.c.l.b16 %v4710
        %v4839 = vunpack.c.l.b16 %v4711
        %v4840 = vunpack.c.l.b16 %v4712
        %v4841 = vunpack.c.l.b16 %v4713
        %v4842 = vunpack.c.l.b16 %v4714
        %v4843 = vunpack.c.l.b16 %v4715
        %v4844 = vunpack.c.l.b16 %v4716
        %v4845 = vunpack.c.l.b16 %v4717
        %v4846 = vunpack.c.l.b16 %v4718
        %v4847 = vunpack.c.l.b16 %v4719
        %v4848 = vunpack.c.l.b16 %v4720
        %v4849 = vunpack.c.l.b16 %v4721
        %v4850 = vunpack.c.l.b16 %v4722
        %v4851 = vunpack.c.l.b16 %v4723
        %v4852 = vunpack.c.l.b16 %v4724
        %v4853 = vunpack.c.l.b16 %v4725
        %v4854 = vpack.c.b16 %v4791, %v4790
        %v4855 = vpack.c.b16 %v4793, %v4792
        %v4856 = vpack.c.b16 %v4795, %v4794
        %v4857 = vpack.c.b16 %v4797, %v4796
        %v4858 = vpack.c.b16 %v4799, %v4798
        %v4859 = vpack.c.b16 %v4801, %v4800
        %v4860 = vpack.c.b16 %v4803, %v4802
        %v4861 = vpack.c.b16 %v4805, %v4804
        %v4862 = vpack.c.b16 %v4807, %v4806
        %v4863 = vpack.c.b16 %v4809, %v4808
        %v4864 = vpack.c.b16 %v4811, %v4810
        %v4865 = vpack.c.b16 %v4813, %v4812
        %v4866 = vpack.c.b16 %v4815, %v4814
        %v4867 = vpack.c.b16 %v4817, %v4816
        %v4868 = vpack.c.b16 %v4819, %v4818
        %v4869 = vpack.c.b16 %v4821, %v4820
        %v4870 = vpack.c.b16 %v4823, %v4822
        %v4871 = vpack.c.b16 %v4825, %v4824
        %v4872 = vpack.c.b16 %v4827, %v4826
        %v4873 = vpack.c.b16 %v4829, %v4828
        %v4874 = vpack.c.b16 %v4831, %v4830
        %v4875 = vpack.c.b16 %v4833, %v4832
        %v4876 = vpack.c.b16 %v4835, %v4834
        %v4877 = vpack.c.b16 %v4837, %v4836
        %v4878 = vpack.c.b16 %v4839, %v4838
        %v4879 = vpack.c.b16 %v4841, %v4840
        %v4880 = vpack.c.b16 %v4843, %v4842
        %v4881 = vpack.c.b16 %v4845, %v4844
        %v4882 = vpack.c.b16 %v4847, %v4846
        %v4883 = vpack.c.b16 %v4849, %v4848
        %v4884 = vpack.c.b16 %v4851, %v4850
        %v4885 = vpack.c.b16 %v4853, %v4852
        %4918 = vmatprep.subr.bf16.mxu0 0
        %4919 = vmatpush1.bf16.msra.mxu0 %v4854
        %4920 = vmatprep.subr.bf16.mxu0 0
        %4921 = vmatpush1.bf16.msra.mxu0 %v4855
        %4922 = vmatprep.subr.bf16.mxu0 0
        %4923 = vmatpush1.bf16.msra.mxu0 %v4856
        %4924 = vmatprep.subr.bf16.mxu0 0
        %4925 = vmatpush1.bf16.msra.mxu0 %v4857
        %4926 = vmatprep.subr.bf16.mxu0 0
        %4927 = vmatpush1.bf16.msra.mxu0 %v4858
        %4928 = vmatprep.subr.bf16.mxu0 0
        %4929 = vmatpush1.bf16.msra.mxu0 %v4859
        %4930 = vmatprep.subr.bf16.mxu0 0
        %4931 = vmatpush1.bf16.msra.mxu0 %v4860
        %4932 = vmatprep.subr.bf16.mxu0 0
        %4933 = vmatpush1.bf16.msra.mxu0 %v4861
        %4934 = vmatprep.subr.bf16.mxu0 0
        %4935 = vmatpush1.bf16.msra.mxu0 %v4862
        %4936 = vmatprep.subr.bf16.mxu0 0
        %4937 = vmatpush1.bf16.msra.mxu0 %v4863
        %4938 = vmatprep.subr.bf16.mxu0 0
        %4939 = vmatpush1.bf16.msra.mxu0 %v4864
        %4940 = vmatprep.subr.bf16.mxu0 0
        %4941 = vmatpush1.bf16.msra.mxu0 %v4865
        %4942 = vmatprep.subr.bf16.mxu0 0
        %4943 = vmatpush1.bf16.msra.mxu0 %v4866
        %4944 = vmatprep.subr.bf16.mxu0 0
        %4945 = vmatpush1.bf16.msra.mxu0 %v4867
        %4946 = vmatprep.subr.bf16.mxu0 0
        %4947 = vmatpush1.bf16.msra.mxu0 %v4868
        %4948 = vmatprep.subr.bf16.mxu0 0
        %4949 = vmatpush1.bf16.msra.mxu0 %v4869
        %4950 = vmatprep.mubr.bf16.mxu0 %v1197
        %4951 = vmatmul.mubr.bf16.gmra.mrb[0].mxu0 %v624
        %v4952 = vpop.f32.mrb[0].mxu0
        %v4953 = vadd.f32 %v717, %v4952
        %v4954 = vpop.f32.mrb[0].mxu0
        %v4955 = vpop.f32.mrb[0].mxu0
        %v4956 = vadd.f32 %v717, %v4955
        %v4957 = vpop.f32.mrb[0].mxu0
        %4958 = vmatprep.mubr.bf16.mxu0 %v1198
        %4959 = vmatmul.mubr.bf16.gmra.mrb[0].mxu0 %v625
        %v4960 = vpop.f32.mrb[0].mxu0
        %v4961 = vadd.f32 %v717, %v4960
        %v4962 = vpop.f32.mrb[0].mxu0
        %v4963 = vpop.f32.mrb[0].mxu0
        %v4964 = vadd.f32 %v717, %v4963
        %v4965 = vpop.f32.mrb[0].mxu0
        %4966 = vmatprep.mubr.bf16.mxu0 %v1199
        %4967 = vmatmul.mubr.bf16.gmra.mrb[0].mxu0 %v626
        %v4968 = vpop.f32.mrb[0].mxu0
        %v4969 = vadd.f32 %v717, %v4968
        %v4970 = vpop.f32.mrb[0].mxu0
        %v4971 = vpop.f32.mrb[0].mxu0
        %v4972 = vadd.f32 %v717, %v4971
        %v4973 = vpop.f32.mrb[0].mxu0
        %4974 = vmatprep.mubr.bf16.mxu0 %v1200
        %4975 = vmatmul.mubr.bf16.gmra.mrb[0].mxu0 %v627
        %v4976 = vpop.f32.mrb[0].mxu0
        %v4977 = vadd.f32 %v717, %v4976
        %v4978 = vpop.f32.mrb[0].mxu0
        %v4979 = vpop.f32.mrb[0].mxu0
        %v4980 = vadd.f32 %v717, %v4979
        %v4981 = vpop.f32.mrb[0].mxu0
        %4982 = vmatprep.mubr.bf16.mxu0 %v1201
        %4983 = vmatmul.mubr.bf16.gmra.mrb[0].mxu0 %v628
        %v4984 = vpop.f32.mrb[0].mxu0
        %v4985 = vadd.f32 %v717, %v4984
        %v4986 = vpop.f32.mrb[0].mxu0
        %v4987 = vpop.f32.mrb[0].mxu0
        %v4988 = vadd.f32 %v717, %v4987
        %v4989 = vpop.f32.mrb[0].mxu0
        %4990 = vmatprep.mubr.bf16.mxu0 %v1202
        %4991 = vmatmul.mubr.bf16.gmra.mrb[0].mxu0 %v629
        %v4992 = vpop.f32.mrb[0].mxu0
        %v4993 = vadd.f32 %v717, %v4992
        %v4994 = vpop.f32.mrb[0].mxu0
        %v4995 = vpop.f32.mrb[0].mxu0
        %v4996 = vadd.f32 %v717, %v4995
        %v4997 = vpop.f32.mrb[0].mxu0
        %4998 = vmatprep.mubr.bf16.mxu0 %v1203
        %4999 = vmatmul.mubr.bf16.gmra.mrb[0].mxu0 %v630
        %v5000 = vpop.f32.mrb[0].mxu0
        %v5001 = vadd.f32 %v717, %v5000
        %v5002 = vpop.f32.mrb[0].mxu0
        %v5003 = vpop.f32.mrb[0].mxu0
        %v5004 = vadd.f32 %v717, %v5003
        %v5005 = vpop.f32.mrb[0].mxu0
        %5006 = vmatprep.mubr.bf16.mxu0 %v1214
        %5007 = vmatmul.mubr.bf16.gmra.mrb[0].mxu0 %v647
        %v5008 = vpop.f32.mrb[0].mxu0
        %v5009 = vadd.f32 %v717, %v5008
        %v5010 = vpop.f32.mrb[0].mxu0
        %v5011 = vpop.f32.mrb[0].mxu0
        %v5012 = vadd.f32 %v717, %v5011
        %v5013 = vpop.f32.mrb[0].mxu0
        %5014 = vdwg.mxu0
        %5015 = vmatprep.subr.bf16.mxu0 0
        %5016 = vmatpush1.bf16.msra.mxu0 %v4870
        %5017 = vmatprep.subr.bf16.mxu0 0
        %5018 = vmatpush1.bf16.msra.mxu0 %v4871
        %5019 = vmatprep.subr.bf16.mxu0 0
        %5020 = vmatpush1.bf16.msra.mxu0 %v4872
        %5021 = vmatprep.subr.bf16.mxu0 0
        %5022 = vmatpush1.bf16.msra.mxu0 %v4873
        %5023 = vmatprep.subr.bf16.mxu0 0
        %5024 = vmatpush1.bf16.msra.mxu0 %v4874
        %5025 = vmatprep.subr.bf16.mxu0 0
        %5026 = vmatpush1.bf16.msra.mxu0 %v4875
        %5027 = vmatprep.subr.bf16.mxu0 0
        %5028 = vmatpush1.bf16.msra.mxu0 %v4876
        %5029 = vmatprep.subr.bf16.mxu0 0
        %5030 = vmatpush1.bf16.msra.mxu0 %v4877
        %5031 = vmatprep.subr.bf16.mxu0 0
        %5032 = vmatpush1.bf16.msra.mxu0 %v4878
        %5033 = vmatprep.subr.bf16.mxu0 0
        %5034 = vmatpush1.bf16.msra.mxu0 %v4879
        %5035 = vmatprep.subr.bf16.mxu0 0
        %5036 = vmatpush1.bf16.msra.mxu0 %v4880
        %5037 = vmatprep.subr.bf16.mxu0 0
        %5038 = vmatpush1.bf16.msra.mxu0 %v4881
        %5039 = vmatprep.subr.bf16.mxu0 0
        %5040 = vmatpush1.bf16.msra.mxu0 %v4882
        %5041 = vmatprep.subr.bf16.mxu0 0
        %5042 = vmatpush1.bf16.msra.mxu0 %v4883
        %5043 = vmatprep.subr.bf16.mxu0 0
        %5044 = vmatpush1.bf16.msra.mxu0 %v4884
        %5045 = vmatprep.subr.bf16.mxu0 0
        %5046 = vmatpush1.bf16.msra.mxu0 %v4885
        %5047 = vmatprep.mubr.bf16.mxu0 %v1198
        %5048 = vmatmul.mubr.bf16.gmra.mrb[0].mxu0 %v625
        %v5049 = vpop.f32.mrb[0].mxu0
        %v5050 = vadd.f32 %v4953, %v5049
        %v5051 = vpop.f32.mrb[0].mxu0
        %v5052 = vpop.f32.mrb[0].mxu0
        %v5053 = vadd.f32 %v4956, %v5052
        %v5054 = vpop.f32.mrb[0].mxu0
        %5055 = vmatprep.mubr.bf16.mxu0 %v1199
        %5056 = vmatmul.mubr.bf16.gmra.mrb[0].mxu0 %v626
        %v5057 = vpop.f32.mrb[0].mxu0
        %v5058 = vadd.f32 %v4961, %v5057
        %v5059 = vpop.f32.mrb[0].mxu0
        %v5060 = vpop.f32.mrb[0].mxu0
        %v5061 = vadd.f32 %v4964, %v5060
        %v5062 = vpop.f32.mrb[0].mxu0
        %5063 = vmatprep.mubr.bf16.mxu0 %v1200
        %5064 = vmatmul.mubr.bf16.gmra.mrb[0].mxu0 %v627
        %v5065 = vpop.f32.mrb[0].mxu0
        %v5066 = vadd.f32 %v4969, %v5065
        %v5067 = vpop.f32.mrb[0].mxu0
        %v5068 = vpop.f32.mrb[0].mxu0
        %v5069 = vadd.f32 %v4972, %v5068
        %v5070 = vpop.f32.mrb[0].mxu0
        %5071 = vmatprep.mubr.bf16.mxu0 %v1201
        %5072 = vmatmul.mubr.bf16.gmra.mrb[0].mxu0 %v628
        %v5073 = vpop.f32.mrb[0].mxu0
        %v5074 = vadd.f32 %v4977, %v5073
        %v5075 = vpop.f32.mrb[0].mxu0
        %v5076 = vpop.f32.mrb[0].mxu0
        %v5077 = vadd.f32 %v4980, %v5076
        %v5078 = vpop.f32.mrb[0].mxu0
        %5079 = vmatprep.mubr.bf16.mxu0 %v1202
        %5080 = vmatmul.mubr.bf16.gmra.mrb[0].mxu0 %v629
        %v5081 = vpop.f32.mrb[0].mxu0
        %v5082 = vadd.f32 %v4985, %v5081
        %v5083 = vpop.f32.mrb[0].mxu0
        %v5084 = vpop.f32.mrb[0].mxu0
        %v5085 = vadd.f32 %v4988, %v5084
        %v5086 = vpop.f32.mrb[0].mxu0
        %5087 = vmatprep.mubr.bf16.mxu0 %v1203
        %5088 = vmatmul.mubr.bf16.gmra.mrb[0].mxu0 %v630
        %v5089 = vpop.f32.mrb[0].mxu0
        %v5090 = vadd.f32 %v4993, %v5089
        %v5091 = vpop.f32.mrb[0].mxu0
        %v5092 = vpop.f32.mrb[0].mxu0
        %v5093 = vadd.f32 %v4996, %v5092
        %v5094 = vpop.f32.mrb[0].mxu0
        %5095 = vmatprep.mubr.bf16.mxu0 %v1214
        %5096 = vmatmul.mubr.bf16.gmra.mrb[0].mxu0 %v647
        %v5097 = vpop.f32.mrb[0].mxu0
        %v5098 = vadd.f32 %v5001, %v5097
        %v5099 = vpop.f32.mrb[0].mxu0
        %v5100 = vpop.f32.mrb[0].mxu0
        %v5101 = vadd.f32 %v5004, %v5100
        %v5102 = vpop.f32.mrb[0].mxu0
        %5103 = vmatprep.mubr.bf16.mxu0 %v4659
        %5104 = vmatmul.mubr.bf16.gmra.mrb[0].mxu0 %v4196
        %v5105 = vpop.f32.mrb[0].mxu0
        %v5106 = vadd.f32 %v5009, %v5105
        %v5107 = vpop.f32.mrb[0].mxu0
        %v5108 = vpop.f32.mrb[0].mxu0
        %v5109 = vadd.f32 %v5012, %v5108
        %v5110 = vpop.f32.mrb[0].mxu0
        %5111 = vdwg.mxu0
        %v5128 = vcombine.high %v4587, %v4587
        %v5130 = vunpack.c.l.s4 1966171168
        %v5131 = vunpack.c.0.s8 %v5130
        %v5132 = vlaneseq
        %v5133 = vshrl.u32 %v5132, 7
        %v5134 = vsub.s32 %v5131, %v5133
        %v5135 = vrot.slane %v4587, %v5134
        %v5137 = vunpack.c.l.s4 1966171168
        %v5138 = vunpack.c.0.s8 %v5137
        %v5139 = vlaneseq
        %v5140 = vshrl.u32 %v5139, 7
        %v5141 = vsub.s32 %v5138, %v5140
        %v5142 = vrot.slane %v5128, %v5141
        %v5143 = vcombine.high %v5135, %v5135
        %v5144 = vcombine.high %v5142, %v5142
        %v5146 = vunpack.c.l.s4 1966171168
        %v5147 = vunpack.c.0.s8 %v5146
        %v5148 = vlaneseq
        %v5149 = vshrl.u32 %v5148, 7
        %v5150 = vsub.s32 %v5147, %v5149
        %v5151 = vrot.slane %v5135, %v5150
        %v5153 = vunpack.c.l.s4 1966171168
        %v5154 = vunpack.c.0.s8 %v5153
        %v5155 = vlaneseq
        %v5156 = vshrl.u32 %v5155, 7
        %v5157 = vsub.s32 %v5154, %v5156
        %v5158 = vrot.slane %v5142, %v5157
        %v5160 = vunpack.c.l.s4 1966171168
        %v5161 = vunpack.c.0.s8 %v5160
        %v5162 = vlaneseq
        %v5163 = vshrl.u32 %v5162, 7
        %v5164 = vsub.s32 %v5161, %v5163
        %v5165 = vrot.slane %v5143, %v5164
        %v5167 = vunpack.c.l.s4 1966171168
        %v5168 = vunpack.c.0.s8 %v5167
        %v5169 = vlaneseq
        %v5170 = vshrl.u32 %v5169, 7
        %v5171 = vsub.s32 %v5168, %v5170
        %v5172 = vrot.slane %v5144, %v5171
        %v5173 = vcombine.high %v5151, %v5151
        %v5174 = vcombine.high %v5158, %v5158
        %v5175 = vcombine.high %v5165, %v5165
        %v5176 = vcombine.high %v5172, %v5172
        %v5177 = vcombine.high %v4590, %v4590
        %v5179 = vunpack.c.l.s4 1966171168
        %v5180 = vunpack.c.0.s8 %v5179
        %v5181 = vlaneseq
        %v5182 = vshrl.u32 %v5181, 7
        %v5183 = vsub.s32 %v5180, %v5182
        %v5184 = vrot.slane %v4590, %v5183
        %v5186 = vunpack.c.l.s4 1966171168
        %v5187 = vunpack.c.0.s8 %v5186
        %v5188 = vlaneseq
        %v5189 = vshrl.u32 %v5188, 7
        %v5190 = vsub.s32 %v5187, %v5189
        %v5191 = vrot.slane %v5177, %v5190
        %v5192 = vcombine.high %v5184, %v5184
        %v5193 = vcombine.high %v5191, %v5191
        %v5195 = vunpack.c.l.s4 1966171168
        %v5196 = vunpack.c.0.s8 %v5195
        %v5197 = vlaneseq
        %v5198 = vshrl.u32 %v5197, 7
        %v5199 = vsub.s32 %v5196, %v5198
        %v5200 = vrot.slane %v5184, %v5199
        %v5202 = vunpack.c.l.s4 1966171168
        %v5203 = vunpack.c.0.s8 %v5202
        %v5204 = vlaneseq
        %v5205 = vshrl.u32 %v5204, 7
        %v5206 = vsub.s32 %v5203, %v5205
        %v5207 = vrot.slane %v5191, %v5206
        %v5209 = vunpack.c.l.s4 1966171168
        %v5210 = vunpack.c.0.s8 %v5209
        %v5211 = vlaneseq
        %v5212 = vshrl.u32 %v5211, 7
        %v5213 = vsub.s32 %v5210, %v5212
        %v5214 = vrot.slane %v5192, %v5213
        %v5216 = vunpack.c.l.s4 1966171168
        %v5217 = vunpack.c.0.s8 %v5216
        %v5218 = vlaneseq
        %v5219 = vshrl.u32 %v5218, 7
        %v5220 = vsub.s32 %v5217, %v5219
        %v5221 = vrot.slane %v5193, %v5220
        %v5222 = vcombine.high %v5200, %v5200
        %v5223 = vcombine.high %v5207, %v5207
        %v5224 = vcombine.high %v5214, %v5214
        %v5225 = vcombine.high %v5221, %v5221
        %v5226 = vcombine.high %v4595, %v4595
        %v5228 = vunpack.c.l.s4 1966171168
        %v5229 = vunpack.c.0.s8 %v5228
        %v5230 = vlaneseq
        %v5231 = vshrl.u32 %v5230, 7
        %v5232 = vsub.s32 %v5229, %v5231
        %v5233 = vrot.slane %v4595, %v5232
        %v5235 = vunpack.c.l.s4 1966171168
        %v5236 = vunpack.c.0.s8 %v5235
        %v5237 = vlaneseq
        %v5238 = vshrl.u32 %v5237, 7
        %v5239 = vsub.s32 %v5236, %v5238
        %v5240 = vrot.slane %v5226, %v5239
        %v5241 = vcombine.high %v5233, %v5233
        %v5242 = vcombine.high %v5240, %v5240
        %v5244 = vunpack.c.l.s4 1966171168
        %v5245 = vunpack.c.0.s8 %v5244
        %v5246 = vlaneseq
        %v5247 = vshrl.u32 %v5246, 7
        %v5248 = vsub.s32 %v5245, %v5247
        %v5249 = vrot.slane %v5233, %v5248
        %v5251 = vunpack.c.l.s4 1966171168
        %v5252 = vunpack.c.0.s8 %v5251
        %v5253 = vlaneseq
        %v5254 = vshrl.u32 %v5253, 7
        %v5255 = vsub.s32 %v5252, %v5254
        %v5256 = vrot.slane %v5240, %v5255
        %v5258 = vunpack.c.l.s4 1966171168
        %v5259 = vunpack.c.0.s8 %v5258
        %v5260 = vlaneseq
        %v5261 = vshrl.u32 %v5260, 7
        %v5262 = vsub.s32 %v5259, %v5261
        %v5263 = vrot.slane %v5241, %v5262
        %v5265 = vunpack.c.l.s4 1966171168
        %v5266 = vunpack.c.0.s8 %v5265
        %v5267 = vlaneseq
        %v5268 = vshrl.u32 %v5267, 7
        %v5269 = vsub.s32 %v5266, %v5268
        %v5270 = vrot.slane %v5242, %v5269
        %v5271 = vcombine.high %v5249, %v5249
        %v5272 = vcombine.high %v5256, %v5256
        %v5273 = vcombine.high %v5263, %v5263
        %v5274 = vcombine.high %v5270, %v5270
        %v5275 = vcombine.high %v4598, %v4598
        %v5277 = vunpack.c.l.s4 1966171168
        %v5278 = vunpack.c.0.s8 %v5277
        %v5279 = vlaneseq
        %v5280 = vshrl.u32 %v5279, 7
        %v5281 = vsub.s32 %v5278, %v5280
        %v5282 = vrot.slane %v4598, %v5281
        %v5284 = vunpack.c.l.s4 1966171168
        %v5285 = vunpack.c.0.s8 %v5284
        %v5286 = vlaneseq
        %v5287 = vshrl.u32 %v5286, 7
        %v5288 = vsub.s32 %v5285, %v5287
        %v5289 = vrot.slane %v5275, %v5288
        %v5290 = vcombine.high %v5282, %v5282
        %v5291 = vcombine.high %v5289, %v5289
        %v5293 = vunpack.c.l.s4 1966171168
        %v5294 = vunpack.c.0.s8 %v5293
        %v5295 = vlaneseq
        %v5296 = vshrl.u32 %v5295, 7
        %v5297 = vsub.s32 %v5294, %v5296
        %v5298 = vrot.slane %v5282, %v5297
        %v5300 = vunpack.c.l.s4 1966171168
        %v5301 = vunpack.c.0.s8 %v5300
        %v5302 = vlaneseq
        %v5303 = vshrl.u32 %v5302, 7
        %v5304 = vsub.s32 %v5301, %v5303
        %v5305 = vrot.slane %v5289, %v5304
        %v5307 = vunpack.c.l.s4 1966171168
        %v5308 = vunpack.c.0.s8 %v5307
        %v5309 = vlaneseq
        %v5310 = vshrl.u32 %v5309, 7
        %v5311 = vsub.s32 %v5308, %v5310
        %v5312 = vrot.slane %v5290, %v5311
        %v5314 = vunpack.c.l.s4 1966171168
        %v5315 = vunpack.c.0.s8 %v5314
        %v5316 = vlaneseq
        %v5317 = vshrl.u32 %v5316, 7
        %v5318 = vsub.s32 %v5315, %v5317
        %v5319 = vrot.slane %v5291, %v5318
        %v5320 = vcombine.high %v5298, %v5298
        %v5321 = vcombine.high %v5305, %v5305
        %v5322 = vcombine.high %v5312, %v5312
        %v5323 = vcombine.high %v5319, %v5319
        %v5324 = vcombine.high %v4603, %v4603
        %v5326 = vunpack.c.l.s4 1966171168
        %v5327 = vunpack.c.0.s8 %v5326
        %v5328 = vlaneseq
        %v5329 = vshrl.u32 %v5328, 7
        %v5330 = vsub.s32 %v5327, %v5329
        %v5331 = vrot.slane %v4603, %v5330
        %v5333 = vunpack.c.l.s4 1966171168
        %v5334 = vunpack.c.0.s8 %v5333
        %v5335 = vlaneseq
        %v5336 = vshrl.u32 %v5335, 7
        %v5337 = vsub.s32 %v5334, %v5336
        %v5338 = vrot.slane %v5324, %v5337
        %v5339 = vcombine.high %v5331, %v5331
        %v5340 = vcombine.high %v5338, %v5338
        %v5342 = vunpack.c.l.s4 1966171168
        %v5343 = vunpack.c.0.s8 %v5342
        %v5344 = vlaneseq
        %v5345 = vshrl.u32 %v5344, 7
        %v5346 = vsub.s32 %v5343, %v5345
        %v5347 = vrot.slane %v5331, %v5346
        %v5349 = vunpack.c.l.s4 1966171168
        %v5350 = vunpack.c.0.s8 %v5349
        %v5351 = vlaneseq
        %v5352 = vshrl.u32 %v5351, 7
        %v5353 = vsub.s32 %v5350, %v5352
        %v5354 = vrot.slane %v5338, %v5353
        %v5356 = vunpack.c.l.s4 1966171168
        %v5357 = vunpack.c.0.s8 %v5356
        %v5358 = vlaneseq
        %v5359 = vshrl.u32 %v5358, 7
        %v5360 = vsub.s32 %v5357, %v5359
        %v5361 = vrot.slane %v5339, %v5360
        %v5363 = vunpack.c.l.s4 1966171168
        %v5364 = vunpack.c.0.s8 %v5363
        %v5365 = vlaneseq
        %v5366 = vshrl.u32 %v5365, 7
        %v5367 = vsub.s32 %v5364, %v5366
        %v5368 = vrot.slane %v5340, %v5367
        %v5369 = vcombine.high %v5347, %v5347
        %v5370 = vcombine.high %v5354, %v5354
        %v5371 = vcombine.high %v5361, %v5361
        %v5372 = vcombine.high %v5368, %v5368
        %v5373 = vcombine.high %v4606, %v4606
        %v5375 = vunpack.c.l.s4 1966171168
        %v5376 = vunpack.c.0.s8 %v5375
        %v5377 = vlaneseq
        %v5378 = vshrl.u32 %v5377, 7
        %v5379 = vsub.s32 %v5376, %v5378
        %v5380 = vrot.slane %v4606, %v5379
        %v5382 = vunpack.c.l.s4 1966171168
        %v5383 = vunpack.c.0.s8 %v5382
        %v5384 = vlaneseq
        %v5385 = vshrl.u32 %v5384, 7
        %v5386 = vsub.s32 %v5383, %v5385
        %v5387 = vrot.slane %v5373, %v5386
        %v5388 = vcombine.high %v5380, %v5380
        %v5389 = vcombine.high %v5387, %v5387
        %v5391 = vunpack.c.l.s4 1966171168
        %v5392 = vunpack.c.0.s8 %v5391
        %v5393 = vlaneseq
        %v5394 = vshrl.u32 %v5393, 7
        %v5395 = vsub.s32 %v5392, %v5394
        %v5396 = vrot.slane %v5380, %v5395
        %v5398 = vunpack.c.l.s4 1966171168
        %v5399 = vunpack.c.0.s8 %v5398
        %v5400 = vlaneseq
        %v5401 = vshrl.u32 %v5400, 7
        %v5402 = vsub.s32 %v5399, %v5401
        %v5403 = vrot.slane %v5387, %v5402
        %v5405 = vunpack.c.l.s4 1966171168
        %v5406 = vunpack.c.0.s8 %v5405
        %v5407 = vlaneseq
        %v5408 = vshrl.u32 %v5407, 7
        %v5409 = vsub.s32 %v5406, %v5408
        %v5410 = vrot.slane %v5388, %v5409
        %v5412 = vunpack.c.l.s4 1966171168
        %v5413 = vunpack.c.0.s8 %v5412
        %v5414 = vlaneseq
        %v5415 = vshrl.u32 %v5414, 7
        %v5416 = vsub.s32 %v5413, %v5415
        %v5417 = vrot.slane %v5389, %v5416
        %v5418 = vcombine.high %v5396, %v5396
        %v5419 = vcombine.high %v5403, %v5403
        %v5420 = vcombine.high %v5410, %v5410
        %v5421 = vcombine.high %v5417, %v5417
        %v5422 = vcombine.high %v4611, %v4611
        %v5424 = vunpack.c.l.s4 1966171168
        %v5425 = vunpack.c.0.s8 %v5424
        %v5426 = vlaneseq
        %v5427 = vshrl.u32 %v5426, 7
        %v5428 = vsub.s32 %v5425, %v5427
        %v5429 = vrot.slane %v4611, %v5428
        %v5431 = vunpack.c.l.s4 1966171168
        %v5432 = vunpack.c.0.s8 %v5431
        %v5433 = vlaneseq
        %v5434 = vshrl.u32 %v5433, 7
        %v5435 = vsub.s32 %v5432, %v5434
        %v5436 = vrot.slane %v5422, %v5435
        %v5437 = vcombine.high %v5429, %v5429
        %v5438 = vcombine.high %v5436, %v5436
        %v5440 = vunpack.c.l.s4 1966171168
        %v5441 = vunpack.c.0.s8 %v5440
        %v5442 = vlaneseq
        %v5443 = vshrl.u32 %v5442, 7
        %v5444 = vsub.s32 %v5441, %v5443
        %v5445 = vrot.slane %v5429, %v5444
        %v5447 = vunpack.c.l.s4 1966171168
        %v5448 = vunpack.c.0.s8 %v5447
        %v5449 = vlaneseq
        %v5450 = vshrl.u32 %v5449, 7
        %v5451 = vsub.s32 %v5448, %v5450
        %v5452 = vrot.slane %v5436, %v5451
        %v5454 = vunpack.c.l.s4 1966171168
        %v5455 = vunpack.c.0.s8 %v5454
        %v5456 = vlaneseq
        %v5457 = vshrl.u32 %v5456, 7
        %v5458 = vsub.s32 %v5455, %v5457
        %v5459 = vrot.slane %v5437, %v5458
        %v5461 = vunpack.c.l.s4 1966171168
        %v5462 = vunpack.c.0.s8 %v5461
        %v5463 = vlaneseq
        %v5464 = vshrl.u32 %v5463, 7
        %v5465 = vsub.s32 %v5462, %v5464
        %v5466 = vrot.slane %v5438, %v5465
        %v5467 = vcombine.high %v5445, %v5445
        %v5468 = vcombine.high %v5452, %v5452
        %v5469 = vcombine.high %v5459, %v5459
        %v5470 = vcombine.high %v5466, %v5466
        %v5471 = vcombine.high %v4614, %v4614
        %v5473 = vunpack.c.l.s4 1966171168
        %v5474 = vunpack.c.0.s8 %v5473
        %v5475 = vlaneseq
        %v5476 = vshrl.u32 %v5475, 7
        %v5477 = vsub.s32 %v5474, %v5476
        %v5478 = vrot.slane %v4614, %v5477
        %v5480 = vunpack.c.l.s4 1966171168
        %v5481 = vunpack.c.0.s8 %v5480
        %v5482 = vlaneseq
        %v5483 = vshrl.u32 %v5482, 7
        %v5484 = vsub.s32 %v5481, %v5483
        %v5485 = vrot.slane %v5471, %v5484
        %v5486 = vcombine.high %v5478, %v5478
        %v5487 = vcombine.high %v5485, %v5485
        %v5489 = vunpack.c.l.s4 1966171168
        %v5490 = vunpack.c.0.s8 %v5489
        %v5491 = vlaneseq
        %v5492 = vshrl.u32 %v5491, 7
        %v5493 = vsub.s32 %v5490, %v5492
        %v5494 = vrot.slane %v5478, %v5493
        %v5496 = vunpack.c.l.s4 1966171168
        %v5497 = vunpack.c.0.s8 %v5496
        %v5498 = vlaneseq
        %v5499 = vshrl.u32 %v5498, 7
        %v5500 = vsub.s32 %v5497, %v5499
        %v5501 = vrot.slane %v5485, %v5500
        %v5503 = vunpack.c.l.s4 1966171168
        %v5504 = vunpack.c.0.s8 %v5503
        %v5505 = vlaneseq
        %v5506 = vshrl.u32 %v5505, 7
        %v5507 = vsub.s32 %v5504, %v5506
        %v5508 = vrot.slane %v5486, %v5507
        %v5510 = vunpack.c.l.s4 1966171168
        %v5511 = vunpack.c.0.s8 %v5510
        %v5512 = vlaneseq
        %v5513 = vshrl.u32 %v5512, 7
        %v5514 = vsub.s32 %v5511, %v5513
        %v5515 = vrot.slane %v5487, %v5514
        %v5516 = vcombine.high %v5494, %v5494
        %v5517 = vcombine.high %v5501, %v5501
        %v5518 = vcombine.high %v5508, %v5508
        %v5519 = vcombine.high %v5515, %v5515
        %v5520 = vcombine.high %v4619, %v4619
        %v5522 = vunpack.c.l.s4 1966171168
        %v5523 = vunpack.c.0.s8 %v5522
        %v5524 = vlaneseq
        %v5525 = vshrl.u32 %v5524, 7
        %v5526 = vsub.s32 %v5523, %v5525
        %v5527 = vrot.slane %v4619, %v5526
        %v5529 = vunpack.c.l.s4 1966171168
        %v5530 = vunpack.c.0.s8 %v5529
        %v5531 = vlaneseq
        %v5532 = vshrl.u32 %v5531, 7
        %v5533 = vsub.s32 %v5530, %v5532
        %v5534 = vrot.slane %v5520, %v5533
        %v5535 = vcombine.high %v5527, %v5527
        %v5536 = vcombine.high %v5534, %v5534
        %v5538 = vunpack.c.l.s4 1966171168
        %v5539 = vunpack.c.0.s8 %v5538
        %v5540 = vlaneseq
        %v5541 = vshrl.u32 %v5540, 7
        %v5542 = vsub.s32 %v5539, %v5541
        %v5543 = vrot.slane %v5527, %v5542
        %v5545 = vunpack.c.l.s4 1966171168
        %v5546 = vunpack.c.0.s8 %v5545
        %v5547 = vlaneseq
        %v5548 = vshrl.u32 %v5547, 7
        %v5549 = vsub.s32 %v5546, %v5548
        %v5550 = vrot.slane %v5534, %v5549
        %v5552 = vunpack.c.l.s4 1966171168
        %v5553 = vunpack.c.0.s8 %v5552
        %v5554 = vlaneseq
        %v5555 = vshrl.u32 %v5554, 7
        %v5556 = vsub.s32 %v5553, %v5555
        %v5557 = vrot.slane %v5535, %v5556
        %v5559 = vunpack.c.l.s4 1966171168
        %v5560 = vunpack.c.0.s8 %v5559
        %v5561 = vlaneseq
        %v5562 = vshrl.u32 %v5561, 7
        %v5563 = vsub.s32 %v5560, %v5562
        %v5564 = vrot.slane %v5536, %v5563
        %v5565 = vcombine.high %v5543, %v5543
        %v5566 = vcombine.high %v5550, %v5550
        %v5567 = vcombine.high %v5557, %v5557
        %v5568 = vcombine.high %v5564, %v5564
        %v5569 = vcombine.high %v4622, %v4622
        %v5571 = vunpack.c.l.s4 1966171168
        %v5572 = vunpack.c.0.s8 %v5571
        %v5573 = vlaneseq
        %v5574 = vshrl.u32 %v5573, 7
        %v5575 = vsub.s32 %v5572, %v5574
        %v5576 = vrot.slane %v4622, %v5575
        %v5578 = vunpack.c.l.s4 1966171168
        %v5579 = vunpack.c.0.s8 %v5578
        %v5580 = vlaneseq
        %v5581 = vshrl.u32 %v5580, 7
        %v5582 = vsub.s32 %v5579, %v5581
        %v5583 = vrot.slane %v5569, %v5582
        %v5584 = vcombine.high %v5576, %v5576
        %v5585 = vcombine.high %v5583, %v5583
        %v5587 = vunpack.c.l.s4 1966171168
        %v5588 = vunpack.c.0.s8 %v5587
        %v5589 = vlaneseq
        %v5590 = vshrl.u32 %v5589, 7
        %v5591 = vsub.s32 %v5588, %v5590
        %v5592 = vrot.slane %v5576, %v5591
        %v5594 = vunpack.c.l.s4 1966171168
        %v5595 = vunpack.c.0.s8 %v5594
        %v5596 = vlaneseq
        %v5597 = vshrl.u32 %v5596, 7
        %v5598 = vsub.s32 %v5595, %v5597
        %v5599 = vrot.slane %v5583, %v5598
        %v5601 = vunpack.c.l.s4 1966171168
        %v5602 = vunpack.c.0.s8 %v5601
        %v5603 = vlaneseq
        %v5604 = vshrl.u32 %v5603, 7
        %v5605 = vsub.s32 %v5602, %v5604
        %v5606 = vrot.slane %v5584, %v5605
        %v5608 = vunpack.c.l.s4 1966171168
        %v5609 = vunpack.c.0.s8 %v5608
        %v5610 = vlaneseq
        %v5611 = vshrl.u32 %v5610, 7
        %v5612 = vsub.s32 %v5609, %v5611
        %v5613 = vrot.slane %v5585, %v5612
        %v5614 = vcombine.high %v5592, %v5592
        %v5615 = vcombine.high %v5599, %v5599
        %v5616 = vcombine.high %v5606, %v5606
        %v5617 = vcombine.high %v5613, %v5613
        %v5618 = vcombine.high %v4627, %v4627
        %v5620 = vunpack.c.l.s4 1966171168
        %v5621 = vunpack.c.0.s8 %v5620
        %v5622 = vlaneseq
        %v5623 = vshrl.u32 %v5622, 7
        %v5624 = vsub.s32 %v5621, %v5623
        %v5625 = vrot.slane %v4627, %v5624
        %v5627 = vunpack.c.l.s4 1966171168
        %v5628 = vunpack.c.0.s8 %v5627
        %v5629 = vlaneseq
        %v5630 = vshrl.u32 %v5629, 7
        %v5631 = vsub.s32 %v5628, %v5630
        %v5632 = vrot.slane %v5618, %v5631
        %v5633 = vcombine.high %v5625, %v5625
        %v5634 = vcombine.high %v5632, %v5632
        %v5636 = vunpack.c.l.s4 1966171168
        %v5637 = vunpack.c.0.s8 %v5636
        %v5638 = vlaneseq
        %v5639 = vshrl.u32 %v5638, 7
        %v5640 = vsub.s32 %v5637, %v5639
        %v5641 = vrot.slane %v5625, %v5640
        %v5643 = vunpack.c.l.s4 1966171168
        %v5644 = vunpack.c.0.s8 %v5643
        %v5645 = vlaneseq
        %v5646 = vshrl.u32 %v5645, 7
        %v5647 = vsub.s32 %v5644, %v5646
        %v5648 = vrot.slane %v5632, %v5647
        %v5650 = vunpack.c.l.s4 1966171168
        %v5651 = vunpack.c.0.s8 %v5650
        %v5652 = vlaneseq
        %v5653 = vshrl.u32 %v5652, 7
        %v5654 = vsub.s32 %v5651, %v5653
        %v5655 = vrot.slane %v5633, %v5654
        %v5657 = vunpack.c.l.s4 1966171168
        %v5658 = vunpack.c.0.s8 %v5657
        %v5659 = vlaneseq
        %v5660 = vshrl.u32 %v5659, 7
        %v5661 = vsub.s32 %v5658, %v5660
        %v5662 = vrot.slane %v5634, %v5661
        %v5663 = vcombine.high %v5641, %v5641
        %v5664 = vcombine.high %v5648, %v5648
        %v5665 = vcombine.high %v5655, %v5655
        %v5666 = vcombine.high %v5662, %v5662
        %v5667 = vcombine.high %v4630, %v4630
        %v5669 = vunpack.c.l.s4 1966171168
        %v5670 = vunpack.c.0.s8 %v5669
        %v5671 = vlaneseq
        %v5672 = vshrl.u32 %v5671, 7
        %v5673 = vsub.s32 %v5670, %v5672
        %v5674 = vrot.slane %v4630, %v5673
        %v5676 = vunpack.c.l.s4 1966171168
        %v5677 = vunpack.c.0.s8 %v5676
        %v5678 = vlaneseq
        %v5679 = vshrl.u32 %v5678, 7
        %v5680 = vsub.s32 %v5677, %v5679
        %v5681 = vrot.slane %v5667, %v5680
        %v5682 = vcombine.high %v5674, %v5674
        %v5683 = vcombine.high %v5681, %v5681
        %v5685 = vunpack.c.l.s4 1966171168
        %v5686 = vunpack.c.0.s8 %v5685
        %v5687 = vlaneseq
        %v5688 = vshrl.u32 %v5687, 7
        %v5689 = vsub.s32 %v5686, %v5688
        %v5690 = vrot.slane %v5674, %v5689
        %v5692 = vunpack.c.l.s4 1966171168
        %v5693 = vunpack.c.0.s8 %v5692
        %v5694 = vlaneseq
        %v5695 = vshrl.u32 %v5694, 7
        %v5696 = vsub.s32 %v5693, %v5695
        %v5697 = vrot.slane %v5681, %v5696
        %v5699 = vunpack.c.l.s4 1966171168
        %v5700 = vunpack.c.0.s8 %v5699
        %v5701 = vlaneseq
        %v5702 = vshrl.u32 %v5701, 7
        %v5703 = vsub.s32 %v5700, %v5702
        %v5704 = vrot.slane %v5682, %v5703
        %v5706 = vunpack.c.l.s4 1966171168
        %v5707 = vunpack.c.0.s8 %v5706
        %v5708 = vlaneseq
        %v5709 = vshrl.u32 %v5708, 7
        %v5710 = vsub.s32 %v5707, %v5709
        %v5711 = vrot.slane %v5683, %v5710
        %v5712 = vcombine.high %v5690, %v5690
        %v5713 = vcombine.high %v5697, %v5697
        %v5714 = vcombine.high %v5704, %v5704
        %v5715 = vcombine.high %v5711, %v5711
        %v5716 = vcombine.high %v4635, %v4635
        %v5718 = vunpack.c.l.s4 1966171168
        %v5719 = vunpack.c.0.s8 %v5718
        %v5720 = vlaneseq
        %v5721 = vshrl.u32 %v5720, 7
        %v5722 = vsub.s32 %v5719, %v5721
        %v5723 = vrot.slane %v4635, %v5722
        %v5725 = vunpack.c.l.s4 1966171168
        %v5726 = vunpack.c.0.s8 %v5725
        %v5727 = vlaneseq
        %v5728 = vshrl.u32 %v5727, 7
        %v5729 = vsub.s32 %v5726, %v5728
        %v5730 = vrot.slane %v5716, %v5729
        %v5731 = vcombine.high %v5723, %v5723
        %v5732 = vcombine.high %v5730, %v5730
        %v5734 = vunpack.c.l.s4 1966171168
        %v5735 = vunpack.c.0.s8 %v5734
        %v5736 = vlaneseq
        %v5737 = vshrl.u32 %v5736, 7
        %v5738 = vsub.s32 %v5735, %v5737
        %v5739 = vrot.slane %v5723, %v5738
        %v5741 = vunpack.c.l.s4 1966171168
        %v5742 = vunpack.c.0.s8 %v5741
        %v5743 = vlaneseq
        %v5744 = vshrl.u32 %v5743, 7
        %v5745 = vsub.s32 %v5742, %v5744
        %v5746 = vrot.slane %v5730, %v5745
        %v5748 = vunpack.c.l.s4 1966171168
        %v5749 = vunpack.c.0.s8 %v5748
        %v5750 = vlaneseq
        %v5751 = vshrl.u32 %v5750, 7
        %v5752 = vsub.s32 %v5749, %v5751
        %v5753 = vrot.slane %v5731, %v5752
        %v5755 = vunpack.c.l.s4 1966171168
        %v5756 = vunpack.c.0.s8 %v5755
        %v5757 = vlaneseq
        %v5758 = vshrl.u32 %v5757, 7
        %v5759 = vsub.s32 %v5756, %v5758
        %v5760 = vrot.slane %v5732, %v5759
        %v5761 = vcombine.high %v5739, %v5739
        %v5762 = vcombine.high %v5746, %v5746
        %v5763 = vcombine.high %v5753, %v5753
        %v5764 = vcombine.high %v5760, %v5760
        %v5765 = vcombine.high %v4638, %v4638
        %v5767 = vunpack.c.l.s4 1966171168
        %v5768 = vunpack.c.0.s8 %v5767
        %v5769 = vlaneseq
        %v5770 = vshrl.u32 %v5769, 7
        %v5771 = vsub.s32 %v5768, %v5770
        %v5772 = vrot.slane %v4638, %v5771
        %v5774 = vunpack.c.l.s4 1966171168
        %v5775 = vunpack.c.0.s8 %v5774
        %v5776 = vlaneseq
        %v5777 = vshrl.u32 %v5776, 7
        %v5778 = vsub.s32 %v5775, %v5777
        %v5779 = vrot.slane %v5765, %v5778
        %v5780 = vcombine.high %v5772, %v5772
        %v5781 = vcombine.high %v5779, %v5779
        %v5783 = vunpack.c.l.s4 1966171168
        %v5784 = vunpack.c.0.s8 %v5783
        %v5785 = vlaneseq
        %v5786 = vshrl.u32 %v5785, 7
        %v5787 = vsub.s32 %v5784, %v5786
        %v5788 = vrot.slane %v5772, %v5787
        %v5790 = vunpack.c.l.s4 1966171168
        %v5791 = vunpack.c.0.s8 %v5790
        %v5792 = vlaneseq
        %v5793 = vshrl.u32 %v5792, 7
        %v5794 = vsub.s32 %v5791, %v5793
        %v5795 = vrot.slane %v5779, %v5794
        %v5797 = vunpack.c.l.s4 1966171168
        %v5798 = vunpack.c.0.s8 %v5797
        %v5799 = vlaneseq
        %v5800 = vshrl.u32 %v5799, 7
        %v5801 = vsub.s32 %v5798, %v5800
        %v5802 = vrot.slane %v5780, %v5801
        %v5804 = vunpack.c.l.s4 1966171168
        %v5805 = vunpack.c.0.s8 %v5804
        %v5806 = vlaneseq
        %v5807 = vshrl.u32 %v5806, 7
        %v5808 = vsub.s32 %v5805, %v5807
        %v5809 = vrot.slane %v5781, %v5808
        %v5810 = vcombine.high %v5788, %v5788
        %v5811 = vcombine.high %v5795, %v5795
        %v5812 = vcombine.high %v5802, %v5802
        %v5813 = vcombine.high %v5809, %v5809
        %v5814 = vcombine.high %v4643, %v4643
        %v5816 = vunpack.c.l.s4 1966171168
        %v5817 = vunpack.c.0.s8 %v5816
        %v5818 = vlaneseq
        %v5819 = vshrl.u32 %v5818, 7
        %v5820 = vsub.s32 %v5817, %v5819
        %v5821 = vrot.slane %v4643, %v5820
        %v5823 = vunpack.c.l.s4 1966171168
        %v5824 = vunpack.c.0.s8 %v5823
        %v5825 = vlaneseq
        %v5826 = vshrl.u32 %v5825, 7
        %v5827 = vsub.s32 %v5824, %v5826
        %v5828 = vrot.slane %v5814, %v5827
        %v5829 = vcombine.high %v5821, %v5821
        %v5830 = vcombine.high %v5828, %v5828
        %v5832 = vunpack.c.l.s4 1966171168
        %v5833 = vunpack.c.0.s8 %v5832
        %v5834 = vlaneseq
        %v5835 = vshrl.u32 %v5834, 7
        %v5836 = vsub.s32 %v5833, %v5835
        %v5837 = vrot.slane %v5821, %v5836
        %v5839 = vunpack.c.l.s4 1966171168
        %v5840 = vunpack.c.0.s8 %v5839
        %v5841 = vlaneseq
        %v5842 = vshrl.u32 %v5841, 7
        %v5843 = vsub.s32 %v5840, %v5842
        %v5844 = vrot.slane %v5828, %v5843
        %v5846 = vunpack.c.l.s4 1966171168
        %v5847 = vunpack.c.0.s8 %v5846
        %v5848 = vlaneseq
        %v5849 = vshrl.u32 %v5848, 7
        %v5850 = vsub.s32 %v5847, %v5849
        %v5851 = vrot.slane %v5829, %v5850
        %v5853 = vunpack.c.l.s4 1966171168
        %v5854 = vunpack.c.0.s8 %v5853
        %v5855 = vlaneseq
        %v5856 = vshrl.u32 %v5855, 7
        %v5857 = vsub.s32 %v5854, %v5856
        %v5858 = vrot.slane %v5830, %v5857
        %v5859 = vcombine.high %v5837, %v5837
        %v5860 = vcombine.high %v5844, %v5844
        %v5861 = vcombine.high %v5851, %v5851
        %v5862 = vcombine.high %v5858, %v5858
        %v5863 = vcombine.high %v4646, %v4646
        %v5865 = vunpack.c.l.s4 1966171168
        %v5866 = vunpack.c.0.s8 %v5865
        %v5867 = vlaneseq
        %v5868 = vshrl.u32 %v5867, 7
        %v5869 = vsub.s32 %v5866, %v5868
        %v5870 = vrot.slane %v4646, %v5869
        %v5872 = vunpack.c.l.s4 1966171168
        %v5873 = vunpack.c.0.s8 %v5872
        %v5874 = vlaneseq
        %v5875 = vshrl.u32 %v5874, 7
        %v5876 = vsub.s32 %v5873, %v5875
        %v5877 = vrot.slane %v5863, %v5876
        %v5878 = vcombine.high %v5870, %v5870
        %v5879 = vcombine.high %v5877, %v5877
        %v5881 = vunpack.c.l.s4 1966171168
        %v5882 = vunpack.c.0.s8 %v5881
        %v5883 = vlaneseq
        %v5884 = vshrl.u32 %v5883, 7
        %v5885 = vsub.s32 %v5882, %v5884
        %v5886 = vrot.slane %v5870, %v5885
        %v5888 = vunpack.c.l.s4 1966171168
        %v5889 = vunpack.c.0.s8 %v5888
        %v5890 = vlaneseq
        %v5891 = vshrl.u32 %v5890, 7
        %v5892 = vsub.s32 %v5889, %v5891
        %v5893 = vrot.slane %v5877, %v5892
        %v5895 = vunpack.c.l.s4 1966171168
        %v5896 = vunpack.c.0.s8 %v5895
        %v5897 = vlaneseq
        %v5898 = vshrl.u32 %v5897, 7
        %v5899 = vsub.s32 %v5896, %v5898
        %v5900 = vrot.slane %v5878, %v5899
        %v5902 = vunpack.c.l.s4 1966171168
        %v5903 = vunpack.c.0.s8 %v5902
        %v5904 = vlaneseq
        %v5905 = vshrl.u32 %v5904, 7
        %v5906 = vsub.s32 %v5903, %v5905
        %v5907 = vrot.slane %v5879, %v5906
        %v5908 = vcombine.high %v5886, %v5886
        %v5909 = vcombine.high %v5893, %v5893
        %v5910 = vcombine.high %v5900, %v5900
        %v5911 = vcombine.high %v5907, %v5907
        %v6056 = vcombine.high %v5050, %v5050
        %v6058 = vunpack.c.l.s4 1966171168
        %v6059 = vunpack.c.0.s8 %v6058
        %v6060 = vlaneseq
        %v6061 = vshrl.u32 %v6060, 7
        %v6062 = vsub.s32 %v6059, %v6061
        %v6063 = vrot.slane %v5050, %v6062
        %v6065 = vunpack.c.l.s4 1966171168
        %v6066 = vunpack.c.0.s8 %v6065
        %v6067 = vlaneseq
        %v6068 = vshrl.u32 %v6067, 7
        %v6069 = vsub.s32 %v6066, %v6068
        %v6070 = vrot.slane %v6056, %v6069
        %v6071 = vcombine.high %v6063, %v6063
        %v6072 = vcombine.high %v6070, %v6070
        %v6074 = vunpack.c.l.s4 1966171168
        %v6075 = vunpack.c.0.s8 %v6074
        %v6076 = vlaneseq
        %v6077 = vshrl.u32 %v6076, 7
        %v6078 = vsub.s32 %v6075, %v6077
        %v6079 = vrot.slane %v6063, %v6078
        %v6081 = vunpack.c.l.s4 1966171168
        %v6082 = vunpack.c.0.s8 %v6081
        %v6083 = vlaneseq
        %v6084 = vshrl.u32 %v6083, 7
        %v6085 = vsub.s32 %v6082, %v6084
        %v6086 = vrot.slane %v6070, %v6085
        %v6088 = vunpack.c.l.s4 1966171168
        %v6089 = vunpack.c.0.s8 %v6088
        %v6090 = vlaneseq
        %v6091 = vshrl.u32 %v6090, 7
        %v6092 = vsub.s32 %v6089, %v6091
        %v6093 = vrot.slane %v6071, %v6092
        %v6095 = vunpack.c.l.s4 1966171168
        %v6096 = vunpack.c.0.s8 %v6095
        %v6097 = vlaneseq
        %v6098 = vshrl.u32 %v6097, 7
        %v6099 = vsub.s32 %v6096, %v6098
        %v6100 = vrot.slane %v6072, %v6099
        %v6101 = vcombine.high %v6079, %v6079
        %v6102 = vcombine.high %v6086, %v6086
        %v6103 = vcombine.high %v6093, %v6093
        %v6104 = vcombine.high %v6100, %v6100
        %v6105 = vcombine.high %v5053, %v5053
        %v6107 = vunpack.c.l.s4 1966171168
        %v6108 = vunpack.c.0.s8 %v6107
        %v6109 = vlaneseq
        %v6110 = vshrl.u32 %v6109, 7
        %v6111 = vsub.s32 %v6108, %v6110
        %v6112 = vrot.slane %v5053, %v6111
        %v6114 = vunpack.c.l.s4 1966171168
        %v6115 = vunpack.c.0.s8 %v6114
        %v6116 = vlaneseq
        %v6117 = vshrl.u32 %v6116, 7
        %v6118 = vsub.s32 %v6115, %v6117
        %v6119 = vrot.slane %v6105, %v6118
        %v6120 = vcombine.high %v6112, %v6112
        %v6121 = vcombine.high %v6119, %v6119
        %v6123 = vunpack.c.l.s4 1966171168
        %v6124 = vunpack.c.0.s8 %v6123
        %v6125 = vlaneseq
        %v6126 = vshrl.u32 %v6125, 7
        %v6127 = vsub.s32 %v6124, %v6126
        %v6128 = vrot.slane %v6112, %v6127
        %v6130 = vunpack.c.l.s4 1966171168
        %v6131 = vunpack.c.0.s8 %v6130
        %v6132 = vlaneseq
        %v6133 = vshrl.u32 %v6132, 7
        %v6134 = vsub.s32 %v6131, %v6133
        %v6135 = vrot.slane %v6119, %v6134
        %v6137 = vunpack.c.l.s4 1966171168
        %v6138 = vunpack.c.0.s8 %v6137
        %v6139 = vlaneseq
        %v6140 = vshrl.u32 %v6139, 7
        %v6141 = vsub.s32 %v6138, %v6140
        %v6142 = vrot.slane %v6120, %v6141
        %v6144 = vunpack.c.l.s4 1966171168
        %v6145 = vunpack.c.0.s8 %v6144
        %v6146 = vlaneseq
        %v6147 = vshrl.u32 %v6146, 7
        %v6148 = vsub.s32 %v6145, %v6147
        %v6149 = vrot.slane %v6121, %v6148
        %v6150 = vcombine.high %v6128, %v6128
        %v6151 = vcombine.high %v6135, %v6135
        %v6152 = vcombine.high %v6142, %v6142
        %v6153 = vcombine.high %v6149, %v6149
        %v6154 = vcombine.high %v5058, %v5058
        %v6156 = vunpack.c.l.s4 1966171168
        %v6157 = vunpack.c.0.s8 %v6156
        %v6158 = vlaneseq
        %v6159 = vshrl.u32 %v6158, 7
        %v6160 = vsub.s32 %v6157, %v6159
        %v6161 = vrot.slane %v5058, %v6160
        %v6163 = vunpack.c.l.s4 1966171168
        %v6164 = vunpack.c.0.s8 %v6163
        %v6165 = vlaneseq
        %v6166 = vshrl.u32 %v6165, 7
        %v6167 = vsub.s32 %v6164, %v6166
        %v6168 = vrot.slane %v6154, %v6167
        %v6169 = vcombine.high %v6161, %v6161
        %v6170 = vcombine.high %v6168, %v6168
        %v6172 = vunpack.c.l.s4 1966171168
        %v6173 = vunpack.c.0.s8 %v6172
        %v6174 = vlaneseq
        %v6175 = vshrl.u32 %v6174, 7
        %v6176 = vsub.s32 %v6173, %v6175
        %v6177 = vrot.slane %v6161, %v6176
        %v6179 = vunpack.c.l.s4 1966171168
        %v6180 = vunpack.c.0.s8 %v6179
        %v6181 = vlaneseq
        %v6182 = vshrl.u32 %v6181, 7
        %v6183 = vsub.s32 %v6180, %v6182
        %v6184 = vrot.slane %v6168, %v6183
        %v6186 = vunpack.c.l.s4 1966171168
        %v6187 = vunpack.c.0.s8 %v6186
        %v6188 = vlaneseq
        %v6189 = vshrl.u32 %v6188, 7
        %v6190 = vsub.s32 %v6187, %v6189
        %v6191 = vrot.slane %v6169, %v6190
        %v6193 = vunpack.c.l.s4 1966171168
        %v6194 = vunpack.c.0.s8 %v6193
        %v6195 = vlaneseq
        %v6196 = vshrl.u32 %v6195, 7
        %v6197 = vsub.s32 %v6194, %v6196
        %v6198 = vrot.slane %v6170, %v6197
        %v6199 = vcombine.high %v6177, %v6177
        %v6200 = vcombine.high %v6184, %v6184
        %v6201 = vcombine.high %v6191, %v6191
        %v6202 = vcombine.high %v6198, %v6198
        %v6203 = vcombine.high %v5061, %v5061
        %v6205 = vunpack.c.l.s4 1966171168
        %v6206 = vunpack.c.0.s8 %v6205
        %v6207 = vlaneseq
        %v6208 = vshrl.u32 %v6207, 7
        %v6209 = vsub.s32 %v6206, %v6208
        %v6210 = vrot.slane %v5061, %v6209
        %v6212 = vunpack.c.l.s4 1966171168
        %v6213 = vunpack.c.0.s8 %v6212
        %v6214 = vlaneseq
        %v6215 = vshrl.u32 %v6214, 7
        %v6216 = vsub.s32 %v6213, %v6215
        %v6217 = vrot.slane %v6203, %v6216
        %v6218 = vcombine.high %v6210, %v6210
        %v6219 = vcombine.high %v6217, %v6217
        %v6221 = vunpack.c.l.s4 1966171168
        %v6222 = vunpack.c.0.s8 %v6221
        %v6223 = vlaneseq
        %v6224 = vshrl.u32 %v6223, 7
        %v6225 = vsub.s32 %v6222, %v6224
        %v6226 = vrot.slane %v6210, %v6225
        %v6228 = vunpack.c.l.s4 1966171168
        %v6229 = vunpack.c.0.s8 %v6228
        %v6230 = vlaneseq
        %v6231 = vshrl.u32 %v6230, 7
        %v6232 = vsub.s32 %v6229, %v6231
        %v6233 = vrot.slane %v6217, %v6232
        %v6235 = vunpack.c.l.s4 1966171168
        %v6236 = vunpack.c.0.s8 %v6235
        %v6237 = vlaneseq
        %v6238 = vshrl.u32 %v6237, 7
        %v6239 = vsub.s32 %v6236, %v6238
        %v6240 = vrot.slane %v6218, %v6239
        %v6242 = vunpack.c.l.s4 1966171168
        %v6243 = vunpack.c.0.s8 %v6242
        %v6244 = vlaneseq
        %v6245 = vshrl.u32 %v6244, 7
        %v6246 = vsub.s32 %v6243, %v6245
        %v6247 = vrot.slane %v6219, %v6246
        %v6248 = vcombine.high %v6226, %v6226
        %v6249 = vcombine.high %v6233, %v6233
        %v6250 = vcombine.high %v6240, %v6240
        %v6251 = vcombine.high %v6247, %v6247
        %v6252 = vcombine.high %v5066, %v5066
        %v6254 = vunpack.c.l.s4 1966171168
        %v6255 = vunpack.c.0.s8 %v6254
        %v6256 = vlaneseq
        %v6257 = vshrl.u32 %v6256, 7
        %v6258 = vsub.s32 %v6255, %v6257
        %v6259 = vrot.slane %v5066, %v6258
        %v6261 = vunpack.c.l.s4 1966171168
        %v6262 = vunpack.c.0.s8 %v6261
        %v6263 = vlaneseq
        %v6264 = vshrl.u32 %v6263, 7
        %v6265 = vsub.s32 %v6262, %v6264
        %v6266 = vrot.slane %v6252, %v6265
        %v6267 = vcombine.high %v6259, %v6259
        %v6268 = vcombine.high %v6266, %v6266
        %v6270 = vunpack.c.l.s4 1966171168
        %v6271 = vunpack.c.0.s8 %v6270
        %v6272 = vlaneseq
        %v6273 = vshrl.u32 %v6272, 7
        %v6274 = vsub.s32 %v6271, %v6273
        %v6275 = vrot.slane %v6259, %v6274
        %v6277 = vunpack.c.l.s4 1966171168
        %v6278 = vunpack.c.0.s8 %v6277
        %v6279 = vlaneseq
        %v6280 = vshrl.u32 %v6279, 7
        %v6281 = vsub.s32 %v6278, %v6280
        %v6282 = vrot.slane %v6266, %v6281
        %v6284 = vunpack.c.l.s4 1966171168
        %v6285 = vunpack.c.0.s8 %v6284
        %v6286 = vlaneseq
        %v6287 = vshrl.u32 %v6286, 7
        %v6288 = vsub.s32 %v6285, %v6287
        %v6289 = vrot.slane %v6267, %v6288
        %v6291 = vunpack.c.l.s4 1966171168
        %v6292 = vunpack.c.0.s8 %v6291
        %v6293 = vlaneseq
        %v6294 = vshrl.u32 %v6293, 7
        %v6295 = vsub.s32 %v6292, %v6294
        %v6296 = vrot.slane %v6268, %v6295
        %v6297 = vcombine.high %v6275, %v6275
        %v6298 = vcombine.high %v6282, %v6282
        %v6299 = vcombine.high %v6289, %v6289
        %v6300 = vcombine.high %v6296, %v6296
        %v6301 = vcombine.high %v5069, %v5069
        %v6303 = vunpack.c.l.s4 1966171168
        %v6304 = vunpack.c.0.s8 %v6303
        %v6305 = vlaneseq
        %v6306 = vshrl.u32 %v6305, 7
        %v6307 = vsub.s32 %v6304, %v6306
        %v6308 = vrot.slane %v5069, %v6307
        %v6310 = vunpack.c.l.s4 1966171168
        %v6311 = vunpack.c.0.s8 %v6310
        %v6312 = vlaneseq
        %v6313 = vshrl.u32 %v6312, 7
        %v6314 = vsub.s32 %v6311, %v6313
        %v6315 = vrot.slane %v6301, %v6314
        %v6316 = vcombine.high %v6308, %v6308
        %v6317 = vcombine.high %v6315, %v6315
        %v6319 = vunpack.c.l.s4 1966171168
        %v6320 = vunpack.c.0.s8 %v6319
        %v6321 = vlaneseq
        %v6322 = vshrl.u32 %v6321, 7
        %v6323 = vsub.s32 %v6320, %v6322
        %v6324 = vrot.slane %v6308, %v6323
        %v6326 = vunpack.c.l.s4 1966171168
        %v6327 = vunpack.c.0.s8 %v6326
        %v6328 = vlaneseq
        %v6329 = vshrl.u32 %v6328, 7
        %v6330 = vsub.s32 %v6327, %v6329
        %v6331 = vrot.slane %v6315, %v6330
        %v6333 = vunpack.c.l.s4 1966171168
        %v6334 = vunpack.c.0.s8 %v6333
        %v6335 = vlaneseq
        %v6336 = vshrl.u32 %v6335, 7
        %v6337 = vsub.s32 %v6334, %v6336
        %v6338 = vrot.slane %v6316, %v6337
        %v6340 = vunpack.c.l.s4 1966171168
        %v6341 = vunpack.c.0.s8 %v6340
        %v6342 = vlaneseq
        %v6343 = vshrl.u32 %v6342, 7
        %v6344 = vsub.s32 %v6341, %v6343
        %v6345 = vrot.slane %v6317, %v6344
        %v6346 = vcombine.high %v6324, %v6324
        %v6347 = vcombine.high %v6331, %v6331
        %v6348 = vcombine.high %v6338, %v6338
        %v6349 = vcombine.high %v6345, %v6345
        %v6350 = vcombine.high %v5074, %v5074
        %v6352 = vunpack.c.l.s4 1966171168
        %v6353 = vunpack.c.0.s8 %v6352
        %v6354 = vlaneseq
        %v6355 = vshrl.u32 %v6354, 7
        %v6356 = vsub.s32 %v6353, %v6355
        %v6357 = vrot.slane %v5074, %v6356
        %v6359 = vunpack.c.l.s4 1966171168
        %v6360 = vunpack.c.0.s8 %v6359
        %v6361 = vlaneseq
        %v6362 = vshrl.u32 %v6361, 7
        %v6363 = vsub.s32 %v6360, %v6362
        %v6364 = vrot.slane %v6350, %v6363
        %v6365 = vcombine.high %v6357, %v6357
        %v6366 = vcombine.high %v6364, %v6364
        %v6368 = vunpack.c.l.s4 1966171168
        %v6369 = vunpack.c.0.s8 %v6368
        %v6370 = vlaneseq
        %v6371 = vshrl.u32 %v6370, 7
        %v6372 = vsub.s32 %v6369, %v6371
        %v6373 = vrot.slane %v6357, %v6372
        %v6375 = vunpack.c.l.s4 1966171168
        %v6376 = vunpack.c.0.s8 %v6375
        %v6377 = vlaneseq
        %v6378 = vshrl.u32 %v6377, 7
        %v6379 = vsub.s32 %v6376, %v6378
        %v6380 = vrot.slane %v6364, %v6379
        %v6382 = vunpack.c.l.s4 1966171168
        %v6383 = vunpack.c.0.s8 %v6382
        %v6384 = vlaneseq
        %v6385 = vshrl.u32 %v6384, 7
        %v6386 = vsub.s32 %v6383, %v6385
        %v6387 = vrot.slane %v6365, %v6386
        %v6389 = vunpack.c.l.s4 1966171168
        %v6390 = vunpack.c.0.s8 %v6389
        %v6391 = vlaneseq
        %v6392 = vshrl.u32 %v6391, 7
        %v6393 = vsub.s32 %v6390, %v6392
        %v6394 = vrot.slane %v6366, %v6393
        %v6395 = vcombine.high %v6373, %v6373
        %v6396 = vcombine.high %v6380, %v6380
        %v6397 = vcombine.high %v6387, %v6387
        %v6398 = vcombine.high %v6394, %v6394
        %v6399 = vcombine.high %v5077, %v5077
        %v6401 = vunpack.c.l.s4 1966171168
        %v6402 = vunpack.c.0.s8 %v6401
        %v6403 = vlaneseq
        %v6404 = vshrl.u32 %v6403, 7
        %v6405 = vsub.s32 %v6402, %v6404
        %v6406 = vrot.slane %v5077, %v6405
        %v6408 = vunpack.c.l.s4 1966171168
        %v6409 = vunpack.c.0.s8 %v6408
        %v6410 = vlaneseq
        %v6411 = vshrl.u32 %v6410, 7
        %v6412 = vsub.s32 %v6409, %v6411
        %v6413 = vrot.slane %v6399, %v6412
        %v6414 = vcombine.high %v6406, %v6406
        %v6415 = vcombine.high %v6413, %v6413
        %v6417 = vunpack.c.l.s4 1966171168
        %v6418 = vunpack.c.0.s8 %v6417
        %v6419 = vlaneseq
        %v6420 = vshrl.u32 %v6419, 7
        %v6421 = vsub.s32 %v6418, %v6420
        %v6422 = vrot.slane %v6406, %v6421
        %v6424 = vunpack.c.l.s4 1966171168
        %v6425 = vunpack.c.0.s8 %v6424
        %v6426 = vlaneseq
        %v6427 = vshrl.u32 %v6426, 7
        %v6428 = vsub.s32 %v6425, %v6427
        %v6429 = vrot.slane %v6413, %v6428
        %v6431 = vunpack.c.l.s4 1966171168
        %v6432 = vunpack.c.0.s8 %v6431
        %v6433 = vlaneseq
        %v6434 = vshrl.u32 %v6433, 7
        %v6435 = vsub.s32 %v6432, %v6434
        %v6436 = vrot.slane %v6414, %v6435
        %v6438 = vunpack.c.l.s4 1966171168
        %v6439 = vunpack.c.0.s8 %v6438
        %v6440 = vlaneseq
        %v6441 = vshrl.u32 %v6440, 7
        %v6442 = vsub.s32 %v6439, %v6441
        %v6443 = vrot.slane %v6415, %v6442
        %v6444 = vcombine.high %v6422, %v6422
        %v6445 = vcombine.high %v6429, %v6429
        %v6446 = vcombine.high %v6436, %v6436
        %v6447 = vcombine.high %v6443, %v6443
        %v6448 = vcombine.high %v5082, %v5082
        %v6450 = vunpack.c.l.s4 1966171168
        %v6451 = vunpack.c.0.s8 %v6450
        %v6452 = vlaneseq
        %v6453 = vshrl.u32 %v6452, 7
        %v6454 = vsub.s32 %v6451, %v6453
        %v6455 = vrot.slane %v5082, %v6454
        %v6457 = vunpack.c.l.s4 1966171168
        %v6458 = vunpack.c.0.s8 %v6457
        %v6459 = vlaneseq
        %v6460 = vshrl.u32 %v6459, 7
        %v6461 = vsub.s32 %v6458, %v6460
        %v6462 = vrot.slane %v6448, %v6461
        %v6463 = vcombine.high %v6455, %v6455
        %v6464 = vcombine.high %v6462, %v6462
        %v6466 = vunpack.c.l.s4 1966171168
        %v6467 = vunpack.c.0.s8 %v6466
        %v6468 = vlaneseq
        %v6469 = vshrl.u32 %v6468, 7
        %v6470 = vsub.s32 %v6467, %v6469
        %v6471 = vrot.slane %v6455, %v6470
        %v6473 = vunpack.c.l.s4 1966171168
        %v6474 = vunpack.c.0.s8 %v6473
        %v6475 = vlaneseq
        %v6476 = vshrl.u32 %v6475, 7
        %v6477 = vsub.s32 %v6474, %v6476
        %v6478 = vrot.slane %v6462, %v6477
        %v6480 = vunpack.c.l.s4 1966171168
        %v6481 = vunpack.c.0.s8 %v6480
        %v6482 = vlaneseq
        %v6483 = vshrl.u32 %v6482, 7
        %v6484 = vsub.s32 %v6481, %v6483
        %v6485 = vrot.slane %v6463, %v6484
        %v6487 = vunpack.c.l.s4 1966171168
        %v6488 = vunpack.c.0.s8 %v6487
        %v6489 = vlaneseq
        %v6490 = vshrl.u32 %v6489, 7
        %v6491 = vsub.s32 %v6488, %v6490
        %v6492 = vrot.slane %v6464, %v6491
        %v6493 = vcombine.high %v6471, %v6471
        %v6494 = vcombine.high %v6478, %v6478
        %v6495 = vcombine.high %v6485, %v6485
        %v6496 = vcombine.high %v6492, %v6492
        %v6497 = vcombine.high %v5085, %v5085
        %v6499 = vunpack.c.l.s4 1966171168
        %v6500 = vunpack.c.0.s8 %v6499
        %v6501 = vlaneseq
        %v6502 = vshrl.u32 %v6501, 7
        %v6503 = vsub.s32 %v6500, %v6502
        %v6504 = vrot.slane %v5085, %v6503
        %v6506 = vunpack.c.l.s4 1966171168
        %v6507 = vunpack.c.0.s8 %v6506
        %v6508 = vlaneseq
        %v6509 = vshrl.u32 %v6508, 7
        %v6510 = vsub.s32 %v6507, %v6509
        %v6511 = vrot.slane %v6497, %v6510
        %v6512 = vcombine.high %v6504, %v6504
        %v6513 = vcombine.high %v6511, %v6511
        %v6515 = vunpack.c.l.s4 1966171168
        %v6516 = vunpack.c.0.s8 %v6515
        %v6517 = vlaneseq
        %v6518 = vshrl.u32 %v6517, 7
        %v6519 = vsub.s32 %v6516, %v6518
        %v6520 = vrot.slane %v6504, %v6519
        %v6522 = vunpack.c.l.s4 1966171168
        %v6523 = vunpack.c.0.s8 %v6522
        %v6524 = vlaneseq
        %v6525 = vshrl.u32 %v6524, 7
        %v6526 = vsub.s32 %v6523, %v6525
        %v6527 = vrot.slane %v6511, %v6526
        %v6529 = vunpack.c.l.s4 1966171168
        %v6530 = vunpack.c.0.s8 %v6529
        %v6531 = vlaneseq
        %v6532 = vshrl.u32 %v6531, 7
        %v6533 = vsub.s32 %v6530, %v6532
        %v6534 = vrot.slane %v6512, %v6533
        %v6536 = vunpack.c.l.s4 1966171168
        %v6537 = vunpack.c.0.s8 %v6536
        %v6538 = vlaneseq
        %v6539 = vshrl.u32 %v6538, 7
        %v6540 = vsub.s32 %v6537, %v6539
        %v6541 = vrot.slane %v6513, %v6540
        %v6542 = vcombine.high %v6520, %v6520
        %v6543 = vcombine.high %v6527, %v6527
        %v6544 = vcombine.high %v6534, %v6534
        %v6545 = vcombine.high %v6541, %v6541
        %v6546 = vcombine.high %v5090, %v5090
        %v6548 = vunpack.c.l.s4 1966171168
        %v6549 = vunpack.c.0.s8 %v6548
        %v6550 = vlaneseq
        %v6551 = vshrl.u32 %v6550, 7
        %v6552 = vsub.s32 %v6549, %v6551
        %v6553 = vrot.slane %v5090, %v6552
        %v6555 = vunpack.c.l.s4 1966171168
        %v6556 = vunpack.c.0.s8 %v6555
        %v6557 = vlaneseq
        %v6558 = vshrl.u32 %v6557, 7
        %v6559 = vsub.s32 %v6556, %v6558
        %v6560 = vrot.slane %v6546, %v6559
        %v6561 = vcombine.high %v6553, %v6553
        %v6562 = vcombine.high %v6560, %v6560
        %v6564 = vunpack.c.l.s4 1966171168
        %v6565 = vunpack.c.0.s8 %v6564
        %v6566 = vlaneseq
        %v6567 = vshrl.u32 %v6566, 7
        %v6568 = vsub.s32 %v6565, %v6567
        %v6569 = vrot.slane %v6553, %v6568
        %v6571 = vunpack.c.l.s4 1966171168
        %v6572 = vunpack.c.0.s8 %v6571
        %v6573 = vlaneseq
        %v6574 = vshrl.u32 %v6573, 7
        %v6575 = vsub.s32 %v6572, %v6574
        %v6576 = vrot.slane %v6560, %v6575
        %v6578 = vunpack.c.l.s4 1966171168
        %v6579 = vunpack.c.0.s8 %v6578
        %v6580 = vlaneseq
        %v6581 = vshrl.u32 %v6580, 7
        %v6582 = vsub.s32 %v6579, %v6581
        %v6583 = vrot.slane %v6561, %v6582
        %v6585 = vunpack.c.l.s4 1966171168
        %v6586 = vunpack.c.0.s8 %v6585
        %v6587 = vlaneseq
        %v6588 = vshrl.u32 %v6587, 7
        %v6589 = vsub.s32 %v6586, %v6588
        %v6590 = vrot.slane %v6562, %v6589
        %v6591 = vcombine.high %v6569, %v6569
        %v6592 = vcombine.high %v6576, %v6576
        %v6593 = vcombine.high %v6583, %v6583
        %v6594 = vcombine.high %v6590, %v6590
        %v6595 = vcombine.high %v5093, %v5093
        %v6597 = vunpack.c.l.s4 1966171168
        %v6598 = vunpack.c.0.s8 %v6597
        %v6599 = vlaneseq
        %v6600 = vshrl.u32 %v6599, 7
        %v6601 = vsub.s32 %v6598, %v6600
        %v6602 = vrot.slane %v5093, %v6601
        %v6604 = vunpack.c.l.s4 1966171168
        %v6605 = vunpack.c.0.s8 %v6604
        %v6606 = vlaneseq
        %v6607 = vshrl.u32 %v6606, 7
        %v6608 = vsub.s32 %v6605, %v6607
        %v6609 = vrot.slane %v6595, %v6608
        %v6610 = vcombine.high %v6602, %v6602
        %v6611 = vcombine.high %v6609, %v6609
        %v6613 = vunpack.c.l.s4 1966171168
        %v6614 = vunpack.c.0.s8 %v6613
        %v6615 = vlaneseq
        %v6616 = vshrl.u32 %v6615, 7
        %v6617 = vsub.s32 %v6614, %v6616
        %v6618 = vrot.slane %v6602, %v6617
        %v6620 = vunpack.c.l.s4 1966171168
        %v6621 = vunpack.c.0.s8 %v6620
        %v6622 = vlaneseq
        %v6623 = vshrl.u32 %v6622, 7
        %v6624 = vsub.s32 %v6621, %v6623
        %v6625 = vrot.slane %v6609, %v6624
        %v6627 = vunpack.c.l.s4 1966171168
        %v6628 = vunpack.c.0.s8 %v6627
        %v6629 = vlaneseq
        %v6630 = vshrl.u32 %v6629, 7
        %v6631 = vsub.s32 %v6628, %v6630
        %v6632 = vrot.slane %v6610, %v6631
        %v6634 = vunpack.c.l.s4 1966171168
        %v6635 = vunpack.c.0.s8 %v6634
        %v6636 = vlaneseq
        %v6637 = vshrl.u32 %v6636, 7
        %v6638 = vsub.s32 %v6635, %v6637
        %v6639 = vrot.slane %v6611, %v6638
        %v6640 = vcombine.high %v6618, %v6618
        %v6641 = vcombine.high %v6625, %v6625
        %v6642 = vcombine.high %v6632, %v6632
        %v6643 = vcombine.high %v6639, %v6639
        %v6644 = vcombine.high %v5098, %v5098
        %v6646 = vunpack.c.l.s4 1966171168
        %v6647 = vunpack.c.0.s8 %v6646
        %v6648 = vlaneseq
        %v6649 = vshrl.u32 %v6648, 7
        %v6650 = vsub.s32 %v6647, %v6649
        %v6651 = vrot.slane %v5098, %v6650
        %v6653 = vunpack.c.l.s4 1966171168
        %v6654 = vunpack.c.0.s8 %v6653
        %v6655 = vlaneseq
        %v6656 = vshrl.u32 %v6655, 7
        %v6657 = vsub.s32 %v6654, %v6656
        %v6658 = vrot.slane %v6644, %v6657
        %v6659 = vcombine.high %v6651, %v6651
        %v6660 = vcombine.high %v6658, %v6658
        %v6662 = vunpack.c.l.s4 1966171168
        %v6663 = vunpack.c.0.s8 %v6662
        %v6664 = vlaneseq
        %v6665 = vshrl.u32 %v6664, 7
        %v6666 = vsub.s32 %v6663, %v6665
        %v6667 = vrot.slane %v6651, %v6666
        %v6669 = vunpack.c.l.s4 1966171168
        %v6670 = vunpack.c.0.s8 %v6669
        %v6671 = vlaneseq
        %v6672 = vshrl.u32 %v6671, 7
        %v6673 = vsub.s32 %v6670, %v6672
        %v6674 = vrot.slane %v6658, %v6673
        %v6676 = vunpack.c.l.s4 1966171168
        %v6677 = vunpack.c.0.s8 %v6676
        %v6678 = vlaneseq
        %v6679 = vshrl.u32 %v6678, 7
        %v6680 = vsub.s32 %v6677, %v6679
        %v6681 = vrot.slane %v6659, %v6680
        %v6683 = vunpack.c.l.s4 1966171168
        %v6684 = vunpack.c.0.s8 %v6683
        %v6685 = vlaneseq
        %v6686 = vshrl.u32 %v6685, 7
        %v6687 = vsub.s32 %v6684, %v6686
        %v6688 = vrot.slane %v6660, %v6687
        %v6689 = vcombine.high %v6667, %v6667
        %v6690 = vcombine.high %v6674, %v6674
        %v6691 = vcombine.high %v6681, %v6681
        %v6692 = vcombine.high %v6688, %v6688
        %v6693 = vcombine.high %v5101, %v5101
        %v6695 = vunpack.c.l.s4 1966171168
        %v6696 = vunpack.c.0.s8 %v6695
        %v6697 = vlaneseq
        %v6698 = vshrl.u32 %v6697, 7
        %v6699 = vsub.s32 %v6696, %v6698
        %v6700 = vrot.slane %v5101, %v6699
        %v6702 = vunpack.c.l.s4 1966171168
        %v6703 = vunpack.c.0.s8 %v6702
        %v6704 = vlaneseq
        %v6705 = vshrl.u32 %v6704, 7
        %v6706 = vsub.s32 %v6703, %v6705
        %v6707 = vrot.slane %v6693, %v6706
        %v6708 = vcombine.high %v6700, %v6700
        %v6709 = vcombine.high %v6707, %v6707
        %v6711 = vunpack.c.l.s4 1966171168
        %v6712 = vunpack.c.0.s8 %v6711
        %v6713 = vlaneseq
        %v6714 = vshrl.u32 %v6713, 7
        %v6715 = vsub.s32 %v6712, %v6714
        %v6716 = vrot.slane %v6700, %v6715
        %v6718 = vunpack.c.l.s4 1966171168
        %v6719 = vunpack.c.0.s8 %v6718
        %v6720 = vlaneseq
        %v6721 = vshrl.u32 %v6720, 7
        %v6722 = vsub.s32 %v6719, %v6721
        %v6723 = vrot.slane %v6707, %v6722
        %v6725 = vunpack.c.l.s4 1966171168
        %v6726 = vunpack.c.0.s8 %v6725
        %v6727 = vlaneseq
        %v6728 = vshrl.u32 %v6727, 7
        %v6729 = vsub.s32 %v6726, %v6728
        %v6730 = vrot.slane %v6708, %v6729
        %v6732 = vunpack.c.l.s4 1966171168
        %v6733 = vunpack.c.0.s8 %v6732
        %v6734 = vlaneseq
        %v6735 = vshrl.u32 %v6734, 7
        %v6736 = vsub.s32 %v6733, %v6735
        %v6737 = vrot.slane %v6709, %v6736
        %v6738 = vcombine.high %v6716, %v6716
        %v6739 = vcombine.high %v6723, %v6723
        %v6740 = vcombine.high %v6730, %v6730
        %v6741 = vcombine.high %v6737, %v6737
        %v6742 = vcombine.high %v5106, %v5106
        %v6744 = vunpack.c.l.s4 1966171168
        %v6745 = vunpack.c.0.s8 %v6744
        %v6746 = vlaneseq
        %v6747 = vshrl.u32 %v6746, 7
        %v6748 = vsub.s32 %v6745, %v6747
        %v6749 = vrot.slane %v5106, %v6748
        %v6751 = vunpack.c.l.s4 1966171168
        %v6752 = vunpack.c.0.s8 %v6751
        %v6753 = vlaneseq
        %v6754 = vshrl.u32 %v6753, 7
        %v6755 = vsub.s32 %v6752, %v6754
        %v6756 = vrot.slane %v6742, %v6755
        %v6757 = vcombine.high %v6749, %v6749
        %v6758 = vcombine.high %v6756, %v6756
        %v6760 = vunpack.c.l.s4 1966171168
        %v6761 = vunpack.c.0.s8 %v6760
        %v6762 = vlaneseq
        %v6763 = vshrl.u32 %v6762, 7
        %v6764 = vsub.s32 %v6761, %v6763
        %v6765 = vrot.slane %v6749, %v6764
        %v6767 = vunpack.c.l.s4 1966171168
        %v6768 = vunpack.c.0.s8 %v6767
        %v6769 = vlaneseq
        %v6770 = vshrl.u32 %v6769, 7
        %v6771 = vsub.s32 %v6768, %v6770
        %v6772 = vrot.slane %v6756, %v6771
        %v6774 = vunpack.c.l.s4 1966171168
        %v6775 = vunpack.c.0.s8 %v6774
        %v6776 = vlaneseq
        %v6777 = vshrl.u32 %v6776, 7
        %v6778 = vsub.s32 %v6775, %v6777
        %v6779 = vrot.slane %v6757, %v6778
        %v6781 = vunpack.c.l.s4 1966171168
        %v6782 = vunpack.c.0.s8 %v6781
        %v6783 = vlaneseq
        %v6784 = vshrl.u32 %v6783, 7
        %v6785 = vsub.s32 %v6782, %v6784
        %v6786 = vrot.slane %v6758, %v6785
        %v6787 = vcombine.high %v6765, %v6765
        %v6788 = vcombine.high %v6772, %v6772
        %v6789 = vcombine.high %v6779, %v6779
        %v6790 = vcombine.high %v6786, %v6786
        %v6791 = vcombine.high %v5109, %v5109
        %v6793 = vunpack.c.l.s4 1966171168
        %v6794 = vunpack.c.0.s8 %v6793
        %v6795 = vlaneseq
        %v6796 = vshrl.u32 %v6795, 7
        %v6797 = vsub.s32 %v6794, %v6796
        %v6798 = vrot.slane %v5109, %v6797
        %v6800 = vunpack.c.l.s4 1966171168
        %v6801 = vunpack.c.0.s8 %v6800
        %v6802 = vlaneseq
        %v6803 = vshrl.u32 %v6802, 7
        %v6804 = vsub.s32 %v6801, %v6803
        %v6805 = vrot.slane %v6791, %v6804
        %v6806 = vcombine.high %v6798, %v6798
        %v6807 = vcombine.high %v6805, %v6805
        %v6809 = vunpack.c.l.s4 1966171168
        %v6810 = vunpack.c.0.s8 %v6809
        %v6811 = vlaneseq
        %v6812 = vshrl.u32 %v6811, 7
        %v6813 = vsub.s32 %v6810, %v6812
        %v6814 = vrot.slane %v6798, %v6813
        %v6816 = vunpack.c.l.s4 1966171168
        %v6817 = vunpack.c.0.s8 %v6816
        %v6818 = vlaneseq
        %v6819 = vshrl.u32 %v6818, 7
        %v6820 = vsub.s32 %v6817, %v6819
        %v6821 = vrot.slane %v6805, %v6820
        %v6823 = vunpack.c.l.s4 1966171168
        %v6824 = vunpack.c.0.s8 %v6823
        %v6825 = vlaneseq
        %v6826 = vshrl.u32 %v6825, 7
        %v6827 = vsub.s32 %v6824, %v6826
        %v6828 = vrot.slane %v6806, %v6827
        %v6830 = vunpack.c.l.s4 1966171168
        %v6831 = vunpack.c.0.s8 %v6830
        %v6832 = vlaneseq
        %v6833 = vshrl.u32 %v6832, 7
        %v6834 = vsub.s32 %v6831, %v6833
        %v6835 = vrot.slane %v6807, %v6834
        %v6836 = vcombine.high %v6814, %v6814
        %v6837 = vcombine.high %v6821, %v6821
        %v6838 = vcombine.high %v6828, %v6828
        %v6839 = vcombine.high %v6835, %v6835
        %v6840 = vlaneseq
        %v6841 = vshrl.u32 %v6840, 7
        %v6842 = vsub.s32 0, %v6841
        %v6843 = vrot.slane %v6079, %v6842
        %v6844 = vlaneseq
        %v6845 = vshrl.u32 %v6844, 7
        %v6846 = vsub.s32 0, %v6845
        %v6847 = vrot.slane %v6093, %v6846
        %v6848 = vlaneseq
        %v6849 = vshrl.u32 %v6848, 7
        %v6850 = vsub.s32 0, %v6849
        %v6851 = vrot.slane %v6101, %v6850
        %v6852 = vlaneseq
        %v6853 = vshrl.u32 %v6852, 7
        %v6854 = vsub.s32 0, %v6853
        %v6855 = vrot.slane %v6103, %v6854
        %v6856 = vlaneseq
        %v6857 = vshrl.u32 %v6856, 7
        %v6858 = vsub.s32 0, %v6857
        %v6859 = vrot.slane %v6086, %v6858
        %v6860 = vlaneseq
        %v6861 = vshrl.u32 %v6860, 7
        %v6862 = vsub.s32 0, %v6861
        %v6863 = vrot.slane %v6100, %v6862
        %v6864 = vlaneseq
        %v6865 = vshrl.u32 %v6864, 7
        %v6866 = vsub.s32 0, %v6865
        %v6867 = vrot.slane %v6102, %v6866
        %v6868 = vlaneseq
        %v6869 = vshrl.u32 %v6868, 7
        %v6870 = vsub.s32 0, %v6869
        %v6871 = vrot.slane %v6104, %v6870
        %v6872 = vlaneseq
        %v6873 = vshrl.u32 %v6872, 7
        %v6874 = vsub.s32 0, %v6873
        %v6875 = vrot.slane %v6128, %v6874
        %v6876 = vlaneseq
        %v6877 = vshrl.u32 %v6876, 7
        %v6878 = vsub.s32 0, %v6877
        %v6879 = vrot.slane %v6142, %v6878
        %v6880 = vlaneseq
        %v6881 = vshrl.u32 %v6880, 7
        %v6882 = vsub.s32 0, %v6881
        %v6883 = vrot.slane %v6150, %v6882
        %v6884 = vlaneseq
        %v6885 = vshrl.u32 %v6884, 7
        %v6886 = vsub.s32 0, %v6885
        %v6887 = vrot.slane %v6152, %v6886
        %v6888 = vlaneseq
        %v6889 = vshrl.u32 %v6888, 7
        %v6890 = vsub.s32 0, %v6889
        %v6891 = vrot.slane %v6135, %v6890
        %v6892 = vlaneseq
        %v6893 = vshrl.u32 %v6892, 7
        %v6894 = vsub.s32 0, %v6893
        %v6895 = vrot.slane %v6149, %v6894
        %v6896 = vlaneseq
        %v6897 = vshrl.u32 %v6896, 7
        %v6898 = vsub.s32 0, %v6897
        %v6899 = vrot.slane %v6151, %v6898
        %v6900 = vlaneseq
        %v6901 = vshrl.u32 %v6900, 7
        %v6902 = vsub.s32 0, %v6901
        %v6903 = vrot.slane %v6153, %v6902
        %v6904 = vlaneseq
        %v6905 = vshrl.u32 %v6904, 7
        %v6906 = vsub.s32 0, %v6905
        %v6907 = vrot.slane %v6177, %v6906
        %v6908 = vlaneseq
        %v6909 = vshrl.u32 %v6908, 7
        %v6910 = vsub.s32 0, %v6909
        %v6911 = vrot.slane %v6191, %v6910
        %v6912 = vlaneseq
        %v6913 = vshrl.u32 %v6912, 7
        %v6914 = vsub.s32 0, %v6913
        %v6915 = vrot.slane %v6199, %v6914
        %v6916 = vlaneseq
        %v6917 = vshrl.u32 %v6916, 7
        %v6918 = vsub.s32 0, %v6917
        %v6919 = vrot.slane %v6201, %v6918
        %v6920 = vlaneseq
        %v6921 = vshrl.u32 %v6920, 7
        %v6922 = vsub.s32 0, %v6921
        %v6923 = vrot.slane %v6184, %v6922
        %v6924 = vlaneseq
        %v6925 = vshrl.u32 %v6924, 7
        %v6926 = vsub.s32 0, %v6925
        %v6927 = vrot.slane %v6198, %v6926
        %v6928 = vlaneseq
        %v6929 = vshrl.u32 %v6928, 7
        %v6930 = vsub.s32 0, %v6929
        %v6931 = vrot.slane %v6200, %v6930
        %v6932 = vlaneseq
        %v6933 = vshrl.u32 %v6932, 7
        %v6934 = vsub.s32 0, %v6933
        %v6935 = vrot.slane %v6202, %v6934
        %v6936 = vlaneseq
        %v6937 = vshrl.u32 %v6936, 7
        %v6938 = vsub.s32 0, %v6937
        %v6939 = vrot.slane %v6226, %v6938
        %v6940 = vlaneseq
        %v6941 = vshrl.u32 %v6940, 7
        %v6942 = vsub.s32 0, %v6941
        %v6943 = vrot.slane %v6240, %v6942
        %v6944 = vlaneseq
        %v6945 = vshrl.u32 %v6944, 7
        %v6946 = vsub.s32 0, %v6945
        %v6947 = vrot.slane %v6248, %v6946
        %v6948 = vlaneseq
        %v6949 = vshrl.u32 %v6948, 7
        %v6950 = vsub.s32 0, %v6949
        %v6951 = vrot.slane %v6250, %v6950
        %v6952 = vlaneseq
        %v6953 = vshrl.u32 %v6952, 7
        %v6954 = vsub.s32 0, %v6953
        %v6955 = vrot.slane %v6233, %v6954
        %v6956 = vlaneseq
        %v6957 = vshrl.u32 %v6956, 7
        %v6958 = vsub.s32 0, %v6957
        %v6959 = vrot.slane %v6247, %v6958
        %v6960 = vlaneseq
        %v6961 = vshrl.u32 %v6960, 7
        %v6962 = vsub.s32 0, %v6961
        %v6963 = vrot.slane %v6249, %v6962
        %v6964 = vlaneseq
        %v6965 = vshrl.u32 %v6964, 7
        %v6966 = vsub.s32 0, %v6965
        %v6967 = vrot.slane %v6251, %v6966
        %v6968 = vlaneseq
        %v6969 = vshrl.u32 %v6968, 7
        %v6970 = vsub.s32 0, %v6969
        %v6971 = vrot.slane %v6275, %v6970
        %v6972 = vlaneseq
        %v6973 = vshrl.u32 %v6972, 7
        %v6974 = vsub.s32 0, %v6973
        %v6975 = vrot.slane %v6289, %v6974
        %v6976 = vlaneseq
        %v6977 = vshrl.u32 %v6976, 7
        %v6978 = vsub.s32 0, %v6977
        %v6979 = vrot.slane %v6297, %v6978
        %v6980 = vlaneseq
        %v6981 = vshrl.u32 %v6980, 7
        %v6982 = vsub.s32 0, %v6981
        %v6983 = vrot.slane %v6299, %v6982
        %v6984 = vlaneseq
        %v6985 = vshrl.u32 %v6984, 7
        %v6986 = vsub.s32 0, %v6985
        %v6987 = vrot.slane %v6282, %v6986
        %v6988 = vlaneseq
        %v6989 = vshrl.u32 %v6988, 7
        %v6990 = vsub.s32 0, %v6989
        %v6991 = vrot.slane %v6296, %v6990
        %v6992 = vlaneseq
        %v6993 = vshrl.u32 %v6992, 7
        %v6994 = vsub.s32 0, %v6993
        %v6995 = vrot.slane %v6298, %v6994
        %v6996 = vlaneseq
        %v6997 = vshrl.u32 %v6996, 7
        %v6998 = vsub.s32 0, %v6997
        %v6999 = vrot.slane %v6300, %v6998
        %v7000 = vlaneseq
        %v7001 = vshrl.u32 %v7000, 7
        %v7002 = vsub.s32 0, %v7001
        %v7003 = vrot.slane %v6324, %v7002
        %v7004 = vlaneseq
        %v7005 = vshrl.u32 %v7004, 7
        %v7006 = vsub.s32 0, %v7005
        %v7007 = vrot.slane %v6338, %v7006
        %v7008 = vlaneseq
        %v7009 = vshrl.u32 %v7008, 7
        %v7010 = vsub.s32 0, %v7009
        %v7011 = vrot.slane %v6346, %v7010
        %v7012 = vlaneseq
        %v7013 = vshrl.u32 %v7012, 7
        %v7014 = vsub.s32 0, %v7013
        %v7015 = vrot.slane %v6348, %v7014
        %v7016 = vlaneseq
        %v7017 = vshrl.u32 %v7016, 7
        %v7018 = vsub.s32 0, %v7017
        %v7019 = vrot.slane %v6331, %v7018
        %v7020 = vlaneseq
        %v7021 = vshrl.u32 %v7020, 7
        %v7022 = vsub.s32 0, %v7021
        %v7023 = vrot.slane %v6345, %v7022
        %v7024 = vlaneseq
        %v7025 = vshrl.u32 %v7024, 7
        %v7026 = vsub.s32 0, %v7025
        %v7027 = vrot.slane %v6347, %v7026
        %v7028 = vlaneseq
        %v7029 = vshrl.u32 %v7028, 7
        %v7030 = vsub.s32 0, %v7029
        %v7031 = vrot.slane %v6349, %v7030
        %v7032 = vlaneseq
        %v7033 = vshrl.u32 %v7032, 7
        %v7034 = vsub.s32 0, %v7033
        %v7035 = vrot.slane %v6373, %v7034
        %v7036 = vlaneseq
        %v7037 = vshrl.u32 %v7036, 7
        %v7038 = vsub.s32 0, %v7037
        %v7039 = vrot.slane %v6387, %v7038
        %v7040 = vlaneseq
        %v7041 = vshrl.u32 %v7040, 7
        %v7042 = vsub.s32 0, %v7041
        %v7043 = vrot.slane %v6395, %v7042
        %v7044 = vlaneseq
        %v7045 = vshrl.u32 %v7044, 7
        %v7046 = vsub.s32 0, %v7045
        %v7047 = vrot.slane %v6397, %v7046
        %v7048 = vlaneseq
        %v7049 = vshrl.u32 %v7048, 7
        %v7050 = vsub.s32 0, %v7049
        %v7051 = vrot.slane %v6380, %v7050
        %v7052 = vlaneseq
        %v7053 = vshrl.u32 %v7052, 7
        %v7054 = vsub.s32 0, %v7053
        %v7055 = vrot.slane %v6394, %v7054
        %v7056 = vlaneseq
        %v7057 = vshrl.u32 %v7056, 7
        %v7058 = vsub.s32 0, %v7057
        %v7059 = vrot.slane %v6396, %v7058
        %v7060 = vlaneseq
        %v7061 = vshrl.u32 %v7060, 7
        %v7062 = vsub.s32 0, %v7061
        %v7063 = vrot.slane %v6398, %v7062
        %v7064 = vlaneseq
        %v7065 = vshrl.u32 %v7064, 7
        %v7066 = vsub.s32 0, %v7065
        %v7067 = vrot.slane %v6422, %v7066
        %v7068 = vlaneseq
        %v7069 = vshrl.u32 %v7068, 7
        %v7070 = vsub.s32 0, %v7069
        %v7071 = vrot.slane %v6436, %v7070
        %v7072 = vlaneseq
        %v7073 = vshrl.u32 %v7072, 7
        %v7074 = vsub.s32 0, %v7073
        %v7075 = vrot.slane %v6444, %v7074
        %v7076 = vlaneseq
        %v7077 = vshrl.u32 %v7076, 7
        %v7078 = vsub.s32 0, %v7077
        %v7079 = vrot.slane %v6446, %v7078
        %v7080 = vlaneseq
        %v7081 = vshrl.u32 %v7080, 7
        %v7082 = vsub.s32 0, %v7081
        %v7083 = vrot.slane %v6429, %v7082
        %v7084 = vlaneseq
        %v7085 = vshrl.u32 %v7084, 7
        %v7086 = vsub.s32 0, %v7085
        %v7087 = vrot.slane %v6443, %v7086
        %v7088 = vlaneseq
        %v7089 = vshrl.u32 %v7088, 7
        %v7090 = vsub.s32 0, %v7089
        %v7091 = vrot.slane %v6445, %v7090
        %v7092 = vlaneseq
        %v7093 = vshrl.u32 %v7092, 7
        %v7094 = vsub.s32 0, %v7093
        %v7095 = vrot.slane %v6447, %v7094
        %v7096 = vlaneseq
        %v7097 = vshrl.u32 %v7096, 7
        %v7098 = vsub.s32 0, %v7097
        %v7099 = vrot.slane %v6471, %v7098
        %v7100 = vlaneseq
        %v7101 = vshrl.u32 %v7100, 7
        %v7102 = vsub.s32 0, %v7101
        %v7103 = vrot.slane %v6485, %v7102
        %v7104 = vlaneseq
        %v7105 = vshrl.u32 %v7104, 7
        %v7106 = vsub.s32 0, %v7105
        %v7107 = vrot.slane %v6493, %v7106
        %v7108 = vlaneseq
        %v7109 = vshrl.u32 %v7108, 7
        %v7110 = vsub.s32 0, %v7109
        %v7111 = vrot.slane %v6495, %v7110
        %v7112 = vlaneseq
        %v7113 = vshrl.u32 %v7112, 7
        %v7114 = vsub.s32 0, %v7113
        %v7115 = vrot.slane %v6478, %v7114
        %v7116 = vlaneseq
        %v7117 = vshrl.u32 %v7116, 7
        %v7118 = vsub.s32 0, %v7117
        %v7119 = vrot.slane %v6492, %v7118
        %v7120 = vlaneseq
        %v7121 = vshrl.u32 %v7120, 7
        %v7122 = vsub.s32 0, %v7121
        %v7123 = vrot.slane %v6494, %v7122
        %v7124 = vlaneseq
        %v7125 = vshrl.u32 %v7124, 7
        %v7126 = vsub.s32 0, %v7125
        %v7127 = vrot.slane %v6496, %v7126
        %v7128 = vlaneseq
        %v7129 = vshrl.u32 %v7128, 7
        %v7130 = vsub.s32 0, %v7129
        %v7131 = vrot.slane %v6520, %v7130
        %v7132 = vlaneseq
        %v7133 = vshrl.u32 %v7132, 7
        %v7134 = vsub.s32 0, %v7133
        %v7135 = vrot.slane %v6534, %v7134
        %v7136 = vlaneseq
        %v7137 = vshrl.u32 %v7136, 7
        %v7138 = vsub.s32 0, %v7137
        %v7139 = vrot.slane %v6542, %v7138
        %v7140 = vlaneseq
        %v7141 = vshrl.u32 %v7140, 7
        %v7142 = vsub.s32 0, %v7141
        %v7143 = vrot.slane %v6544, %v7142
        %v7144 = vlaneseq
        %v7145 = vshrl.u32 %v7144, 7
        %v7146 = vsub.s32 0, %v7145
        %v7147 = vrot.slane %v6527, %v7146
        %v7148 = vlaneseq
        %v7149 = vshrl.u32 %v7148, 7
        %v7150 = vsub.s32 0, %v7149
        %v7151 = vrot.slane %v6541, %v7150
        %v7152 = vlaneseq
        %v7153 = vshrl.u32 %v7152, 7
        %v7154 = vsub.s32 0, %v7153
        %v7155 = vrot.slane %v6543, %v7154
        %v7156 = vlaneseq
        %v7157 = vshrl.u32 %v7156, 7
        %v7158 = vsub.s32 0, %v7157
        %v7159 = vrot.slane %v6545, %v7158
        %v7160 = vlaneseq
        %v7161 = vshrl.u32 %v7160, 7
        %v7162 = vsub.s32 0, %v7161
        %v7163 = vrot.slane %v6569, %v7162
        %v7164 = vlaneseq
        %v7165 = vshrl.u32 %v7164, 7
        %v7166 = vsub.s32 0, %v7165
        %v7167 = vrot.slane %v6583, %v7166
        %v7168 = vlaneseq
        %v7169 = vshrl.u32 %v7168, 7
        %v7170 = vsub.s32 0, %v7169
        %v7171 = vrot.slane %v6591, %v7170
        %v7172 = vlaneseq
        %v7173 = vshrl.u32 %v7172, 7
        %v7174 = vsub.s32 0, %v7173
        %v7175 = vrot.slane %v6593, %v7174
        %v7176 = vlaneseq
        %v7177 = vshrl.u32 %v7176, 7
        %v7178 = vsub.s32 0, %v7177
        %v7179 = vrot.slane %v6576, %v7178
        %v7180 = vlaneseq
        %v7181 = vshrl.u32 %v7180, 7
        %v7182 = vsub.s32 0, %v7181
        %v7183 = vrot.slane %v6590, %v7182
        %v7184 = vlaneseq
        %v7185 = vshrl.u32 %v7184, 7
        %v7186 = vsub.s32 0, %v7185
        %v7187 = vrot.slane %v6592, %v7186
        %v7188 = vlaneseq
        %v7189 = vshrl.u32 %v7188, 7
        %v7190 = vsub.s32 0, %v7189
        %v7191 = vrot.slane %v6594, %v7190
        %v7192 = vlaneseq
        %v7193 = vshrl.u32 %v7192, 7
        %v7194 = vsub.s32 0, %v7193
        %v7195 = vrot.slane %v6618, %v7194
        %v7196 = vlaneseq
        %v7197 = vshrl.u32 %v7196, 7
        %v7198 = vsub.s32 0, %v7197
        %v7199 = vrot.slane %v6632, %v7198
        %v7200 = vlaneseq
        %v7201 = vshrl.u32 %v7200, 7
        %v7202 = vsub.s32 0, %v7201
        %v7203 = vrot.slane %v6640, %v7202
        %v7204 = vlaneseq
        %v7205 = vshrl.u32 %v7204, 7
        %v7206 = vsub.s32 0, %v7205
        %v7207 = vrot.slane %v6642, %v7206
        %v7208 = vlaneseq
        %v7209 = vshrl.u32 %v7208, 7
        %v7210 = vsub.s32 0, %v7209
        %v7211 = vrot.slane %v6625, %v7210
        %v7212 = vlaneseq
        %v7213 = vshrl.u32 %v7212, 7
        %v7214 = vsub.s32 0, %v7213
        %v7215 = vrot.slane %v6639, %v7214
        %v7216 = vlaneseq
        %v7217 = vshrl.u32 %v7216, 7
        %v7218 = vsub.s32 0, %v7217
        %v7219 = vrot.slane %v6641, %v7218
        %v7220 = vlaneseq
        %v7221 = vshrl.u32 %v7220, 7
        %v7222 = vsub.s32 0, %v7221
        %v7223 = vrot.slane %v6643, %v7222
        %v7224 = vlaneseq
        %v7225 = vshrl.u32 %v7224, 7
        %v7226 = vsub.s32 0, %v7225
        %v7227 = vrot.slane %v6667, %v7226
        %v7228 = vlaneseq
        %v7229 = vshrl.u32 %v7228, 7
        %v7230 = vsub.s32 0, %v7229
        %v7231 = vrot.slane %v6681, %v7230
        %v7232 = vlaneseq
        %v7233 = vshrl.u32 %v7232, 7
        %v7234 = vsub.s32 0, %v7233
        %v7235 = vrot.slane %v6689, %v7234
        %v7236 = vlaneseq
        %v7237 = vshrl.u32 %v7236, 7
        %v7238 = vsub.s32 0, %v7237
        %v7239 = vrot.slane %v6691, %v7238
        %v7240 = vlaneseq
        %v7241 = vshrl.u32 %v7240, 7
        %v7242 = vsub.s32 0, %v7241
        %v7243 = vrot.slane %v6674, %v7242
        %v7244 = vlaneseq
        %v7245 = vshrl.u32 %v7244, 7
        %v7246 = vsub.s32 0, %v7245
        %v7247 = vrot.slane %v6688, %v7246
        %v7248 = vlaneseq
        %v7249 = vshrl.u32 %v7248, 7
        %v7250 = vsub.s32 0, %v7249
        %v7251 = vrot.slane %v6690, %v7250
        %v7252 = vlaneseq
        %v7253 = vshrl.u32 %v7252, 7
        %v7254 = vsub.s32 0, %v7253
        %v7255 = vrot.slane %v6692, %v7254
        %v7256 = vlaneseq
        %v7257 = vshrl.u32 %v7256, 7
        %v7258 = vsub.s32 0, %v7257
        %v7259 = vrot.slane %v6716, %v7258
        %v7260 = vlaneseq
        %v7261 = vshrl.u32 %v7260, 7
        %v7262 = vsub.s32 0, %v7261
        %v7263 = vrot.slane %v6730, %v7262
        %v7264 = vlaneseq
        %v7265 = vshrl.u32 %v7264, 7
        %v7266 = vsub.s32 0, %v7265
        %v7267 = vrot.slane %v6738, %v7266
        %v7268 = vlaneseq
        %v7269 = vshrl.u32 %v7268, 7
        %v7270 = vsub.s32 0, %v7269
        %v7271 = vrot.slane %v6740, %v7270
        %v7272 = vlaneseq
        %v7273 = vshrl.u32 %v7272, 7
        %v7274 = vsub.s32 0, %v7273
        %v7275 = vrot.slane %v6723, %v7274
        %v7276 = vlaneseq
        %v7277 = vshrl.u32 %v7276, 7
        %v7278 = vsub.s32 0, %v7277
        %v7279 = vrot.slane %v6737, %v7278
        %v7280 = vlaneseq
        %v7281 = vshrl.u32 %v7280, 7
        %v7282 = vsub.s32 0, %v7281
        %v7283 = vrot.slane %v6739, %v7282
        %v7284 = vlaneseq
        %v7285 = vshrl.u32 %v7284, 7
        %v7286 = vsub.s32 0, %v7285
        %v7287 = vrot.slane %v6741, %v7286
        %v7288 = vlaneseq
        %v7289 = vshrl.u32 %v7288, 7
        %v7290 = vsub.s32 0, %v7289
        %v7291 = vrot.slane %v6765, %v7290
        %v7292 = vlaneseq
        %v7293 = vshrl.u32 %v7292, 7
        %v7294 = vsub.s32 0, %v7293
        %v7295 = vrot.slane %v6779, %v7294
        %v7296 = vlaneseq
        %v7297 = vshrl.u32 %v7296, 7
        %v7298 = vsub.s32 0, %v7297
        %v7299 = vrot.slane %v6787, %v7298
        %v7300 = vlaneseq
        %v7301 = vshrl.u32 %v7300, 7
        %v7302 = vsub.s32 0, %v7301
        %v7303 = vrot.slane %v6789, %v7302
        %v7304 = vlaneseq
        %v7305 = vshrl.u32 %v7304, 7
        %v7306 = vsub.s32 0, %v7305
        %v7307 = vrot.slane %v6772, %v7306
        %v7308 = vlaneseq
        %v7309 = vshrl.u32 %v7308, 7
        %v7310 = vsub.s32 0, %v7309
        %v7311 = vrot.slane %v6786, %v7310
        %v7312 = vlaneseq
        %v7313 = vshrl.u32 %v7312, 7
        %v7314 = vsub.s32 0, %v7313
        %v7315 = vrot.slane %v6788, %v7314
        %v7316 = vlaneseq
        %v7317 = vshrl.u32 %v7316, 7
        %v7318 = vsub.s32 0, %v7317
        %v7319 = vrot.slane %v6790, %v7318
        %v7320 = vlaneseq
        %v7321 = vshrl.u32 %v7320, 7
        %v7322 = vsub.s32 0, %v7321
        %v7323 = vrot.slane %v6814, %v7322
        %v7324 = vlaneseq
        %v7325 = vshrl.u32 %v7324, 7
        %v7326 = vsub.s32 0, %v7325
        %v7327 = vrot.slane %v6828, %v7326
        %v7328 = vlaneseq
        %v7329 = vshrl.u32 %v7328, 7
        %v7330 = vsub.s32 0, %v7329
        %v7331 = vrot.slane %v6836, %v7330
        %v7332 = vlaneseq
        %v7333 = vshrl.u32 %v7332, 7
        %v7334 = vsub.s32 0, %v7333
        %v7335 = vrot.slane %v6838, %v7334
        %v7336 = vlaneseq
        %v7337 = vshrl.u32 %v7336, 7
        %v7338 = vsub.s32 0, %v7337
        %v7339 = vrot.slane %v6821, %v7338
        %v7340 = vlaneseq
        %v7341 = vshrl.u32 %v7340, 7
        %v7342 = vsub.s32 0, %v7341
        %v7343 = vrot.slane %v6835, %v7342
        %v7344 = vlaneseq
        %v7345 = vshrl.u32 %v7344, 7
        %v7346 = vsub.s32 0, %v7345
        %v7347 = vrot.slane %v6837, %v7346
        %v7348 = vlaneseq
        %v7349 = vshrl.u32 %v7348, 7
        %v7350 = vsub.s32 0, %v7349
        %v7351 = vrot.slane %v6839, %v7350
        %v7480 = vsel %vm4035, %v5151, %v6843
        %v7481 = vsel %vm4035, %v5165, %v6847
        %v7482 = vsel %vm4035, %v5173, %v6851
        %v7483 = vsel %vm4035, %v5175, %v6855
        %v7484 = vsel %vm4035, %v5158, %v6859
        %v7485 = vsel %vm4035, %v5172, %v6863
        %v7486 = vsel %vm4035, %v5174, %v6867
        %v7487 = vsel %vm4035, %v5176, %v6871
        %v7488 = vsel %vm4035, %v5200, %v6875
        %v7489 = vsel %vm4035, %v5214, %v6879
        %v7490 = vsel %vm4035, %v5222, %v6883
        %v7491 = vsel %vm4035, %v5224, %v6887
        %v7492 = vsel %vm4035, %v5207, %v6891
        %v7493 = vsel %vm4035, %v5221, %v6895
        %v7494 = vsel %vm4035, %v5223, %v6899
        %v7495 = vsel %vm4035, %v5225, %v6903
        %v7496 = vsel %vm4035, %v5249, %v6907
        %v7497 = vsel %vm4035, %v5263, %v6911
        %v7498 = vsel %vm4035, %v5271, %v6915
        %v7499 = vsel %vm4035, %v5273, %v6919
        %v7500 = vsel %vm4035, %v5256, %v6923
        %v7501 = vsel %vm4035, %v5270, %v6927
        %v7502 = vsel %vm4035, %v5272, %v6931
        %v7503 = vsel %vm4035, %v5274, %v6935
        %v7504 = vsel %vm4035, %v5298, %v6939
        %v7505 = vsel %vm4035, %v5312, %v6943
        %v7506 = vsel %vm4035, %v5320, %v6947
        %v7507 = vsel %vm4035, %v5322, %v6951
        %v7508 = vsel %vm4035, %v5305, %v6955
        %v7509 = vsel %vm4035, %v5319, %v6959
        %v7510 = vsel %vm4035, %v5321, %v6963
        %v7511 = vsel %vm4035, %v5323, %v6967
        %v7512 = vsel %vm4035, %v5347, %v6971
        %v7513 = vsel %vm4035, %v5361, %v6975
        %v7514 = vsel %vm4035, %v5369, %v6979
        %v7515 = vsel %vm4035, %v5371, %v6983
        %v7516 = vsel %vm4035, %v5354, %v6987
        %v7517 = vsel %vm4035, %v5368, %v6991
        %v7518 = vsel %vm4035, %v5370, %v6995
        %v7519 = vsel %vm4035, %v5372, %v6999
        %v7520 = vsel %vm4035, %v5396, %v7003
        %v7521 = vsel %vm4035, %v5410, %v7007
        %v7522 = vsel %vm4035, %v5418, %v7011
        %v7523 = vsel %vm4035, %v5420, %v7015
        %v7524 = vsel %vm4035, %v5403, %v7019
        %v7525 = vsel %vm4035, %v5417, %v7023
        %v7526 = vsel %vm4035, %v5419, %v7027
        %v7527 = vsel %vm4035, %v5421, %v7031
        %v7528 = vsel %vm4035, %v5445, %v7035
        %v7529 = vsel %vm4035, %v5459, %v7039
        %v7530 = vsel %vm4035, %v5467, %v7043
        %v7531 = vsel %vm4035, %v5469, %v7047
        %v7532 = vsel %vm4035, %v5452, %v7051
        %v7533 = vsel %vm4035, %v5466, %v7055
        %v7534 = vsel %vm4035, %v5468, %v7059
        %v7535 = vsel %vm4035, %v5470, %v7063
        %v7536 = vsel %vm4035, %v5494, %v7067
        %v7537 = vsel %vm4035, %v5508, %v7071
        %v7538 = vsel %vm4035, %v5516, %v7075
        %v7539 = vsel %vm4035, %v5518, %v7079
        %v7540 = vsel %vm4035, %v5501, %v7083
        %v7541 = vsel %vm4035, %v5515, %v7087
        %v7542 = vsel %vm4035, %v5517, %v7091
        %v7543 = vsel %vm4035, %v5519, %v7095
        %v7544 = vsel %vm4035, %v5543, %v7099
        %v7545 = vsel %vm4035, %v5557, %v7103
        %v7546 = vsel %vm4035, %v5565, %v7107
        %v7547 = vsel %vm4035, %v5567, %v7111
        %v7548 = vsel %vm4035, %v5550, %v7115
        %v7549 = vsel %vm4035, %v5564, %v7119
        %v7550 = vsel %vm4035, %v5566, %v7123
        %v7551 = vsel %vm4035, %v5568, %v7127
        %v7552 = vsel %vm4035, %v5592, %v7131
        %v7553 = vsel %vm4035, %v5606, %v7135
        %v7554 = vsel %vm4035, %v5614, %v7139
        %v7555 = vsel %vm4035, %v5616, %v7143
        %v7556 = vsel %vm4035, %v5599, %v7147
        %v7557 = vsel %vm4035, %v5613, %v7151
        %v7558 = vsel %vm4035, %v5615, %v7155
        %v7559 = vsel %vm4035, %v5617, %v7159
        %v7560 = vsel %vm4035, %v5641, %v7163
        %v7561 = vsel %vm4035, %v5655, %v7167
        %v7562 = vsel %vm4035, %v5663, %v7171
        %v7563 = vsel %vm4035, %v5665, %v7175
        %v7564 = vsel %vm4035, %v5648, %v7179
        %v7565 = vsel %vm4035, %v5662, %v7183
        %v7566 = vsel %vm4035, %v5664, %v7187
        %v7567 = vsel %vm4035, %v5666, %v7191
        %v7568 = vsel %vm4035, %v5690, %v7195
        %v7569 = vsel %vm4035, %v5704, %v7199
        %v7570 = vsel %vm4035, %v5712, %v7203
        %v7571 = vsel %vm4035, %v5714, %v7207
        %v7572 = vsel %vm4035, %v5697, %v7211
        %v7573 = vsel %vm4035, %v5711, %v7215
        %v7574 = vsel %vm4035, %v5713, %v7219
        %v7575 = vsel %vm4035, %v5715, %v7223
        %v7576 = vsel %vm4035, %v5739, %v7227
        %v7577 = vsel %vm4035, %v5753, %v7231
        %v7578 = vsel %vm4035, %v5761, %v7235
        %v7579 = vsel %vm4035, %v5763, %v7239
        %v7580 = vsel %vm4035, %v5746, %v7243
        %v7581 = vsel %vm4035, %v5760, %v7247
        %v7582 = vsel %vm4035, %v5762, %v7251
        %v7583 = vsel %vm4035, %v5764, %v7255
        %v7584 = vsel %vm4035, %v5788, %v7259
        %v7585 = vsel %vm4035, %v5802, %v7263
        %v7586 = vsel %vm4035, %v5810, %v7267
        %v7587 = vsel %vm4035, %v5812, %v7271
        %v7588 = vsel %vm4035, %v5795, %v7275
        %v7589 = vsel %vm4035, %v5809, %v7279
        %v7590 = vsel %vm4035, %v5811, %v7283
        %v7591 = vsel %vm4035, %v5813, %v7287
        %v7592 = vsel %vm4035, %v5837, %v7291
        %v7593 = vsel %vm4035, %v5851, %v7295
        %v7594 = vsel %vm4035, %v5859, %v7299
        %v7595 = vsel %vm4035, %v5861, %v7303
        %v7596 = vsel %vm4035, %v5844, %v7307
        %v7597 = vsel %vm4035, %v5858, %v7311
        %v7598 = vsel %vm4035, %v5860, %v7315
        %v7599 = vsel %vm4035, %v5862, %v7319
        %v7600 = vsel %vm4035, %v5886, %v7323
        %v7601 = vsel %vm4035, %v5900, %v7327
        %v7602 = vsel %vm4035, %v5908, %v7331
        %v7603 = vsel %vm4035, %v5910, %v7335
        %v7604 = vsel %vm4035, %v5893, %v7339
        %v7605 = vsel %vm4035, %v5907, %v7343
        %v7606 = vsel %vm4035, %v5909, %v7347
        %v7607 = vsel %vm4035, %v5911, %v7351
        %v7864 = vcombine.low %v4036, %v4037
        %v7865 = vcombine.low %v4038, %v4039
        %v7867 = vunpack.c.l.s4 1983009808
        %v7868 = vunpack.c.0.s8 %v7867
        %v7869 = vlaneseq
        %v7870 = vshrl.u32 %v7869, 7
        %v7871 = vsub.s32 %v7868, %v7870
        %v7872 = vrot.slane %v7864, %v7871
        %v7874 = vunpack.c.l.s4 1983009808
        %v7875 = vunpack.c.0.s8 %v7874
        %v7876 = vlaneseq
        %v7877 = vshrl.u32 %v7876, 7
        %v7878 = vsub.s32 %v7875, %v7877
        %v7879 = vrot.slane %v7865, %v7878
        %v7880 = vcombine.low %v7872, %v7879
        %v7881 = vcombine.low %v4040, %v4041
        %v7882 = vcombine.low %v4042, %v4043
        %v7884 = vunpack.c.l.s4 1983009808
        %v7885 = vunpack.c.0.s8 %v7884
        %v7886 = vlaneseq
        %v7887 = vshrl.u32 %v7886, 7
        %v7888 = vsub.s32 %v7885, %v7887
        %v7889 = vrot.slane %v7881, %v7888
        %v7891 = vunpack.c.l.s4 1983009808
        %v7892 = vunpack.c.0.s8 %v7891
        %v7893 = vlaneseq
        %v7894 = vshrl.u32 %v7893, 7
        %v7895 = vsub.s32 %v7892, %v7894
        %v7896 = vrot.slane %v7882, %v7895
        %v7897 = vcombine.low %v7889, %v7896
        %v7898 = vcombine.low %v4044, %v4045
        %v7899 = vcombine.low %v4046, %v4047
        %v7901 = vunpack.c.l.s4 1983009808
        %v7902 = vunpack.c.0.s8 %v7901
        %v7903 = vlaneseq
        %v7904 = vshrl.u32 %v7903, 7
        %v7905 = vsub.s32 %v7902, %v7904
        %v7906 = vrot.slane %v7898, %v7905
        %v7908 = vunpack.c.l.s4 1983009808
        %v7909 = vunpack.c.0.s8 %v7908
        %v7910 = vlaneseq
        %v7911 = vshrl.u32 %v7910, 7
        %v7912 = vsub.s32 %v7909, %v7911
        %v7913 = vrot.slane %v7899, %v7912
        %v7914 = vcombine.low %v7906, %v7913
        %v7915 = vcombine.low %v4048, %v4049
        %v7916 = vcombine.low %v4050, %v4051
        %v7918 = vunpack.c.l.s4 1983009808
        %v7919 = vunpack.c.0.s8 %v7918
        %v7920 = vlaneseq
        %v7921 = vshrl.u32 %v7920, 7
        %v7922 = vsub.s32 %v7919, %v7921
        %v7923 = vrot.slane %v7915, %v7922
        %v7925 = vunpack.c.l.s4 1983009808
        %v7926 = vunpack.c.0.s8 %v7925
        %v7927 = vlaneseq
        %v7928 = vshrl.u32 %v7927, 7
        %v7929 = vsub.s32 %v7926, %v7928
        %v7930 = vrot.slane %v7916, %v7929
        %v7931 = vcombine.low %v7923, %v7930
        %v7932 = vcombine.low %v7480, %v7481
        %v7933 = vcombine.low %v7482, %v7483
        %v7935 = vunpack.c.l.s4 1983009808
        %v7936 = vunpack.c.0.s8 %v7935
        %v7937 = vlaneseq
        %v7938 = vshrl.u32 %v7937, 7
        %v7939 = vsub.s32 %v7936, %v7938
        %v7940 = vrot.slane %v7932, %v7939
        %v7942 = vunpack.c.l.s4 1983009808
        %v7943 = vunpack.c.0.s8 %v7942
        %v7944 = vlaneseq
        %v7945 = vshrl.u32 %v7944, 7
        %v7946 = vsub.s32 %v7943, %v7945
        %v7947 = vrot.slane %v7933, %v7946
        %v7948 = vcombine.low %v7940, %v7947
        %v7949 = vcombine.low %v7484, %v7485
        %v7950 = vcombine.low %v7486, %v7487
        %v7952 = vunpack.c.l.s4 1983009808
        %v7953 = vunpack.c.0.s8 %v7952
        %v7954 = vlaneseq
        %v7955 = vshrl.u32 %v7954, 7
        %v7956 = vsub.s32 %v7953, %v7955
        %v7957 = vrot.slane %v7949, %v7956
        %v7959 = vunpack.c.l.s4 1983009808
        %v7960 = vunpack.c.0.s8 %v7959
        %v7961 = vlaneseq
        %v7962 = vshrl.u32 %v7961, 7
        %v7963 = vsub.s32 %v7960, %v7962
        %v7964 = vrot.slane %v7950, %v7963
        %v7965 = vcombine.low %v7957, %v7964
        %v7966 = vcombine.low %v7488, %v7489
        %v7967 = vcombine.low %v7490, %v7491
        %v7969 = vunpack.c.l.s4 1983009808
        %v7970 = vunpack.c.0.s8 %v7969
        %v7971 = vlaneseq
        %v7972 = vshrl.u32 %v7971, 7
        %v7973 = vsub.s32 %v7970, %v7972
        %v7974 = vrot.slane %v7966, %v7973
        %v7976 = vunpack.c.l.s4 1983009808
        %v7977 = vunpack.c.0.s8 %v7976
        %v7978 = vlaneseq
        %v7979 = vshrl.u32 %v7978, 7
        %v7980 = vsub.s32 %v7977, %v7979
        %v7981 = vrot.slane %v7967, %v7980
        %v7982 = vcombine.low %v7974, %v7981
        %v7983 = vcombine.low %v7492, %v7493
        %v7984 = vcombine.low %v7494, %v7495
        %v7986 = vunpack.c.l.s4 1983009808
        %v7987 = vunpack.c.0.s8 %v7986
        %v7988 = vlaneseq
        %v7989 = vshrl.u32 %v7988, 7
        %v7990 = vsub.s32 %v7987, %v7989
        %v7991 = vrot.slane %v7983, %v7990
        %v7993 = vunpack.c.l.s4 1983009808
        %v7994 = vunpack.c.0.s8 %v7993
        %v7995 = vlaneseq
        %v7996 = vshrl.u32 %v7995, 7
        %v7997 = vsub.s32 %v7994, %v7996
        %v7998 = vrot.slane %v7984, %v7997
        %v7999 = vcombine.low %v7991, %v7998
        %v8000 = vcombine.low %v4052, %v4053
        %v8001 = vcombine.low %v4054, %v4055
        %v8003 = vunpack.c.l.s4 1983009808
        %v8004 = vunpack.c.0.s8 %v8003
        %v8005 = vlaneseq
        %v8006 = vshrl.u32 %v8005, 7
        %v8007 = vsub.s32 %v8004, %v8006
        %v8008 = vrot.slane %v8000, %v8007
        %v8010 = vunpack.c.l.s4 1983009808
        %v8011 = vunpack.c.0.s8 %v8010
        %v8012 = vlaneseq
        %v8013 = vshrl.u32 %v8012, 7
        %v8014 = vsub.s32 %v8011, %v8013
        %v8015 = vrot.slane %v8001, %v8014
        %v8016 = vcombine.low %v8008, %v8015
        %v8017 = vcombine.low %v4056, %v4057
        %v8018 = vcombine.low %v4058, %v4059
        %v8020 = vunpack.c.l.s4 1983009808
        %v8021 = vunpack.c.0.s8 %v8020
        %v8022 = vlaneseq
        %v8023 = vshrl.u32 %v8022, 7
        %v8024 = vsub.s32 %v8021, %v8023
        %v8025 = vrot.slane %v8017, %v8024
        %v8027 = vunpack.c.l.s4 1983009808
        %v8028 = vunpack.c.0.s8 %v8027
        %v8029 = vlaneseq
        %v8030 = vshrl.u32 %v8029, 7
        %v8031 = vsub.s32 %v8028, %v8030
        %v8032 = vrot.slane %v8018, %v8031
        %v8033 = vcombine.low %v8025, %v8032
        %v8034 = vcombine.low %v4060, %v4061
        %v8035 = vcombine.low %v4062, %v4063
        %v8037 = vunpack.c.l.s4 1983009808
        %v8038 = vunpack.c.0.s8 %v8037
        %v8039 = vlaneseq
        %v8040 = vshrl.u32 %v8039, 7
        %v8041 = vsub.s32 %v8038, %v8040
        %v8042 = vrot.slane %v8034, %v8041
        %v8044 = vunpack.c.l.s4 1983009808
        %v8045 = vunpack.c.0.s8 %v8044
        %v8046 = vlaneseq
        %v8047 = vshrl.u32 %v8046, 7
        %v8048 = vsub.s32 %v8045, %v8047
        %v8049 = vrot.slane %v8035, %v8048
        %v8050 = vcombine.low %v8042, %v8049
        %v8051 = vcombine.low %v4064, %v4065
        %v8052 = vcombine.low %v4066, %v4067
        %v8054 = vunpack.c.l.s4 1983009808
        %v8055 = vunpack.c.0.s8 %v8054
        %v8056 = vlaneseq
        %v8057 = vshrl.u32 %v8056, 7
        %v8058 = vsub.s32 %v8055, %v8057
        %v8059 = vrot.slane %v8051, %v8058
        %v8061 = vunpack.c.l.s4 1983009808
        %v8062 = vunpack.c.0.s8 %v8061
        %v8063 = vlaneseq
        %v8064 = vshrl.u32 %v8063, 7
        %v8065 = vsub.s32 %v8062, %v8064
        %v8066 = vrot.slane %v8052, %v8065
        %v8067 = vcombine.low %v8059, %v8066
        %v8068 = vcombine.low %v7496, %v7497
        %v8069 = vcombine.low %v7498, %v7499
        %v8071 = vunpack.c.l.s4 1983009808
        %v8072 = vunpack.c.0.s8 %v8071
        %v8073 = vlaneseq
        %v8074 = vshrl.u32 %v8073, 7
        %v8075 = vsub.s32 %v8072, %v8074
        %v8076 = vrot.slane %v8068, %v8075
        %v8078 = vunpack.c.l.s4 1983009808
        %v8079 = vunpack.c.0.s8 %v8078
        %v8080 = vlaneseq
        %v8081 = vshrl.u32 %v8080, 7
        %v8082 = vsub.s32 %v8079, %v8081
        %v8083 = vrot.slane %v8069, %v8082
        %v8084 = vcombine.low %v8076, %v8083
        %v8085 = vcombine.low %v7500, %v7501
        %v8086 = vcombine.low %v7502, %v7503
        %v8088 = vunpack.c.l.s4 1983009808
        %v8089 = vunpack.c.0.s8 %v8088
        %v8090 = vlaneseq
        %v8091 = vshrl.u32 %v8090, 7
        %v8092 = vsub.s32 %v8089, %v8091
        %v8093 = vrot.slane %v8085, %v8092
        %v8095 = vunpack.c.l.s4 1983009808
        %v8096 = vunpack.c.0.s8 %v8095
        %v8097 = vlaneseq
        %v8098 = vshrl.u32 %v8097, 7
        %v8099 = vsub.s32 %v8096, %v8098
        %v8100 = vrot.slane %v8086, %v8099
        %v8101 = vcombine.low %v8093, %v8100
        %v8102 = vcombine.low %v7504, %v7505
        %v8103 = vcombine.low %v7506, %v7507
        %v8105 = vunpack.c.l.s4 1983009808
        %v8106 = vunpack.c.0.s8 %v8105
        %v8107 = vlaneseq
        %v8108 = vshrl.u32 %v8107, 7
        %v8109 = vsub.s32 %v8106, %v8108
        %v8110 = vrot.slane %v8102, %v8109
        %v8112 = vunpack.c.l.s4 1983009808
        %v8113 = vunpack.c.0.s8 %v8112
        %v8114 = vlaneseq
        %v8115 = vshrl.u32 %v8114, 7
        %v8116 = vsub.s32 %v8113, %v8115
        %v8117 = vrot.slane %v8103, %v8116
        %v8118 = vcombine.low %v8110, %v8117
        %v8119 = vcombine.low %v7508, %v7509
        %v8120 = vcombine.low %v7510, %v7511
        %v8122 = vunpack.c.l.s4 1983009808
        %v8123 = vunpack.c.0.s8 %v8122
        %v8124 = vlaneseq
        %v8125 = vshrl.u32 %v8124, 7
        %v8126 = vsub.s32 %v8123, %v8125
        %v8127 = vrot.slane %v8119, %v8126
        %v8129 = vunpack.c.l.s4 1983009808
        %v8130 = vunpack.c.0.s8 %v8129
        %v8131 = vlaneseq
        %v8132 = vshrl.u32 %v8131, 7
        %v8133 = vsub.s32 %v8130, %v8132
        %v8134 = vrot.slane %v8120, %v8133
        %v8135 = vcombine.low %v8127, %v8134
        %v8136 = vcombine.low %v4068, %v4069
        %v8137 = vcombine.low %v4070, %v4071
        %v8139 = vunpack.c.l.s4 1983009808
        %v8140 = vunpack.c.0.s8 %v8139
        %v8141 = vlaneseq
        %v8142 = vshrl.u32 %v8141, 7
        %v8143 = vsub.s32 %v8140, %v8142
        %v8144 = vrot.slane %v8136, %v8143
        %v8146 = vunpack.c.l.s4 1983009808
        %v8147 = vunpack.c.0.s8 %v8146
        %v8148 = vlaneseq
        %v8149 = vshrl.u32 %v8148, 7
        %v8150 = vsub.s32 %v8147, %v8149
        %v8151 = vrot.slane %v8137, %v8150
        %v8152 = vcombine.low %v8144, %v8151
        %v8153 = vcombine.low %v4072, %v4073
        %v8154 = vcombine.low %v4074, %v4075
        %v8156 = vunpack.c.l.s4 1983009808
        %v8157 = vunpack.c.0.s8 %v8156
        %v8158 = vlaneseq
        %v8159 = vshrl.u32 %v8158, 7
        %v8160 = vsub.s32 %v8157, %v8159
        %v8161 = vrot.slane %v8153, %v8160
        %v8163 = vunpack.c.l.s4 1983009808
        %v8164 = vunpack.c.0.s8 %v8163
        %v8165 = vlaneseq
        %v8166 = vshrl.u32 %v8165, 7
        %v8167 = vsub.s32 %v8164, %v8166
        %v8168 = vrot.slane %v8154, %v8167
        %v8169 = vcombine.low %v8161, %v8168
        %v8170 = vcombine.low %v4076, %v4077
        %v8171 = vcombine.low %v4078, %v4079
        %v8173 = vunpack.c.l.s4 1983009808
        %v8174 = vunpack.c.0.s8 %v8173
        %v8175 = vlaneseq
        %v8176 = vshrl.u32 %v8175, 7
        %v8177 = vsub.s32 %v8174, %v8176
        %v8178 = vrot.slane %v8170, %v8177
        %v8180 = vunpack.c.l.s4 1983009808
        %v8181 = vunpack.c.0.s8 %v8180
        %v8182 = vlaneseq
        %v8183 = vshrl.u32 %v8182, 7
        %v8184 = vsub.s32 %v8181, %v8183
        %v8185 = vrot.slane %v8171, %v8184
        %v8186 = vcombine.low %v8178, %v8185
        %v8187 = vcombine.low %v4080, %v4081
        %v8188 = vcombine.low %v4082, %v4083
        %v8190 = vunpack.c.l.s4 1983009808
        %v8191 = vunpack.c.0.s8 %v8190
        %v8192 = vlaneseq
        %v8193 = vshrl.u32 %v8192, 7
        %v8194 = vsub.s32 %v8191, %v8193
        %v8195 = vrot.slane %v8187, %v8194
        %v8197 = vunpack.c.l.s4 1983009808
        %v8198 = vunpack.c.0.s8 %v8197
        %v8199 = vlaneseq
        %v8200 = vshrl.u32 %v8199, 7
        %v8201 = vsub.s32 %v8198, %v8200
        %v8202 = vrot.slane %v8188, %v8201
        %v8203 = vcombine.low %v8195, %v8202
        %v8204 = vcombine.low %v7512, %v7513
        %v8205 = vcombine.low %v7514, %v7515
        %v8207 = vunpack.c.l.s4 1983009808
        %v8208 = vunpack.c.0.s8 %v8207
        %v8209 = vlaneseq
        %v8210 = vshrl.u32 %v8209, 7
        %v8211 = vsub.s32 %v8208, %v8210
        %v8212 = vrot.slane %v8204, %v8211
        %v8214 = vunpack.c.l.s4 1983009808
        %v8215 = vunpack.c.0.s8 %v8214
        %v8216 = vlaneseq
        %v8217 = vshrl.u32 %v8216, 7
        %v8218 = vsub.s32 %v8215, %v8217
        %v8219 = vrot.slane %v8205, %v8218
        %v8220 = vcombine.low %v8212, %v8219
        %v8221 = vcombine.low %v7516, %v7517
        %v8222 = vcombine.low %v7518, %v7519
        %v8224 = vunpack.c.l.s4 1983009808
        %v8225 = vunpack.c.0.s8 %v8224
        %v8226 = vlaneseq
        %v8227 = vshrl.u32 %v8226, 7
        %v8228 = vsub.s32 %v8225, %v8227
        %v8229 = vrot.slane %v8221, %v8228
        %v8231 = vunpack.c.l.s4 1983009808
        %v8232 = vunpack.c.0.s8 %v8231
        %v8233 = vlaneseq
        %v8234 = vshrl.u32 %v8233, 7
        %v8235 = vsub.s32 %v8232, %v8234
        %v8236 = vrot.slane %v8222, %v8235
        %v8237 = vcombine.low %v8229, %v8236
        %v8238 = vcombine.low %v7520, %v7521
        %v8239 = vcombine.low %v7522, %v7523
        %v8241 = vunpack.c.l.s4 1983009808
        %v8242 = vunpack.c.0.s8 %v8241
        %v8243 = vlaneseq
        %v8244 = vshrl.u32 %v8243, 7
        %v8245 = vsub.s32 %v8242, %v8244
        %v8246 = vrot.slane %v8238, %v8245
        %v8248 = vunpack.c.l.s4 1983009808
        %v8249 = vunpack.c.0.s8 %v8248
        %v8250 = vlaneseq
        %v8251 = vshrl.u32 %v8250, 7
        %v8252 = vsub.s32 %v8249, %v8251
        %v8253 = vrot.slane %v8239, %v8252
        %v8254 = vcombine.low %v8246, %v8253
        %v8255 = vcombine.low %v7524, %v7525
        %v8256 = vcombine.low %v7526, %v7527
        %v8258 = vunpack.c.l.s4 1983009808
        %v8259 = vunpack.c.0.s8 %v8258
        %v8260 = vlaneseq
        %v8261 = vshrl.u32 %v8260, 7
        %v8262 = vsub.s32 %v8259, %v8261
        %v8263 = vrot.slane %v8255, %v8262
        %v8265 = vunpack.c.l.s4 1983009808
        %v8266 = vunpack.c.0.s8 %v8265
        %v8267 = vlaneseq
        %v8268 = vshrl.u32 %v8267, 7
        %v8269 = vsub.s32 %v8266, %v8268
        %v8270 = vrot.slane %v8256, %v8269
        %v8271 = vcombine.low %v8263, %v8270
        %v8272 = vcombine.low %v4084, %v4085
        %v8273 = vcombine.low %v4086, %v4087
        %v8275 = vunpack.c.l.s4 1983009808
        %v8276 = vunpack.c.0.s8 %v8275
        %v8277 = vlaneseq
        %v8278 = vshrl.u32 %v8277, 7
        %v8279 = vsub.s32 %v8276, %v8278
        %v8280 = vrot.slane %v8272, %v8279
        %v8282 = vunpack.c.l.s4 1983009808
        %v8283 = vunpack.c.0.s8 %v8282
        %v8284 = vlaneseq
        %v8285 = vshrl.u32 %v8284, 7
        %v8286 = vsub.s32 %v8283, %v8285
        %v8287 = vrot.slane %v8273, %v8286
        %v8288 = vcombine.low %v8280, %v8287
        %v8289 = vcombine.low %v4088, %v4089
        %v8290 = vcombine.low %v4090, %v4091
        %v8292 = vunpack.c.l.s4 1983009808
        %v8293 = vunpack.c.0.s8 %v8292
        %v8294 = vlaneseq
        %v8295 = vshrl.u32 %v8294, 7
        %v8296 = vsub.s32 %v8293, %v8295
        %v8297 = vrot.slane %v8289, %v8296
        %v8299 = vunpack.c.l.s4 1983009808
        %v8300 = vunpack.c.0.s8 %v8299
        %v8301 = vlaneseq
        %v8302 = vshrl.u32 %v8301, 7
        %v8303 = vsub.s32 %v8300, %v8302
        %v8304 = vrot.slane %v8290, %v8303
        %v8305 = vcombine.low %v8297, %v8304
        %v8306 = vcombine.low %v4092, %v4093
        %v8307 = vcombine.low %v4094, %v4095
        %v8309 = vunpack.c.l.s4 1983009808
        %v8310 = vunpack.c.0.s8 %v8309
        %v8311 = vlaneseq
        %v8312 = vshrl.u32 %v8311, 7
        %v8313 = vsub.s32 %v8310, %v8312
        %v8314 = vrot.slane %v8306, %v8313
        %v8316 = vunpack.c.l.s4 1983009808
        %v8317 = vunpack.c.0.s8 %v8316
        %v8318 = vlaneseq
        %v8319 = vshrl.u32 %v8318, 7
        %v8320 = vsub.s32 %v8317, %v8319
        %v8321 = vrot.slane %v8307, %v8320
        %v8322 = vcombine.low %v8314, %v8321
        %v8323 = vcombine.low %v4096, %v4097
        %v8324 = vcombine.low %v4098, %v4099
        %v8326 = vunpack.c.l.s4 1983009808
        %v8327 = vunpack.c.0.s8 %v8326
        %v8328 = vlaneseq
        %v8329 = vshrl.u32 %v8328, 7
        %v8330 = vsub.s32 %v8327, %v8329
        %v8331 = vrot.slane %v8323, %v8330
        %v8333 = vunpack.c.l.s4 1983009808
        %v8334 = vunpack.c.0.s8 %v8333
        %v8335 = vlaneseq
        %v8336 = vshrl.u32 %v8335, 7
        %v8337 = vsub.s32 %v8334, %v8336
        %v8338 = vrot.slane %v8324, %v8337
        %v8339 = vcombine.low %v8331, %v8338
        %v8340 = vcombine.low %v7528, %v7529
        %v8341 = vcombine.low %v7530, %v7531
        %v8343 = vunpack.c.l.s4 1983009808
        %v8344 = vunpack.c.0.s8 %v8343
        %v8345 = vlaneseq
        %v8346 = vshrl.u32 %v8345, 7
        %v8347 = vsub.s32 %v8344, %v8346
        %v8348 = vrot.slane %v8340, %v8347
        %v8350 = vunpack.c.l.s4 1983009808
        %v8351 = vunpack.c.0.s8 %v8350
        %v8352 = vlaneseq
        %v8353 = vshrl.u32 %v8352, 7
        %v8354 = vsub.s32 %v8351, %v8353
        %v8355 = vrot.slane %v8341, %v8354
        %v8356 = vcombine.low %v8348, %v8355
        %v8357 = vcombine.low %v7532, %v7533
        %v8358 = vcombine.low %v7534, %v7535
        %v8360 = vunpack.c.l.s4 1983009808
        %v8361 = vunpack.c.0.s8 %v8360
        %v8362 = vlaneseq
        %v8363 = vshrl.u32 %v8362, 7
        %v8364 = vsub.s32 %v8361, %v8363
        %v8365 = vrot.slane %v8357, %v8364
        %v8367 = vunpack.c.l.s4 1983009808
        %v8368 = vunpack.c.0.s8 %v8367
        %v8369 = vlaneseq
        %v8370 = vshrl.u32 %v8369, 7
        %v8371 = vsub.s32 %v8368, %v8370
        %v8372 = vrot.slane %v8358, %v8371
        %v8373 = vcombine.low %v8365, %v8372
        %v8374 = vcombine.low %v7536, %v7537
        %v8375 = vcombine.low %v7538, %v7539
        %v8377 = vunpack.c.l.s4 1983009808
        %v8378 = vunpack.c.0.s8 %v8377
        %v8379 = vlaneseq
        %v8380 = vshrl.u32 %v8379, 7
        %v8381 = vsub.s32 %v8378, %v8380
        %v8382 = vrot.slane %v8374, %v8381
        %v8384 = vunpack.c.l.s4 1983009808
        %v8385 = vunpack.c.0.s8 %v8384
        %v8386 = vlaneseq
        %v8387 = vshrl.u32 %v8386, 7
        %v8388 = vsub.s32 %v8385, %v8387
        %v8389 = vrot.slane %v8375, %v8388
        %v8390 = vcombine.low %v8382, %v8389
        %v8391 = vcombine.low %v7540, %v7541
        %v8392 = vcombine.low %v7542, %v7543
        %v8394 = vunpack.c.l.s4 1983009808
        %v8395 = vunpack.c.0.s8 %v8394
        %v8396 = vlaneseq
        %v8397 = vshrl.u32 %v8396, 7
        %v8398 = vsub.s32 %v8395, %v8397
        %v8399 = vrot.slane %v8391, %v8398
        %v8401 = vunpack.c.l.s4 1983009808
        %v8402 = vunpack.c.0.s8 %v8401
        %v8403 = vlaneseq
        %v8404 = vshrl.u32 %v8403, 7
        %v8405 = vsub.s32 %v8402, %v8404
        %v8406 = vrot.slane %v8392, %v8405
        %v8407 = vcombine.low %v8399, %v8406
        %v8408 = vcombine.low %v4100, %v4101
        %v8409 = vcombine.low %v4102, %v4103
        %v8411 = vunpack.c.l.s4 1983009808
        %v8412 = vunpack.c.0.s8 %v8411
        %v8413 = vlaneseq
        %v8414 = vshrl.u32 %v8413, 7
        %v8415 = vsub.s32 %v8412, %v8414
        %v8416 = vrot.slane %v8408, %v8415
        %v8418 = vunpack.c.l.s4 1983009808
        %v8419 = vunpack.c.0.s8 %v8418
        %v8420 = vlaneseq
        %v8421 = vshrl.u32 %v8420, 7
        %v8422 = vsub.s32 %v8419, %v8421
        %v8423 = vrot.slane %v8409, %v8422
        %v8424 = vcombine.low %v8416, %v8423
        %v8425 = vcombine.low %v4104, %v4105
        %v8426 = vcombine.low %v4106, %v4107
        %v8428 = vunpack.c.l.s4 1983009808
        %v8429 = vunpack.c.0.s8 %v8428
        %v8430 = vlaneseq
        %v8431 = vshrl.u32 %v8430, 7
        %v8432 = vsub.s32 %v8429, %v8431
        %v8433 = vrot.slane %v8425, %v8432
        %v8435 = vunpack.c.l.s4 1983009808
        %v8436 = vunpack.c.0.s8 %v8435
        %v8437 = vlaneseq
        %v8438 = vshrl.u32 %v8437, 7
        %v8439 = vsub.s32 %v8436, %v8438
        %v8440 = vrot.slane %v8426, %v8439
        %v8441 = vcombine.low %v8433, %v8440
        %v8442 = vcombine.low %v4108, %v4109
        %v8443 = vcombine.low %v4110, %v4111
        %v8445 = vunpack.c.l.s4 1983009808
        %v8446 = vunpack.c.0.s8 %v8445
        %v8447 = vlaneseq
        %v8448 = vshrl.u32 %v8447, 7
        %v8449 = vsub.s32 %v8446, %v8448
        %v8450 = vrot.slane %v8442, %v8449
        %v8452 = vunpack.c.l.s4 1983009808
        %v8453 = vunpack.c.0.s8 %v8452
        %v8454 = vlaneseq
        %v8455 = vshrl.u32 %v8454, 7
        %v8456 = vsub.s32 %v8453, %v8455
        %v8457 = vrot.slane %v8443, %v8456
        %v8458 = vcombine.low %v8450, %v8457
        %v8459 = vcombine.low %v4112, %v4113
        %v8460 = vcombine.low %v4114, %v4115
        %v8462 = vunpack.c.l.s4 1983009808
        %v8463 = vunpack.c.0.s8 %v8462
        %v8464 = vlaneseq
        %v8465 = vshrl.u32 %v8464, 7
        %v8466 = vsub.s32 %v8463, %v8465
        %v8467 = vrot.slane %v8459, %v8466
        %v8469 = vunpack.c.l.s4 1983009808
        %v8470 = vunpack.c.0.s8 %v8469
        %v8471 = vlaneseq
        %v8472 = vshrl.u32 %v8471, 7
        %v8473 = vsub.s32 %v8470, %v8472
        %v8474 = vrot.slane %v8460, %v8473
        %v8475 = vcombine.low %v8467, %v8474
        %v8476 = vcombine.low %v7544, %v7545
        %v8477 = vcombine.low %v7546, %v7547
        %v8479 = vunpack.c.l.s4 1983009808
        %v8480 = vunpack.c.0.s8 %v8479
        %v8481 = vlaneseq
        %v8482 = vshrl.u32 %v8481, 7
        %v8483 = vsub.s32 %v8480, %v8482
        %v8484 = vrot.slane %v8476, %v8483
        %v8486 = vunpack.c.l.s4 1983009808
        %v8487 = vunpack.c.0.s8 %v8486
        %v8488 = vlaneseq
        %v8489 = vshrl.u32 %v8488, 7
        %v8490 = vsub.s32 %v8487, %v8489
        %v8491 = vrot.slane %v8477, %v8490
        %v8492 = vcombine.low %v8484, %v8491
        %v8493 = vcombine.low %v7548, %v7549
        %v8494 = vcombine.low %v7550, %v7551
        %v8496 = vunpack.c.l.s4 1983009808
        %v8497 = vunpack.c.0.s8 %v8496
        %v8498 = vlaneseq
        %v8499 = vshrl.u32 %v8498, 7
        %v8500 = vsub.s32 %v8497, %v8499
        %v8501 = vrot.slane %v8493, %v8500
        %v8503 = vunpack.c.l.s4 1983009808
        %v8504 = vunpack.c.0.s8 %v8503
        %v8505 = vlaneseq
        %v8506 = vshrl.u32 %v8505, 7
        %v8507 = vsub.s32 %v8504, %v8506
        %v8508 = vrot.slane %v8494, %v8507
        %v8509 = vcombine.low %v8501, %v8508
        %v8510 = vcombine.low %v7552, %v7553
        %v8511 = vcombine.low %v7554, %v7555
        %v8513 = vunpack.c.l.s4 1983009808
        %v8514 = vunpack.c.0.s8 %v8513
        %v8515 = vlaneseq
        %v8516 = vshrl.u32 %v8515, 7
        %v8517 = vsub.s32 %v8514, %v8516
        %v8518 = vrot.slane %v8510, %v8517
        %v8520 = vunpack.c.l.s4 1983009808
        %v8521 = vunpack.c.0.s8 %v8520
        %v8522 = vlaneseq
        %v8523 = vshrl.u32 %v8522, 7
        %v8524 = vsub.s32 %v8521, %v8523
        %v8525 = vrot.slane %v8511, %v8524
        %v8526 = vcombine.low %v8518, %v8525
        %v8527 = vcombine.low %v7556, %v7557
        %v8528 = vcombine.low %v7558, %v7559
        %v8530 = vunpack.c.l.s4 1983009808
        %v8531 = vunpack.c.0.s8 %v8530
        %v8532 = vlaneseq
        %v8533 = vshrl.u32 %v8532, 7
        %v8534 = vsub.s32 %v8531, %v8533
        %v8535 = vrot.slane %v8527, %v8534
        %v8537 = vunpack.c.l.s4 1983009808
        %v8538 = vunpack.c.0.s8 %v8537
        %v8539 = vlaneseq
        %v8540 = vshrl.u32 %v8539, 7
        %v8541 = vsub.s32 %v8538, %v8540
        %v8542 = vrot.slane %v8528, %v8541
        %v8543 = vcombine.low %v8535, %v8542
        %v8544 = vcombine.low %v4116, %v4117
        %v8545 = vcombine.low %v4118, %v4119
        %v8547 = vunpack.c.l.s4 1983009808
        %v8548 = vunpack.c.0.s8 %v8547
        %v8549 = vlaneseq
        %v8550 = vshrl.u32 %v8549, 7
        %v8551 = vsub.s32 %v8548, %v8550
        %v8552 = vrot.slane %v8544, %v8551
        %v8554 = vunpack.c.l.s4 1983009808
        %v8555 = vunpack.c.0.s8 %v8554
        %v8556 = vlaneseq
        %v8557 = vshrl.u32 %v8556, 7
        %v8558 = vsub.s32 %v8555, %v8557
        %v8559 = vrot.slane %v8545, %v8558
        %v8560 = vcombine.low %v8552, %v8559
        %v8561 = vcombine.low %v4120, %v4121
        %v8562 = vcombine.low %v4122, %v4123
        %v8564 = vunpack.c.l.s4 1983009808
        %v8565 = vunpack.c.0.s8 %v8564
        %v8566 = vlaneseq
        %v8567 = vshrl.u32 %v8566, 7
        %v8568 = vsub.s32 %v8565, %v8567
        %v8569 = vrot.slane %v8561, %v8568
        %v8571 = vunpack.c.l.s4 1983009808
        %v8572 = vunpack.c.0.s8 %v8571
        %v8573 = vlaneseq
        %v8574 = vshrl.u32 %v8573, 7
        %v8575 = vsub.s32 %v8572, %v8574
        %v8576 = vrot.slane %v8562, %v8575
        %v8577 = vcombine.low %v8569, %v8576
        %v8578 = vcombine.low %v4124, %v4125
        %v8579 = vcombine.low %v4126, %v4127
        %v8581 = vunpack.c.l.s4 1983009808
        %v8582 = vunpack.c.0.s8 %v8581
        %v8583 = vlaneseq
        %v8584 = vshrl.u32 %v8583, 7
        %v8585 = vsub.s32 %v8582, %v8584
        %v8586 = vrot.slane %v8578, %v8585
        %v8588 = vunpack.c.l.s4 1983009808
        %v8589 = vunpack.c.0.s8 %v8588
        %v8590 = vlaneseq
        %v8591 = vshrl.u32 %v8590, 7
        %v8592 = vsub.s32 %v8589, %v8591
        %v8593 = vrot.slane %v8579, %v8592
        %v8594 = vcombine.low %v8586, %v8593
        %v8595 = vcombine.low %v4128, %v4129
        %v8596 = vcombine.low %v4130, %v4131
        %v8598 = vunpack.c.l.s4 1983009808
        %v8599 = vunpack.c.0.s8 %v8598
        %v8600 = vlaneseq
        %v8601 = vshrl.u32 %v8600, 7
        %v8602 = vsub.s32 %v8599, %v8601
        %v8603 = vrot.slane %v8595, %v8602
        %v8605 = vunpack.c.l.s4 1983009808
        %v8606 = vunpack.c.0.s8 %v8605
        %v8607 = vlaneseq
        %v8608 = vshrl.u32 %v8607, 7
        %v8609 = vsub.s32 %v8606, %v8608
        %v8610 = vrot.slane %v8596, %v8609
        %v8611 = vcombine.low %v8603, %v8610
        %v8612 = vcombine.low %v7560, %v7561
        %v8613 = vcombine.low %v7562, %v7563
        %v8615 = vunpack.c.l.s4 1983009808
        %v8616 = vunpack.c.0.s8 %v8615
        %v8617 = vlaneseq
        %v8618 = vshrl.u32 %v8617, 7
        %v8619 = vsub.s32 %v8616, %v8618
        %v8620 = vrot.slane %v8612, %v8619
        %v8622 = vunpack.c.l.s4 1983009808
        %v8623 = vunpack.c.0.s8 %v8622
        %v8624 = vlaneseq
        %v8625 = vshrl.u32 %v8624, 7
        %v8626 = vsub.s32 %v8623, %v8625
        %v8627 = vrot.slane %v8613, %v8626
        %v8628 = vcombine.low %v8620, %v8627
        %v8629 = vcombine.low %v7564, %v7565
        %v8630 = vcombine.low %v7566, %v7567
        %v8632 = vunpack.c.l.s4 1983009808
        %v8633 = vunpack.c.0.s8 %v8632
        %v8634 = vlaneseq
        %v8635 = vshrl.u32 %v8634, 7
        %v8636 = vsub.s32 %v8633, %v8635
        %v8637 = vrot.slane %v8629, %v8636
        %v8639 = vunpack.c.l.s4 1983009808
        %v8640 = vunpack.c.0.s8 %v8639
        %v8641 = vlaneseq
        %v8642 = vshrl.u32 %v8641, 7
        %v8643 = vsub.s32 %v8640, %v8642
        %v8644 = vrot.slane %v8630, %v8643
        %v8645 = vcombine.low %v8637, %v8644
        %v8646 = vcombine.low %v7568, %v7569
        %v8647 = vcombine.low %v7570, %v7571
        %v8649 = vunpack.c.l.s4 1983009808
        %v8650 = vunpack.c.0.s8 %v8649
        %v8651 = vlaneseq
        %v8652 = vshrl.u32 %v8651, 7
        %v8653 = vsub.s32 %v8650, %v8652
        %v8654 = vrot.slane %v8646, %v8653
        %v8656 = vunpack.c.l.s4 1983009808
        %v8657 = vunpack.c.0.s8 %v8656
        %v8658 = vlaneseq
        %v8659 = vshrl.u32 %v8658, 7
        %v8660 = vsub.s32 %v8657, %v8659
        %v8661 = vrot.slane %v8647, %v8660
        %v8662 = vcombine.low %v8654, %v8661
        %v8663 = vcombine.low %v7572, %v7573
        %v8664 = vcombine.low %v7574, %v7575
        %v8666 = vunpack.c.l.s4 1983009808
        %v8667 = vunpack.c.0.s8 %v8666
        %v8668 = vlaneseq
        %v8669 = vshrl.u32 %v8668, 7
        %v8670 = vsub.s32 %v8667, %v8669
        %v8671 = vrot.slane %v8663, %v8670
        %v8673 = vunpack.c.l.s4 1983009808
        %v8674 = vunpack.c.0.s8 %v8673
        %v8675 = vlaneseq
        %v8676 = vshrl.u32 %v8675, 7
        %v8677 = vsub.s32 %v8674, %v8676
        %v8678 = vrot.slane %v8664, %v8677
        %v8679 = vcombine.low %v8671, %v8678
        %v8680 = vcombine.low %v4132, %v4133
        %v8681 = vcombine.low %v4134, %v4135
        %v8683 = vunpack.c.l.s4 1983009808
        %v8684 = vunpack.c.0.s8 %v8683
        %v8685 = vlaneseq
        %v8686 = vshrl.u32 %v8685, 7
        %v8687 = vsub.s32 %v8684, %v8686
        %v8688 = vrot.slane %v8680, %v8687
        %v8690 = vunpack.c.l.s4 1983009808
        %v8691 = vunpack.c.0.s8 %v8690
        %v8692 = vlaneseq
        %v8693 = vshrl.u32 %v8692, 7
        %v8694 = vsub.s32 %v8691, %v8693
        %v8695 = vrot.slane %v8681, %v8694
        %v8696 = vcombine.low %v8688, %v8695
        %v8697 = vcombine.low %v4136, %v4137
        %v8698 = vcombine.low %v4138, %v4139
        %v8700 = vunpack.c.l.s4 1983009808
        %v8701 = vunpack.c.0.s8 %v8700
        %v8702 = vlaneseq
        %v8703 = vshrl.u32 %v8702, 7
        %v8704 = vsub.s32 %v8701, %v8703
        %v8705 = vrot.slane %v8697, %v8704
        %v8707 = vunpack.c.l.s4 1983009808
        %v8708 = vunpack.c.0.s8 %v8707
        %v8709 = vlaneseq
        %v8710 = vshrl.u32 %v8709, 7
        %v8711 = vsub.s32 %v8708, %v8710
        %v8712 = vrot.slane %v8698, %v8711
        %v8713 = vcombine.low %v8705, %v8712
        %v8714 = vcombine.low %v4140, %v4141
        %v8715 = vcombine.low %v4142, %v4143
        %v8717 = vunpack.c.l.s4 1983009808
        %v8718 = vunpack.c.0.s8 %v8717
        %v8719 = vlaneseq
        %v8720 = vshrl.u32 %v8719, 7
        %v8721 = vsub.s32 %v8718, %v8720
        %v8722 = vrot.slane %v8714, %v8721
        %v8724 = vunpack.c.l.s4 1983009808
        %v8725 = vunpack.c.0.s8 %v8724
        %v8726 = vlaneseq
        %v8727 = vshrl.u32 %v8726, 7
        %v8728 = vsub.s32 %v8725, %v8727
        %v8729 = vrot.slane %v8715, %v8728
        %v8730 = vcombine.low %v8722, %v8729
        %v8731 = vcombine.low %v4144, %v4145
        %v8732 = vcombine.low %v4146, %v4147
        %v8734 = vunpack.c.l.s4 1983009808
        %v8735 = vunpack.c.0.s8 %v8734
        %v8736 = vlaneseq
        %v8737 = vshrl.u32 %v8736, 7
        %v8738 = vsub.s32 %v8735, %v8737
        %v8739 = vrot.slane %v8731, %v8738
        %v8741 = vunpack.c.l.s4 1983009808
        %v8742 = vunpack.c.0.s8 %v8741
        %v8743 = vlaneseq
        %v8744 = vshrl.u32 %v8743, 7
        %v8745 = vsub.s32 %v8742, %v8744
        %v8746 = vrot.slane %v8732, %v8745
        %v8747 = vcombine.low %v8739, %v8746
        %v8748 = vcombine.low %v7576, %v7577
        %v8749 = vcombine.low %v7578, %v7579
        %v8751 = vunpack.c.l.s4 1983009808
        %v8752 = vunpack.c.0.s8 %v8751
        %v8753 = vlaneseq
        %v8754 = vshrl.u32 %v8753, 7
        %v8755 = vsub.s32 %v8752, %v8754
        %v8756 = vrot.slane %v8748, %v8755
        %v8758 = vunpack.c.l.s4 1983009808
        %v8759 = vunpack.c.0.s8 %v8758
        %v8760 = vlaneseq
        %v8761 = vshrl.u32 %v8760, 7
        %v8762 = vsub.s32 %v8759, %v8761
        %v8763 = vrot.slane %v8749, %v8762
        %v8764 = vcombine.low %v8756, %v8763
        %v8765 = vcombine.low %v7580, %v7581
        %v8766 = vcombine.low %v7582, %v7583
        %v8768 = vunpack.c.l.s4 1983009808
        %v8769 = vunpack.c.0.s8 %v8768
        %v8770 = vlaneseq
        %v8771 = vshrl.u32 %v8770, 7
        %v8772 = vsub.s32 %v8769, %v8771
        %v8773 = vrot.slane %v8765, %v8772
        %v8775 = vunpack.c.l.s4 1983009808
        %v8776 = vunpack.c.0.s8 %v8775
        %v8777 = vlaneseq
        %v8778 = vshrl.u32 %v8777, 7
        %v8779 = vsub.s32 %v8776, %v8778
        %v8780 = vrot.slane %v8766, %v8779
        %v8781 = vcombine.low %v8773, %v8780
        %v8782 = vcombine.low %v7584, %v7585
        %v8783 = vcombine.low %v7586, %v7587
        %v8785 = vunpack.c.l.s4 1983009808
        %v8786 = vunpack.c.0.s8 %v8785
        %v8787 = vlaneseq
        %v8788 = vshrl.u32 %v8787, 7
        %v8789 = vsub.s32 %v8786, %v8788
        %v8790 = vrot.slane %v8782, %v8789
        %v8792 = vunpack.c.l.s4 1983009808
        %v8793 = vunpack.c.0.s8 %v8792
        %v8794 = vlaneseq
        %v8795 = vshrl.u32 %v8794, 7
        %v8796 = vsub.s32 %v8793, %v8795
        %v8797 = vrot.slane %v8783, %v8796
        %v8798 = vcombine.low %v8790, %v8797
        %v8799 = vcombine.low %v7588, %v7589
        %v8800 = vcombine.low %v7590, %v7591
        %v8802 = vunpack.c.l.s4 1983009808
        %v8803 = vunpack.c.0.s8 %v8802
        %v8804 = vlaneseq
        %v8805 = vshrl.u32 %v8804, 7
        %v8806 = vsub.s32 %v8803, %v8805
        %v8807 = vrot.slane %v8799, %v8806
        %v8809 = vunpack.c.l.s4 1983009808
        %v8810 = vunpack.c.0.s8 %v8809
        %v8811 = vlaneseq
        %v8812 = vshrl.u32 %v8811, 7
        %v8813 = vsub.s32 %v8810, %v8812
        %v8814 = vrot.slane %v8800, %v8813
        %v8815 = vcombine.low %v8807, %v8814
        %v8816 = vcombine.low %v4148, %v4149
        %v8817 = vcombine.low %v4150, %v4151
        %v8819 = vunpack.c.l.s4 1983009808
        %v8820 = vunpack.c.0.s8 %v8819
        %v8821 = vlaneseq
        %v8822 = vshrl.u32 %v8821, 7
        %v8823 = vsub.s32 %v8820, %v8822
        %v8824 = vrot.slane %v8816, %v8823
        %v8826 = vunpack.c.l.s4 1983009808
        %v8827 = vunpack.c.0.s8 %v8826
        %v8828 = vlaneseq
        %v8829 = vshrl.u32 %v8828, 7
        %v8830 = vsub.s32 %v8827, %v8829
        %v8831 = vrot.slane %v8817, %v8830
        %v8832 = vcombine.low %v8824, %v8831
        %v8833 = vcombine.low %v4152, %v4153
        %v8834 = vcombine.low %v4154, %v4155
        %v8836 = vunpack.c.l.s4 1983009808
        %v8837 = vunpack.c.0.s8 %v8836
        %v8838 = vlaneseq
        %v8839 = vshrl.u32 %v8838, 7
        %v8840 = vsub.s32 %v8837, %v8839
        %v8841 = vrot.slane %v8833, %v8840
        %v8843 = vunpack.c.l.s4 1983009808
        %v8844 = vunpack.c.0.s8 %v8843
        %v8845 = vlaneseq
        %v8846 = vshrl.u32 %v8845, 7
        %v8847 = vsub.s32 %v8844, %v8846
        %v8848 = vrot.slane %v8834, %v8847
        %v8849 = vcombine.low %v8841, %v8848
        %v8850 = vcombine.low %v4156, %v4157
        %v8851 = vcombine.low %v4158, %v4159
        %v8853 = vunpack.c.l.s4 1983009808
        %v8854 = vunpack.c.0.s8 %v8853
        %v8855 = vlaneseq
        %v8856 = vshrl.u32 %v8855, 7
        %v8857 = vsub.s32 %v8854, %v8856
        %v8858 = vrot.slane %v8850, %v8857
        %v8860 = vunpack.c.l.s4 1983009808
        %v8861 = vunpack.c.0.s8 %v8860
        %v8862 = vlaneseq
        %v8863 = vshrl.u32 %v8862, 7
        %v8864 = vsub.s32 %v8861, %v8863
        %v8865 = vrot.slane %v8851, %v8864
        %v8866 = vcombine.low %v8858, %v8865
        %v8867 = vcombine.low %v4160, %v4161
        %v8868 = vcombine.low %v4162, %v4163
        %v8870 = vunpack.c.l.s4 1983009808
        %v8871 = vunpack.c.0.s8 %v8870
        %v8872 = vlaneseq
        %v8873 = vshrl.u32 %v8872, 7
        %v8874 = vsub.s32 %v8871, %v8873
        %v8875 = vrot.slane %v8867, %v8874
        %v8877 = vunpack.c.l.s4 1983009808
        %v8878 = vunpack.c.0.s8 %v8877
        %v8879 = vlaneseq
        %v8880 = vshrl.u32 %v8879, 7
        %v8881 = vsub.s32 %v8878, %v8880
        %v8882 = vrot.slane %v8868, %v8881
        %v8883 = vcombine.low %v8875, %v8882
        %v8884 = vcombine.low %v7592, %v7593
        %v8885 = vcombine.low %v7594, %v7595
        %v8887 = vunpack.c.l.s4 1983009808
        %v8888 = vunpack.c.0.s8 %v8887
        %v8889 = vlaneseq
        %v8890 = vshrl.u32 %v8889, 7
        %v8891 = vsub.s32 %v8888, %v8890
        %v8892 = vrot.slane %v8884, %v8891
        %v8894 = vunpack.c.l.s4 1983009808
        %v8895 = vunpack.c.0.s8 %v8894
        %v8896 = vlaneseq
        %v8897 = vshrl.u32 %v8896, 7
        %v8898 = vsub.s32 %v8895, %v8897
        %v8899 = vrot.slane %v8885, %v8898
        %v8900 = vcombine.low %v8892, %v8899
        %v8901 = vcombine.low %v7596, %v7597
        %v8902 = vcombine.low %v7598, %v7599
        %v8904 = vunpack.c.l.s4 1983009808
        %v8905 = vunpack.c.0.s8 %v8904
        %v8906 = vlaneseq
        %v8907 = vshrl.u32 %v8906, 7
        %v8908 = vsub.s32 %v8905, %v8907
        %v8909 = vrot.slane %v8901, %v8908
        %v8911 = vunpack.c.l.s4 1983009808
        %v8912 = vunpack.c.0.s8 %v8911
        %v8913 = vlaneseq
        %v8914 = vshrl.u32 %v8913, 7
        %v8915 = vsub.s32 %v8912, %v8914
        %v8916 = vrot.slane %v8902, %v8915
        %v8917 = vcombine.low %v8909, %v8916
        %v8918 = vcombine.low %v7600, %v7601
        %v8919 = vcombine.low %v7602, %v7603
        %v8921 = vunpack.c.l.s4 1983009808
        %v8922 = vunpack.c.0.s8 %v8921
        %v8923 = vlaneseq
        %v8924 = vshrl.u32 %v8923, 7
        %v8925 = vsub.s32 %v8922, %v8924
        %v8926 = vrot.slane %v8918, %v8925
        %v8928 = vunpack.c.l.s4 1983009808
        %v8929 = vunpack.c.0.s8 %v8928
        %v8930 = vlaneseq
        %v8931 = vshrl.u32 %v8930, 7
        %v8932 = vsub.s32 %v8929, %v8931
        %v8933 = vrot.slane %v8919, %v8932
        %v8934 = vcombine.low %v8926, %v8933
        %v8935 = vcombine.low %v7604, %v7605
        %v8936 = vcombine.low %v7606, %v7607
        %v8938 = vunpack.c.l.s4 1983009808
        %v8939 = vunpack.c.0.s8 %v8938
        %v8940 = vlaneseq
        %v8941 = vshrl.u32 %v8940, 7
        %v8942 = vsub.s32 %v8939, %v8941
        %v8943 = vrot.slane %v8935, %v8942
        %v8945 = vunpack.c.l.s4 1983009808
        %v8946 = vunpack.c.0.s8 %v8945
        %v8947 = vlaneseq
        %v8948 = vshrl.u32 %v8947, 7
        %v8949 = vsub.s32 %v8946, %v8948
        %v8950 = vrot.slane %v8936, %v8949
        %v8951 = vcombine.low %v8943, %v8950
        %9016 = vst [vmem:[%s270] sm:$0xff] %v7880
        %9017 = vst [vmem:[%s270 + $0x8] sm:$0xff] %v7897
        %9018 = vst [vmem:[%s270 + $0x10] sm:$0xff] %v7914
        %9019 = vst [vmem:[%s270 + $0x18] sm:$0xff] %v7931
        %9020 = vst [vmem:[%s270 + $0x20] sm:$0xff] %v7948
        %9021 = vst [vmem:[%s270 + $0x28] sm:$0xff] %v7965
        %9022 = vst [vmem:[%s270 + $0x30] sm:$0xff] %v7982
        %9023 = vst [vmem:[%s270 + $0x38] sm:$0xff] %v7999
        %9024 = vst [vmem:[%s270 + $0x40] sm:$0xff] %v8016
        %9025 = vst [vmem:[%s270 + $0x48] sm:$0xff] %v8033
        %9026 = vst [vmem:[%s270 + $0x50] sm:$0xff] %v8050
        %9027 = vst [vmem:[%s270 + $0x58] sm:$0xff] %v8067
        %9028 = vst [vmem:[%s270 + $0x60] sm:$0xff] %v8084
        %9029 = vst [vmem:[%s270 + $0x68] sm:$0xff] %v8101
        %9030 = vst [vmem:[%s270 + $0x70] sm:$0xff] %v8118
        %9031 = vst [vmem:[%s270 + $0x78] sm:$0xff] %v8135
        %9032 = vst [vmem:[%s270 + $0x80] sm:$0xff] %v8152
        %9033 = vst [vmem:[%s270 + $0x88] sm:$0xff] %v8169
        %9034 = vst [vmem:[%s270 + $0x90] sm:$0xff] %v8186
        %9035 = vst [vmem:[%s270 + $0x98] sm:$0xff] %v8203
        %9036 = vst [vmem:[%s270 + $0xa0] sm:$0xff] %v8220
        %9037 = vst [vmem:[%s270 + $0xa8] sm:$0xff] %v8237
        %9038 = vst [vmem:[%s270 + $0xb0] sm:$0xff] %v8254
        %9039 = vst [vmem:[%s270 + $0xb8] sm:$0xff] %v8271
        %9040 = vst [vmem:[%s270 + $0xc0] sm:$0xff] %v8288
        %9041 = vst [vmem:[%s270 + $0xc8] sm:$0xff] %v8305
        %9042 = vst [vmem:[%s270 + $0xd0] sm:$0xff] %v8322
        %9043 = vst [vmem:[%s270 + $0xd8] sm:$0xff] %v8339
        %9044 = vst [vmem:[%s270 + $0xe0] sm:$0xff] %v8356
        %9045 = vst [vmem:[%s270 + $0xe8] sm:$0xff] %v8373
        %9046 = vst [vmem:[%s270 + $0xf0] sm:$0xff] %v8390
        %9047 = vst [vmem:[%s270 + $0xf8] sm:$0xff] %v8407
        %9048 = vst [vmem:[%s270 + $0x100] sm:$0xff] %v8424
        %9049 = vst [vmem:[%s270 + $0x108] sm:$0xff] %v8441
        %9050 = vst [vmem:[%s270 + $0x110] sm:$0xff] %v8458
        %9051 = vst [vmem:[%s270 + $0x118] sm:$0xff] %v8475
        %9052 = vst [vmem:[%s270 + $0x120] sm:$0xff] %v8492
        %9053 = vst [vmem:[%s270 + $0x128] sm:$0xff] %v8509
        %9054 = vst [vmem:[%s270 + $0x130] sm:$0xff] %v8526
        %9055 = vst [vmem:[%s270 + $0x138] sm:$0xff] %v8543
        %9056 = vst [vmem:[%s270 + $0x140] sm:$0xff] %v8560
        %9057 = vst [vmem:[%s270 + $0x148] sm:$0xff] %v8577
        %9058 = vst [vmem:[%s270 + $0x150] sm:$0xff] %v8594
        %9059 = vst [vmem:[%s270 + $0x158] sm:$0xff] %v8611
        %9060 = vst [vmem:[%s270 + $0x160] sm:$0xff] %v8628
        %9061 = vst [vmem:[%s270 + $0x168] sm:$0xff] %v8645
        %9062 = vst [vmem:[%s270 + $0x170] sm:$0xff] %v8662
        %9063 = vst [vmem:[%s270 + $0x178] sm:$0xff] %v8679
        %9064 = vst [vmem:[%s270 + $0x180] sm:$0xff] %v8696
        %9065 = vst [vmem:[%s270 + $0x188] sm:$0xff] %v8713
        %9066 = vst [vmem:[%s270 + $0x190] sm:$0xff] %v8730
        %9067 = vst [vmem:[%s270 + $0x198] sm:$0xff] %v8747
        %9068 = vst [vmem:[%s270 + $0x1a0] sm:$0xff] %v8764
        %9069 = vst [vmem:[%s270 + $0x1a8] sm:$0xff] %v8781
        %9070 = vst [vmem:[%s270 + $0x1b0] sm:$0xff] %v8798
        %9071 = vst [vmem:[%s270 + $0x1b8] sm:$0xff] %v8815
        %9072 = vst [vmem:[%s270 + $0x1c0] sm:$0xff] %v8832
        %9073 = vst [vmem:[%s270 + $0x1c8] sm:$0xff] %v8849
        %9074 = vst [vmem:[%s270 + $0x1d0] sm:$0xff] %v8866
        %9075 = vst [vmem:[%s270 + $0x1d8] sm:$0xff] %v8883
        %9076 = vst [vmem:[%s270 + $0x1e0] sm:$0xff] %v8900
        %9077 = vst [vmem:[%s270 + $0x1e8] sm:$0xff] %v8917
        %9078 = vst [vmem:[%s270 + $0x1f0] sm:$0xff] %v8934
        %9079 = vst [vmem:[%s270 + $0x1f8] sm:$0xff] %v8951
        %s9080 = sand.u32 %s142, 1
        %s9081 = scalar_lea.sflag [#allocation3], %s9080
        %s9082 = sand.u32 %s142, 1
        %s9083 = smul.addr %s9082, 512
        %s9084 = scalar_lea.vmem [#allocation2], %s9083
        // Predicated region
        $region37: #{upsample_forward.1} parent=35 // pred_check
          %p9085 = pneg %p152
        $region38: #{upsample_forward.1} parent=35 // pred_check_branch
          %9087 = sbr.rel (%p9085) target = $region40
        $region39: #{upsample_forward.1} parent=35 // pred_region
          %s9088 = smul.u32 16, %s23
          %s9090 = ssub.s32 8192, 8192
          %9091 = vsyncadd %s9081, %s9090
          %s9092 = smul.addr %s9088, 4
          %s9093 = smul.addr %s22, 128
          %s9094 = sadd.s32 %s9092, %s9093
          %s9095 = smul.addr %s9094, 128
          %s9096 = scalar_lea.hbm %s4, %s9095
          %s9097 = sshll.u32 %s9084, 4
          %s9098 = int_to_ptr.vmem [resolvable:$true] %s9097
          %9103 = dma.vmem_to_hbm [thread:$0]  %s9098, 8192, %s9096, %s9081, 128, 128, 8
        $region40: #{upsample_forward.1} parent=35 // pred_fallthru
          _
      $region36: #{upsample_forward.1} parent=5 // pred_fallthru
        _
      %p9104 = scmp.le.s32.totalorder 2, %s13
      // Predicated region
      $region41: #{upsample_forward.1} parent=5 // pred_check
        %p9105 = pneg %p9104
      $region42: #{upsample_forward.1} parent=5 // pred_check_branch
        %9107 = sbr.rel (%p9105) target = $region44
      $region43: #{upsample_forward.1} parent=5 // pred_region
        %s9108 = ssub.s32 %s13, 2
        // Predicated region
        $region45: #{upsample_forward.1} parent=43 // pred_check
          %p9109 = pneg %p158
        $region46: #{upsample_forward.1} parent=43 // pred_check_branch
          %9111 = sbr.rel (%p9109) target = $region48
        $region47: #{upsample_forward.1} parent=43 // pred_region
          %s9112 = sand.u32 %s143, 1
          %s9113 = scalar_lea.sflag [#allocation3], %s9112
          %s9114 = sand.u32 %s143, 1
          %s9115 = smul.addr %s9114, 512
          %s9116 = scalar_lea.vmem [#allocation2], %s9115
          %9117 = dma.done %s9113, 8192
        $region48: #{upsample_forward.1} parent=43 // pred_fallthru
          _
      $region44: #{upsample_forward.1} parent=5 // pred_fallthru
        _
    $region6: #{upsample_forward.1} parent=1 // loop_footer
      %s17 = sadd.s32 1, %s13
    $region7: #{upsample_forward.1} parent=1 // loop_footer_branch
      %12 = sbr.rel target = $region3
    $region8: #{upsample_forward.1} parent=1 // loop_exit
      _
    %9118 = vsyncpa [#allocation3], 1
    %s9119 = scalar_lea.sflag [#allocation3], 1
    %9120 = vsyncpa %s9119, 1

</llo_original>
